<compile_context>
chip_gen: v7x
topology: tpu7x:2x2x1
jax: 0.10.0
libtpu: 0.0.40
codegen_flags: <defaults>
</compile_context>

<pallas_src>
import functools

import jax
import jax.numpy as jnp
from jax.experimental import pallas as pl
from jax.experimental.pallas import tpu as pltpu

LANE = 128   # TPU lane width; channel dims are padded to a multiple of this
HALO = 8     # sublane-aligned width halo of the conv1-output scratch (>= K//2)


def _round_up(x, m):
    return (x + m - 1) // m * m


def _resblock_kernel(x_ref, wres_ref, w1_ref, w2_ref, b1_ref, bo_ref,
                     out_ref, y1_ref, *, H, W, TH, K):
    """One (batch element, row tile) per grid step.

    x_ref  : (TH+4p, W+2p, Cp) bf16 input window (2p row halo, p width halo,
             channels zero-padded to Cp), DMA'd per grid step by its BlockSpec.
    w*_ref : bf16 weights with BN scales pre-folded; w1/w2 im2col-flattened to
             (K*K*Cin_p, Cop) so each conv is a single wide-contraction matmul.
    b1_ref : (1, Cop) f32  conv1-BN bias.
    bo_ref : (1, Cop) f32  conv2-BN bias + residual-BN bias (pre-added).
    out_ref: (TH, W, Cop) f32 output tile.
    y1_ref : (R1, W+2*HALO, Cop) bf16 scratch: conv1 output + zero width halo.
    """
    p = K // 2
    R1 = TH + 2 * p                 # conv1 output rows needed by conv2
    Cp = x_ref.shape[-1]            # padded input channels  (multiple of 128)
    Cop = out_ref.shape[-1]         # padded output channels (multiple of 128)
    j = pl.program_id(1)

    xw = x_ref[...]                                    # (TH+4p, W+2p, Cp) bf16

    # ---- conv1 (BN scale folded into w1) as ONE im2col matmul ----------------
    stk1 = jnp.concatenate(
        [xw[kh:kh + R1, kw:kw + W, :] for kh in range(K) for kw in range(K)],
        axis=-1).reshape(R1 * W, K * K * Cp)
    acc1 = jnp.dot(stk1, w1_ref[...], preferred_element_type=jnp.float32)
    y1 = jnp.maximum(acc1 + b1_ref[...], 0.0).reshape(R1, W, Cop)

    # Store conv1 output once in bf16; keep a zero width halo so conv2's 'SAME'
    # zero padding in W is just a column offset when slicing the scratch.
    y1_ref[:, HALO:HALO + W, :] = y1.astype(y1_ref.dtype)
    y1_ref[:, HALO - p:HALO, :] = jnp.zeros((R1, p, Cop), y1_ref.dtype)
    y1_ref[:, HALO + W:HALO + W + p, :] = jnp.zeros((R1, p, Cop), y1_ref.dtype)

    # conv1 over the zero row-halo yields ReLU(b1) != 0, but conv2 must see 0
    # outside the image.  Only the first / last row tiles can contain such rows,
    # so the full-tile mask is gated onto them.
    @pl.when((j == 0) | (j == pl.num_programs(1) - 1))
    def _():
        r = jax.lax.broadcasted_iota(jnp.int32, (R1, 1, 1), 0)
        orig_row = j * TH - p + r
        valid = (orig_row >= 0) & (orig_row < H)
        y1_ref[...] = jnp.where(valid, y1_ref[...], 0)

    # ---- residual branch: 1x1 conv (BN scale folded) seeds the accumulator ---
    xc = xw[2 * p:2 * p + TH, p:p + W, :].reshape(TH * W, Cp)
    acc2 = jnp.dot(xc, wres_ref[...], preferred_element_type=jnp.float32)

    # ---- conv2 (BN scale folded into w2) as ONE im2col matmul ----------------
    stk2 = jnp.concatenate(
        [y1_ref[kh:kh + TH, HALO - p + kw:HALO - p + kw + W, :]
         for kh in range(K) for kw in range(K)],
        axis=-1).reshape(TH * W, K * K * Cop)
    acc2 = acc2 + jnp.dot(stk2, w2_ref[...], preferred_element_type=jnp.float32)

    # ---- combined bias (conv2 BN + residual BN) + final ReLU -----------------
    out = jnp.maximum(acc2 + bo_ref[...], 0.0)
    # TODO(synk): Dropout2d is identity in eval mode; training-mode channel
    # dropout (tied to PyTorch's RNG stream) is not reproduced here.
    out_ref[...] = out.reshape(TH, W, Cop).astype(out_ref.dtype)


def resblock_forward(x_nhwc, params, *, kernel_size=3, tile_h=16):
    """Fused ResBlock forward (inference).  NHWC activations, HWIO weights."""
    N, H, W, Cin = x_nhwc.shape
    K = kernel_size
    assert K % 2 == 1, "SAME padding assumes an odd kernel size"
    p = K // 2
    assert p <= HALO
    Cout = params["w1"].shape[-1]

    Cp = _round_up(Cin, LANE)                 # lane-dense channel padding
    Cop = _round_up(Cout, LANE)
    TH = max(1, min(tile_h, H))               # rows per grid step
    n_h = -(-H // TH)                         # cdiv: ragged last tile is padded
    Hpad = n_h * TH
    R1 = TH + 2 * p
    Wp = W + 2 * p

    # Fold the BatchNorm scales into the conv weights (one-time, outside the
    # kernel); only biases remain in-kernel.  bo = conv2-BN bias + res-BN bias.
    w1 = params["w1"] * params["s1"].reshape(1, 1, 1, Cout)
    w2 = params["w2"] * params["s2"].reshape(1, 1, 1, Cout)
    wr = params["w_res"] * params["s_res"].reshape(1, Cout)
    b1 = params["b1"].reshape(1, Cout).astype(jnp.float32)
    bo = (params["b2"] + params["b_res"]).reshape(1, Cout).astype(jnp.float32)

    # Channel padding + im2col flattening of the KxK taps into the contraction
    # dim (tap order (kh, kw) matches the in-kernel concatenation order).
    # TODO(synk): for Cin/Cout << 128, fold taps BEFORE padding (K*K*Cin -> 128)
    # to avoid multiplying zeros on the MXU; irrelevant once channels >= 128.
    w1 = jnp.pad(w1, ((0, 0), (0, 0), (0, Cp - Cin), (0, Cop - Cout)))
    w1 = w1.reshape(K * K * Cp, Cop).astype(jnp.bfloat16)
    w2 = jnp.pad(w2, ((0, 0), (0, 0), (0, Cop - Cout), (0, Cop - Cout)))
    w2 = w2.reshape(K * K * Cop, Cop).astype(jnp.bfloat16)
    wr = jnp.pad(wr, ((0, Cp - Cin), (0, Cop - Cout))).astype(jnp.bfloat16)
    b1 = jnp.pad(b1, ((0, 0), (0, Cop - Cout)))
    bo = jnp.pad(bo, ((0, 0), (0, Cop - Cout)))

    # Activations: bf16, zero channel / width / row padding, then pre-gathered
    # overlapping (TH+4p)-row windows so each grid step stages ONE window in
    # VMEM (auto double-buffered) instead of the whole image.
    # TODO(synk): keep activations in this padded, lane-dense bf16 layout
    # between layers, and use a manual halo DMA (memory_space=pl.ANY +
    # make_async_copy) to avoid the ~(TH+4p)/TH HBM duplication of the gather.
    xp = jnp.pad(x_nhwc.astype(jnp.bfloat16),
                 ((0, 0), (2 * p, 2 * p + Hpad - H), (p, p), (0, Cp - Cin)))
    xwin = jnp.concatenate(
        [xp[:, None, i * TH:i * TH + TH + 4 * p] for i in range(n_h)], axis=1)

    # Explicit VMEM budget (resident buffers + headroom), per review.
    win_bytes = (TH + 4 * p) * Wp * Cp * 2
    out_bytes = TH * W * Cop * 4
    wgt_bytes = (K * K * Cp + K * K * Cop + Cp) * Cop * 2 + 2 * Cop * 4
    y1_bytes = R1 * (W + 2 * HALO) * Cop * 2
    tmp_bytes = (R1 * W * K * K * Cp * 2 + R1 * W * Cop * 8
                 + TH * W * K * K * Cop * 2 + TH * W * Cop * 8)
    vmem_est = 2 * win_bytes + 2 * out_bytes + 2 * wgt_bytes + y1_bytes + tmp_bytes
    vmem_limit = int(min(max(1.5 * vmem_est + (2 << 20), 8 << 20), 64 << 20))

    flops = 2 * N * Hpad * W * Cop * (Cp + K * K * Cp + K * K * Cop)
    bytes_accessed = (xwin.size * 2 + N * Hpad * W * Cop * 4
                      + (w1.size + w2.size + wr.size) * 2
                      + (b1.size + bo.size) * 4)

    kernel = functools.partial(_resblock_kernel, H=H, W=W, TH=TH, K=K)

    out = pl.pallas_call(
        kernel,
        out_shape=jax.ShapeDtypeStruct((N, Hpad, W, Cop), jnp.float32),
        grid=(N, n_h),
        in_specs=[
            pl.BlockSpec((None, None, TH + 4 * p, Wp, Cp),
                         lambda n, i: (n, i, 0, 0, 0)),                # x window
            pl.BlockSpec((Cp, Cop), lambda n, i: (0, 0)),              # w_res
            pl.BlockSpec((K * K * Cp, Cop), lambda n, i: (0, 0)),      # w1 im2col
            pl.BlockSpec((K * K * Cop, Cop), lambda n, i: (0, 0)),     # w2 im2col
            pl.BlockSpec((1, Cop), lambda n, i: (0, 0)),               # b1
            pl.BlockSpec((1, Cop), lambda n, i: (0, 0)),               # b2 + b_res
        ],
        out_specs=pl.BlockSpec((None, TH, W, Cop), lambda n, i: (n, i, 0, 0)),
        scratch_shapes=[pltpu.VMEM((R1, W + 2 * HALO, Cop), jnp.bfloat16)],
        compiler_params=pltpu.CompilerParams(
            dimension_semantics=("parallel", "parallel"),
            vmem_limit_bytes=vmem_limit),
        cost_estimate=pl.CostEstimate(flops=flops, transcendentals=0,
                                      bytes_accessed=bytes_accessed),
    )(xwin, wr, w1, w2, b1, bo)

    # TODO(synk): emit bf16 / keep the padded-channel layout if the consumer
    # accepts it, to drop this extra HBM slice pass and halve output traffic.
    return out[:, :H, :, :Cout]


# ---------------- pure-JAX reference (for correctness check) ----------------
def _conv_nhwc(x, w_hwio, padding):
    return jax.lax.conv_general_dilated(
        x, w_hwio, window_strides=(1, 1), padding=padding,
        dimension_numbers=("NHWC", "HWIO", "NHWC"))


def resblock_reference(x_nhwc, params):
    wres_hwio = params["w_res"][None, None]  # (1,1,Cin,Cout)
    identity = _conv_nhwc(x_nhwc, wres_hwio, "VALID")
    identity = identity * params["s_res"] + params["b_res"]

    out = _conv_nhwc(x_nhwc, params["w1"], "SAME")
    out = jnp.maximum(out * params["s1"] + params["b1"], 0.0)
    out = _conv_nhwc(out, params["w2"], "SAME")
    out = out * params["s2"] + params["b2"]
    return jnp.maximum(out + identity, 0.0)


def _fold_bn(gamma, beta, mean, var, eps=1e-5):
    scale = gamma / jnp.sqrt(var + eps)
    bias = beta - mean * scale
    return scale.reshape(1, -1), bias.reshape(1, -1)


if __name__ == "__main__":
    N, Cin, Cout, H, W, K = 2, 4, 8, 16, 16, 3

    key = jax.random.PRNGKey(0)
    keys = jax.random.split(key, 8)

    # PyTorch-layout weights (OIHW), converted to the kernel's HWIO layout.
    w_res_oihw = 0.1 * jax.random.normal(keys[0], (Cout, Cin, 1, 1), jnp.float32)
    w1_oihw = 0.1 * jax.random.normal(keys[1], (Cout, Cin, K, K), jnp.float32)
    w2_oihw = 0.1 * jax.random.normal(keys[2], (Cout, Cout, K, K), jnp.float32)

    def bn_params(k):
        ks = jax.random.split(k, 4)
        gamma = 1.0 + 0.1 * jax.random.normal(ks[0], (Cout,), jnp.float32)
        beta = 0.1 * jax.random.normal(ks[1], (Cout,), jnp.float32)
        mean = 0.1 * jax.random.normal(ks[2], (Cout,), jnp.float32)
        var = 0.5 + jax.random.uniform(ks[3], (Cout,), jnp.float32)
        return _fold_bn(gamma, beta, mean, var)

    s_res, b_res = bn_params(keys[3])
    s1, b1 = bn_params(keys[4])
    s2, b2 = bn_params(keys[5])

    params = {
        "w_res": jnp.transpose(w_res_oihw[:, :, 0, 0], (1, 0)),   # (Cin, Cout)
        "w1": jnp.transpose(w1_oihw, (2, 3, 1, 0)),               # HWIO
        "w2": jnp.transpose(w2_oihw, (2, 3, 1, 0)),               # HWIO
        "s_res": s_res, "b_res": b_res,
        "s1": s1, "b1": b1,
        "s2": s2, "b2": b2,
    }

    x_nchw = jax.random.normal(keys[6], (N, Cin, H, W), jnp.float32)
    x_nhwc = jnp.transpose(x_nchw, (0, 2, 3, 1))

    out = resblock_forward(x_nhwc, params, kernel_size=K, tile_h=16)
    out = jax.block_until_ready(out)

    ref = resblock_reference(x_nhwc, params)
    assert out.shape == (N, H, W, Cout)
    # Tolerance accounts for bf16 MXU inputs (f32 accumulation) vs f32 reference.
    assert jnp.allclose(out, ref, rtol=5e-2, atol=5e-2), (
        f"max abs err = {jnp.max(jnp.abs(out - ref))}")

    print("KERNEL_OK")
</pallas_src>

<mosaic_0001>
module attributes {stable_mosaic.version = 11 : i64} {
  func.func @_resblock_kernel(%arg0: i32, %arg1: i32, %arg2: memref<1x1x20x18x128xbf16, #tpu.memory_space<vmem>>, %arg3: memref<128x128xbf16, #tpu.memory_space<vmem>>, %arg4: memref<1152x128xbf16, #tpu.memory_space<vmem>>, %arg5: memref<1152x128xbf16, #tpu.memory_space<vmem>>, %arg6: memref<1x128xf32, #tpu.memory_space<vmem>>, %arg7: memref<1x128xf32, #tpu.memory_space<vmem>>, %arg8: memref<1x16x16x128xf32, #tpu.memory_space<vmem>>, %arg9: memref<18x32x128xbf16, #tpu.memory_space<vmem>>) attributes {dimension_semantics = [#tpu.dimension_semantics<parallel>, #tpu.dimension_semantics<parallel>], iteration_bounds = array<i64: 2, 1>, scalar_prefetch = 0 : i64, scratch_operands = 1 : i64, tpu.core_type = #tpu.core_type<tc>, window_params = [{transform_indices = @transform_0, window_bounds = array<i64: 1, 1, 20, 18, 128>}, {pipeline_mode = #tpu.pipeline_mode<synchronous>, transform_indices = @transform_1, window_bounds = array<i64: 128, 128>}, {pipeline_mode = #tpu.pipeline_mode<synchronous>, transform_indices = @transform_2, window_bounds = array<i64: 1152, 128>}, {pipeline_mode = #tpu.pipeline_mode<synchronous>, transform_indices = @transform_3, window_bounds = array<i64: 1152, 128>}, {pipeline_mode = #tpu.pipeline_mode<synchronous>, transform_indices = @transform_4, window_bounds = array<i64: 1, 128>}, {pipeline_mode = #tpu.pipeline_mode<synchronous>, transform_indices = @transform_5, window_bounds = array<i64: 1, 128>}, {transform_indices = @transform_6, window_bounds = array<i64: 1, 16, 16, 128>}]} {
    %c0 = arith.constant 0 : index
    %c0_0 = arith.constant 0 : index
    %c0_1 = arith.constant 0 : index
    %c0_2 = arith.constant 0 : index
    %c0_3 = arith.constant 0 : index
    %0 = vector.load %arg2[%c0, %c0_0, %c0_1, %c0_2, %c0_3] : memref<1x1x20x18x128xbf16, #tpu.memory_space<vmem>>, vector<1x1x20x18x128xbf16>
    %1 = vector.shape_cast %0 : vector<1x1x20x18x128xbf16> to vector<20x18x128xbf16>
    %2 = vector.extract_strided_slice %1 {offsets = [0, 0, 0], sizes = [18, 16, 128], strides = [1, 1, 1]} : vector<20x18x128xbf16> to vector<18x16x128xbf16>
    %3 = vector.extract_strided_slice %1 {offsets = [0, 1, 0], sizes = [18, 16, 128], strides = [1, 1, 1]} : vector<20x18x128xbf16> to vector<18x16x128xbf16>
    %4 = vector.extract_strided_slice %1 {offsets = [0, 2, 0], sizes = [18, 16, 128], strides = [1, 1, 1]} : vector<20x18x128xbf16> to vector<18x16x128xbf16>
    %5 = vector.extract_strided_slice %1 {offsets = [1, 0, 0], sizes = [18, 16, 128], strides = [1, 1, 1]} : vector<20x18x128xbf16> to vector<18x16x128xbf16>
    %6 = vector.extract_strided_slice %1 {offsets = [1, 1, 0], sizes = [18, 16, 128], strides = [1, 1, 1]} : vector<20x18x128xbf16> to vector<18x16x128xbf16>
    %7 = vector.extract_strided_slice %1 {offsets = [1, 2, 0], sizes = [18, 16, 128], strides = [1, 1, 1]} : vector<20x18x128xbf16> to vector<18x16x128xbf16>
    %8 = vector.extract_strided_slice %1 {offsets = [2, 0, 0], sizes = [18, 16, 128], strides = [1, 1, 1]} : vector<20x18x128xbf16> to vector<18x16x128xbf16>
    %9 = vector.extract_strided_slice %1 {offsets = [2, 1, 0], sizes = [18, 16, 128], strides = [1, 1, 1]} : vector<20x18x128xbf16> to vector<18x16x128xbf16>
    %10 = vector.extract_strided_slice %1 {offsets = [2, 2, 0], sizes = [18, 16, 128], strides = [1, 1, 1]} : vector<20x18x128xbf16> to vector<18x16x128xbf16>
    %11 = tpu.concatenate %2, %3, %4, %5, %6, %7, %8, %9, %10 in 2 : vector<18x16x128xbf16>, vector<18x16x128xbf16>, vector<18x16x128xbf16>, vector<18x16x128xbf16>, vector<18x16x128xbf16>, vector<18x16x128xbf16>, vector<18x16x128xbf16>, vector<18x16x128xbf16>, vector<18x16x128xbf16> -> vector<18x16x1152xbf16>
    %12 = vector.shape_cast %11 : vector<18x16x1152xbf16> to vector<288x1152xbf16>
    %c0_4 = arith.constant 0 : index
    %c0_5 = arith.constant 0 : index
    %13 = vector.load %arg4[%c0_4, %c0_5] : memref<1152x128xbf16, #tpu.memory_space<vmem>>, vector<1152x128xbf16>
    %cst = arith.constant dense<0.000000e+00> : vector<288x128xf32>
    %14 = tpu.matmul %12, %13, %cst {dimension_numbers = #tpu.dot_dimension_numbers<[1], [0], [0], [1], [0, 0, 1, 1], [], []>} : vector<288x1152xbf16>, vector<1152x128xbf16>, vector<288x128xf32> -> vector<288x128xf32>
    %c0_6 = arith.constant 0 : index
    %c0_7 = arith.constant 0 : index
    %15 = vector.load %arg6[%c0_6, %c0_7] : memref<1x128xf32, #tpu.memory_space<vmem>>, vector<1x128xf32>
    %16 = vector.broadcast %15 : vector<1x128xf32> to vector<288x128xf32>
    %17 = arith.addf %14, %16 : vector<288x128xf32>
    %cst_8 = arith.constant 0.000000e+00 : f32
    %18 = vector.broadcast %cst_8 : f32 to vector<288x128xf32>
    %19 = arith.maximumf %17, %18 : vector<288x128xf32>
    %20 = vector.shape_cast %19 : vector<288x128xf32> to vector<18x16x128xf32>
    %21 = arith.truncf %20 : vector<18x16x128xf32> to vector<18x16x128xbf16>
    %c0_9 = arith.constant 0 : index
    %c8 = arith.constant 8 : index
    %c0_10 = arith.constant 0 : index
    %22 = vector.load %arg9[%c0_9, %c8, %c0_10] : memref<18x32x128xbf16, #tpu.memory_space<vmem>>, vector<18x16x128xbf16>
    tpu.vector_store %arg9[%c0_9, %c8, %c0_10], %21 {strides = array<i32>} : memref<18x32x128xbf16, #tpu.memory_space<vmem>>, vector<18x16x128xbf16>,
    %cst_11 = arith.constant 0.000000e+00 : bf16
    %23 = vector.broadcast %cst_11 : bf16 to vector<18x1x128xbf16>
    %c0_12 = arith.constant 0 : index
    %c7 = arith.constant 7 : index
    %c0_13 = arith.constant 0 : index
    %24 = vector.load %arg9[%c0_12, %c7, %c0_13] : memref<18x32x128xbf16, #tpu.memory_space<vmem>>, vector<18x1x128xbf16>
    tpu.vector_store %arg9[%c0_12, %c7, %c0_13], %23 {strides = array<i32>} : memref<18x32x128xbf16, #tpu.memory_space<vmem>>, vector<18x1x128xbf16>,
    %cst_14 = arith.constant 0.000000e+00 : bf16
    %25 = vector.broadcast %cst_14 : bf16 to vector<18x1x128xbf16>
    %c0_15 = arith.constant 0 : index
    %c24 = arith.constant 24 : index
    %c0_16 = arith.constant 0 : index
    %26 = vector.load %arg9[%c0_15, %c24, %c0_16] : memref<18x32x128xbf16, #tpu.memory_space<vmem>>, vector<18x1x128xbf16>
    tpu.vector_store %arg9[%c0_15, %c24, %c0_16], %25 {strides = array<i32>} : memref<18x32x128xbf16, #tpu.memory_space<vmem>>, vector<18x1x128xbf16>,
    %c0_i32 = arith.constant 0 : i32
    %27 = arith.cmpi eq, %arg1, %c0_i32 : i32
    %c0_i32_17 = arith.constant 0 : i32
    %28 = arith.cmpi eq, %arg1, %c0_i32_17 : i32
    %29 = arith.ori %27, %28 : i1
    %30 = arith.extui %29 : i1 to i32
    %c0_i32_18 = arith.constant 0 : i32
    %31 = arith.cmpi ne, %30, %c0_i32_18 : i32
    scf.if %31 {
      %59 = tpu.iota {dimensions = array<i32: 0>} : vector<18x1x1xi32>
      %c16_i32 = arith.constant 16 : i32
      %60 = arith.muli %arg1, %c16_i32 : i32
      %c1_i32 = arith.constant 1 : i32
      %61 = arith.subi %60, %c1_i32 : i32
      %62 = vector.broadcast %61 : i32 to vector<18x1x1xi32>
      %63 = arith.addi %62, %59 : vector<18x1x1xi32>
      %c0_i32_56 = arith.constant 0 : i32
      %64 = vector.broadcast %c0_i32_56 : i32 to vector<18x1x1xi32>
      %65 = arith.cmpi sge, %63, %64 : vector<18x1x1xi32>
      %c16_i32_57 = arith.constant 16 : i32
      %66 = vector.broadcast %c16_i32_57 : i32 to vector<18x1x1xi32>
      %67 = arith.cmpi slt, %63, %66 : vector<18x1x1xi32>
      %68 = arith.andi %65, %67 : vector<18x1x1xi1>
      %c0_58 = arith.constant 0 : index
      %c0_59 = arith.constant 0 : index
      %c0_60 = arith.constant 0 : index
      %69 = vector.load %arg9[%c0_58, %c0_59, %c0_60] : memref<18x32x128xbf16, #tpu.memory_space<vmem>>, vector<18x32x128xbf16>
      %c0_i32_61 = arith.constant 0 : i32
      %70 = arith.sitofp %c0_i32_61 : i32 to bf16
      %71 = vector.shape_cast %68 : vector<18x1x1xi1> to vector<18x1x1xi1>
      %72 = vector.broadcast %71 : vector<18x1x1xi1> to vector<18x32x128xi1>
      %73 = vector.broadcast %70 : bf16 to vector<18x32x128xbf16>
      %74 = arith.select %72, %69, %73 : vector<18x32x128xi1>, vector<18x32x128xbf16>
      %c0_62 = arith.constant 0 : index
      %c0_63 = arith.constant 0 : index
      %c0_64 = arith.constant 0 : index
      %75 = vector.load %arg9[%c0_62, %c0_63, %c0_64] : memref<18x32x128xbf16, #tpu.memory_space<vmem>>, vector<18x32x128xbf16>
      tpu.vector_store %arg9[%c0_62, %c0_63, %c0_64], %74 {strides = array<i32>} : memref<18x32x128xbf16, #tpu.memory_space<vmem>>, vector<18x32x128xbf16>,
    } else {
    }
    %32 = vector.extract_strided_slice %1 {offsets = [2, 1, 0], sizes = [16, 16, 128], strides = [1, 1, 1]} : vector<20x18x128xbf16> to vector<16x16x128xbf16>
    %33 = vector.shape_cast %32 : vector<16x16x128xbf16> to vector<256x128xbf16>
    %c0_19 = arith.constant 0 : index
    %c0_20 = arith.constant 0 : index
    %34 = vector.load %arg3[%c0_19, %c0_20] : memref<128x128xbf16, #tpu.memory_space<vmem>>, vector<128x128xbf16>
    %cst_21 = arith.constant dense<0.000000e+00> : vector<256x128xf32>
    %35 = tpu.matmul %33, %34, %cst_21 {dimension_numbers = #tpu.dot_dimension_numbers<[1], [0], [0], [1], [0, 0, 1, 1], [], []>} : vector<256x128xbf16>, vector<128x128xbf16>, vector<256x128xf32> -> vector<256x128xf32>
    %c0_22 = arith.constant 0 : index
    %c7_23 = arith.constant 7 : index
    %c0_24 = arith.constant 0 : index
    %36 = vector.load %arg9[%c0_22, %c7_23, %c0_24] : memref<18x32x128xbf16, #tpu.memory_space<vmem>>, vector<16x16x128xbf16>
    %c0_25 = arith.constant 0 : index
    %c8_26 = arith.constant 8 : index
    %c0_27 = arith.constant 0 : index
    %37 = vector.load %arg9[%c0_25, %c8_26, %c0_27] : memref<18x32x128xbf16, #tpu.memory_space<vmem>>, vector<16x16x128xbf16>
    %c0_28 = arith.constant 0 : index
    %c9 = arith.constant 9 : index
    %c0_29 = arith.constant 0 : index
    %38 = vector.load %arg9[%c0_28, %c9, %c0_29] : memref<18x32x128xbf16, #tpu.memory_space<vmem>>, vector<16x16x128xbf16>
    %c1 = arith.constant 1 : index
    %c7_30 = arith.constant 7 : index
    %c0_31 = arith.constant 0 : index
    %39 = vector.load %arg9[%c1, %c7_30, %c0_31] : memref<18x32x128xbf16, #tpu.memory_space<vmem>>, vector<16x16x128xbf16>
    %c1_32 = arith.constant 1 : index
    %c8_33 = arith.constant 8 : index
    %c0_34 = arith.constant 0 : index
    %40 = vector.load %arg9[%c1_32, %c8_33, %c0_34] : memref<18x32x128xbf16, #tpu.memory_space<vmem>>, vector<16x16x128xbf16>
    %c1_35 = arith.constant 1 : index
    %c9_36 = arith.constant 9 : index
    %c0_37 = arith.constant 0 : index
    %41 = vector.load %arg9[%c1_35, %c9_36, %c0_37] : memref<18x32x128xbf16, #tpu.memory_space<vmem>>, vector<16x16x128xbf16>
    %c2 = arith.constant 2 : index
    %c7_38 = arith.constant 7 : index
    %c0_39 = arith.constant 0 : index
    %42 = vector.load %arg9[%c2, %c7_38, %c0_39] : memref<18x32x128xbf16, #tpu.memory_space<vmem>>, vector<16x16x128xbf16>
    %c2_40 = arith.constant 2 : index
    %c8_41 = arith.constant 8 : index
    %c0_42 = arith.constant 0 : index
    %43 = vector.load %arg9[%c2_40, %c8_41, %c0_42] : memref<18x32x128xbf16, #tpu.memory_space<vmem>>, vector<16x16x128xbf16>
    %c2_43 = arith.constant 2 : index
    %c9_44 = arith.constant 9 : index
    %c0_45 = arith.constant 0 : index
    %44 = vector.load %arg9[%c2_43, %c9_44, %c0_45] : memref<18x32x128xbf16, #tpu.memory_space<vmem>>, vector<16x16x128xbf16>
    %45 = tpu.concatenate %36, %37, %38, %39, %40, %41, %42, %43, %44 in 2 : vector<16x16x128xbf16>, vector<16x16x128xbf16>, vector<16x16x128xbf16>, vector<16x16x128xbf16>, vector<16x16x128xbf16>, vector<16x16x128xbf16>, vector<16x16x128xbf16>, vector<16x16x128xbf16>, vector<16x16x128xbf16> -> vector<16x16x1152xbf16>
    %46 = vector.shape_cast %45 : vector<16x16x1152xbf16> to vector<256x1152xbf16>
    %c0_46 = arith.constant 0 : index
    %c0_47 = arith.constant 0 : index
    %47 = vector.load %arg5[%c0_46, %c0_47] : memref<1152x128xbf16, #tpu.memory_space<vmem>>, vector<1152x128xbf16>
    %cst_48 = arith.constant dense<0.000000e+00> : vector<256x128xf32>
    %48 = tpu.matmul %46, %47, %cst_48 {dimension_numbers = #tpu.dot_dimension_numbers<[1], [0], [0], [1], [0, 0, 1, 1], [], []>} : vector<256x1152xbf16>, vector<1152x128xbf16>, vector<256x128xf32> -> vector<256x128xf32>
    %49 = arith.addf %35, %48 : vector<256x128xf32>
    %c0_49 = arith.constant 0 : index
    %c0_50 = arith.constant 0 : index
    %50 = vector.load %arg7[%c0_49, %c0_50] : memref<1x128xf32, #tpu.memory_space<vmem>>, vector<1x128xf32>
    %51 = vector.broadcast %50 : vector<1x128xf32> to vector<256x128xf32>
    %52 = arith.addf %49, %51 : vector<256x128xf32>
    %cst_51 = arith.constant 0.000000e+00 : f32
    %53 = vector.broadcast %cst_51 : f32 to vector<256x128xf32>
    %54 = arith.maximumf %52, %53 : vector<256x128xf32>
    %55 = vector.shape_cast %54 : vector<256x128xf32> to vector<16x16x128xf32>
    %c0_52 = arith.constant 0 : index
    %c0_53 = arith.constant 0 : index
    %c0_54 = arith.constant 0 : index
    %c0_55 = arith.constant 0 : index
    %56 = vector.load %arg8[%c0_52, %c0_53, %c0_54, %c0_55] : memref<1x16x16x128xf32, #tpu.memory_space<vmem>>, vector<1x16x16x128xf32>
    %57 = vector.shape_cast %56 : vector<1x16x16x128xf32> to vector<16x16x128xf32>
    %58 = vector.shape_cast %55 : vector<16x16x128xf32> to vector<1x16x16x128xf32>
    tpu.vector_store %arg8[%c0_52, %c0_53, %c0_54, %c0_55], %58 {strides = array<i32>} : memref<1x16x16x128xf32, #tpu.memory_space<vmem>>, vector<1x16x16x128xf32>,
    return
  }
  func.func @transform_0(%arg0: i32, %arg1: i32) -> (i32, i32, i32, i32, i32) {
    %c0_i32 = arith.constant 0 : i32
    %c0_i32_0 = arith.constant 0 : i32
    %c0_i32_1 = arith.constant 0 : i32
    %c0_i32_2 = arith.constant 0 : i32
    return %arg0, %arg1, %c0_i32, %c0_i32_0, %c0_i32_1 : i32, i32, i32, i32, i32
  }
  func.func @transform_1(%arg0: i32, %arg1: i32) -> (i32, i32) {
    %c0_i32 = arith.constant 0 : i32
    %c0_i32_0 = arith.constant 0 : i32
    %c0_i32_1 = arith.constant 0 : i32
    return %c0_i32, %c0_i32_0 : i32, i32
  }
  func.func @transform_2(%arg0: i32, %arg1: i32) -> (i32, i32) {
    %c0_i32 = arith.constant 0 : i32
    %c0_i32_0 = arith.constant 0 : i32
    %c0_i32_1 = arith.constant 0 : i32
    return %c0_i32, %c0_i32_0 : i32, i32
  }
  func.func @transform_3(%arg0: i32, %arg1: i32) -> (i32, i32) {
    %c0_i32 = arith.constant 0 : i32
    %c0_i32_0 = arith.constant 0 : i32
    %c0_i32_1 = arith.constant 0 : i32
    return %c0_i32, %c0_i32_0 : i32, i32
  }
  func.func @transform_4(%arg0: i32, %arg1: i32) -> (i32, i32) {
    %c0_i32 = arith.constant 0 : i32
    %c0_i32_0 = arith.constant 0 : i32
    %c0_i32_1 = arith.constant 0 : i32
    return %c0_i32, %c0_i32_0 : i32, i32
  }
  func.func @transform_5(%arg0: i32, %arg1: i32) -> (i32, i32) {
    %c0_i32 = arith.constant 0 : i32
    %c0_i32_0 = arith.constant 0 : i32
    %c0_i32_1 = arith.constant 0 : i32
    return %c0_i32, %c0_i32_0 : i32, i32
  }
  func.func @transform_6(%arg0: i32, %arg1: i32) -> (i32, i32, i32, i32) {
    %c0_i32 = arith.constant 0 : i32
    %c0_i32_0 = arith.constant 0 : i32
    %c0_i32_1 = arith.constant 0 : i32
    return %arg0, %arg1, %c0_i32, %c0_i32_0 : i32, i32, i32, i32
  }
}

</mosaic_0001>

<llo_original>
// kernel: tpu_custom_call.1
$region0: #{tpu_custom_call.1}
  #allocation0 [shape = 'u32[]', space=smem, size = 0x4, offset = 0x4, fixed_abs, tag = 'smem constant byte address 0x4 - core index']
  #allocation1 [shape = 'u32[144,128]{1,0:T(1,128)}', space=vmem, size = 0x12000, scoped, tag = 'internal scratch']
  #allocation2 [shape = 'bf16[18,32,128]{2,1,0:T(16,128)(2,1)}', space=vmem, size = 0x24000, scoped, tag = 'scratch operand']
  %s0 = inlined_call_operand.vmem [shape: bf16[2,1,20,18,128], index: 0, kind: input, shape index: {}]
  %s1 = inlined_call_operand.vmem [shape: bf16[128,128], index: 1, kind: input, shape index: {}]
  %s2 = inlined_call_operand.vmem [shape: bf16[1152,128], index: 2, kind: input, shape index: {}]
  %s3 = inlined_call_operand.hbm [shape: bf16[1152,128], index: 3, kind: input, shape index: {}]
  %s4 = inlined_call_operand.vmem [shape: f32[1,128], index: 4, kind: input, shape index: {}]
  %s5 = inlined_call_operand.vmem [shape: f32[1,128], index: 5, kind: input, shape index: {}]
  %s6 = inlined_call_operand.hbm [shape: f32[2,16,16,128], index: 6, kind: output, shape index: {}]
  %s7 = sld [smem:[#allocation0]]
  $region65: #{tpu_custom_call.1} parent=0
    _
  %s9 = ssub.s32 1, %s7
  %s10 = scalar_select 0, %s9, %s7
  $region1: #{tpu_custom_call.1} parent=0
    #allocation3 [shape = 'u8[294912]{0}', space=vmem, size = 0x48000, scoped, tag = 'input window, operand 3, single buffered']
    #allocation4 [shape = 's32[2]{0}', space=sflag, size = 0x8, scoped, tag = 'scoped memory for tpu_custom_call.1']
    #allocation5 [shape = 's32[2]{0}', space=sflag, size = 0x8, scoped, tag = 'scoped memory for tpu_custom_call.1']
    #allocation6 [shape = 'u8[262144]{0}', space=vmem, size = 0x40000, scoped, tag = 'output window, operand 0']
    %11 = vsyncpa [#allocation4], 0
    %12 = vsyncpa [#allocation5], 0
    %s13 = scalar_lea.sflag [#allocation5], 1
    %14 = vsyncpa %s13, 0
    loop: start=0, step=1, limit=4
    $region2: #{tpu_custom_call.1} parent=1 // loop_pre_header
      _
    $region3: #{tpu_custom_call.1} parent=1 // loop_header
      %s16 = sphi 0, %s20
      %p17 = scmp.ge.s32.totalorder %s16, 4
      %s23 = sphi 0, %s35
      %s24 = sphi 0, %s31
      %s25 = sphi 0, %s23
      %s26 = sphi 0, %s24
      %s27 = sphi 0, %s25
      %s28 = sphi 0, %s26
      %s40 = sphi 0, %s42
      %s43 = sphi 0, %s40
      %s44 = sphi 0, %s43
      %s60 = sphi 0, %s44
      %s64 = sphi 0, %s64
      %s66 = sphi 0, %s64
      %s67 = sphi 0, %s66
      %s81 = sphi 0, %s67
      %s85 = sphi 0, %s85
      %s87 = sphi 0, %s85
      %s88 = sphi 0, %s87
      %s102 = sphi 0, %s88
      %s106 = sphi 0, %s106
      %s108 = sphi 0, %s106
      %s109 = sphi 0, %s108
      %s123 = sphi 0, %s109
      %s127 = sphi 0, %s127
      %s129 = sphi 0, %s127
      %s130 = sphi 0, %s129
      %s144 = sphi 0, %s130
      %s148 = sphi 0, %s148
      %s150 = sphi 0, %s148
      %s151 = sphi 0, %s150
      %s165 = sphi 0, %s151
      %s173 = sphi 0, %s175
      %s176 = sphi 0, %s173
      %s177 = sphi 0, %s176
      %s193 = sphi 0, %s177
    $region4: #{tpu_custom_call.1} parent=1 // loop_header_branch
      %19 = sbr.rel (%p17) target = $region8
    $region5: #{tpu_custom_call.1} parent=1 // loop_body
      %s21 = ssub.s32 %s16, 1
      %s22 = ssub.s32 %s16, 2
      %s29 = sadd.s32 1, %s24
      %p30 = scmp.ge.s32.totalorder %s29, 1
      %s31 = scalar_select %p30, 0, %s29
      %s32 = sadd.s32 1, %s23
      %s33 = scalar_select %p30, %s32, %s23
      %p34 = scmp.ge.s32.totalorder %s33, 2
      %s35 = scalar_select %p34, 0, %s33
      %s36 = ssub.s32 %s23, %s35
      %s37 = ssub.s32 %s24, %s31
      %s38 = sor.u32 %s36, %s37
      %p39 = scmp.eq.s32.totalorder %s38, 0
      %s41 = sadd.s32 %s40, 1
      %s42 = scalar_select %p39, %s40, %s41
      %p45 = pneg %p39
      %p46 = scmp.eq.s32.totalorder %s16, 1
      %p47 = por %p45, %p46
      %p48 = scmp.ne.s32.totalorder %s40, %s43
      %p49 = scmp.eq.s32.totalorder %s16, 0
      %p50 = por %p48, %p49
      %p51 = scmp.ne.s32.totalorder %s40, %s43
      %p52 = scmp.eq.s32.totalorder %s21, 1
      %p53 = por %p51, %p52
      %p54 = scmp.ne.s32.totalorder %s43, %s44
      %p55 = scmp.eq.s32.totalorder %s21, 0
      %p56 = por %p54, %p55
      %p57 = scmp.ne.s32.totalorder %s43, %s44
      %p58 = scmp.eq.s32.totalorder %s22, 1
      %p59 = por %p57, %p58
      %p61 = scmp.ne.s32.totalorder %s44, %s60
      %p62 = scmp.eq.s32.totalorder %s22, 0
      %p63 = por %p61, %p62
      %s65 = sadd.s32 %s64, 1
      %p68 = scmp.eq.s32.totalorder %s16, 1
      %p69 = scmp.ne.s32.totalorder %s64, %s66
      %p70 = scmp.eq.s32.totalorder %s16, 0
      %p71 = por %p69, %p70
      %p72 = scmp.ne.s32.totalorder %s64, %s66
      %p73 = scmp.eq.s32.totalorder %s21, 1
      %p74 = por %p72, %p73
      %p75 = scmp.ne.s32.totalorder %s66, %s67
      %p76 = scmp.eq.s32.totalorder %s21, 0
      %p77 = por %p75, %p76
      %p78 = scmp.ne.s32.totalorder %s66, %s67
      %p79 = scmp.eq.s32.totalorder %s22, 1
      %p80 = por %p78, %p79
      %p82 = scmp.ne.s32.totalorder %s67, %s81
      %p83 = scmp.eq.s32.totalorder %s22, 0
      %p84 = por %p82, %p83
      %s86 = sadd.s32 %s85, 1
      %p89 = scmp.eq.s32.totalorder %s16, 1
      %p90 = scmp.ne.s32.totalorder %s85, %s87
      %p91 = scmp.eq.s32.totalorder %s16, 0
      %p92 = por %p90, %p91
      %p93 = scmp.ne.s32.totalorder %s85, %s87
      %p94 = scmp.eq.s32.totalorder %s21, 1
      %p95 = por %p93, %p94
      %p96 = scmp.ne.s32.totalorder %s87, %s88
      %p97 = scmp.eq.s32.totalorder %s21, 0
      %p98 = por %p96, %p97
      %p99 = scmp.ne.s32.totalorder %s87, %s88
      %p100 = scmp.eq.s32.totalorder %s22, 1
      %p101 = por %p99, %p100
      %p103 = scmp.ne.s32.totalorder %s88, %s102
      %p104 = scmp.eq.s32.totalorder %s22, 0
      %p105 = por %p103, %p104
      %s107 = sadd.s32 %s106, 1
      %p110 = scmp.eq.s32.totalorder %s16, 1
      %p111 = scmp.ne.s32.totalorder %s106, %s108
      %p112 = scmp.eq.s32.totalorder %s16, 0
      %p113 = por %p111, %p112
      %p114 = scmp.ne.s32.totalorder %s106, %s108
      %p115 = scmp.eq.s32.totalorder %s21, 1
      %p116 = por %p114, %p115
      %p117 = scmp.ne.s32.totalorder %s108, %s109
      %p118 = scmp.eq.s32.totalorder %s21, 0
      %p119 = por %p117, %p118
      %p120 = scmp.ne.s32.totalorder %s108, %s109
      %p121 = scmp.eq.s32.totalorder %s22, 1
      %p122 = por %p120, %p121
      %p124 = scmp.ne.s32.totalorder %s109, %s123
      %p125 = scmp.eq.s32.totalorder %s22, 0
      %p126 = por %p124, %p125
      %s128 = sadd.s32 %s127, 1
      %p131 = scmp.eq.s32.totalorder %s16, 1
      %p132 = scmp.ne.s32.totalorder %s127, %s129
      %p133 = scmp.eq.s32.totalorder %s16, 0
      %p134 = por %p132, %p133
      %p135 = scmp.ne.s32.totalorder %s127, %s129
      %p136 = scmp.eq.s32.totalorder %s21, 1
      %p137 = por %p135, %p136
      %p138 = scmp.ne.s32.totalorder %s129, %s130
      %p139 = scmp.eq.s32.totalorder %s21, 0
      %p140 = por %p138, %p139
      %p141 = scmp.ne.s32.totalorder %s129, %s130
      %p142 = scmp.eq.s32.totalorder %s22, 1
      %p143 = por %p141, %p142
      %p145 = scmp.ne.s32.totalorder %s130, %s144
      %p146 = scmp.eq.s32.totalorder %s22, 0
      %p147 = por %p145, %p146
      %s149 = sadd.s32 %s148, 1
      %p152 = scmp.eq.s32.totalorder %s16, 1
      %p153 = scmp.ne.s32.totalorder %s148, %s150
      %p154 = scmp.eq.s32.totalorder %s16, 0
      %p155 = por %p153, %p154
      %p156 = scmp.ne.s32.totalorder %s148, %s150
      %p157 = scmp.eq.s32.totalorder %s21, 1
      %p158 = por %p156, %p157
      %p159 = scmp.ne.s32.totalorder %s150, %s151
      %p160 = scmp.eq.s32.totalorder %s21, 0
      %p161 = por %p159, %p160
      %p162 = scmp.ne.s32.totalorder %s150, %s151
      %p163 = scmp.eq.s32.totalorder %s22, 1
      %p164 = por %p162, %p163
      %p166 = scmp.ne.s32.totalorder %s151, %s165
      %p167 = scmp.eq.s32.totalorder %s22, 0
      %p168 = por %p166, %p167
      %s169 = ssub.s32 %s23, %s35
      %s170 = ssub.s32 %s24, %s31
      %s171 = sor.u32 %s169, %s170
      %p172 = scmp.eq.s32.totalorder %s171, 0
      %s174 = sadd.s32 %s173, 1
      %s175 = scalar_select %p172, %s173, %s174
      %p178 = pneg %p172
      %p179 = scmp.eq.s32.totalorder %s16, 1
      %p180 = por %p178, %p179
      %p181 = scmp.ne.s32.totalorder %s173, %s176
      %p182 = scmp.eq.s32.totalorder %s16, 0
      %p183 = por %p181, %p182
      %p184 = scmp.ne.s32.totalorder %s173, %s176
      %p185 = scmp.eq.s32.totalorder %s21, 1
      %p186 = por %p184, %p185
      %p187 = scmp.ne.s32.totalorder %s176, %s177
      %p188 = scmp.eq.s32.totalorder %s21, 0
      %p189 = por %p187, %p188
      %p190 = scmp.ne.s32.totalorder %s176, %s177
      %p191 = scmp.eq.s32.totalorder %s22, 1
      %p192 = por %p190, %p191
      %p194 = scmp.ne.s32.totalorder %s177, %s193
      %p195 = scmp.eq.s32.totalorder %s22, 0
      %p196 = por %p194, %p195
      %p197 = scmp.le.s32.totalorder 1, %s16
      %p198 = scmp.lt.s32.totalorder %s16, 3
      %p199 = pnand %p197, %p198
      %p200 = pneg %p199
      // Predicated region
      $region9: #{tpu_custom_call.1} parent=5 // pred_check
        _
      $region10: #{tpu_custom_call.1} parent=5 // pred_check_branch
        %202 = sbr.rel (%p199) target = $region12
      $region11: #{tpu_custom_call.1} parent=5 // pred_region
        %s203 = ssub.s32 %s16, 1
        // Predicated region
        $region13: #{tpu_custom_call.1} parent=11 // pred_check
          %p204 = pneg %p77
        $region14: #{tpu_custom_call.1} parent=11 // pred_check_branch
          %206 = sbr.rel (%p204) target = $region16
        $region15: #{tpu_custom_call.1} parent=11 // pred_region
          _
        $region16: #{tpu_custom_call.1} parent=11 // pred_fallthru
          _
        // Predicated region
        $region17: #{tpu_custom_call.1} parent=11 // pred_check
          %p207 = pneg %p98
        $region18: #{tpu_custom_call.1} parent=11 // pred_check_branch
          %209 = sbr.rel (%p207) target = $region20
        $region19: #{tpu_custom_call.1} parent=11 // pred_region
          _
        $region20: #{tpu_custom_call.1} parent=11 // pred_fallthru
          _
        // Predicated region
        $region21: #{tpu_custom_call.1} parent=11 // pred_check
          %p210 = pneg %p119
        $region22: #{tpu_custom_call.1} parent=11 // pred_check_branch
          %212 = sbr.rel (%p210) target = $region24
        $region23: #{tpu_custom_call.1} parent=11 // pred_region
          %s214 = ssub.s32 9216, 9216
          %215 = vsyncadd [#allocation4], %s214
          %s216 = sshll.u32 [#allocation3], 4
          %s217 = int_to_ptr.vmem [resolvable:$true] %s216
          %222 = dma.hbm_to_vmem [thread:$0]  %s3, 9216, %s217, [#allocation4], 64, 64, 4
        $region24: #{tpu_custom_call.1} parent=11 // pred_fallthru
          _
        // Predicated region
        $region25: #{tpu_custom_call.1} parent=11 // pred_check
          %p223 = pneg %p140
        $region26: #{tpu_custom_call.1} parent=11 // pred_check_branch
          %225 = sbr.rel (%p223) target = $region28
        $region27: #{tpu_custom_call.1} parent=11 // pred_region
          _
        $region28: #{tpu_custom_call.1} parent=11 // pred_fallthru
          _
        // Predicated region
        $region29: #{tpu_custom_call.1} parent=11 // pred_check
          %p226 = pneg %p161
        $region30: #{tpu_custom_call.1} parent=11 // pred_check_branch
          %228 = sbr.rel (%p226) target = $region32
        $region31: #{tpu_custom_call.1} parent=11 // pred_region
          _
        $region32: #{tpu_custom_call.1} parent=11 // pred_fallthru
          _
      $region12: #{tpu_custom_call.1} parent=5 // pred_fallthru
        _
      %p229 = scmp.lt.s32.totalorder %s16, 2
      // Predicated region
      $region33: #{tpu_custom_call.1} parent=5 // pred_check
        %p230 = pneg %p229
      $region34: #{tpu_custom_call.1} parent=5 // pred_check_branch
        %232 = sbr.rel (%p230) target = $region36
      $region35: #{tpu_custom_call.1} parent=5 // pred_region
        // Predicated region
        $region37: #{tpu_custom_call.1} parent=35 // pred_check
          %p233 = pneg %p50
        $region38: #{tpu_custom_call.1} parent=35 // pred_check_branch
          %235 = sbr.rel (%p233) target = $region40
        $region39: #{tpu_custom_call.1} parent=35 // pred_region
          %p236 = scmp.lt.s32.totalorder %s23, 1
          %s237 = scalar_select %p236, %s23, 1
          %p238 = scmp.lt.s32.totalorder %s24, 0
          %s239 = scalar_select %p238, %s24, 0
          %s240 = smul.addr %s239, 60
          %s241 = smul.addr %s237, 60
          %s242 = sadd.s32 %s240, %s241
          %s243 = smul.addr %s242, 4
          %s244 = scalar_lea.vmem %s0, %s243
        $region40: #{tpu_custom_call.1} parent=35 // pred_fallthru
          _
      $region36: #{tpu_custom_call.1} parent=5 // pred_fallthru
        _
      %p245 = scmp.le.s32.totalorder 1, %s16
      %p246 = scmp.lt.s32.totalorder %s16, 3
      %p247 = pnand %p245, %p246
      %p248 = pneg %p247
      // Predicated region
      $region41: #{tpu_custom_call.1} parent=5 // pred_check
        _
      $region42: #{tpu_custom_call.1} parent=5 // pred_check_branch
        %250 = sbr.rel (%p247) target = $region44
      $region43: #{tpu_custom_call.1} parent=5 // pred_region
        %s251 = ssub.s32 %s16, 1
        // Predicated region
        $region45: #{tpu_custom_call.1} parent=43 // pred_check
          %p252 = pneg %p119
        $region46: #{tpu_custom_call.1} parent=43 // pred_check_branch
          %254 = sbr.rel (%p252) target = $region48
        $region47: #{tpu_custom_call.1} parent=43 // pred_region
          %255 = dma.done [#allocation4], 9216
        $region48: #{tpu_custom_call.1} parent=43 // pred_fallthru
          _
        %p256 = scmp.lt.s32.totalorder %s25, 1
        %s257 = scalar_select %p256, %s25, 1
        %p258 = scmp.lt.s32.totalorder %s26, 0
        %s259 = scalar_select %p258, %s26, 0
        %s260 = smul.addr %s259, 60
        %s261 = smul.addr %s257, 60
        %s262 = sadd.s32 %s260, %s261
        %s263 = smul.addr %s262, 4
        %s264 = scalar_lea.vmem %s0, %s263
        %p265 = pneg %p56
        %p266 = pneg %p53
        %p267 = pneg %p77
        %p268 = pneg %p74
        %p269 = pneg %p98
        %p270 = pneg %p95
        %p271 = pneg %p119
        %p272 = pneg %p116
        %p273 = pneg %p140
        %p274 = pneg %p137
        %p275 = pneg %p161
        %p276 = pneg %p158
        %p277 = pneg %p189
        %p278 = pneg %p186
        %s279 = sand.u32 %s176, 1
        %s280 = scalar_lea.sflag [#allocation5], %s279
        %s281 = sand.u32 %s176, 1
        %s282 = smul.addr %s281, 256
        %s283 = scalar_lea.vmem [#allocation6], %s282
        %p284 = scmp.lt.s32.totalorder %s25, 1
        %s285 = scalar_select %p284, %s25, 1
        %p286 = scmp.lt.s32.totalorder %s26, 0
        %s287 = scalar_select %p286, %s26, 0
        %s288 = smul.addr %s287, 60
        %s289 = smul.addr %s285, 60
        %s290 = sadd.s32 %s288, %s289
        %s291 = smul.addr %s290, 4
        %s292 = scalar_lea.vmem %s0, %s291
        %s293 = smul.u32 16, %s26
        %v295 = vld [vmem:[%s292] sm:$0xf]
        %v296 = vld [vmem:[%s292 + $0x4] sm:$0xf]
        %v297 = vld [vmem:[%s292 + $0x8] sm:$0x1]
        %v298 = vld [vmem:[%s292 + $0xc] sm:$0xf]
        %v299 = vld [vmem:[%s292 + $0x10] sm:$0xf]
        %v300 = vld [vmem:[%s292 + $0x14] sm:$0x1]
        %v301 = vld [vmem:[%s292 + $0x18] sm:$0xf]
        %v302 = vld [vmem:[%s292 + $0x1c] sm:$0xf]
        %v303 = vld [vmem:[%s292 + $0x20] sm:$0x1]
        %v304 = vld [vmem:[%s292 + $0x24] sm:$0xf]
        %v305 = vld [vmem:[%s292 + $0x28] sm:$0xf]
        %v306 = vld [vmem:[%s292 + $0x2c] sm:$0x1]
        %v307 = vld [vmem:[%s292 + $0x30] sm:$0xf]
        %v308 = vld [vmem:[%s292 + $0x34] sm:$0xf]
        %v309 = vld [vmem:[%s292 + $0x38] sm:$0x1]
        %v310 = vld [vmem:[%s292 + $0x3c] sm:$0xf]
        %v311 = vld [vmem:[%s292 + $0x40] sm:$0xf]
        %v312 = vld [vmem:[%s292 + $0x44] sm:$0x1]
        %v313 = vld [vmem:[%s292 + $0x48] sm:$0xf]
        %v314 = vld [vmem:[%s292 + $0x4c] sm:$0xf]
        %v315 = vld [vmem:[%s292 + $0x50] sm:$0x1]
        %v316 = vld [vmem:[%s292 + $0x54] sm:$0xf]
        %v317 = vld [vmem:[%s292 + $0x58] sm:$0xf]
        %v318 = vld [vmem:[%s292 + $0x5c] sm:$0x1]
        %v319 = vld [vmem:[%s292 + $0x60] sm:$0xf]
        %v320 = vld [vmem:[%s292 + $0x64] sm:$0xf]
        %v321 = vld [vmem:[%s292 + $0x68] sm:$0x1]
        %v322 = vld [vmem:[%s292 + $0x6c] sm:$0xf]
        %v323 = vld [vmem:[%s292 + $0x70] sm:$0xf]
        %v324 = vld [vmem:[%s292 + $0x74] sm:$0x1]
        %v325 = vld [vmem:[%s292 + $0x78] sm:$0xf]
        %v326 = vld [vmem:[%s292 + $0x7c] sm:$0xf]
        %v327 = vld [vmem:[%s292 + $0x80] sm:$0x1]
        %v328 = vld [vmem:[%s292 + $0x84] sm:$0xf]
        %v329 = vld [vmem:[%s292 + $0x88] sm:$0xf]
        %v330 = vld [vmem:[%s292 + $0x8c] sm:$0x1]
        %v331 = vld [vmem:[%s292 + $0x90] sm:$0xf]
        %v332 = vld [vmem:[%s292 + $0x94] sm:$0xf]
        %v333 = vld [vmem:[%s292 + $0x98] sm:$0x1]
        %v334 = vld [vmem:[%s292 + $0x9c] sm:$0xf]
        %v335 = vld [vmem:[%s292 + $0xa0] sm:$0xf]
        %v336 = vld [vmem:[%s292 + $0xa4] sm:$0x1]
        %v337 = vld [vmem:[%s292 + $0xa8] sm:$0xf]
        %v338 = vld [vmem:[%s292 + $0xac] sm:$0xf]
        %v339 = vld [vmem:[%s292 + $0xb0] sm:$0x1]
        %v340 = vld [vmem:[%s292 + $0xb4] sm:$0xf]
        %v341 = vld [vmem:[%s292 + $0xb8] sm:$0xf]
        %v342 = vld [vmem:[%s292 + $0xbc] sm:$0x1]
        %v343 = vld [vmem:[%s292 + $0xc0] sm:$0xf]
        %v344 = vld [vmem:[%s292 + $0xc4] sm:$0xf]
        %v345 = vld [vmem:[%s292 + $0xc8] sm:$0x1]
        %v346 = vld [vmem:[%s292 + $0xcc] sm:$0xf]
        %v347 = vld [vmem:[%s292 + $0xd0] sm:$0xf]
        %v348 = vld [vmem:[%s292 + $0xd4] sm:$0x1]
        %v349 = vld [vmem:[%s292 + $0xd8] sm:$0xf]
        %v350 = vld [vmem:[%s292 + $0xdc] sm:$0xf]
        %v351 = vld [vmem:[%s292 + $0xe0] sm:$0x1]
        %v352 = vld [vmem:[%s292 + $0xe4] sm:$0xf]
        %v353 = vld [vmem:[%s292 + $0xe8] sm:$0xf]
        %v354 = vld [vmem:[%s292 + $0xec] sm:$0x1]
        %v391 = vunpack.c.l.b16 %v295
        %v392 = vunpack.c.l.b16 %v296
        %v393 = vunpack.c.l.b16 %v298
        %v394 = vunpack.c.l.b16 %v299
        %v395 = vunpack.c.l.b16 %v301
        %v396 = vunpack.c.l.b16 %v302
        %v397 = vunpack.c.l.b16 %v304
        %v398 = vunpack.c.l.b16 %v305
        %v399 = vunpack.c.l.b16 %v307
        %v400 = vunpack.c.l.b16 %v308
        %v401 = vunpack.c.l.b16 %v310
        %v402 = vunpack.c.l.b16 %v311
        %v403 = vunpack.c.l.b16 %v313
        %v404 = vunpack.c.l.b16 %v314
        %v405 = vunpack.c.l.b16 %v316
        %v406 = vunpack.c.l.b16 %v317
        %v407 = vunpack.c.l.b16 %v319
        %v408 = vunpack.c.l.b16 %v320
        %v409 = vunpack.c.l.b16 %v322
        %v410 = vunpack.c.l.b16 %v323
        %v411 = vunpack.c.l.b16 %v325
        %v412 = vunpack.c.l.b16 %v326
        %v413 = vunpack.c.l.b16 %v328
        %v414 = vunpack.c.l.b16 %v329
        %v415 = vunpack.c.l.b16 %v331
        %v416 = vunpack.c.l.b16 %v332
        %v417 = vunpack.c.l.b16 %v334
        %v418 = vunpack.c.l.b16 %v335
        %v419 = vunpack.c.l.b16 %v337
        %v420 = vunpack.c.l.b16 %v338
        %v421 = vunpack.c.l.b16 %v340
        %v422 = vunpack.c.l.b16 %v341
        %v423 = vunpack.c.l.b16 %v343
        %v424 = vunpack.c.l.b16 %v344
        %v425 = vunpack.c.l.b16 %v346
        %v426 = vunpack.c.l.b16 %v347
        %v427 = vpack.c.b16 %v392, %v391
        %v428 = vpack.c.b16 %v394, %v393
        %v429 = vpack.c.b16 %v396, %v395
        %v430 = vpack.c.b16 %v398, %v397
        %v431 = vpack.c.b16 %v400, %v399
        %v432 = vpack.c.b16 %v402, %v401
        %v433 = vpack.c.b16 %v404, %v403
        %v434 = vpack.c.b16 %v406, %v405
        %v435 = vpack.c.b16 %v408, %v407
        %v436 = vpack.c.b16 %v410, %v409
        %v437 = vpack.c.b16 %v412, %v411
        %v438 = vpack.c.b16 %v414, %v413
        %v439 = vpack.c.b16 %v416, %v415
        %v440 = vpack.c.b16 %v418, %v417
        %v441 = vpack.c.b16 %v420, %v419
        %v442 = vpack.c.b16 %v422, %v421
        %v443 = vpack.c.b16 %v424, %v423
        %v444 = vpack.c.b16 %v426, %v425
        %v481 = vunpack.c.l.b16 %v297
        %v482 = vunpack.c.l.b16 %v300
        %v483 = vunpack.c.l.b16 %v303
        %v484 = vunpack.c.l.b16 %v306
        %v485 = vunpack.c.l.b16 %v309
        %v486 = vunpack.c.l.b16 %v312
        %v487 = vunpack.c.l.b16 %v315
        %v488 = vunpack.c.l.b16 %v318
        %v489 = vunpack.c.l.b16 %v321
        %v490 = vunpack.c.l.b16 %v324
        %v491 = vunpack.c.l.b16 %v327
        %v492 = vunpack.c.l.b16 %v330
        %v493 = vunpack.c.l.b16 %v333
        %v494 = vunpack.c.l.b16 %v336
        %v495 = vunpack.c.l.b16 %v339
        %v496 = vunpack.c.l.b16 %v342
        %v497 = vunpack.c.l.b16 %v345
        %v498 = vunpack.c.l.b16 %v348
        %v499 = vpack.c.b16 %v481, %v481
        %v500 = vpack.c.b16 %v482, %v482
        %v501 = vpack.c.b16 %v483, %v483
        %v502 = vpack.c.b16 %v484, %v484
        %v503 = vpack.c.b16 %v485, %v485
        %v504 = vpack.c.b16 %v486, %v486
        %v505 = vpack.c.b16 %v487, %v487
        %v506 = vpack.c.b16 %v488, %v488
        %v507 = vpack.c.b16 %v489, %v489
        %v508 = vpack.c.b16 %v490, %v490
        %v509 = vpack.c.b16 %v491, %v491
        %v510 = vpack.c.b16 %v492, %v492
        %v511 = vpack.c.b16 %v493, %v493
        %v512 = vpack.c.b16 %v494, %v494
        %v513 = vpack.c.b16 %v495, %v495
        %v514 = vpack.c.b16 %v496, %v496
        %v515 = vpack.c.b16 %v497, %v497
        %v516 = vpack.c.b16 %v498, %v498
        %vm517 = vsmask.f32 7424
        %v519 = vshrl.u32 %v427, 16
        %v521 = vshll.u32 %v427, 16
        %v523 = vrot.slane %v521, 1
        %v524 = vor.u32 %v519, %v523
        %v526 = vshll.u32 %v499, 16
        %v528 = vrot.slane %v526, 1
        %v529 = vsel %vm517, %v524, %v528
        %v531 = vshrl.u32 %v428, 16
        %v533 = vshll.u32 %v428, 16
        %v535 = vrot.slane %v533, 1
        %v536 = vor.u32 %v531, %v535
        %v538 = vshll.u32 %v500, 16
        %v540 = vrot.slane %v538, 1
        %v541 = vsel %vm517, %v536, %v540
        %v543 = vshrl.u32 %v429, 16
        %v545 = vshll.u32 %v429, 16
        %v547 = vrot.slane %v545, 1
        %v548 = vor.u32 %v543, %v547
        %v550 = vshll.u32 %v501, 16
        %v552 = vrot.slane %v550, 1
        %v553 = vsel %vm517, %v548, %v552
        %v555 = vshrl.u32 %v430, 16
        %v557 = vshll.u32 %v430, 16
        %v559 = vrot.slane %v557, 1
        %v560 = vor.u32 %v555, %v559
        %v562 = vshll.u32 %v502, 16
        %v564 = vrot.slane %v562, 1
        %v565 = vsel %vm517, %v560, %v564
        %v567 = vshrl.u32 %v431, 16
        %v569 = vshll.u32 %v431, 16
        %v571 = vrot.slane %v569, 1
        %v572 = vor.u32 %v567, %v571
        %v574 = vshll.u32 %v503, 16
        %v576 = vrot.slane %v574, 1
        %v577 = vsel %vm517, %v572, %v576
        %v579 = vshrl.u32 %v432, 16
        %v581 = vshll.u32 %v432, 16
        %v583 = vrot.slane %v581, 1
        %v584 = vor.u32 %v579, %v583
        %v586 = vshll.u32 %v504, 16
        %v588 = vrot.slane %v586, 1
        %v589 = vsel %vm517, %v584, %v588
        %v591 = vshrl.u32 %v433, 16
        %v593 = vshll.u32 %v433, 16
        %v595 = vrot.slane %v593, 1
        %v596 = vor.u32 %v591, %v595
        %v598 = vshll.u32 %v505, 16
        %v600 = vrot.slane %v598, 1
        %v601 = vsel %vm517, %v596, %v600
        %v603 = vshrl.u32 %v434, 16
        %v605 = vshll.u32 %v434, 16
        %v607 = vrot.slane %v605, 1
        %v608 = vor.u32 %v603, %v607
        %v610 = vshll.u32 %v506, 16
        %v612 = vrot.slane %v610, 1
        %v613 = vsel %vm517, %v608, %v612
        %v615 = vshrl.u32 %v435, 16
        %v617 = vshll.u32 %v435, 16
        %v619 = vrot.slane %v617, 1
        %v620 = vor.u32 %v615, %v619
        %v622 = vshll.u32 %v507, 16
        %v624 = vrot.slane %v622, 1
        %v625 = vsel %vm517, %v620, %v624
        %v627 = vshrl.u32 %v436, 16
        %v629 = vshll.u32 %v436, 16
        %v631 = vrot.slane %v629, 1
        %v632 = vor.u32 %v627, %v631
        %v634 = vshll.u32 %v508, 16
        %v636 = vrot.slane %v634, 1
        %v637 = vsel %vm517, %v632, %v636
        %v639 = vshrl.u32 %v437, 16
        %v641 = vshll.u32 %v437, 16
        %v643 = vrot.slane %v641, 1
        %v644 = vor.u32 %v639, %v643
        %v646 = vshll.u32 %v509, 16
        %v648 = vrot.slane %v646, 1
        %v649 = vsel %vm517, %v644, %v648
        %v651 = vshrl.u32 %v438, 16
        %v653 = vshll.u32 %v438, 16
        %v655 = vrot.slane %v653, 1
        %v656 = vor.u32 %v651, %v655
        %v658 = vshll.u32 %v510, 16
        %v660 = vrot.slane %v658, 1
        %v661 = vsel %vm517, %v656, %v660
        %v663 = vshrl.u32 %v439, 16
        %v665 = vshll.u32 %v439, 16
        %v667 = vrot.slane %v665, 1
        %v668 = vor.u32 %v663, %v667
        %v670 = vshll.u32 %v511, 16
        %v672 = vrot.slane %v670, 1
        %v673 = vsel %vm517, %v668, %v672
        %v675 = vshrl.u32 %v440, 16
        %v677 = vshll.u32 %v440, 16
        %v679 = vrot.slane %v677, 1
        %v680 = vor.u32 %v675, %v679
        %v682 = vshll.u32 %v512, 16
        %v684 = vrot.slane %v682, 1
        %v685 = vsel %vm517, %v680, %v684
        %v687 = vshrl.u32 %v441, 16
        %v689 = vshll.u32 %v441, 16
        %v691 = vrot.slane %v689, 1
        %v692 = vor.u32 %v687, %v691
        %v694 = vshll.u32 %v513, 16
        %v696 = vrot.slane %v694, 1
        %v697 = vsel %vm517, %v692, %v696
        %v699 = vshrl.u32 %v442, 16
        %v701 = vshll.u32 %v442, 16
        %v703 = vrot.slane %v701, 1
        %v704 = vor.u32 %v699, %v703
        %v706 = vshll.u32 %v514, 16
        %v708 = vrot.slane %v706, 1
        %v709 = vsel %vm517, %v704, %v708
        %v711 = vshrl.u32 %v443, 16
        %v713 = vshll.u32 %v443, 16
        %v715 = vrot.slane %v713, 1
        %v716 = vor.u32 %v711, %v715
        %v718 = vshll.u32 %v515, 16
        %v720 = vrot.slane %v718, 1
        %v721 = vsel %vm517, %v716, %v720
        %v723 = vshrl.u32 %v444, 16
        %v725 = vshll.u32 %v444, 16
        %v727 = vrot.slane %v725, 1
        %v728 = vor.u32 %v723, %v727
        %v730 = vshll.u32 %v516, 16
        %v732 = vrot.slane %v730, 1
        %v733 = vsel %vm517, %v728, %v732
        %vm752 = vcmask 1046528
        %v753 = vrot.slane %v427, 1
        %v754 = vrot.slane %v499, 1
        %v755 = vsel %vm752, %v753, %v754
        %v756 = vrot.slane %v428, 1
        %v757 = vrot.slane %v500, 1
        %v758 = vsel %vm752, %v756, %v757
        %v759 = vrot.slane %v429, 1
        %v760 = vrot.slane %v501, 1
        %v761 = vsel %vm752, %v759, %v760
        %v762 = vrot.slane %v430, 1
        %v763 = vrot.slane %v502, 1
        %v764 = vsel %vm752, %v762, %v763
        %v765 = vrot.slane %v431, 1
        %v766 = vrot.slane %v503, 1
        %v767 = vsel %vm752, %v765, %v766
        %v768 = vrot.slane %v432, 1
        %v769 = vrot.slane %v504, 1
        %v770 = vsel %vm752, %v768, %v769
        %v771 = vrot.slane %v433, 1
        %v772 = vrot.slane %v505, 1
        %v773 = vsel %vm752, %v771, %v772
        %v774 = vrot.slane %v434, 1
        %v775 = vrot.slane %v506, 1
        %v776 = vsel %vm752, %v774, %v775
        %v777 = vrot.slane %v435, 1
        %v778 = vrot.slane %v507, 1
        %v779 = vsel %vm752, %v777, %v778
        %v780 = vrot.slane %v436, 1
        %v781 = vrot.slane %v508, 1
        %v782 = vsel %vm752, %v780, %v781
        %v783 = vrot.slane %v437, 1
        %v784 = vrot.slane %v509, 1
        %v785 = vsel %vm752, %v783, %v784
        %v786 = vrot.slane %v438, 1
        %v787 = vrot.slane %v510, 1
        %v788 = vsel %vm752, %v786, %v787
        %v789 = vrot.slane %v439, 1
        %v790 = vrot.slane %v511, 1
        %v791 = vsel %vm752, %v789, %v790
        %v792 = vrot.slane %v440, 1
        %v793 = vrot.slane %v512, 1
        %v794 = vsel %vm752, %v792, %v793
        %v795 = vrot.slane %v441, 1
        %v796 = vrot.slane %v513, 1
        %v797 = vsel %vm752, %v795, %v796
        %v798 = vrot.slane %v442, 1
        %v799 = vrot.slane %v514, 1
        %v800 = vsel %vm752, %v798, %v799
        %v801 = vrot.slane %v443, 1
        %v802 = vrot.slane %v515, 1
        %v803 = vsel %vm752, %v801, %v802
        %v804 = vrot.slane %v444, 1
        %v805 = vrot.slane %v516, 1
        %v806 = vsel %vm752, %v804, %v805
        %v827 = vunpack.c.l.b16 %v349
        %v828 = vunpack.c.l.b16 %v350
        %v829 = vpack.c.b16 %v828, %v827
        %v832 = vunpack.c.l.b16 %v351
        %v833 = vpack.c.b16 %v832, %v832
        %v835 = vshrl.u32 %v829, 16
        %v837 = vshll.u32 %v829, 16
        %v839 = vrot.slane %v837, 1
        %v840 = vor.u32 %v835, %v839
        %v842 = vshll.u32 %v833, 16
        %v844 = vrot.slane %v842, 1
        %v845 = vsel %vm517, %v840, %v844
        %v847 = vrot.slane %v829, 1
        %v848 = vrot.slane %v833, 1
        %v849 = vsel %vm752, %v847, %v848
        %v853 = vunpack.c.l.b16 %v352
        %v854 = vunpack.c.l.b16 %v353
        %v855 = vpack.c.b16 %v854, %v853
        %v858 = vunpack.c.l.b16 %v354
        %v859 = vpack.c.b16 %v858, %v858
        %v861 = vshrl.u32 %v855, 16
        %v863 = vshll.u32 %v855, 16
        %v865 = vrot.slane %v863, 1
        %v866 = vor.u32 %v861, %v865
        %v868 = vshll.u32 %v859, 16
        %v870 = vrot.slane %v868, 1
        %v871 = vsel %vm517, %v866, %v870
        %v873 = vrot.slane %v855, 1
        %v874 = vrot.slane %v859, 1
        %v875 = vsel %vm752, %v873, %v874
        %v877 = vld [vmem:[%s2] sm:$0xf]
        %v878 = vld [vmem:[%s2 + $0x4] sm:$0xf]
        %v879 = vld [vmem:[%s2 + $0x8] sm:$0xf]
        %v880 = vld [vmem:[%s2 + $0xc] sm:$0xf]
        %v881 = vld [vmem:[%s2 + $0x10] sm:$0xf]
        %v882 = vld [vmem:[%s2 + $0x14] sm:$0xf]
        %v883 = vld [vmem:[%s2 + $0x18] sm:$0xf]
        %v884 = vld [vmem:[%s2 + $0x1c] sm:$0xf]
        %v885 = vld [vmem:[%s2 + $0x20] sm:$0xf]
        %v886 = vld [vmem:[%s2 + $0x24] sm:$0xf]
        %v887 = vld [vmem:[%s2 + $0x28] sm:$0xf]
        %v888 = vld [vmem:[%s2 + $0x2c] sm:$0xf]
        %v889 = vld [vmem:[%s2 + $0x30] sm:$0xf]
        %v890 = vld [vmem:[%s2 + $0x34] sm:$0xf]
        %v891 = vld [vmem:[%s2 + $0x38] sm:$0xf]
        %v892 = vld [vmem:[%s2 + $0x3c] sm:$0xf]
        %v893 = vld [vmem:[%s2 + $0x40] sm:$0xf]
        %v894 = vld [vmem:[%s2 + $0x44] sm:$0xf]
        %v895 = vld [vmem:[%s2 + $0x48] sm:$0xf]
        %v896 = vld [vmem:[%s2 + $0x4c] sm:$0xf]
        %v897 = vld [vmem:[%s2 + $0x50] sm:$0xf]
        %v898 = vld [vmem:[%s2 + $0x54] sm:$0xf]
        %v899 = vld [vmem:[%s2 + $0x58] sm:$0xf]
        %v900 = vld [vmem:[%s2 + $0x5c] sm:$0xf]
        %v901 = vld [vmem:[%s2 + $0x60] sm:$0xf]
        %v902 = vld [vmem:[%s2 + $0x64] sm:$0xf]
        %v903 = vld [vmem:[%s2 + $0x68] sm:$0xf]
        %v904 = vld [vmem:[%s2 + $0x6c] sm:$0xf]
        %v905 = vld [vmem:[%s2 + $0x70] sm:$0xf]
        %v906 = vld [vmem:[%s2 + $0x74] sm:$0xf]
        %v907 = vld [vmem:[%s2 + $0x78] sm:$0xf]
        %v908 = vld [vmem:[%s2 + $0x7c] sm:$0xf]
        %v909 = vld [vmem:[%s2 + $0x80] sm:$0xf]
        %v910 = vld [vmem:[%s2 + $0x84] sm:$0xf]
        %v911 = vld [vmem:[%s2 + $0x88] sm:$0xf]
        %v912 = vld [vmem:[%s2 + $0x8c] sm:$0xf]
        %v913 = vld [vmem:[%s2 + $0x90] sm:$0xf]
        %v914 = vld [vmem:[%s2 + $0x94] sm:$0xf]
        %v915 = vld [vmem:[%s2 + $0x98] sm:$0xf]
        %v916 = vld [vmem:[%s2 + $0x9c] sm:$0xf]
        %v917 = vld [vmem:[%s2 + $0xa0] sm:$0xf]
        %v918 = vld [vmem:[%s2 + $0xa4] sm:$0xf]
        %v919 = vld [vmem:[%s2 + $0xa8] sm:$0xf]
        %v920 = vld [vmem:[%s2 + $0xac] sm:$0xf]
        %v921 = vld [vmem:[%s2 + $0xb0] sm:$0xf]
        %v922 = vld [vmem:[%s2 + $0xb4] sm:$0xf]
        %v923 = vld [vmem:[%s2 + $0xb8] sm:$0xf]
        %v924 = vld [vmem:[%s2 + $0xbc] sm:$0xf]
        %v925 = vld [vmem:[%s2 + $0xc0] sm:$0xf]
        %v926 = vld [vmem:[%s2 + $0xc4] sm:$0xf]
        %v927 = vld [vmem:[%s2 + $0xc8] sm:$0xf]
        %v928 = vld [vmem:[%s2 + $0xcc] sm:$0xf]
        %v929 = vld [vmem:[%s2 + $0xd0] sm:$0xf]
        %v930 = vld [vmem:[%s2 + $0xd4] sm:$0xf]
        %v931 = vld [vmem:[%s2 + $0xd8] sm:$0xf]
        %v932 = vld [vmem:[%s2 + $0xdc] sm:$0xf]
        %v933 = vld [vmem:[%s2 + $0xe0] sm:$0xf]
        %v934 = vld [vmem:[%s2 + $0xe4] sm:$0xf]
        %v935 = vld [vmem:[%s2 + $0xe8] sm:$0xf]
        %v936 = vld [vmem:[%s2 + $0xec] sm:$0xf]
        %v937 = vld [vmem:[%s2 + $0xf0] sm:$0xf]
        %v938 = vld [vmem:[%s2 + $0xf4] sm:$0xf]
        %v939 = vld [vmem:[%s2 + $0xf8] sm:$0xf]
        %v940 = vld [vmem:[%s2 + $0xfc] sm:$0xf]
        %v941 = vld [vmem:[%s2 + $0x100] sm:$0xf]
        %v942 = vld [vmem:[%s2 + $0x104] sm:$0xf]
        %v943 = vld [vmem:[%s2 + $0x108] sm:$0xf]
        %v944 = vld [vmem:[%s2 + $0x10c] sm:$0xf]
        %v945 = vld [vmem:[%s2 + $0x110] sm:$0xf]
        %v946 = vld [vmem:[%s2 + $0x114] sm:$0xf]
        %v947 = vld [vmem:[%s2 + $0x118] sm:$0xf]
        %v948 = vld [vmem:[%s2 + $0x11c] sm:$0xf]
        %v949 = vld [vmem:[%s2 + $0x120] sm:$0xf]
        %v950 = vld [vmem:[%s2 + $0x124] sm:$0xf]
        %v951 = vld [vmem:[%s2 + $0x128] sm:$0xf]
        %v952 = vld [vmem:[%s2 + $0x12c] sm:$0xf]
        %v953 = vld [vmem:[%s2 + $0x130] sm:$0xf]
        %v954 = vld [vmem:[%s2 + $0x134] sm:$0xf]
        %v955 = vld [vmem:[%s2 + $0x138] sm:$0xf]
        %v956 = vld [vmem:[%s2 + $0x13c] sm:$0xf]
        %v957 = vld [vmem:[%s2 + $0x140] sm:$0xf]
        %v958 = vld [vmem:[%s2 + $0x144] sm:$0xf]
        %v959 = vld [vmem:[%s2 + $0x148] sm:$0xf]
        %v960 = vld [vmem:[%s2 + $0x14c] sm:$0xf]
        %v961 = vld [vmem:[%s2 + $0x150] sm:$0xf]
        %v962 = vld [vmem:[%s2 + $0x154] sm:$0xf]
        %v963 = vld [vmem:[%s2 + $0x158] sm:$0xf]
        %v964 = vld [vmem:[%s2 + $0x15c] sm:$0xf]
        %v965 = vld [vmem:[%s2 + $0x160] sm:$0xf]
        %v966 = vld [vmem:[%s2 + $0x164] sm:$0xf]
        %v967 = vld [vmem:[%s2 + $0x168] sm:$0xf]
        %v968 = vld [vmem:[%s2 + $0x16c] sm:$0xf]
        %v969 = vld [vmem:[%s2 + $0x170] sm:$0xf]
        %v970 = vld [vmem:[%s2 + $0x174] sm:$0xf]
        %v971 = vld [vmem:[%s2 + $0x178] sm:$0xf]
        %v972 = vld [vmem:[%s2 + $0x17c] sm:$0xf]
        %v973 = vld [vmem:[%s2 + $0x180] sm:$0xf]
        %v974 = vld [vmem:[%s2 + $0x184] sm:$0xf]
        %v975 = vld [vmem:[%s2 + $0x188] sm:$0xf]
        %v976 = vld [vmem:[%s2 + $0x18c] sm:$0xf]
        %v977 = vld [vmem:[%s2 + $0x190] sm:$0xf]
        %v978 = vld [vmem:[%s2 + $0x194] sm:$0xf]
        %v979 = vld [vmem:[%s2 + $0x198] sm:$0xf]
        %v980 = vld [vmem:[%s2 + $0x19c] sm:$0xf]
        %v981 = vld [vmem:[%s2 + $0x1a0] sm:$0xf]
        %v982 = vld [vmem:[%s2 + $0x1a4] sm:$0xf]
        %v983 = vld [vmem:[%s2 + $0x1a8] sm:$0xf]
        %v984 = vld [vmem:[%s2 + $0x1ac] sm:$0xf]
        %v985 = vld [vmem:[%s2 + $0x1b0] sm:$0xf]
        %v986 = vld [vmem:[%s2 + $0x1b4] sm:$0xf]
        %v987 = vld [vmem:[%s2 + $0x1b8] sm:$0xf]
        %v988 = vld [vmem:[%s2 + $0x1bc] sm:$0xf]
        %v989 = vld [vmem:[%s2 + $0x1c0] sm:$0xf]
        %v990 = vld [vmem:[%s2 + $0x1c4] sm:$0xf]
        %v991 = vld [vmem:[%s2 + $0x1c8] sm:$0xf]
        %v992 = vld [vmem:[%s2 + $0x1cc] sm:$0xf]
        %v993 = vld [vmem:[%s2 + $0x1d0] sm:$0xf]
        %v994 = vld [vmem:[%s2 + $0x1d4] sm:$0xf]
        %v995 = vld [vmem:[%s2 + $0x1d8] sm:$0xf]
        %v996 = vld [vmem:[%s2 + $0x1dc] sm:$0xf]
        %v997 = vld [vmem:[%s2 + $0x1e0] sm:$0xf]
        %v998 = vld [vmem:[%s2 + $0x1e4] sm:$0xf]
        %v999 = vld [vmem:[%s2 + $0x1e8] sm:$0xf]
        %v1000 = vld [vmem:[%s2 + $0x1ec] sm:$0xf]
        %v1001 = vld [vmem:[%s2 + $0x1f0] sm:$0xf]
        %v1002 = vld [vmem:[%s2 + $0x1f4] sm:$0xf]
        %v1003 = vld [vmem:[%s2 + $0x1f8] sm:$0xf]
        %v1004 = vld [vmem:[%s2 + $0x1fc] sm:$0xf]
        %v1005 = vld [vmem:[%s2 + $0x200] sm:$0xf]
        %v1006 = vld [vmem:[%s2 + $0x204] sm:$0xf]
        %v1007 = vld [vmem:[%s2 + $0x208] sm:$0xf]
        %v1008 = vld [vmem:[%s2 + $0x20c] sm:$0xf]
        %v1009 = vld [vmem:[%s2 + $0x210] sm:$0xf]
        %v1010 = vld [vmem:[%s2 + $0x214] sm:$0xf]
        %v1011 = vld [vmem:[%s2 + $0x218] sm:$0xf]
        %v1012 = vld [vmem:[%s2 + $0x21c] sm:$0xf]
        %v1013 = vld [vmem:[%s2 + $0x220] sm:$0xf]
        %v1014 = vld [vmem:[%s2 + $0x224] sm:$0xf]
        %v1015 = vld [vmem:[%s2 + $0x228] sm:$0xf]
        %v1016 = vld [vmem:[%s2 + $0x22c] sm:$0xf]
        %v1017 = vld [vmem:[%s2 + $0x230] sm:$0xf]
        %v1018 = vld [vmem:[%s2 + $0x234] sm:$0xf]
        %v1019 = vld [vmem:[%s2 + $0x238] sm:$0xf]
        %v1020 = vld [vmem:[%s2 + $0x23c] sm:$0xf]
        %v1021 = vld [vmem:[%s4] sm:$0x1]
        %v1023 = vlaneseq
        %v1024 = vshrl.u32 %v1023, 7
        %v1025 = vsub.s32 0, %v1024
        %v1026 = vrot.slane %v1021, %v1025
        %v1172 = vunpack.c.l.b16 %v877
        %v1173 = vunpack.c.l.b16 %v878
        %v1174 = vunpack.c.l.b16 %v879
        %v1175 = vunpack.c.l.b16 %v880
        %v1176 = vunpack.c.l.b16 %v881
        %v1177 = vunpack.c.l.b16 %v882
        %v1178 = vunpack.c.l.b16 %v883
        %v1179 = vunpack.c.l.b16 %v884
        %v1180 = vunpack.c.l.b16 %v885
        %v1181 = vunpack.c.l.b16 %v886
        %v1182 = vunpack.c.l.b16 %v887
        %v1183 = vunpack.c.l.b16 %v888
        %v1184 = vunpack.c.l.b16 %v889
        %v1185 = vunpack.c.l.b16 %v890
        %v1186 = vunpack.c.l.b16 %v891
        %v1187 = vunpack.c.l.b16 %v892
        %v1188 = vunpack.c.l.b16 %v893
        %v1189 = vunpack.c.l.b16 %v894
        %v1190 = vunpack.c.l.b16 %v895
        %v1191 = vunpack.c.l.b16 %v896
        %v1192 = vunpack.c.l.b16 %v897
        %v1193 = vunpack.c.l.b16 %v898
        %v1194 = vunpack.c.l.b16 %v899
        %v1195 = vunpack.c.l.b16 %v900
        %v1196 = vunpack.c.l.b16 %v901
        %v1197 = vunpack.c.l.b16 %v902
        %v1198 = vunpack.c.l.b16 %v903
        %v1199 = vunpack.c.l.b16 %v904
        %v1200 = vunpack.c.l.b16 %v905
        %v1201 = vunpack.c.l.b16 %v906
        %v1202 = vunpack.c.l.b16 %v907
        %v1203 = vunpack.c.l.b16 %v908
        %v1204 = vunpack.c.l.b16 %v909
        %v1205 = vunpack.c.l.b16 %v910
        %v1206 = vunpack.c.l.b16 %v911
        %v1207 = vunpack.c.l.b16 %v912
        %v1208 = vunpack.c.l.b16 %v913
        %v1209 = vunpack.c.l.b16 %v914
        %v1210 = vunpack.c.l.b16 %v915
        %v1211 = vunpack.c.l.b16 %v916
        %v1212 = vunpack.c.l.b16 %v917
        %v1213 = vunpack.c.l.b16 %v918
        %v1214 = vunpack.c.l.b16 %v919
        %v1215 = vunpack.c.l.b16 %v920
        %v1216 = vunpack.c.l.b16 %v921
        %v1217 = vunpack.c.l.b16 %v922
        %v1218 = vunpack.c.l.b16 %v923
        %v1219 = vunpack.c.l.b16 %v924
        %v1220 = vunpack.c.l.b16 %v925
        %v1221 = vunpack.c.l.b16 %v926
        %v1222 = vunpack.c.l.b16 %v927
        %v1223 = vunpack.c.l.b16 %v928
        %v1224 = vunpack.c.l.b16 %v929
        %v1225 = vunpack.c.l.b16 %v930
        %v1226 = vunpack.c.l.b16 %v931
        %v1227 = vunpack.c.l.b16 %v932
        %v1228 = vunpack.c.l.b16 %v933
        %v1229 = vunpack.c.l.b16 %v934
        %v1230 = vunpack.c.l.b16 %v935
        %v1231 = vunpack.c.l.b16 %v936
        %v1232 = vunpack.c.l.b16 %v937
        %v1233 = vunpack.c.l.b16 %v938
        %v1234 = vunpack.c.l.b16 %v939
        %v1235 = vunpack.c.l.b16 %v940
        %v1236 = vunpack.c.l.b16 %v941
        %v1237 = vunpack.c.l.b16 %v942
        %v1238 = vunpack.c.l.b16 %v943
        %v1239 = vunpack.c.l.b16 %v944
        %v1240 = vunpack.c.l.b16 %v945
        %v1241 = vunpack.c.l.b16 %v946
        %v1242 = vunpack.c.l.b16 %v947
        %v1243 = vunpack.c.l.b16 %v948
        %v1244 = vunpack.c.l.b16 %v949
        %v1245 = vunpack.c.l.b16 %v950
        %v1246 = vunpack.c.l.b16 %v951
        %v1247 = vunpack.c.l.b16 %v952
        %v1248 = vunpack.c.l.b16 %v953
        %v1249 = vunpack.c.l.b16 %v954
        %v1250 = vunpack.c.l.b16 %v955
        %v1251 = vunpack.c.l.b16 %v956
        %v1252 = vunpack.c.l.b16 %v957
        %v1253 = vunpack.c.l.b16 %v958
        %v1254 = vunpack.c.l.b16 %v959
        %v1255 = vunpack.c.l.b16 %v960
        %v1256 = vunpack.c.l.b16 %v961
        %v1257 = vunpack.c.l.b16 %v962
        %v1258 = vunpack.c.l.b16 %v963
        %v1259 = vunpack.c.l.b16 %v964
        %v1260 = vunpack.c.l.b16 %v965
        %v1261 = vunpack.c.l.b16 %v966
        %v1262 = vunpack.c.l.b16 %v967
        %v1263 = vunpack.c.l.b16 %v968
        %v1264 = vunpack.c.l.b16 %v969
        %v1265 = vunpack.c.l.b16 %v970
        %v1266 = vunpack.c.l.b16 %v971
        %v1267 = vunpack.c.l.b16 %v972
        %v1268 = vunpack.c.l.b16 %v973
        %v1269 = vunpack.c.l.b16 %v974
        %v1270 = vunpack.c.l.b16 %v975
        %v1271 = vunpack.c.l.b16 %v976
        %v1272 = vunpack.c.l.b16 %v977
        %v1273 = vunpack.c.l.b16 %v978
        %v1274 = vunpack.c.l.b16 %v979
        %v1275 = vunpack.c.l.b16 %v980
        %v1276 = vunpack.c.l.b16 %v981
        %v1277 = vunpack.c.l.b16 %v982
        %v1278 = vunpack.c.l.b16 %v983
        %v1279 = vunpack.c.l.b16 %v984
        %v1280 = vunpack.c.l.b16 %v985
        %v1281 = vunpack.c.l.b16 %v986
        %v1282 = vunpack.c.l.b16 %v987
        %v1283 = vunpack.c.l.b16 %v988
        %v1284 = vunpack.c.l.b16 %v989
        %v1285 = vunpack.c.l.b16 %v990
        %v1286 = vunpack.c.l.b16 %v991
        %v1287 = vunpack.c.l.b16 %v992
        %v1288 = vunpack.c.l.b16 %v993
        %v1289 = vunpack.c.l.b16 %v994
        %v1290 = vunpack.c.l.b16 %v995
        %v1291 = vunpack.c.l.b16 %v996
        %v1292 = vunpack.c.l.b16 %v997
        %v1293 = vunpack.c.l.b16 %v998
        %v1294 = vunpack.c.l.b16 %v999
        %v1295 = vunpack.c.l.b16 %v1000
        %v1296 = vunpack.c.l.b16 %v1001
        %v1297 = vunpack.c.l.b16 %v1002
        %v1298 = vunpack.c.l.b16 %v1003
        %v1299 = vunpack.c.l.b16 %v1004
        %v1300 = vunpack.c.l.b16 %v1005
        %v1301 = vunpack.c.l.b16 %v1006
        %v1302 = vunpack.c.l.b16 %v1007
        %v1303 = vunpack.c.l.b16 %v1008
        %v1304 = vunpack.c.l.b16 %v1009
        %v1305 = vunpack.c.l.b16 %v1010
        %v1306 = vunpack.c.l.b16 %v1011
        %v1307 = vunpack.c.l.b16 %v1012
        %v1308 = vunpack.c.l.b16 %v1013
        %v1309 = vunpack.c.l.b16 %v1014
        %v1310 = vunpack.c.l.b16 %v1015
        %v1311 = vunpack.c.l.b16 %v1016
        %v1312 = vunpack.c.l.b16 %v1017
        %v1313 = vunpack.c.l.b16 %v1018
        %v1314 = vunpack.c.l.b16 %v1019
        %v1315 = vunpack.c.l.b16 %v1020
        %v1316 = vpack.c.b16 %v1173, %v1172
        %v1317 = vpack.c.b16 %v1175, %v1174
        %v1318 = vpack.c.b16 %v1177, %v1176
        %v1319 = vpack.c.b16 %v1179, %v1178
        %v1320 = vpack.c.b16 %v1181, %v1180
        %v1321 = vpack.c.b16 %v1183, %v1182
        %v1322 = vpack.c.b16 %v1185, %v1184
        %v1323 = vpack.c.b16 %v1187, %v1186
        %v1324 = vpack.c.b16 %v1189, %v1188
        %v1325 = vpack.c.b16 %v1191, %v1190
        %v1326 = vpack.c.b16 %v1193, %v1192
        %v1327 = vpack.c.b16 %v1195, %v1194
        %v1328 = vpack.c.b16 %v1197, %v1196
        %v1329 = vpack.c.b16 %v1199, %v1198
        %v1330 = vpack.c.b16 %v1201, %v1200
        %v1331 = vpack.c.b16 %v1203, %v1202
        %v1332 = vpack.c.b16 %v1205, %v1204
        %v1333 = vpack.c.b16 %v1207, %v1206
        %v1334 = vpack.c.b16 %v1209, %v1208
        %v1335 = vpack.c.b16 %v1211, %v1210
        %v1336 = vpack.c.b16 %v1213, %v1212
        %v1337 = vpack.c.b16 %v1215, %v1214
        %v1338 = vpack.c.b16 %v1217, %v1216
        %v1339 = vpack.c.b16 %v1219, %v1218
        %v1340 = vpack.c.b16 %v1221, %v1220
        %v1341 = vpack.c.b16 %v1223, %v1222
        %v1342 = vpack.c.b16 %v1225, %v1224
        %v1343 = vpack.c.b16 %v1227, %v1226
        %v1344 = vpack.c.b16 %v1229, %v1228
        %v1345 = vpack.c.b16 %v1231, %v1230
        %v1346 = vpack.c.b16 %v1233, %v1232
        %v1347 = vpack.c.b16 %v1235, %v1234
        %v1348 = vpack.c.b16 %v1237, %v1236
        %v1349 = vpack.c.b16 %v1239, %v1238
        %v1350 = vpack.c.b16 %v1241, %v1240
        %v1351 = vpack.c.b16 %v1243, %v1242
        %v1352 = vpack.c.b16 %v1245, %v1244
        %v1353 = vpack.c.b16 %v1247, %v1246
        %v1354 = vpack.c.b16 %v1249, %v1248
        %v1355 = vpack.c.b16 %v1251, %v1250
        %v1356 = vpack.c.b16 %v1253, %v1252
        %v1357 = vpack.c.b16 %v1255, %v1254
        %v1358 = vpack.c.b16 %v1257, %v1256
        %v1359 = vpack.c.b16 %v1259, %v1258
        %v1360 = vpack.c.b16 %v1261, %v1260
        %v1361 = vpack.c.b16 %v1263, %v1262
        %v1362 = vpack.c.b16 %v1265, %v1264
        %v1363 = vpack.c.b16 %v1267, %v1266
        %v1364 = vpack.c.b16 %v1269, %v1268
        %v1365 = vpack.c.b16 %v1271, %v1270
        %v1366 = vpack.c.b16 %v1273, %v1272
        %v1367 = vpack.c.b16 %v1275, %v1274
        %v1368 = vpack.c.b16 %v1277, %v1276
        %v1369 = vpack.c.b16 %v1279, %v1278
        %v1370 = vpack.c.b16 %v1281, %v1280
        %v1371 = vpack.c.b16 %v1283, %v1282
        %v1372 = vpack.c.b16 %v1285, %v1284
        %v1373 = vpack.c.b16 %v1287, %v1286
        %v1374 = vpack.c.b16 %v1289, %v1288
        %v1375 = vpack.c.b16 %v1291, %v1290
        %v1376 = vpack.c.b16 %v1293, %v1292
        %v1377 = vpack.c.b16 %v1295, %v1294
        %v1378 = vpack.c.b16 %v1297, %v1296
        %v1379 = vpack.c.b16 %v1299, %v1298
        %v1380 = vpack.c.b16 %v1301, %v1300
        %v1381 = vpack.c.b16 %v1303, %v1302
        %v1382 = vpack.c.b16 %v1305, %v1304
        %v1383 = vpack.c.b16 %v1307, %v1306
        %v1384 = vpack.c.b16 %v1309, %v1308
        %v1385 = vpack.c.b16 %v1311, %v1310
        %v1386 = vpack.c.b16 %v1313, %v1312
        %v1387 = vpack.c.b16 %v1315, %v1314
        %1460 = vmatprep.subr.bf16.mxu0 0
        %1461 = vmatpush1.bf16.msra.mxu0 %v1316
        %1462 = vmatprep.subr.bf16.mxu0 0
        %1463 = vmatpush1.bf16.msra.mxu0 %v1317
        %1464 = vmatprep.subr.bf16.mxu0 0
        %1465 = vmatpush1.bf16.msra.mxu0 %v1318
        %1466 = vmatprep.subr.bf16.mxu0 0
        %1467 = vmatpush1.bf16.msra.mxu0 %v1319
        %1468 = vmatprep.subr.bf16.mxu0 0
        %1469 = vmatpush1.bf16.msra.mxu0 %v1320
        %1470 = vmatprep.subr.bf16.mxu0 0
        %1471 = vmatpush1.bf16.msra.mxu0 %v1321
        %1472 = vmatprep.subr.bf16.mxu0 0
        %1473 = vmatpush1.bf16.msra.mxu0 %v1322
        %1474 = vmatprep.subr.bf16.mxu0 0
        %1475 = vmatpush1.bf16.msra.mxu0 %v1323
        %1476 = vmatprep.subr.bf16.mxu0 0
        %1477 = vmatpush1.bf16.msra.mxu0 %v1324
        %1478 = vmatprep.subr.bf16.mxu0 0
        %1479 = vmatpush1.bf16.msra.mxu0 %v1325
        %1480 = vmatprep.subr.bf16.mxu0 0
        %1481 = vmatpush1.bf16.msra.mxu0 %v1326
        %1482 = vmatprep.subr.bf16.mxu0 0
        %1483 = vmatpush1.bf16.msra.mxu0 %v1327
        %1484 = vmatprep.subr.bf16.mxu0 0
        %1485 = vmatpush1.bf16.msra.mxu0 %v1328
        %1486 = vmatprep.subr.bf16.mxu0 0
        %1487 = vmatpush1.bf16.msra.mxu0 %v1329
        %1488 = vmatprep.subr.bf16.mxu0 0
        %1489 = vmatpush1.bf16.msra.mxu0 %v1330
        %1490 = vmatprep.subr.bf16.mxu0 0
        %1491 = vmatpush1.bf16.msra.mxu0 %v1331
        %1492 = vmatprep.mubr.bf16.mxu0 %v529
        %1493 = vmatmul.mubr.bf16.gmra.mrb[0].mxu0 %v427
        %v1494 = vpop.f32.mrb[0].mxu0
        %v1495 = vadd.f32 %v1026, %v1494
        %v1496 = vpop.f32.mrb[0].mxu0
        %v1497 = vpop.f32.mrb[0].mxu0
        %v1498 = vadd.f32 %v1026, %v1497
        %v1499 = vpop.f32.mrb[0].mxu0
        %1500 = vmatprep.mubr.bf16.mxu0 %v541
        %1501 = vmatmul.mubr.bf16.gmra.mrb[0].mxu0 %v428
        %v1502 = vpop.f32.mrb[0].mxu0
        %v1503 = vadd.f32 %v1026, %v1502
        %v1504 = vpop.f32.mrb[0].mxu0
        %v1505 = vpop.f32.mrb[0].mxu0
        %v1506 = vadd.f32 %v1026, %v1505
        %v1507 = vpop.f32.mrb[0].mxu0
        %1508 = vmatprep.mubr.bf16.mxu0 %v553
        %1509 = vmatmul.mubr.bf16.gmra.mrb[0].mxu0 %v429
        %v1510 = vpop.f32.mrb[0].mxu0
        %v1511 = vadd.f32 %v1026, %v1510
        %v1512 = vpop.f32.mrb[0].mxu0
        %v1513 = vpop.f32.mrb[0].mxu0
        %v1514 = vadd.f32 %v1026, %v1513
        %v1515 = vpop.f32.mrb[0].mxu0
        %1516 = vmatprep.mubr.bf16.mxu0 %v565
        %1517 = vmatmul.mubr.bf16.gmra.mrb[0].mxu0 %v430
        %v1518 = vpop.f32.mrb[0].mxu0
        %v1519 = vadd.f32 %v1026, %v1518
        %v1520 = vpop.f32.mrb[0].mxu0
        %v1521 = vpop.f32.mrb[0].mxu0
        %v1522 = vadd.f32 %v1026, %v1521
        %v1523 = vpop.f32.mrb[0].mxu0
        %1524 = vmatprep.mubr.bf16.mxu0 %v577
        %1525 = vmatmul.mubr.bf16.gmra.mrb[0].mxu0 %v431
        %v1526 = vpop.f32.mrb[0].mxu0
        %v1527 = vadd.f32 %v1026, %v1526
        %v1528 = vpop.f32.mrb[0].mxu0
        %v1529 = vpop.f32.mrb[0].mxu0
        %v1530 = vadd.f32 %v1026, %v1529
        %v1531 = vpop.f32.mrb[0].mxu0
        %1532 = vmatprep.mubr.bf16.mxu0 %v589
        %1533 = vmatmul.mubr.bf16.gmra.mrb[0].mxu0 %v432
        %v1534 = vpop.f32.mrb[0].mxu0
        %v1535 = vadd.f32 %v1026, %v1534
        %v1536 = vpop.f32.mrb[0].mxu0
        %v1537 = vpop.f32.mrb[0].mxu0
        %v1538 = vadd.f32 %v1026, %v1537
        %v1539 = vpop.f32.mrb[0].mxu0
        %1540 = vmatprep.mubr.bf16.mxu0 %v601
        %1541 = vmatmul.mubr.bf16.gmra.mrb[0].mxu0 %v433
        %v1542 = vpop.f32.mrb[0].mxu0
        %v1543 = vadd.f32 %v1026, %v1542
        %v1544 = vpop.f32.mrb[0].mxu0
        %v1545 = vpop.f32.mrb[0].mxu0
        %v1546 = vadd.f32 %v1026, %v1545
        %v1547 = vpop.f32.mrb[0].mxu0
        %1548 = vmatprep.mubr.bf16.mxu0 %v613
        %1549 = vmatmul.mubr.bf16.gmra.mrb[0].mxu0 %v434
        %v1550 = vpop.f32.mrb[0].mxu0
        %v1551 = vadd.f32 %v1026, %v1550
        %v1552 = vpop.f32.mrb[0].mxu0
        %v1553 = vpop.f32.mrb[0].mxu0
        %v1554 = vadd.f32 %v1026, %v1553
        %v1555 = vpop.f32.mrb[0].mxu0
        %1556 = vmatprep.mubr.bf16.mxu0 %v625
        %1557 = vmatmul.mubr.bf16.gmra.mrb[0].mxu0 %v435
        %v1558 = vpop.f32.mrb[0].mxu0
        %v1559 = vadd.f32 %v1026, %v1558
        %v1560 = vpop.f32.mrb[0].mxu0
        %v1561 = vpop.f32.mrb[0].mxu0
        %v1562 = vadd.f32 %v1026, %v1561
        %v1563 = vpop.f32.mrb[0].mxu0
        %1564 = vmatprep.mubr.bf16.mxu0 %v637
        %1565 = vmatmul.mubr.bf16.gmra.mrb[0].mxu0 %v436
        %v1566 = vpop.f32.mrb[0].mxu0
        %v1567 = vadd.f32 %v1026, %v1566
        %v1568 = vpop.f32.mrb[0].mxu0
        %v1569 = vpop.f32.mrb[0].mxu0
        %v1570 = vadd.f32 %v1026, %v1569
        %v1571 = vpop.f32.mrb[0].mxu0
        %1572 = vmatprep.mubr.bf16.mxu0 %v649
        %1573 = vmatmul.mubr.bf16.gmra.mrb[0].mxu0 %v437
        %v1574 = vpop.f32.mrb[0].mxu0
        %v1575 = vadd.f32 %v1026, %v1574
        %v1576 = vpop.f32.mrb[0].mxu0
        %v1577 = vpop.f32.mrb[0].mxu0
        %v1578 = vadd.f32 %v1026, %v1577
        %v1579 = vpop.f32.mrb[0].mxu0
        %1580 = vmatprep.mubr.bf16.mxu0 %v661
        %1581 = vmatmul.mubr.bf16.gmra.mrb[0].mxu0 %v438
        %v1582 = vpop.f32.mrb[0].mxu0
        %v1583 = vadd.f32 %v1026, %v1582
        %v1584 = vpop.f32.mrb[0].mxu0
        %v1585 = vpop.f32.mrb[0].mxu0
        %v1586 = vadd.f32 %v1026, %v1585
        %v1587 = vpop.f32.mrb[0].mxu0
        %1588 = vmatprep.mubr.bf16.mxu0 %v673
        %1589 = vmatmul.mubr.bf16.gmra.mrb[0].mxu0 %v439
        %v1590 = vpop.f32.mrb[0].mxu0
        %v1591 = vadd.f32 %v1026, %v1590
        %v1592 = vpop.f32.mrb[0].mxu0
        %v1593 = vpop.f32.mrb[0].mxu0
        %v1594 = vadd.f32 %v1026, %v1593
        %v1595 = vpop.f32.mrb[0].mxu0
        %1596 = vmatprep.mubr.bf16.mxu0 %v685
        %1597 = vmatmul.mubr.bf16.gmra.mrb[0].mxu0 %v440
        %v1598 = vpop.f32.mrb[0].mxu0
        %v1599 = vadd.f32 %v1026, %v1598
        %v1600 = vpop.f32.mrb[0].mxu0
        %v1601 = vpop.f32.mrb[0].mxu0
        %v1602 = vadd.f32 %v1026, %v1601
        %v1603 = vpop.f32.mrb[0].mxu0
        %1604 = vmatprep.mubr.bf16.mxu0 %v697
        %1605 = vmatmul.mubr.bf16.gmra.mrb[0].mxu0 %v441
        %v1606 = vpop.f32.mrb[0].mxu0
        %v1607 = vadd.f32 %v1026, %v1606
        %v1608 = vpop.f32.mrb[0].mxu0
        %v1609 = vpop.f32.mrb[0].mxu0
        %v1610 = vadd.f32 %v1026, %v1609
        %v1611 = vpop.f32.mrb[0].mxu0
        %1612 = vmatprep.mubr.bf16.mxu0 %v709
        %1613 = vmatmul.mubr.bf16.gmra.mrb[0].mxu0 %v442
        %v1614 = vpop.f32.mrb[0].mxu0
        %v1615 = vadd.f32 %v1026, %v1614
        %v1616 = vpop.f32.mrb[0].mxu0
        %v1617 = vpop.f32.mrb[0].mxu0
        %v1618 = vadd.f32 %v1026, %v1617
        %v1619 = vpop.f32.mrb[0].mxu0
        %1620 = vmatprep.mubr.bf16.mxu0 %v721
        %1621 = vmatmul.mubr.bf16.gmra.mrb[0].mxu0 %v443
        %v1622 = vpop.f32.mrb[0].mxu0
        %v1623 = vadd.f32 %v1026, %v1622
        %v1624 = vpop.f32.mrb[0].mxu0
        %v1625 = vpop.f32.mrb[0].mxu0
        %v1626 = vadd.f32 %v1026, %v1625
        %v1627 = vpop.f32.mrb[0].mxu0
        %1628 = vmatprep.mubr.bf16.mxu0 %v733
        %1629 = vmatmul.mubr.bf16.gmra.mrb[0].mxu0 %v444
        %v1630 = vpop.f32.mrb[0].mxu0
        %v1631 = vadd.f32 %v1026, %v1630
        %v1632 = vpop.f32.mrb[0].mxu0
        %v1633 = vpop.f32.mrb[0].mxu0
        %v1634 = vadd.f32 %v1026, %v1633
        %v1635 = vpop.f32.mrb[0].mxu0
        %1636 = vdwg.mxu0
        %1637 = vmatprep.subr.bf16.mxu0 0
        %1638 = vmatpush1.bf16.msra.mxu0 %v1332
        %1639 = vmatprep.subr.bf16.mxu0 0
        %1640 = vmatpush1.bf16.msra.mxu0 %v1333
        %1641 = vmatprep.subr.bf16.mxu0 0
        %1642 = vmatpush1.bf16.msra.mxu0 %v1334
        %1643 = vmatprep.subr.bf16.mxu0 0
        %1644 = vmatpush1.bf16.msra.mxu0 %v1335
        %1645 = vmatprep.subr.bf16.mxu0 0
        %1646 = vmatpush1.bf16.msra.mxu0 %v1336
        %1647 = vmatprep.subr.bf16.mxu0 0
        %1648 = vmatpush1.bf16.msra.mxu0 %v1337
        %1649 = vmatprep.subr.bf16.mxu0 0
        %1650 = vmatpush1.bf16.msra.mxu0 %v1338
        %1651 = vmatprep.subr.bf16.mxu0 0
        %1652 = vmatpush1.bf16.msra.mxu0 %v1339
        %1653 = vmatprep.subr.bf16.mxu0 0
        %1654 = vmatpush1.bf16.msra.mxu0 %v1340
        %1655 = vmatprep.subr.bf16.mxu0 0
        %1656 = vmatpush1.bf16.msra.mxu0 %v1341
        %1657 = vmatprep.subr.bf16.mxu0 0
        %1658 = vmatpush1.bf16.msra.mxu0 %v1342
        %1659 = vmatprep.subr.bf16.mxu0 0
        %1660 = vmatpush1.bf16.msra.mxu0 %v1343
        %1661 = vmatprep.subr.bf16.mxu0 0
        %1662 = vmatpush1.bf16.msra.mxu0 %v1344
        %1663 = vmatprep.subr.bf16.mxu0 0
        %1664 = vmatpush1.bf16.msra.mxu0 %v1345
        %1665 = vmatprep.subr.bf16.mxu0 0
        %1666 = vmatpush1.bf16.msra.mxu0 %v1346
        %1667 = vmatprep.subr.bf16.mxu0 0
        %1668 = vmatpush1.bf16.msra.mxu0 %v1347
        %1669 = vmatprep.mubr.bf16.mxu0 %v428
        %1670 = vmatmul.mubr.bf16.gmra.mrb[0].mxu0 %v755
        %v1671 = vpop.f32.mrb[0].mxu0
        %v1672 = vadd.f32 %v1495, %v1671
        %v1673 = vpop.f32.mrb[0].mxu0
        %v1674 = vpop.f32.mrb[0].mxu0
        %v1675 = vadd.f32 %v1498, %v1674
        %v1676 = vpop.f32.mrb[0].mxu0
        %1677 = vmatprep.mubr.bf16.mxu0 %v429
        %1678 = vmatmul.mubr.bf16.gmra.mrb[0].mxu0 %v758
        %v1679 = vpop.f32.mrb[0].mxu0
        %v1680 = vadd.f32 %v1503, %v1679
        %v1681 = vpop.f32.mrb[0].mxu0
        %v1682 = vpop.f32.mrb[0].mxu0
        %v1683 = vadd.f32 %v1506, %v1682
        %v1684 = vpop.f32.mrb[0].mxu0
        %1685 = vmatprep.mubr.bf16.mxu0 %v430
        %1686 = vmatmul.mubr.bf16.gmra.mrb[0].mxu0 %v761
        %v1687 = vpop.f32.mrb[0].mxu0
        %v1688 = vadd.f32 %v1511, %v1687
        %v1689 = vpop.f32.mrb[0].mxu0
        %v1690 = vpop.f32.mrb[0].mxu0
        %v1691 = vadd.f32 %v1514, %v1690
        %v1692 = vpop.f32.mrb[0].mxu0
        %1693 = vmatprep.mubr.bf16.mxu0 %v431
        %1694 = vmatmul.mubr.bf16.gmra.mrb[0].mxu0 %v764
        %v1695 = vpop.f32.mrb[0].mxu0
        %v1696 = vadd.f32 %v1519, %v1695
        %v1697 = vpop.f32.mrb[0].mxu0
        %v1698 = vpop.f32.mrb[0].mxu0
        %v1699 = vadd.f32 %v1522, %v1698
        %v1700 = vpop.f32.mrb[0].mxu0
        %1701 = vmatprep.mubr.bf16.mxu0 %v432
        %1702 = vmatmul.mubr.bf16.gmra.mrb[0].mxu0 %v767
        %v1703 = vpop.f32.mrb[0].mxu0
        %v1704 = vadd.f32 %v1527, %v1703
        %v1705 = vpop.f32.mrb[0].mxu0
        %v1706 = vpop.f32.mrb[0].mxu0
        %v1707 = vadd.f32 %v1530, %v1706
        %v1708 = vpop.f32.mrb[0].mxu0
        %1709 = vmatprep.mubr.bf16.mxu0 %v433
        %1710 = vmatmul.mubr.bf16.gmra.mrb[0].mxu0 %v770
        %v1711 = vpop.f32.mrb[0].mxu0
        %v1712 = vadd.f32 %v1535, %v1711
        %v1713 = vpop.f32.mrb[0].mxu0
        %v1714 = vpop.f32.mrb[0].mxu0
        %v1715 = vadd.f32 %v1538, %v1714
        %v1716 = vpop.f32.mrb[0].mxu0
        %1717 = vmatprep.mubr.bf16.mxu0 %v434
        %1718 = vmatmul.mubr.bf16.gmra.mrb[0].mxu0 %v773
        %v1719 = vpop.f32.mrb[0].mxu0
        %v1720 = vadd.f32 %v1543, %v1719
        %v1721 = vpop.f32.mrb[0].mxu0
        %v1722 = vpop.f32.mrb[0].mxu0
        %v1723 = vadd.f32 %v1546, %v1722
        %v1724 = vpop.f32.mrb[0].mxu0
        %1725 = vmatprep.mubr.bf16.mxu0 %v435
        %1726 = vmatmul.mubr.bf16.gmra.mrb[0].mxu0 %v776
        %v1727 = vpop.f32.mrb[0].mxu0
        %v1728 = vadd.f32 %v1551, %v1727
        %v1729 = vpop.f32.mrb[0].mxu0
        %v1730 = vpop.f32.mrb[0].mxu0
        %v1731 = vadd.f32 %v1554, %v1730
        %v1732 = vpop.f32.mrb[0].mxu0
        %1733 = vmatprep.mubr.bf16.mxu0 %v436
        %1734 = vmatmul.mubr.bf16.gmra.mrb[0].mxu0 %v779
        %v1735 = vpop.f32.mrb[0].mxu0
        %v1736 = vadd.f32 %v1559, %v1735
        %v1737 = vpop.f32.mrb[0].mxu0
        %v1738 = vpop.f32.mrb[0].mxu0
        %v1739 = vadd.f32 %v1562, %v1738
        %v1740 = vpop.f32.mrb[0].mxu0
        %1741 = vmatprep.mubr.bf16.mxu0 %v437
        %1742 = vmatmul.mubr.bf16.gmra.mrb[0].mxu0 %v782
        %v1743 = vpop.f32.mrb[0].mxu0
        %v1744 = vadd.f32 %v1567, %v1743
        %v1745 = vpop.f32.mrb[0].mxu0
        %v1746 = vpop.f32.mrb[0].mxu0
        %v1747 = vadd.f32 %v1570, %v1746
        %v1748 = vpop.f32.mrb[0].mxu0
        %1749 = vmatprep.mubr.bf16.mxu0 %v438
        %1750 = vmatmul.mubr.bf16.gmra.mrb[0].mxu0 %v785
        %v1751 = vpop.f32.mrb[0].mxu0
        %v1752 = vadd.f32 %v1575, %v1751
        %v1753 = vpop.f32.mrb[0].mxu0
        %v1754 = vpop.f32.mrb[0].mxu0
        %v1755 = vadd.f32 %v1578, %v1754
        %v1756 = vpop.f32.mrb[0].mxu0
        %1757 = vmatprep.mubr.bf16.mxu0 %v439
        %1758 = vmatmul.mubr.bf16.gmra.mrb[0].mxu0 %v788
        %v1759 = vpop.f32.mrb[0].mxu0
        %v1760 = vadd.f32 %v1583, %v1759
        %v1761 = vpop.f32.mrb[0].mxu0
        %v1762 = vpop.f32.mrb[0].mxu0
        %v1763 = vadd.f32 %v1586, %v1762
        %v1764 = vpop.f32.mrb[0].mxu0
        %1765 = vmatprep.mubr.bf16.mxu0 %v440
        %1766 = vmatmul.mubr.bf16.gmra.mrb[0].mxu0 %v791
        %v1767 = vpop.f32.mrb[0].mxu0
        %v1768 = vadd.f32 %v1591, %v1767
        %v1769 = vpop.f32.mrb[0].mxu0
        %v1770 = vpop.f32.mrb[0].mxu0
        %v1771 = vadd.f32 %v1594, %v1770
        %v1772 = vpop.f32.mrb[0].mxu0
        %1773 = vmatprep.mubr.bf16.mxu0 %v441
        %1774 = vmatmul.mubr.bf16.gmra.mrb[0].mxu0 %v794
        %v1775 = vpop.f32.mrb[0].mxu0
        %v1776 = vadd.f32 %v1599, %v1775
        %v1777 = vpop.f32.mrb[0].mxu0
        %v1778 = vpop.f32.mrb[0].mxu0
        %v1779 = vadd.f32 %v1602, %v1778
        %v1780 = vpop.f32.mrb[0].mxu0
        %1781 = vmatprep.mubr.bf16.mxu0 %v442
        %1782 = vmatmul.mubr.bf16.gmra.mrb[0].mxu0 %v797
        %v1783 = vpop.f32.mrb[0].mxu0
        %v1784 = vadd.f32 %v1607, %v1783
        %v1785 = vpop.f32.mrb[0].mxu0
        %v1786 = vpop.f32.mrb[0].mxu0
        %v1787 = vadd.f32 %v1610, %v1786
        %v1788 = vpop.f32.mrb[0].mxu0
        %1789 = vmatprep.mubr.bf16.mxu0 %v443
        %1790 = vmatmul.mubr.bf16.gmra.mrb[0].mxu0 %v800
        %v1791 = vpop.f32.mrb[0].mxu0
        %v1792 = vadd.f32 %v1615, %v1791
        %v1793 = vpop.f32.mrb[0].mxu0
        %v1794 = vpop.f32.mrb[0].mxu0
        %v1795 = vadd.f32 %v1618, %v1794
        %v1796 = vpop.f32.mrb[0].mxu0
        %1797 = vmatprep.mubr.bf16.mxu0 %v444
        %1798 = vmatmul.mubr.bf16.gmra.mrb[0].mxu0 %v803
        %v1799 = vpop.f32.mrb[0].mxu0
        %v1800 = vadd.f32 %v1623, %v1799
        %v1801 = vpop.f32.mrb[0].mxu0
        %v1802 = vpop.f32.mrb[0].mxu0
        %v1803 = vadd.f32 %v1626, %v1802
        %v1804 = vpop.f32.mrb[0].mxu0
        %1805 = vmatprep.mubr.bf16.mxu0 %v829
        %1806 = vmatmul.mubr.bf16.gmra.mrb[0].mxu0 %v806
        %v1807 = vpop.f32.mrb[0].mxu0
        %v1808 = vadd.f32 %v1631, %v1807
        %v1809 = vpop.f32.mrb[0].mxu0
        %v1810 = vpop.f32.mrb[0].mxu0
        %v1811 = vadd.f32 %v1634, %v1810
        %v1812 = vpop.f32.mrb[0].mxu0
        %1813 = vdwg.mxu0
        %1814 = vmatprep.subr.bf16.mxu0 0
        %1815 = vmatpush1.bf16.msra.mxu0 %v1348
        %1816 = vmatprep.subr.bf16.mxu0 0
        %1817 = vmatpush1.bf16.msra.mxu0 %v1349
        %1818 = vmatprep.subr.bf16.mxu0 0
        %1819 = vmatpush1.bf16.msra.mxu0 %v1350
        %1820 = vmatprep.subr.bf16.mxu0 0
        %1821 = vmatpush1.bf16.msra.mxu0 %v1351
        %1822 = vmatprep.subr.bf16.mxu0 0
        %1823 = vmatpush1.bf16.msra.mxu0 %v1352
        %1824 = vmatprep.subr.bf16.mxu0 0
        %1825 = vmatpush1.bf16.msra.mxu0 %v1353
        %1826 = vmatprep.subr.bf16.mxu0 0
        %1827 = vmatpush1.bf16.msra.mxu0 %v1354
        %1828 = vmatprep.subr.bf16.mxu0 0
        %1829 = vmatpush1.bf16.msra.mxu0 %v1355
        %1830 = vmatprep.subr.bf16.mxu0 0
        %1831 = vmatpush1.bf16.msra.mxu0 %v1356
        %1832 = vmatprep.subr.bf16.mxu0 0
        %1833 = vmatpush1.bf16.msra.mxu0 %v1357
        %1834 = vmatprep.subr.bf16.mxu0 0
        %1835 = vmatpush1.bf16.msra.mxu0 %v1358
        %1836 = vmatprep.subr.bf16.mxu0 0
        %1837 = vmatpush1.bf16.msra.mxu0 %v1359
        %1838 = vmatprep.subr.bf16.mxu0 0
        %1839 = vmatpush1.bf16.msra.mxu0 %v1360
        %1840 = vmatprep.subr.bf16.mxu0 0
        %1841 = vmatpush1.bf16.msra.mxu0 %v1361
        %1842 = vmatprep.subr.bf16.mxu0 0
        %1843 = vmatpush1.bf16.msra.mxu0 %v1362
        %1844 = vmatprep.subr.bf16.mxu0 0
        %1845 = vmatpush1.bf16.msra.mxu0 %v1363
        %1846 = vmatprep.mubr.bf16.mxu0 %v758
        %1847 = vmatmul.mubr.bf16.gmra.mrb[0].mxu0 %v541
        %v1848 = vpop.f32.mrb[0].mxu0
        %v1849 = vadd.f32 %v1672, %v1848
        %v1850 = vpop.f32.mrb[0].mxu0
        %v1851 = vpop.f32.mrb[0].mxu0
        %v1852 = vadd.f32 %v1675, %v1851
        %v1853 = vpop.f32.mrb[0].mxu0
        %1854 = vmatprep.mubr.bf16.mxu0 %v761
        %1855 = vmatmul.mubr.bf16.gmra.mrb[0].mxu0 %v553
        %v1856 = vpop.f32.mrb[0].mxu0
        %v1857 = vadd.f32 %v1680, %v1856
        %v1858 = vpop.f32.mrb[0].mxu0
        %v1859 = vpop.f32.mrb[0].mxu0
        %v1860 = vadd.f32 %v1683, %v1859
        %v1861 = vpop.f32.mrb[0].mxu0
        %1862 = vmatprep.mubr.bf16.mxu0 %v764
        %1863 = vmatmul.mubr.bf16.gmra.mrb[0].mxu0 %v565
        %v1864 = vpop.f32.mrb[0].mxu0
        %v1865 = vadd.f32 %v1688, %v1864
        %v1866 = vpop.f32.mrb[0].mxu0
        %v1867 = vpop.f32.mrb[0].mxu0
        %v1868 = vadd.f32 %v1691, %v1867
        %v1869 = vpop.f32.mrb[0].mxu0
        %1870 = vmatprep.mubr.bf16.mxu0 %v767
        %1871 = vmatmul.mubr.bf16.gmra.mrb[0].mxu0 %v577
        %v1872 = vpop.f32.mrb[0].mxu0
        %v1873 = vadd.f32 %v1696, %v1872
        %v1874 = vpop.f32.mrb[0].mxu0
        %v1875 = vpop.f32.mrb[0].mxu0
        %v1876 = vadd.f32 %v1699, %v1875
        %v1877 = vpop.f32.mrb[0].mxu0
        %1878 = vmatprep.mubr.bf16.mxu0 %v770
        %1879 = vmatmul.mubr.bf16.gmra.mrb[0].mxu0 %v589
        %v1880 = vpop.f32.mrb[0].mxu0
        %v1881 = vadd.f32 %v1704, %v1880
        %v1882 = vpop.f32.mrb[0].mxu0
        %v1883 = vpop.f32.mrb[0].mxu0
        %v1884 = vadd.f32 %v1707, %v1883
        %v1885 = vpop.f32.mrb[0].mxu0
        %1886 = vmatprep.mubr.bf16.mxu0 %v773
        %1887 = vmatmul.mubr.bf16.gmra.mrb[0].mxu0 %v601
        %v1888 = vpop.f32.mrb[0].mxu0
        %v1889 = vadd.f32 %v1712, %v1888
        %v1890 = vpop.f32.mrb[0].mxu0
        %v1891 = vpop.f32.mrb[0].mxu0
        %v1892 = vadd.f32 %v1715, %v1891
        %v1893 = vpop.f32.mrb[0].mxu0
        %1894 = vmatprep.mubr.bf16.mxu0 %v776
        %1895 = vmatmul.mubr.bf16.gmra.mrb[0].mxu0 %v613
        %v1896 = vpop.f32.mrb[0].mxu0
        %v1897 = vadd.f32 %v1720, %v1896
        %v1898 = vpop.f32.mrb[0].mxu0
        %v1899 = vpop.f32.mrb[0].mxu0
        %v1900 = vadd.f32 %v1723, %v1899
        %v1901 = vpop.f32.mrb[0].mxu0
        %1902 = vmatprep.mubr.bf16.mxu0 %v779
        %1903 = vmatmul.mubr.bf16.gmra.mrb[0].mxu0 %v625
        %v1904 = vpop.f32.mrb[0].mxu0
        %v1905 = vadd.f32 %v1728, %v1904
        %v1906 = vpop.f32.mrb[0].mxu0
        %v1907 = vpop.f32.mrb[0].mxu0
        %v1908 = vadd.f32 %v1731, %v1907
        %v1909 = vpop.f32.mrb[0].mxu0
        %1910 = vmatprep.mubr.bf16.mxu0 %v782
        %1911 = vmatmul.mubr.bf16.gmra.mrb[0].mxu0 %v637
        %v1912 = vpop.f32.mrb[0].mxu0
        %v1913 = vadd.f32 %v1736, %v1912
        %v1914 = vpop.f32.mrb[0].mxu0
        %v1915 = vpop.f32.mrb[0].mxu0
        %v1916 = vadd.f32 %v1739, %v1915
        %v1917 = vpop.f32.mrb[0].mxu0
        %1918 = vmatprep.mubr.bf16.mxu0 %v785
        %1919 = vmatmul.mubr.bf16.gmra.mrb[0].mxu0 %v649
        %v1920 = vpop.f32.mrb[0].mxu0
        %v1921 = vadd.f32 %v1744, %v1920
        %v1922 = vpop.f32.mrb[0].mxu0
        %v1923 = vpop.f32.mrb[0].mxu0
        %v1924 = vadd.f32 %v1747, %v1923
        %v1925 = vpop.f32.mrb[0].mxu0
        %1926 = vmatprep.mubr.bf16.mxu0 %v788
        %1927 = vmatmul.mubr.bf16.gmra.mrb[0].mxu0 %v661
        %v1928 = vpop.f32.mrb[0].mxu0
        %v1929 = vadd.f32 %v1752, %v1928
        %v1930 = vpop.f32.mrb[0].mxu0
        %v1931 = vpop.f32.mrb[0].mxu0
        %v1932 = vadd.f32 %v1755, %v1931
        %v1933 = vpop.f32.mrb[0].mxu0
        %1934 = vmatprep.mubr.bf16.mxu0 %v791
        %1935 = vmatmul.mubr.bf16.gmra.mrb[0].mxu0 %v673
        %v1936 = vpop.f32.mrb[0].mxu0
        %v1937 = vadd.f32 %v1760, %v1936
        %v1938 = vpop.f32.mrb[0].mxu0
        %v1939 = vpop.f32.mrb[0].mxu0
        %v1940 = vadd.f32 %v1763, %v1939
        %v1941 = vpop.f32.mrb[0].mxu0
        %1942 = vmatprep.mubr.bf16.mxu0 %v794
        %1943 = vmatmul.mubr.bf16.gmra.mrb[0].mxu0 %v685
        %v1944 = vpop.f32.mrb[0].mxu0
        %v1945 = vadd.f32 %v1768, %v1944
        %v1946 = vpop.f32.mrb[0].mxu0
        %v1947 = vpop.f32.mrb[0].mxu0
        %v1948 = vadd.f32 %v1771, %v1947
        %v1949 = vpop.f32.mrb[0].mxu0
        %1950 = vmatprep.mubr.bf16.mxu0 %v797
        %1951 = vmatmul.mubr.bf16.gmra.mrb[0].mxu0 %v697
        %v1952 = vpop.f32.mrb[0].mxu0
        %v1953 = vadd.f32 %v1776, %v1952
        %v1954 = vpop.f32.mrb[0].mxu0
        %v1955 = vpop.f32.mrb[0].mxu0
        %v1956 = vadd.f32 %v1779, %v1955
        %v1957 = vpop.f32.mrb[0].mxu0
        %1958 = vmatprep.mubr.bf16.mxu0 %v800
        %1959 = vmatmul.mubr.bf16.gmra.mrb[0].mxu0 %v709
        %v1960 = vpop.f32.mrb[0].mxu0
        %v1961 = vadd.f32 %v1784, %v1960
        %v1962 = vpop.f32.mrb[0].mxu0
        %v1963 = vpop.f32.mrb[0].mxu0
        %v1964 = vadd.f32 %v1787, %v1963
        %v1965 = vpop.f32.mrb[0].mxu0
        %1966 = vmatprep.mubr.bf16.mxu0 %v803
        %1967 = vmatmul.mubr.bf16.gmra.mrb[0].mxu0 %v721
        %v1968 = vpop.f32.mrb[0].mxu0
        %v1969 = vadd.f32 %v1792, %v1968
        %v1970 = vpop.f32.mrb[0].mxu0
        %v1971 = vpop.f32.mrb[0].mxu0
        %v1972 = vadd.f32 %v1795, %v1971
        %v1973 = vpop.f32.mrb[0].mxu0
        %1974 = vmatprep.mubr.bf16.mxu0 %v806
        %1975 = vmatmul.mubr.bf16.gmra.mrb[0].mxu0 %v733
        %v1976 = vpop.f32.mrb[0].mxu0
        %v1977 = vadd.f32 %v1800, %v1976
        %v1978 = vpop.f32.mrb[0].mxu0
        %v1979 = vpop.f32.mrb[0].mxu0
        %v1980 = vadd.f32 %v1803, %v1979
        %v1981 = vpop.f32.mrb[0].mxu0
        %1982 = vmatprep.mubr.bf16.mxu0 %v849
        %1983 = vmatmul.mubr.bf16.gmra.mrb[0].mxu0 %v845
        %v1984 = vpop.f32.mrb[0].mxu0
        %v1985 = vadd.f32 %v1808, %v1984
        %v1986 = vpop.f32.mrb[0].mxu0
        %v1987 = vpop.f32.mrb[0].mxu0
        %v1988 = vadd.f32 %v1811, %v1987
        %v1989 = vpop.f32.mrb[0].mxu0
        %1990 = vdwg.mxu0
        %1991 = vmatprep.subr.bf16.mxu0 0
        %1992 = vmatpush1.bf16.msra.mxu0 %v1364
        %1993 = vmatprep.subr.bf16.mxu0 0
        %1994 = vmatpush1.bf16.msra.mxu0 %v1365
        %1995 = vmatprep.subr.bf16.mxu0 0
        %1996 = vmatpush1.bf16.msra.mxu0 %v1366
        %1997 = vmatprep.subr.bf16.mxu0 0
        %1998 = vmatpush1.bf16.msra.mxu0 %v1367
        %1999 = vmatprep.subr.bf16.mxu0 0
        %2000 = vmatpush1.bf16.msra.mxu0 %v1368
        %2001 = vmatprep.subr.bf16.mxu0 0
        %2002 = vmatpush1.bf16.msra.mxu0 %v1369
        %2003 = vmatprep.subr.bf16.mxu0 0
        %2004 = vmatpush1.bf16.msra.mxu0 %v1370
        %2005 = vmatprep.subr.bf16.mxu0 0
        %2006 = vmatpush1.bf16.msra.mxu0 %v1371
        %2007 = vmatprep.subr.bf16.mxu0 0
        %2008 = vmatpush1.bf16.msra.mxu0 %v1372
        %2009 = vmatprep.subr.bf16.mxu0 0
        %2010 = vmatpush1.bf16.msra.mxu0 %v1373
        %2011 = vmatprep.subr.bf16.mxu0 0
        %2012 = vmatpush1.bf16.msra.mxu0 %v1374
        %2013 = vmatprep.subr.bf16.mxu0 0
        %2014 = vmatpush1.bf16.msra.mxu0 %v1375
        %2015 = vmatprep.subr.bf16.mxu0 0
        %2016 = vmatpush1.bf16.msra.mxu0 %v1376
        %2017 = vmatprep.subr.bf16.mxu0 0
        %2018 = vmatpush1.bf16.msra.mxu0 %v1377
        %2019 = vmatprep.subr.bf16.mxu0 0
        %2020 = vmatpush1.bf16.msra.mxu0 %v1378
        %2021 = vmatprep.subr.bf16.mxu0 0
        %2022 = vmatpush1.bf16.msra.mxu0 %v1379
        %2023 = vmatprep.mubr.bf16.mxu0 %v553
        %2024 = vmatmul.mubr.bf16.gmra.mrb[0].mxu0 %v429
        %v2025 = vpop.f32.mrb[0].mxu0
        %v2026 = vadd.f32 %v1849, %v2025
        %v2027 = vpop.f32.mrb[0].mxu0
        %v2028 = vpop.f32.mrb[0].mxu0
        %v2029 = vadd.f32 %v1852, %v2028
        %v2030 = vpop.f32.mrb[0].mxu0
        %2031 = vmatprep.mubr.bf16.mxu0 %v565
        %2032 = vmatmul.mubr.bf16.gmra.mrb[0].mxu0 %v430
        %v2033 = vpop.f32.mrb[0].mxu0
        %v2034 = vadd.f32 %v1857, %v2033
        %v2035 = vpop.f32.mrb[0].mxu0
        %v2036 = vpop.f32.mrb[0].mxu0
        %v2037 = vadd.f32 %v1860, %v2036
        %v2038 = vpop.f32.mrb[0].mxu0
        %2039 = vmatprep.mubr.bf16.mxu0 %v577
        %2040 = vmatmul.mubr.bf16.gmra.mrb[0].mxu0 %v431
        %v2041 = vpop.f32.mrb[0].mxu0
        %v2042 = vadd.f32 %v1865, %v2041
        %v2043 = vpop.f32.mrb[0].mxu0
        %v2044 = vpop.f32.mrb[0].mxu0
        %v2045 = vadd.f32 %v1868, %v2044
        %v2046 = vpop.f32.mrb[0].mxu0
        %2047 = vmatprep.mubr.bf16.mxu0 %v589
        %2048 = vmatmul.mubr.bf16.gmra.mrb[0].mxu0 %v432
        %v2049 = vpop.f32.mrb[0].mxu0
        %v2050 = vadd.f32 %v1873, %v2049
        %v2051 = vpop.f32.mrb[0].mxu0
        %v2052 = vpop.f32.mrb[0].mxu0
        %v2053 = vadd.f32 %v1876, %v2052
        %v2054 = vpop.f32.mrb[0].mxu0
        %2055 = vmatprep.mubr.bf16.mxu0 %v601
        %2056 = vmatmul.mubr.bf16.gmra.mrb[0].mxu0 %v433
        %v2057 = vpop.f32.mrb[0].mxu0
        %v2058 = vadd.f32 %v1881, %v2057
        %v2059 = vpop.f32.mrb[0].mxu0
        %v2060 = vpop.f32.mrb[0].mxu0
        %v2061 = vadd.f32 %v1884, %v2060
        %v2062 = vpop.f32.mrb[0].mxu0
        %2063 = vmatprep.mubr.bf16.mxu0 %v613
        %2064 = vmatmul.mubr.bf16.gmra.mrb[0].mxu0 %v434
        %v2065 = vpop.f32.mrb[0].mxu0
        %v2066 = vadd.f32 %v1889, %v2065
        %v2067 = vpop.f32.mrb[0].mxu0
        %v2068 = vpop.f32.mrb[0].mxu0
        %v2069 = vadd.f32 %v1892, %v2068
        %v2070 = vpop.f32.mrb[0].mxu0
        %2071 = vmatprep.mubr.bf16.mxu0 %v625
        %2072 = vmatmul.mubr.bf16.gmra.mrb[0].mxu0 %v435
        %v2073 = vpop.f32.mrb[0].mxu0
        %v2074 = vadd.f32 %v1897, %v2073
        %v2075 = vpop.f32.mrb[0].mxu0
        %v2076 = vpop.f32.mrb[0].mxu0
        %v2077 = vadd.f32 %v1900, %v2076
        %v2078 = vpop.f32.mrb[0].mxu0
        %2079 = vmatprep.mubr.bf16.mxu0 %v637
        %2080 = vmatmul.mubr.bf16.gmra.mrb[0].mxu0 %v436
        %v2081 = vpop.f32.mrb[0].mxu0
        %v2082 = vadd.f32 %v1905, %v2081
        %v2083 = vpop.f32.mrb[0].mxu0
        %v2084 = vpop.f32.mrb[0].mxu0
        %v2085 = vadd.f32 %v1908, %v2084
        %v2086 = vpop.f32.mrb[0].mxu0
        %2087 = vmatprep.mubr.bf16.mxu0 %v649
        %2088 = vmatmul.mubr.bf16.gmra.mrb[0].mxu0 %v437
        %v2089 = vpop.f32.mrb[0].mxu0
        %v2090 = vadd.f32 %v1913, %v2089
        %v2091 = vpop.f32.mrb[0].mxu0
        %v2092 = vpop.f32.mrb[0].mxu0
        %v2093 = vadd.f32 %v1916, %v2092
        %v2094 = vpop.f32.mrb[0].mxu0
        %2095 = vmatprep.mubr.bf16.mxu0 %v661
        %2096 = vmatmul.mubr.bf16.gmra.mrb[0].mxu0 %v438
        %v2097 = vpop.f32.mrb[0].mxu0
        %v2098 = vadd.f32 %v1921, %v2097
        %v2099 = vpop.f32.mrb[0].mxu0
        %v2100 = vpop.f32.mrb[0].mxu0
        %v2101 = vadd.f32 %v1924, %v2100
        %v2102 = vpop.f32.mrb[0].mxu0
        %2103 = vmatprep.mubr.bf16.mxu0 %v673
        %2104 = vmatmul.mubr.bf16.gmra.mrb[0].mxu0 %v439
        %v2105 = vpop.f32.mrb[0].mxu0
        %v2106 = vadd.f32 %v1929, %v2105
        %v2107 = vpop.f32.mrb[0].mxu0
        %v2108 = vpop.f32.mrb[0].mxu0
        %v2109 = vadd.f32 %v1932, %v2108
        %v2110 = vpop.f32.mrb[0].mxu0
        %2111 = vmatprep.mubr.bf16.mxu0 %v685
        %2112 = vmatmul.mubr.bf16.gmra.mrb[0].mxu0 %v440
        %v2113 = vpop.f32.mrb[0].mxu0
        %v2114 = vadd.f32 %v1937, %v2113
        %v2115 = vpop.f32.mrb[0].mxu0
        %v2116 = vpop.f32.mrb[0].mxu0
        %v2117 = vadd.f32 %v1940, %v2116
        %v2118 = vpop.f32.mrb[0].mxu0
        %2119 = vmatprep.mubr.bf16.mxu0 %v697
        %2120 = vmatmul.mubr.bf16.gmra.mrb[0].mxu0 %v441
        %v2121 = vpop.f32.mrb[0].mxu0
        %v2122 = vadd.f32 %v1945, %v2121
        %v2123 = vpop.f32.mrb[0].mxu0
        %v2124 = vpop.f32.mrb[0].mxu0
        %v2125 = vadd.f32 %v1948, %v2124
        %v2126 = vpop.f32.mrb[0].mxu0
        %2127 = vmatprep.mubr.bf16.mxu0 %v709
        %2128 = vmatmul.mubr.bf16.gmra.mrb[0].mxu0 %v442
        %v2129 = vpop.f32.mrb[0].mxu0
        %v2130 = vadd.f32 %v1953, %v2129
        %v2131 = vpop.f32.mrb[0].mxu0
        %v2132 = vpop.f32.mrb[0].mxu0
        %v2133 = vadd.f32 %v1956, %v2132
        %v2134 = vpop.f32.mrb[0].mxu0
        %2135 = vmatprep.mubr.bf16.mxu0 %v721
        %2136 = vmatmul.mubr.bf16.gmra.mrb[0].mxu0 %v443
        %v2137 = vpop.f32.mrb[0].mxu0
        %v2138 = vadd.f32 %v1961, %v2137
        %v2139 = vpop.f32.mrb[0].mxu0
        %v2140 = vpop.f32.mrb[0].mxu0
        %v2141 = vadd.f32 %v1964, %v2140
        %v2142 = vpop.f32.mrb[0].mxu0
        %2143 = vmatprep.mubr.bf16.mxu0 %v733
        %2144 = vmatmul.mubr.bf16.gmra.mrb[0].mxu0 %v444
        %v2145 = vpop.f32.mrb[0].mxu0
        %v2146 = vadd.f32 %v1969, %v2145
        %v2147 = vpop.f32.mrb[0].mxu0
        %v2148 = vpop.f32.mrb[0].mxu0
        %v2149 = vadd.f32 %v1972, %v2148
        %v2150 = vpop.f32.mrb[0].mxu0
        %2151 = vmatprep.mubr.bf16.mxu0 %v845
        %2152 = vmatmul.mubr.bf16.gmra.mrb[0].mxu0 %v829
        %v2153 = vpop.f32.mrb[0].mxu0
        %v2154 = vadd.f32 %v1977, %v2153
        %v2155 = vpop.f32.mrb[0].mxu0
        %v2156 = vpop.f32.mrb[0].mxu0
        %v2157 = vadd.f32 %v1980, %v2156
        %v2158 = vpop.f32.mrb[0].mxu0
        %2159 = vmatprep.mubr.bf16.mxu0 %v871
        %2160 = vmatmul.mubr.bf16.gmra.mrb[0].mxu0 %v855
        %v2161 = vpop.f32.mrb[0].mxu0
        %v2162 = vadd.f32 %v1985, %v2161
        %v2163 = vpop.f32.mrb[0].mxu0
        %v2164 = vpop.f32.mrb[0].mxu0
        %v2165 = vadd.f32 %v1988, %v2164
        %v2166 = vpop.f32.mrb[0].mxu0
        %2167 = vdwg.mxu0
        %2168 = vmatprep.subr.bf16.mxu0 0
        %2169 = vmatpush1.bf16.msra.mxu0 %v1380
        %2170 = vmatprep.subr.bf16.mxu0 0
        %2171 = vmatpush1.bf16.msra.mxu0 %v1381
        %2172 = vmatprep.subr.bf16.mxu0 0
        %2173 = vmatpush1.bf16.msra.mxu0 %v1382
        %2174 = vmatprep.subr.bf16.mxu0 0
        %2175 = vmatpush1.bf16.msra.mxu0 %v1383
        %2176 = vmatprep.subr.bf16.mxu0 0
        %2177 = vmatpush1.bf16.msra.mxu0 %v1384
        %2178 = vmatprep.subr.bf16.mxu0 0
        %2179 = vmatpush1.bf16.msra.mxu0 %v1385
        %2180 = vmatprep.subr.bf16.mxu0 0
        %2181 = vmatpush1.bf16.msra.mxu0 %v1386
        %2182 = vmatprep.subr.bf16.mxu0 0
        %2183 = vmatpush1.bf16.msra.mxu0 %v1387
        %2184 = vmatprep.subr.bf16.mxu0 0
        %2185 = vmatpush1.bf16.msra.mxu0 0
        %2186 = vmatprep.subr.bf16.mxu0 0
        %2187 = vmatpush1.bf16.msra.mxu0 0
        %2188 = vmatprep.subr.bf16.mxu0 0
        %2189 = vmatpush1.bf16.msra.mxu0 0
        %2190 = vmatprep.subr.bf16.mxu0 0
        %2191 = vmatpush1.bf16.msra.mxu0 0
        %2192 = vmatprep.subr.bf16.mxu0 0
        %2193 = vmatpush1.bf16.msra.mxu0 0
        %2194 = vmatprep.subr.bf16.mxu0 0
        %2195 = vmatpush1.bf16.msra.mxu0 0
        %2196 = vmatprep.subr.bf16.mxu0 0
        %2197 = vmatpush1.bf16.msra.mxu0 0
        %2198 = vmatprep.subr.bf16.mxu0 0
        %2199 = vmatpush1.bf16.msra.mxu0 0
        %2200 = vmatprep.mubr.bf16.mxu0 0
        %2201 = vmatmul.mubr.bf16.gmra.mrb[0].mxu0 %v761
        %v2202 = vpop.f32.mrb[0].mxu0
        %v2203 = vadd.f32 %v2026, %v2202
        %v2204 = vpop.f32.mrb[0].mxu0
        %v2205 = vpop.f32.mrb[0].mxu0
        %v2206 = vadd.f32 %v2029, %v2205
        %v2207 = vpop.f32.mrb[0].mxu0
        %2208 = vmatprep.mubr.bf16.mxu0 0
        %2209 = vmatmul.mubr.bf16.gmra.mrb[0].mxu0 %v764
        %v2210 = vpop.f32.mrb[0].mxu0
        %v2211 = vadd.f32 %v2034, %v2210
        %v2212 = vpop.f32.mrb[0].mxu0
        %v2213 = vpop.f32.mrb[0].mxu0
        %v2214 = vadd.f32 %v2037, %v2213
        %v2215 = vpop.f32.mrb[0].mxu0
        %2216 = vmatprep.mubr.bf16.mxu0 0
        %2217 = vmatmul.mubr.bf16.gmra.mrb[0].mxu0 %v767
        %v2218 = vpop.f32.mrb[0].mxu0
        %v2219 = vadd.f32 %v2042, %v2218
        %v2220 = vpop.f32.mrb[0].mxu0
        %v2221 = vpop.f32.mrb[0].mxu0
        %v2222 = vadd.f32 %v2045, %v2221
        %v2223 = vpop.f32.mrb[0].mxu0
        %2224 = vmatprep.mubr.bf16.mxu0 0
        %2225 = vmatmul.mubr.bf16.gmra.mrb[0].mxu0 %v770
        %v2226 = vpop.f32.mrb[0].mxu0
        %v2227 = vadd.f32 %v2050, %v2226
        %v2228 = vpop.f32.mrb[0].mxu0
        %v2229 = vpop.f32.mrb[0].mxu0
        %v2230 = vadd.f32 %v2053, %v2229
        %v2231 = vpop.f32.mrb[0].mxu0
        %2232 = vmatprep.mubr.bf16.mxu0 0
        %2233 = vmatmul.mubr.bf16.gmra.mrb[0].mxu0 %v773
        %v2234 = vpop.f32.mrb[0].mxu0
        %v2235 = vadd.f32 %v2058, %v2234
        %v2236 = vpop.f32.mrb[0].mxu0
        %v2237 = vpop.f32.mrb[0].mxu0
        %v2238 = vadd.f32 %v2061, %v2237
        %v2239 = vpop.f32.mrb[0].mxu0
        %2240 = vmatprep.mubr.bf16.mxu0 0
        %2241 = vmatmul.mubr.bf16.gmra.mrb[0].mxu0 %v776
        %v2242 = vpop.f32.mrb[0].mxu0
        %v2243 = vadd.f32 %v2066, %v2242
        %v2244 = vpop.f32.mrb[0].mxu0
        %v2245 = vpop.f32.mrb[0].mxu0
        %v2246 = vadd.f32 %v2069, %v2245
        %v2247 = vpop.f32.mrb[0].mxu0
        %2248 = vmatprep.mubr.bf16.mxu0 0
        %2249 = vmatmul.mubr.bf16.gmra.mrb[0].mxu0 %v779
        %v2250 = vpop.f32.mrb[0].mxu0
        %v2251 = vadd.f32 %v2074, %v2250
        %v2252 = vpop.f32.mrb[0].mxu0
        %v2253 = vpop.f32.mrb[0].mxu0
        %v2254 = vadd.f32 %v2077, %v2253
        %v2255 = vpop.f32.mrb[0].mxu0
        %2256 = vmatprep.mubr.bf16.mxu0 0
        %2257 = vmatmul.mubr.bf16.gmra.mrb[0].mxu0 %v782
        %v2258 = vpop.f32.mrb[0].mxu0
        %v2259 = vadd.f32 %v2082, %v2258
        %v2260 = vpop.f32.mrb[0].mxu0
        %v2261 = vpop.f32.mrb[0].mxu0
        %v2262 = vadd.f32 %v2085, %v2261
        %v2263 = vpop.f32.mrb[0].mxu0
        %2264 = vmatprep.mubr.bf16.mxu0 0
        %2265 = vmatmul.mubr.bf16.gmra.mrb[0].mxu0 %v785
        %v2266 = vpop.f32.mrb[0].mxu0
        %v2267 = vadd.f32 %v2090, %v2266
        %v2268 = vpop.f32.mrb[0].mxu0
        %v2269 = vpop.f32.mrb[0].mxu0
        %v2270 = vadd.f32 %v2093, %v2269
        %v2271 = vpop.f32.mrb[0].mxu0
        %2272 = vmatprep.mubr.bf16.mxu0 0
        %2273 = vmatmul.mubr.bf16.gmra.mrb[0].mxu0 %v788
        %v2274 = vpop.f32.mrb[0].mxu0
        %v2275 = vadd.f32 %v2098, %v2274
        %v2276 = vpop.f32.mrb[0].mxu0
        %v2277 = vpop.f32.mrb[0].mxu0
        %v2278 = vadd.f32 %v2101, %v2277
        %v2279 = vpop.f32.mrb[0].mxu0
        %2280 = vmatprep.mubr.bf16.mxu0 0
        %2281 = vmatmul.mubr.bf16.gmra.mrb[0].mxu0 %v791
        %v2282 = vpop.f32.mrb[0].mxu0
        %v2283 = vadd.f32 %v2106, %v2282
        %v2284 = vpop.f32.mrb[0].mxu0
        %v2285 = vpop.f32.mrb[0].mxu0
        %v2286 = vadd.f32 %v2109, %v2285
        %v2287 = vpop.f32.mrb[0].mxu0
        %2288 = vmatprep.mubr.bf16.mxu0 0
        %2289 = vmatmul.mubr.bf16.gmra.mrb[0].mxu0 %v794
        %v2290 = vpop.f32.mrb[0].mxu0
        %v2291 = vadd.f32 %v2114, %v2290
        %v2292 = vpop.f32.mrb[0].mxu0
        %v2293 = vpop.f32.mrb[0].mxu0
        %v2294 = vadd.f32 %v2117, %v2293
        %v2295 = vpop.f32.mrb[0].mxu0
        %2296 = vmatprep.mubr.bf16.mxu0 0
        %2297 = vmatmul.mubr.bf16.gmra.mrb[0].mxu0 %v797
        %v2298 = vpop.f32.mrb[0].mxu0
        %v2299 = vadd.f32 %v2122, %v2298
        %v2300 = vpop.f32.mrb[0].mxu0
        %v2301 = vpop.f32.mrb[0].mxu0
        %v2302 = vadd.f32 %v2125, %v2301
        %v2303 = vpop.f32.mrb[0].mxu0
        %2304 = vmatprep.mubr.bf16.mxu0 0
        %2305 = vmatmul.mubr.bf16.gmra.mrb[0].mxu0 %v800
        %v2306 = vpop.f32.mrb[0].mxu0
        %v2307 = vadd.f32 %v2130, %v2306
        %v2308 = vpop.f32.mrb[0].mxu0
        %v2309 = vpop.f32.mrb[0].mxu0
        %v2310 = vadd.f32 %v2133, %v2309
        %v2311 = vpop.f32.mrb[0].mxu0
        %2312 = vmatprep.mubr.bf16.mxu0 0
        %2313 = vmatmul.mubr.bf16.gmra.mrb[0].mxu0 %v803
        %v2314 = vpop.f32.mrb[0].mxu0
        %v2315 = vadd.f32 %v2138, %v2314
        %v2316 = vpop.f32.mrb[0].mxu0
        %v2317 = vpop.f32.mrb[0].mxu0
        %v2318 = vadd.f32 %v2141, %v2317
        %v2319 = vpop.f32.mrb[0].mxu0
        %2320 = vmatprep.mubr.bf16.mxu0 0
        %2321 = vmatmul.mubr.bf16.gmra.mrb[0].mxu0 %v806
        %v2322 = vpop.f32.mrb[0].mxu0
        %v2323 = vadd.f32 %v2146, %v2322
        %v2324 = vpop.f32.mrb[0].mxu0
        %v2325 = vpop.f32.mrb[0].mxu0
        %v2326 = vadd.f32 %v2149, %v2325
        %v2327 = vpop.f32.mrb[0].mxu0
        %2328 = vmatprep.mubr.bf16.mxu0 0
        %2329 = vmatmul.mubr.bf16.gmra.mrb[0].mxu0 %v849
        %v2330 = vpop.f32.mrb[0].mxu0
        %v2331 = vadd.f32 %v2154, %v2330
        %v2332 = vpop.f32.mrb[0].mxu0
        %v2333 = vpop.f32.mrb[0].mxu0
        %v2334 = vadd.f32 %v2157, %v2333
        %v2335 = vpop.f32.mrb[0].mxu0
        %2336 = vmatprep.mubr.bf16.mxu0 0
        %2337 = vmatmul.mubr.bf16.gmra.mrb[0].mxu0 %v875
        %v2338 = vpop.f32.mrb[0].mxu0
        %v2339 = vadd.f32 %v2162, %v2338
        %v2340 = vpop.f32.mrb[0].mxu0
        %v2341 = vpop.f32.mrb[0].mxu0
        %v2342 = vadd.f32 %v2165, %v2341
        %v2343 = vpop.f32.mrb[0].mxu0
        %2344 = vdwg.mxu0
        %v2345 = vmax.f32 %v2203, 0.0
        %v2346 = vmax.f32 %v2206, 0.0
        %v2347 = vmax.f32 %v2211, 0.0
        %v2348 = vmax.f32 %v2214, 0.0
        %v2349 = vmax.f32 %v2219, 0.0
        %v2350 = vmax.f32 %v2222, 0.0
        %v2351 = vmax.f32 %v2227, 0.0
        %v2352 = vmax.f32 %v2230, 0.0
        %v2353 = vmax.f32 %v2235, 0.0
        %v2354 = vmax.f32 %v2238, 0.0
        %v2355 = vmax.f32 %v2243, 0.0
        %v2356 = vmax.f32 %v2246, 0.0
        %v2357 = vmax.f32 %v2251, 0.0
        %v2358 = vmax.f32 %v2254, 0.0
        %v2359 = vmax.f32 %v2259, 0.0
        %v2360 = vmax.f32 %v2262, 0.0
        %v2361 = vmax.f32 %v2267, 0.0
        %v2362 = vmax.f32 %v2270, 0.0
        %v2363 = vmax.f32 %v2275, 0.0
        %v2364 = vmax.f32 %v2278, 0.0
        %v2365 = vmax.f32 %v2283, 0.0
        %v2366 = vmax.f32 %v2286, 0.0
        %v2367 = vmax.f32 %v2291, 0.0
        %v2368 = vmax.f32 %v2294, 0.0
        %v2369 = vmax.f32 %v2299, 0.0
        %v2370 = vmax.f32 %v2302, 0.0
        %v2371 = vmax.f32 %v2307, 0.0
        %v2372 = vmax.f32 %v2310, 0.0
        %v2373 = vmax.f32 %v2315, 0.0
        %v2374 = vmax.f32 %v2318, 0.0
        %v2375 = vmax.f32 %v2323, 0.0
        %v2376 = vmax.f32 %v2326, 0.0
        %v2377 = vmax.f32 %v2331, 0.0
        %v2378 = vmax.f32 %v2334, 0.0
        %v2379 = vmax.f32 %v2339, 0.0
        %v2380 = vmax.f32 %v2342, 0.0
        %v2381 = vpack.c.bf16 %v2346, %v2345
        %v2382 = vpack.c.bf16 %v2348, %v2347
        %v2383 = vpack.c.bf16 %v2350, %v2349
        %v2384 = vpack.c.bf16 %v2352, %v2351
        %v2385 = vpack.c.bf16 %v2354, %v2353
        %v2386 = vpack.c.bf16 %v2356, %v2355
        %v2387 = vpack.c.bf16 %v2358, %v2357
        %v2388 = vpack.c.bf16 %v2360, %v2359
        %v2389 = vpack.c.bf16 %v2362, %v2361
        %v2390 = vpack.c.bf16 %v2364, %v2363
        %v2391 = vpack.c.bf16 %v2366, %v2365
        %v2392 = vpack.c.bf16 %v2368, %v2367
        %v2393 = vpack.c.bf16 %v2370, %v2369
        %v2394 = vpack.c.bf16 %v2372, %v2371
        %v2395 = vpack.c.bf16 %v2374, %v2373
        %v2396 = vpack.c.bf16 %v2376, %v2375
        %v2397 = vpack.c.bf16 %v2378, %v2377
        %v2398 = vpack.c.bf16 %v2380, %v2379
        %v2417 = vrot.slane %v2381, 4
        %v2418 = vrot.slane %v2382, 4
        %v2419 = vrot.slane %v2383, 4
        %v2420 = vrot.slane %v2384, 4
        %v2421 = vrot.slane %v2385, 4
        %v2422 = vrot.slane %v2386, 4
        %v2423 = vrot.slane %v2387, 4
        %v2424 = vrot.slane %v2388, 4
        %v2425 = vrot.slane %v2389, 4
        %v2426 = vrot.slane %v2390, 4
        %v2427 = vrot.slane %v2391, 4
        %v2428 = vrot.slane %v2392, 4
        %v2429 = vrot.slane %v2393, 4
        %v2430 = vrot.slane %v2394, 4
        %v2431 = vrot.slane %v2395, 4
        %v2432 = vrot.slane %v2396, 4
        %v2433 = vrot.slane %v2397, 4
        %v2434 = vrot.slane %v2398, 4
        %2453 = vst [vmem:[#allocation2] sm:$0xf0] %v2417
        %2454 = vst [vmem:[#allocation2 + $0x8] sm:$0xf] %v2417
        %2455 = vst [vmem:[#allocation2 + $0x10] sm:$0xf0] %v2418
        %2456 = vst [vmem:[#allocation2 + $0x18] sm:$0xf] %v2418
        %2457 = vst [vmem:[#allocation2 + $0x20] sm:$0xf0] %v2419
        %2458 = vst [vmem:[#allocation2 + $0x28] sm:$0xf] %v2419
        %2459 = vst [vmem:[#allocation2 + $0x30] sm:$0xf0] %v2420
        %2460 = vst [vmem:[#allocation2 + $0x38] sm:$0xf] %v2420
        %2461 = vst [vmem:[#allocation2 + $0x40] sm:$0xf0] %v2421
        %2462 = vst [vmem:[#allocation2 + $0x48] sm:$0xf] %v2421
        %2463 = vst [vmem:[#allocation2 + $0x50] sm:$0xf0] %v2422
        %2464 = vst [vmem:[#allocation2 + $0x58] sm:$0xf] %v2422
        %2465 = vst [vmem:[#allocation2 + $0x60] sm:$0xf0] %v2423
        %2466 = vst [vmem:[#allocation2 + $0x68] sm:$0xf] %v2423
        %2467 = vst [vmem:[#allocation2 + $0x70] sm:$0xf0] %v2424
        %2468 = vst [vmem:[#allocation2 + $0x78] sm:$0xf] %v2424
        %2469 = vst [vmem:[#allocation2 + $0x80] sm:$0xf0] %v2425
        %2470 = vst [vmem:[#allocation2 + $0x88] sm:$0xf] %v2425
        %2471 = vst [vmem:[#allocation2 + $0x90] sm:$0xf0] %v2426
        %2472 = vst [vmem:[#allocation2 + $0x98] sm:$0xf] %v2426
        %2473 = vst [vmem:[#allocation2 + $0xa0] sm:$0xf0] %v2427
        %2474 = vst [vmem:[#allocation2 + $0xa8] sm:$0xf] %v2427
        %2475 = vst [vmem:[#allocation2 + $0xb0] sm:$0xf0] %v2428
        %2476 = vst [vmem:[#allocation2 + $0xb8] sm:$0xf] %v2428
        %2477 = vst [vmem:[#allocation2 + $0xc0] sm:$0xf0] %v2429
        %2478 = vst [vmem:[#allocation2 + $0xc8] sm:$0xf] %v2429
        %2479 = vst [vmem:[#allocation2 + $0xd0] sm:$0xf0] %v2430
        %2480 = vst [vmem:[#allocation2 + $0xd8] sm:$0xf] %v2430
        %2481 = vst [vmem:[#allocation2 + $0xe0] sm:$0xf0] %v2431
        %2482 = vst [vmem:[#allocation2 + $0xe8] sm:$0xf] %v2431
        %2483 = vst [vmem:[#allocation2 + $0xf0] sm:$0xf0] %v2432
        %2484 = vst [vmem:[#allocation2 + $0xf8] sm:$0xf] %v2432
        %2485 = vst [vmem:[#allocation2 + $0x100] sm:$0xf0] %v2433
        %2486 = vst [vmem:[#allocation2 + $0x108] sm:$0xf] %v2433
        %2487 = vst [vmem:[#allocation2 + $0x110] sm:$0xf0] %v2434
        %2488 = vst [vmem:[#allocation2 + $0x118] sm:$0xf] %v2434
        %vm2489 = vcmask 1043459
        %vm2490 = vsmask.f32 7950
        %vm2491 = vmand %vm2489, %vm2490
        %v2492 = vld [vmem:[#allocation2] sm:$0x8]
        %v2493 = vsel %vm2491, 0, %v2492
        %2494 = vst [vmem:[#allocation2] sm:$0x8] %v2493
        %v2495 = vld [vmem:[#allocation2 + $0x10] sm:$0x8]
        %v2496 = vsel %vm2491, 0, %v2495
        %2497 = vst [vmem:[#allocation2 + $0x10] sm:$0x8] %v2496
        %v2498 = vld [vmem:[#allocation2 + $0x20] sm:$0x8]
        %v2499 = vsel %vm2491, 0, %v2498
        %2500 = vst [vmem:[#allocation2 + $0x20] sm:$0x8] %v2499
        %v2501 = vld [vmem:[#allocation2 + $0x30] sm:$0x8]
        %v2502 = vsel %vm2491, 0, %v2501
        %2503 = vst [vmem:[#allocation2 + $0x30] sm:$0x8] %v2502
        %v2504 = vld [vmem:[#allocation2 + $0x40] sm:$0x8]
        %v2505 = vsel %vm2491, 0, %v2504
        %2506 = vst [vmem:[#allocation2 + $0x40] sm:$0x8] %v2505
        %v2507 = vld [vmem:[#allocation2 + $0x50] sm:$0x8]
        %v2508 = vsel %vm2491, 0, %v2507
        %2509 = vst [vmem:[#allocation2 + $0x50] sm:$0x8] %v2508
        %v2510 = vld [vmem:[#allocation2 + $0x60] sm:$0x8]
        %v2511 = vsel %vm2491, 0, %v2510
        %2512 = vst [vmem:[#allocation2 + $0x60] sm:$0x8] %v2511
        %v2513 = vld [vmem:[#allocation2 + $0x70] sm:$0x8]
        %v2514 = vsel %vm2491, 0, %v2513
        %2515 = vst [vmem:[#allocation2 + $0x70] sm:$0x8] %v2514
        %v2516 = vld [vmem:[#allocation2 + $0x80] sm:$0x8]
        %v2517 = vsel %vm2491, 0, %v2516
        %2518 = vst [vmem:[#allocation2 + $0x80] sm:$0x8] %v2517
        %v2519 = vld [vmem:[#allocation2 + $0x90] sm:$0x8]
        %v2520 = vsel %vm2491, 0, %v2519
        %2521 = vst [vmem:[#allocation2 + $0x90] sm:$0x8] %v2520
        %v2522 = vld [vmem:[#allocation2 + $0xa0] sm:$0x8]
        %v2523 = vsel %vm2491, 0, %v2522
        %2524 = vst [vmem:[#allocation2 + $0xa0] sm:$0x8] %v2523
        %v2525 = vld [vmem:[#allocation2 + $0xb0] sm:$0x8]
        %v2526 = vsel %vm2491, 0, %v2525
        %2527 = vst [vmem:[#allocation2 + $0xb0] sm:$0x8] %v2526
        %v2528 = vld [vmem:[#allocation2 + $0xc0] sm:$0x8]
        %v2529 = vsel %vm2491, 0, %v2528
        %2530 = vst [vmem:[#allocation2 + $0xc0] sm:$0x8] %v2529
        %v2531 = vld [vmem:[#allocation2 + $0xd0] sm:$0x8]
        %v2532 = vsel %vm2491, 0, %v2531
        %2533 = vst [vmem:[#allocation2 + $0xd0] sm:$0x8] %v2532
        %v2534 = vld [vmem:[#allocation2 + $0xe0] sm:$0x8]
        %v2535 = vsel %vm2491, 0, %v2534
        %2536 = vst [vmem:[#allocation2 + $0xe0] sm:$0x8] %v2535
        %v2537 = vld [vmem:[#allocation2 + $0xf0] sm:$0x8]
        %v2538 = vsel %vm2491, 0, %v2537
        %2539 = vst [vmem:[#allocation2 + $0xf0] sm:$0x8] %v2538
        %v2540 = vld [vmem:[#allocation2 + $0x100] sm:$0x8]
        %v2541 = vsel %vm2491, 0, %v2540
        %2542 = vst [vmem:[#allocation2 + $0x100] sm:$0x8] %v2541
        %v2543 = vld [vmem:[#allocation2 + $0x110] sm:$0x8]
        %v2544 = vsel %vm2491, 0, %v2543
        %2545 = vst [vmem:[#allocation2 + $0x110] sm:$0x8] %v2544
        %vm2546 = vcmask 1044484
        %vm2547 = vsmask.f32 4352
        %vm2548 = vmand %vm2546, %vm2547
        %v2549 = vld [vmem:[#allocation2 + $0x8] sm:$0x10]
        %v2550 = vsel %vm2548, 0, %v2549
        %2551 = vst [vmem:[#allocation2 + $0x8] sm:$0x10] %v2550
        %v2552 = vld [vmem:[#allocation2 + $0x18] sm:$0x10]
        %v2553 = vsel %vm2548, 0, %v2552
        %2554 = vst [vmem:[#allocation2 + $0x18] sm:$0x10] %v2553
        %v2555 = vld [vmem:[#allocation2 + $0x28] sm:$0x10]
        %v2556 = vsel %vm2548, 0, %v2555
        %2557 = vst [vmem:[#allocation2 + $0x28] sm:$0x10] %v2556
        %v2558 = vld [vmem:[#allocation2 + $0x38] sm:$0x10]
        %v2559 = vsel %vm2548, 0, %v2558
        %2560 = vst [vmem:[#allocation2 + $0x38] sm:$0x10] %v2559
        %v2561 = vld [vmem:[#allocation2 + $0x48] sm:$0x10]
        %v2562 = vsel %vm2548, 0, %v2561
        %2563 = vst [vmem:[#allocation2 + $0x48] sm:$0x10] %v2562
        %v2564 = vld [vmem:[#allocation2 + $0x58] sm:$0x10]
        %v2565 = vsel %vm2548, 0, %v2564
        %2566 = vst [vmem:[#allocation2 + $0x58] sm:$0x10] %v2565
        %v2567 = vld [vmem:[#allocation2 + $0x68] sm:$0x10]
        %v2568 = vsel %vm2548, 0, %v2567
        %2569 = vst [vmem:[#allocation2 + $0x68] sm:$0x10] %v2568
        %v2570 = vld [vmem:[#allocation2 + $0x78] sm:$0x10]
        %v2571 = vsel %vm2548, 0, %v2570
        %2572 = vst [vmem:[#allocation2 + $0x78] sm:$0x10] %v2571
        %v2573 = vld [vmem:[#allocation2 + $0x88] sm:$0x10]
        %v2574 = vsel %vm2548, 0, %v2573
        %2575 = vst [vmem:[#allocation2 + $0x88] sm:$0x10] %v2574
        %v2576 = vld [vmem:[#allocation2 + $0x98] sm:$0x10]
        %v2577 = vsel %vm2548, 0, %v2576
        %2578 = vst [vmem:[#allocation2 + $0x98] sm:$0x10] %v2577
        %v2579 = vld [vmem:[#allocation2 + $0xa8] sm:$0x10]
        %v2580 = vsel %vm2548, 0, %v2579
        %2581 = vst [vmem:[#allocation2 + $0xa8] sm:$0x10] %v2580
        %v2582 = vld [vmem:[#allocation2 + $0xb8] sm:$0x10]
        %v2583 = vsel %vm2548, 0, %v2582
        %2584 = vst [vmem:[#allocation2 + $0xb8] sm:$0x10] %v2583
        %v2585 = vld [vmem:[#allocation2 + $0xc8] sm:$0x10]
        %v2586 = vsel %vm2548, 0, %v2585
        %2587 = vst [vmem:[#allocation2 + $0xc8] sm:$0x10] %v2586
        %v2588 = vld [vmem:[#allocation2 + $0xd8] sm:$0x10]
        %v2589 = vsel %vm2548, 0, %v2588
        %2590 = vst [vmem:[#allocation2 + $0xd8] sm:$0x10] %v2589
        %v2591 = vld [vmem:[#allocation2 + $0xe8] sm:$0x10]
        %v2592 = vsel %vm2548, 0, %v2591
        %2593 = vst [vmem:[#allocation2 + $0xe8] sm:$0x10] %v2592
        %v2594 = vld [vmem:[#allocation2 + $0xf8] sm:$0x10]
        %v2595 = vsel %vm2548, 0, %v2594
        %2596 = vst [vmem:[#allocation2 + $0xf8] sm:$0x10] %v2595
        %v2597 = vld [vmem:[#allocation2 + $0x108] sm:$0x10]
        %v2598 = vsel %vm2548, 0, %v2597
        %2599 = vst [vmem:[#allocation2 + $0x108] sm:$0x10] %v2598
        %v2600 = vld [vmem:[#allocation2 + $0x118] sm:$0x10]
        %v2601 = vsel %vm2548, 0, %v2600
        %2602 = vst [vmem:[#allocation2 + $0x118] sm:$0x10] %v2601
        %p2603 = scmp.eq.s32.totalorder %s26, 0
        // Predicated region
        $region49: #{tpu_custom_call.1} parent=43 // pred_check
          %p2604 = pneg %p2603
        $region50: #{tpu_custom_call.1} parent=43 // pred_check_branch
          %2606 = sbr.rel (%p2604) target = $region52
        $region51: #{tpu_custom_call.1} parent=43 // pred_region
          %s2607 = smul.u32 %s26, 16
          %s2608 = ssub.s32 %s2607, 1
          %v2609 = vstv %s2608
          %v2610 = vadd.s32 %v2609, 1
          %v2611 = vadd.s32 %v2609, 2
          %v2612 = vadd.s32 %v2609, 3
          %v2613 = vadd.s32 %v2609, 4
          %v2614 = vadd.s32 %v2609, 5
          %v2615 = vadd.s32 %v2609, 6
          %v2616 = vadd.s32 %v2609, 7
          %v2617 = vadd.s32 %v2609, 8
          %v2618 = vadd.s32 %v2609, 9
          %v2619 = vadd.s32 %v2609, 10
          %v2620 = vadd.s32 %v2609, 11
          %v2621 = vadd.s32 %v2609, 12
          %v2622 = vadd.s32 %v2609, 13
          %v2623 = vadd.s32 %v2609, 14
          %v2624 = vadd.s32 %v2609, 15
          %v2625 = vadd.s32 %v2609, 16
          %v2626 = vadd.s32 %v2609, 17
          %vm2627 = vcmp.ge.s32.totalorder %v2609, 0
          %vm2628 = vcmp.ge.s32.totalorder %v2610, 0
          %vm2629 = vcmp.ge.s32.totalorder %v2611, 0
          %vm2630 = vcmp.ge.s32.totalorder %v2612, 0
          %vm2631 = vcmp.ge.s32.totalorder %v2613, 0
          %vm2632 = vcmp.ge.s32.totalorder %v2614, 0
          %vm2633 = vcmp.ge.s32.totalorder %v2615, 0
          %vm2634 = vcmp.ge.s32.totalorder %v2616, 0
          %vm2635 = vcmp.ge.s32.totalorder %v2617, 0
          %vm2636 = vcmp.ge.s32.totalorder %v2618, 0
          %vm2637 = vcmp.ge.s32.totalorder %v2619, 0
          %vm2638 = vcmp.ge.s32.totalorder %v2620, 0
          %vm2639 = vcmp.ge.s32.totalorder %v2621, 0
          %vm2640 = vcmp.ge.s32.totalorder %v2622, 0
          %vm2641 = vcmp.ge.s32.totalorder %v2623, 0
          %vm2642 = vcmp.ge.s32.totalorder %v2624, 0
          %vm2643 = vcmp.ge.s32.totalorder %v2625, 0
          %vm2644 = vcmp.ge.s32.totalorder %v2626, 0
          %vm2645 = vcmp.lt.s32.totalorder %v2609, 16
          %vm2646 = vcmp.lt.s32.totalorder %v2610, 16
          %vm2647 = vcmp.lt.s32.totalorder %v2611, 16
          %vm2648 = vcmp.lt.s32.totalorder %v2612, 16
          %vm2649 = vcmp.lt.s32.totalorder %v2613, 16
          %vm2650 = vcmp.lt.s32.totalorder %v2614, 16
          %vm2651 = vcmp.lt.s32.totalorder %v2615, 16
          %vm2652 = vcmp.lt.s32.totalorder %v2616, 16
          %vm2653 = vcmp.lt.s32.totalorder %v2617, 16
          %vm2654 = vcmp.lt.s32.totalorder %v2618, 16
          %vm2655 = vcmp.lt.s32.totalorder %v2619, 16
          %vm2656 = vcmp.lt.s32.totalorder %v2620, 16
          %vm2657 = vcmp.lt.s32.totalorder %v2621, 16
          %vm2658 = vcmp.lt.s32.totalorder %v2622, 16
          %vm2659 = vcmp.lt.s32.totalorder %v2623, 16
          %vm2660 = vcmp.lt.s32.totalorder %v2624, 16
          %vm2661 = vcmp.lt.s32.totalorder %v2625, 16
          %vm2662 = vcmp.lt.s32.totalorder %v2626, 16
          %vm2663 = vmand %vm2627, %vm2645
          %vm2664 = vmand %vm2628, %vm2646
          %vm2665 = vmand %vm2629, %vm2647
          %vm2666 = vmand %vm2630, %vm2648
          %vm2667 = vmand %vm2631, %vm2649
          %vm2668 = vmand %vm2632, %vm2650
          %vm2669 = vmand %vm2633, %vm2651
          %vm2670 = vmand %vm2634, %vm2652
          %vm2671 = vmand %vm2635, %vm2653
          %vm2672 = vmand %vm2636, %vm2654
          %vm2673 = vmand %vm2637, %vm2655
          %vm2674 = vmand %vm2638, %vm2656
          %vm2675 = vmand %vm2639, %vm2657
          %vm2676 = vmand %vm2640, %vm2658
          %vm2677 = vmand %vm2641, %vm2659
          %vm2678 = vmand %vm2642, %vm2660
          %vm2679 = vmand %vm2643, %vm2661
          %vm2680 = vmand %vm2644, %vm2662
          %v2681 = vld [vmem:[#allocation2] sm:$0xff]
          %v2682 = vld [vmem:[#allocation2 + $0x8] sm:$0xff]
          %v2683 = vld [vmem:[#allocation2 + $0x10] sm:$0xff]
          %v2684 = vld [vmem:[#allocation2 + $0x18] sm:$0xff]
          %v2685 = vld [vmem:[#allocation2 + $0x20] sm:$0xff]
          %v2686 = vld [vmem:[#allocation2 + $0x28] sm:$0xff]
          %v2687 = vld [vmem:[#allocation2 + $0x30] sm:$0xff]
          %v2688 = vld [vmem:[#allocation2 + $0x38] sm:$0xff]
          %v2689 = vld [vmem:[#allocation2 + $0x40] sm:$0xff]
          %v2690 = vld [vmem:[#allocation2 + $0x48] sm:$0xff]
          %v2691 = vld [vmem:[#allocation2 + $0x50] sm:$0xff]
          %v2692 = vld [vmem:[#allocation2 + $0x58] sm:$0xff]
          %v2693 = vld [vmem:[#allocation2 + $0x60] sm:$0xff]
          %v2694 = vld [vmem:[#allocation2 + $0x68] sm:$0xff]
          %v2695 = vld [vmem:[#allocation2 + $0x70] sm:$0xff]
          %v2696 = vld [vmem:[#allocation2 + $0x78] sm:$0xff]
          %v2697 = vld [vmem:[#allocation2 + $0x80] sm:$0xff]
          %v2698 = vld [vmem:[#allocation2 + $0x88] sm:$0xff]
          %v2699 = vld [vmem:[#allocation2 + $0x90] sm:$0xff]
          %v2700 = vld [vmem:[#allocation2 + $0x98] sm:$0xff]
          %v2701 = vld [vmem:[#allocation2 + $0xa0] sm:$0xff]
          %v2702 = vld [vmem:[#allocation2 + $0xa8] sm:$0xff]
          %v2703 = vld [vmem:[#allocation2 + $0xb0] sm:$0xff]
          %v2704 = vld [vmem:[#allocation2 + $0xb8] sm:$0xff]
          %v2705 = vld [vmem:[#allocation2 + $0xc0] sm:$0xff]
          %v2706 = vld [vmem:[#allocation2 + $0xc8] sm:$0xff]
          %v2707 = vld [vmem:[#allocation2 + $0xd0] sm:$0xff]
          %v2708 = vld [vmem:[#allocation2 + $0xd8] sm:$0xff]
          %v2709 = vld [vmem:[#allocation2 + $0xe0] sm:$0xff]
          %v2710 = vld [vmem:[#allocation2 + $0xe8] sm:$0xff]
          %v2711 = vld [vmem:[#allocation2 + $0xf0] sm:$0xff]
          %v2712 = vld [vmem:[#allocation2 + $0xf8] sm:$0xff]
          %v2713 = vld [vmem:[#allocation2 + $0x100] sm:$0xff]
          %v2714 = vld [vmem:[#allocation2 + $0x108] sm:$0xff]
          %v2715 = vld [vmem:[#allocation2 + $0x110] sm:$0xff]
          %v2716 = vld [vmem:[#allocation2 + $0x118] sm:$0xff]
          %v2717 = vsel %vm2663, 1, 0
          %v2718 = vsel %vm2664, 1, 0
          %v2719 = vsel %vm2665, 1, 0
          %v2720 = vsel %vm2666, 1, 0
          %v2721 = vsel %vm2667, 1, 0
          %v2722 = vsel %vm2668, 1, 0
          %v2723 = vsel %vm2669, 1, 0
          %v2724 = vsel %vm2670, 1, 0
          %v2725 = vsel %vm2671, 1, 0
          %v2726 = vsel %vm2672, 1, 0
          %v2727 = vsel %vm2673, 1, 0
          %v2728 = vsel %vm2674, 1, 0
          %v2729 = vsel %vm2675, 1, 0
          %v2730 = vsel %vm2676, 1, 0
          %v2731 = vsel %vm2677, 1, 0
          %v2732 = vsel %vm2678, 1, 0
          %v2733 = vsel %vm2679, 1, 0
          %v2734 = vsel %vm2680, 1, 0
          %vm2735 = vcmp.eq.s32.totalorder %v2717, 1
          %vm2736 = vcmp.eq.s32.totalorder %v2718, 1
          %vm2737 = vcmp.eq.s32.totalorder %v2719, 1
          %vm2738 = vcmp.eq.s32.totalorder %v2720, 1
          %vm2739 = vcmp.eq.s32.totalorder %v2721, 1
          %vm2740 = vcmp.eq.s32.totalorder %v2722, 1
          %vm2741 = vcmp.eq.s32.totalorder %v2723, 1
          %vm2742 = vcmp.eq.s32.totalorder %v2724, 1
          %vm2743 = vcmp.eq.s32.totalorder %v2725, 1
          %vm2744 = vcmp.eq.s32.totalorder %v2726, 1
          %vm2745 = vcmp.eq.s32.totalorder %v2727, 1
          %vm2746 = vcmp.eq.s32.totalorder %v2728, 1
          %vm2747 = vcmp.eq.s32.totalorder %v2729, 1
          %vm2748 = vcmp.eq.s32.totalorder %v2730, 1
          %vm2749 = vcmp.eq.s32.totalorder %v2731, 1
          %vm2750 = vcmp.eq.s32.totalorder %v2732, 1
          %vm2751 = vcmp.eq.s32.totalorder %v2733, 1
          %vm2752 = vcmp.eq.s32.totalorder %v2734, 1
          %v2753 = vsel %vm2735, %v2681, 0
          %v2754 = vsel %vm2735, %v2682, 0
          %v2755 = vsel %vm2736, %v2683, 0
          %v2756 = vsel %vm2736, %v2684, 0
          %v2757 = vsel %vm2737, %v2685, 0
          %v2758 = vsel %vm2737, %v2686, 0
          %v2759 = vsel %vm2738, %v2687, 0
          %v2760 = vsel %vm2738, %v2688, 0
          %v2761 = vsel %vm2739, %v2689, 0
          %v2762 = vsel %vm2739, %v2690, 0
          %v2763 = vsel %vm2740, %v2691, 0
          %v2764 = vsel %vm2740, %v2692, 0
          %v2765 = vsel %vm2741, %v2693, 0
          %v2766 = vsel %vm2741, %v2694, 0
          %v2767 = vsel %vm2742, %v2695, 0
          %v2768 = vsel %vm2742, %v2696, 0
          %v2769 = vsel %vm2743, %v2697, 0
          %v2770 = vsel %vm2743, %v2698, 0
          %v2771 = vsel %vm2744, %v2699, 0
          %v2772 = vsel %vm2744, %v2700, 0
          %v2773 = vsel %vm2745, %v2701, 0
          %v2774 = vsel %vm2745, %v2702, 0
          %v2775 = vsel %vm2746, %v2703, 0
          %v2776 = vsel %vm2746, %v2704, 0
          %v2777 = vsel %vm2747, %v2705, 0
          %v2778 = vsel %vm2747, %v2706, 0
          %v2779 = vsel %vm2748, %v2707, 0
          %v2780 = vsel %vm2748, %v2708, 0
          %v2781 = vsel %vm2749, %v2709, 0
          %v2782 = vsel %vm2749, %v2710, 0
          %v2783 = vsel %vm2750, %v2711, 0
          %v2784 = vsel %vm2750, %v2712, 0
          %v2785 = vsel %vm2751, %v2713, 0
          %v2786 = vsel %vm2751, %v2714, 0
          %v2787 = vsel %vm2752, %v2715, 0
          %v2788 = vsel %vm2752, %v2716, 0
          %2789 = vst [vmem:[#allocation2] sm:$0xff] %v2753
          %2790 = vst [vmem:[#allocation2 + $0x8] sm:$0xff] %v2754
          %2791 = vst [vmem:[#allocation2 + $0x10] sm:$0xff] %v2755
          %2792 = vst [vmem:[#allocation2 + $0x18] sm:$0xff] %v2756
          %2793 = vst [vmem:[#allocation2 + $0x20] sm:$0xff] %v2757
          %2794 = vst [vmem:[#allocation2 + $0x28] sm:$0xff] %v2758
          %2795 = vst [vmem:[#allocation2 + $0x30] sm:$0xff] %v2759
          %2796 = vst [vmem:[#allocation2 + $0x38] sm:$0xff] %v2760
          %2797 = vst [vmem:[#allocation2 + $0x40] sm:$0xff] %v2761
          %2798 = vst [vmem:[#allocation2 + $0x48] sm:$0xff] %v2762
          %2799 = vst [vmem:[#allocation2 + $0x50] sm:$0xff] %v2763
          %2800 = vst [vmem:[#allocation2 + $0x58] sm:$0xff] %v2764
          %2801 = vst [vmem:[#allocation2 + $0x60] sm:$0xff] %v2765
          %2802 = vst [vmem:[#allocation2 + $0x68] sm:$0xff] %v2766
          %2803 = vst [vmem:[#allocation2 + $0x70] sm:$0xff] %v2767
          %2804 = vst [vmem:[#allocation2 + $0x78] sm:$0xff] %v2768
          %2805 = vst [vmem:[#allocation2 + $0x80] sm:$0xff] %v2769
          %2806 = vst [vmem:[#allocation2 + $0x88] sm:$0xff] %v2770
          %2807 = vst [vmem:[#allocation2 + $0x90] sm:$0xff] %v2771
          %2808 = vst [vmem:[#allocation2 + $0x98] sm:$0xff] %v2772
          %2809 = vst [vmem:[#allocation2 + $0xa0] sm:$0xff] %v2773
          %2810 = vst [vmem:[#allocation2 + $0xa8] sm:$0xff] %v2774
          %2811 = vst [vmem:[#allocation2 + $0xb0] sm:$0xff] %v2775
          %2812 = vst [vmem:[#allocation2 + $0xb8] sm:$0xff] %v2776
          %2813 = vst [vmem:[#allocation2 + $0xc0] sm:$0xff] %v2777
          %2814 = vst [vmem:[#allocation2 + $0xc8] sm:$0xff] %v2778
          %2815 = vst [vmem:[#allocation2 + $0xd0] sm:$0xff] %v2779
          %2816 = vst [vmem:[#allocation2 + $0xd8] sm:$0xff] %v2780
          %2817 = vst [vmem:[#allocation2 + $0xe0] sm:$0xff] %v2781
          %2818 = vst [vmem:[#allocation2 + $0xe8] sm:$0xff] %v2782
          %2819 = vst [vmem:[#allocation2 + $0xf0] sm:$0xff] %v2783
          %2820 = vst [vmem:[#allocation2 + $0xf8] sm:$0xff] %v2784
          %2821 = vst [vmem:[#allocation2 + $0x100] sm:$0xff] %v2785
          %2822 = vst [vmem:[#allocation2 + $0x108] sm:$0xff] %v2786
          %2823 = vst [vmem:[#allocation2 + $0x110] sm:$0xff] %v2787
          %2824 = vst [vmem:[#allocation2 + $0x118] sm:$0xff] %v2788
        $region52: #{tpu_custom_call.1} parent=43 // pred_fallthru
          _
        %vm2825 = vsmask.f32 3328
        %vm2826 = vsmask.f32 7440
        %vm2827 = vmor %vm2825, %vm2826
        %v2829 = vshrl.u32 %v301, 16
        %v2831 = vrot.slane %v2829, 4
        %v2832 = vshll.u32 %v301, 16
        %v2834 = vrot.slane %v2832, 5
        %v2835 = vor.u32 %v2831, %v2834
        %v2836 = vrot.slane %v2835, 4
        %v2838 = vshll.u32 %v302, 16
        %v2840 = vrot.slane %v2838, 5
        %v2841 = vsel %vm2827, %v2836, %v2840
        %v2842 = vshrl.u32 %v302, 16
        %v2844 = vrot.slane %v2842, 4
        %v2845 = vor.u32 %v2844, %v2840
        %v2846 = vrot.slane %v2845, 4
        %v2848 = vshll.u32 %v303, 16
        %v2850 = vrot.slane %v2848, 5
        %v2851 = vsel %vm2827, %v2846, %v2850
        %v2853 = vshrl.u32 %v304, 16
        %v2855 = vrot.slane %v2853, 4
        %v2856 = vshll.u32 %v304, 16
        %v2858 = vrot.slane %v2856, 5
        %v2859 = vor.u32 %v2855, %v2858
        %v2860 = vrot.slane %v2859, 4
        %v2862 = vshll.u32 %v305, 16
        %v2864 = vrot.slane %v2862, 5
        %v2865 = vsel %vm2827, %v2860, %v2864
        %v2866 = vshrl.u32 %v305, 16
        %v2868 = vrot.slane %v2866, 4
        %v2869 = vor.u32 %v2868, %v2864
        %v2870 = vrot.slane %v2869, 4
        %v2872 = vshll.u32 %v306, 16
        %v2874 = vrot.slane %v2872, 5
        %v2875 = vsel %vm2827, %v2870, %v2874
        %v2877 = vshrl.u32 %v307, 16
        %v2879 = vrot.slane %v2877, 4
        %v2880 = vshll.u32 %v307, 16
        %v2882 = vrot.slane %v2880, 5
        %v2883 = vor.u32 %v2879, %v2882
        %v2884 = vrot.slane %v2883, 4
        %v2886 = vshll.u32 %v308, 16
        %v2888 = vrot.slane %v2886, 5
        %v2889 = vsel %vm2827, %v2884, %v2888
        %v2890 = vshrl.u32 %v308, 16
        %v2892 = vrot.slane %v2890, 4
        %v2893 = vor.u32 %v2892, %v2888
        %v2894 = vrot.slane %v2893, 4
        %v2896 = vshll.u32 %v309, 16
        %v2898 = vrot.slane %v2896, 5
        %v2899 = vsel %vm2827, %v2894, %v2898
        %v2901 = vshrl.u32 %v310, 16
        %v2903 = vrot.slane %v2901, 4
        %v2904 = vshll.u32 %v310, 16
        %v2906 = vrot.slane %v2904, 5
        %v2907 = vor.u32 %v2903, %v2906
        %v2908 = vrot.slane %v2907, 4
        %v2910 = vshll.u32 %v311, 16
        %v2912 = vrot.slane %v2910, 5
        %v2913 = vsel %vm2827, %v2908, %v2912
        %v2914 = vshrl.u32 %v311, 16
        %v2916 = vrot.slane %v2914, 4
        %v2917 = vor.u32 %v2916, %v2912
        %v2918 = vrot.slane %v2917, 4
        %v2920 = vshll.u32 %v312, 16
        %v2922 = vrot.slane %v2920, 5
        %v2923 = vsel %vm2827, %v2918, %v2922
        %v2925 = vshrl.u32 %v313, 16
        %v2927 = vrot.slane %v2925, 4
        %v2928 = vshll.u32 %v313, 16
        %v2930 = vrot.slane %v2928, 5
        %v2931 = vor.u32 %v2927, %v2930
        %v2932 = vrot.slane %v2931, 4
        %v2934 = vshll.u32 %v314, 16
        %v2936 = vrot.slane %v2934, 5
        %v2937 = vsel %vm2827, %v2932, %v2936
        %v2938 = vshrl.u32 %v314, 16
        %v2940 = vrot.slane %v2938, 4
        %v2941 = vor.u32 %v2940, %v2936
        %v2942 = vrot.slane %v2941, 4
        %v2944 = vshll.u32 %v315, 16
        %v2946 = vrot.slane %v2944, 5
        %v2947 = vsel %vm2827, %v2942, %v2946
        %v2949 = vshrl.u32 %v316, 16
        %v2951 = vrot.slane %v2949, 4
        %v2952 = vshll.u32 %v316, 16
        %v2954 = vrot.slane %v2952, 5
        %v2955 = vor.u32 %v2951, %v2954
        %v2956 = vrot.slane %v2955, 4
        %v2958 = vshll.u32 %v317, 16
        %v2960 = vrot.slane %v2958, 5
        %v2961 = vsel %vm2827, %v2956, %v2960
        %v2962 = vshrl.u32 %v317, 16
        %v2964 = vrot.slane %v2962, 4
        %v2965 = vor.u32 %v2964, %v2960
        %v2966 = vrot.slane %v2965, 4
        %v2968 = vshll.u32 %v318, 16
        %v2970 = vrot.slane %v2968, 5
        %v2971 = vsel %vm2827, %v2966, %v2970
        %v2973 = vshrl.u32 %v319, 16
        %v2975 = vrot.slane %v2973, 4
        %v2976 = vshll.u32 %v319, 16
        %v2978 = vrot.slane %v2976, 5
        %v2979 = vor.u32 %v2975, %v2978
        %v2980 = vrot.slane %v2979, 4
        %v2982 = vshll.u32 %v320, 16
        %v2984 = vrot.slane %v2982, 5
        %v2985 = vsel %vm2827, %v2980, %v2984
        %v2986 = vshrl.u32 %v320, 16
        %v2988 = vrot.slane %v2986, 4
        %v2989 = vor.u32 %v2988, %v2984
        %v2990 = vrot.slane %v2989, 4
        %v2992 = vshll.u32 %v321, 16
        %v2994 = vrot.slane %v2992, 5
        %v2995 = vsel %vm2827, %v2990, %v2994
        %v2997 = vshrl.u32 %v322, 16
        %v2999 = vrot.slane %v2997, 4
        %v3000 = vshll.u32 %v322, 16
        %v3002 = vrot.slane %v3000, 5
        %v3003 = vor.u32 %v2999, %v3002
        %v3004 = vrot.slane %v3003, 4
        %v3006 = vshll.u32 %v323, 16
        %v3008 = vrot.slane %v3006, 5
        %v3009 = vsel %vm2827, %v3004, %v3008
        %v3010 = vshrl.u32 %v323, 16
        %v3012 = vrot.slane %v3010, 4
        %v3013 = vor.u32 %v3012, %v3008
        %v3014 = vrot.slane %v3013, 4
        %v3016 = vshll.u32 %v324, 16
        %v3018 = vrot.slane %v3016, 5
        %v3019 = vsel %vm2827, %v3014, %v3018
        %v3021 = vshrl.u32 %v325, 16
        %v3023 = vrot.slane %v3021, 4
        %v3024 = vshll.u32 %v325, 16
        %v3026 = vrot.slane %v3024, 5
        %v3027 = vor.u32 %v3023, %v3026
        %v3028 = vrot.slane %v3027, 4
        %v3030 = vshll.u32 %v326, 16
        %v3032 = vrot.slane %v3030, 5
        %v3033 = vsel %vm2827, %v3028, %v3032
        %v3034 = vshrl.u32 %v326, 16
        %v3036 = vrot.slane %v3034, 4
        %v3037 = vor.u32 %v3036, %v3032
        %v3038 = vrot.slane %v3037, 4
        %v3040 = vshll.u32 %v327, 16
        %v3042 = vrot.slane %v3040, 5
        %v3043 = vsel %vm2827, %v3038, %v3042
        %v3045 = vshrl.u32 %v328, 16
        %v3047 = vrot.slane %v3045, 4
        %v3048 = vshll.u32 %v328, 16
        %v3050 = vrot.slane %v3048, 5
        %v3051 = vor.u32 %v3047, %v3050
        %v3052 = vrot.slane %v3051, 4
        %v3054 = vshll.u32 %v329, 16
        %v3056 = vrot.slane %v3054, 5
        %v3057 = vsel %vm2827, %v3052, %v3056
        %v3058 = vshrl.u32 %v329, 16
        %v3060 = vrot.slane %v3058, 4
        %v3061 = vor.u32 %v3060, %v3056
        %v3062 = vrot.slane %v3061, 4
        %v3064 = vshll.u32 %v330, 16
        %v3066 = vrot.slane %v3064, 5
        %v3067 = vsel %vm2827, %v3062, %v3066
        %v3069 = vshrl.u32 %v331, 16
        %v3071 = vrot.slane %v3069, 4
        %v3072 = vshll.u32 %v331, 16
        %v3074 = vrot.slane %v3072, 5
        %v3075 = vor.u32 %v3071, %v3074
        %v3076 = vrot.slane %v3075, 4
        %v3078 = vshll.u32 %v332, 16
        %v3080 = vrot.slane %v3078, 5
        %v3081 = vsel %vm2827, %v3076, %v3080
        %v3082 = vshrl.u32 %v332, 16
        %v3084 = vrot.slane %v3082, 4
        %v3085 = vor.u32 %v3084, %v3080
        %v3086 = vrot.slane %v3085, 4
        %v3088 = vshll.u32 %v333, 16
        %v3090 = vrot.slane %v3088, 5
        %v3091 = vsel %vm2827, %v3086, %v3090
        %v3093 = vshrl.u32 %v334, 16
        %v3095 = vrot.slane %v3093, 4
        %v3096 = vshll.u32 %v334, 16
        %v3098 = vrot.slane %v3096, 5
        %v3099 = vor.u32 %v3095, %v3098
        %v3100 = vrot.slane %v3099, 4
        %v3102 = vshll.u32 %v335, 16
        %v3104 = vrot.slane %v3102, 5
        %v3105 = vsel %vm2827, %v3100, %v3104
        %v3106 = vshrl.u32 %v335, 16
        %v3108 = vrot.slane %v3106, 4
        %v3109 = vor.u32 %v3108, %v3104
        %v3110 = vrot.slane %v3109, 4
        %v3112 = vshll.u32 %v336, 16
        %v3114 = vrot.slane %v3112, 5
        %v3115 = vsel %vm2827, %v3110, %v3114
        %v3117 = vshrl.u32 %v337, 16
        %v3119 = vrot.slane %v3117, 4
        %v3120 = vshll.u32 %v337, 16
        %v3122 = vrot.slane %v3120, 5
        %v3123 = vor.u32 %v3119, %v3122
        %v3124 = vrot.slane %v3123, 4
        %v3126 = vshll.u32 %v338, 16
        %v3128 = vrot.slane %v3126, 5
        %v3129 = vsel %vm2827, %v3124, %v3128
        %v3130 = vshrl.u32 %v338, 16
        %v3132 = vrot.slane %v3130, 4
        %v3133 = vor.u32 %v3132, %v3128
        %v3134 = vrot.slane %v3133, 4
        %v3136 = vshll.u32 %v339, 16
        %v3138 = vrot.slane %v3136, 5
        %v3139 = vsel %vm2827, %v3134, %v3138
        %v3141 = vshrl.u32 %v340, 16
        %v3143 = vrot.slane %v3141, 4
        %v3144 = vshll.u32 %v340, 16
        %v3146 = vrot.slane %v3144, 5
        %v3147 = vor.u32 %v3143, %v3146
        %v3148 = vrot.slane %v3147, 4
        %v3150 = vshll.u32 %v341, 16
        %v3152 = vrot.slane %v3150, 5
        %v3153 = vsel %vm2827, %v3148, %v3152
        %v3154 = vshrl.u32 %v341, 16
        %v3156 = vrot.slane %v3154, 4
        %v3157 = vor.u32 %v3156, %v3152
        %v3158 = vrot.slane %v3157, 4
        %v3160 = vshll.u32 %v342, 16
        %v3162 = vrot.slane %v3160, 5
        %v3163 = vsel %vm2827, %v3158, %v3162
        %v3165 = vshrl.u32 %v343, 16
        %v3167 = vrot.slane %v3165, 4
        %v3168 = vshll.u32 %v343, 16
        %v3170 = vrot.slane %v3168, 5
        %v3171 = vor.u32 %v3167, %v3170
        %v3172 = vrot.slane %v3171, 4
        %v3174 = vshll.u32 %v344, 16
        %v3176 = vrot.slane %v3174, 5
        %v3177 = vsel %vm2827, %v3172, %v3176
        %v3178 = vshrl.u32 %v344, 16
        %v3180 = vrot.slane %v3178, 4
        %v3181 = vor.u32 %v3180, %v3176
        %v3182 = vrot.slane %v3181, 4
        %v3184 = vshll.u32 %v345, 16
        %v3186 = vrot.slane %v3184, 5
        %v3187 = vsel %vm2827, %v3182, %v3186
        %v3189 = vshrl.u32 %v346, 16
        %v3191 = vrot.slane %v3189, 4
        %v3192 = vshll.u32 %v346, 16
        %v3194 = vrot.slane %v3192, 5
        %v3195 = vor.u32 %v3191, %v3194
        %v3196 = vrot.slane %v3195, 4
        %v3198 = vshll.u32 %v347, 16
        %v3200 = vrot.slane %v3198, 5
        %v3201 = vsel %vm2827, %v3196, %v3200
        %v3202 = vshrl.u32 %v347, 16
        %v3204 = vrot.slane %v3202, 4
        %v3205 = vor.u32 %v3204, %v3200
        %v3206 = vrot.slane %v3205, 4
        %v3208 = vshll.u32 %v348, 16
        %v3210 = vrot.slane %v3208, 5
        %v3211 = vsel %vm2827, %v3206, %v3210
        %v3212 = vld [vmem:[%s1] sm:$0xf]
        %v3213 = vld [vmem:[%s1 + $0x4] sm:$0xf]
        %v3214 = vld [vmem:[%s1 + $0x8] sm:$0xf]
        %v3215 = vld [vmem:[%s1 + $0xc] sm:$0xf]
        %v3216 = vld [vmem:[%s1 + $0x10] sm:$0xf]
        %v3217 = vld [vmem:[%s1 + $0x14] sm:$0xf]
        %v3218 = vld [vmem:[%s1 + $0x18] sm:$0xf]
        %v3219 = vld [vmem:[%s1 + $0x1c] sm:$0xf]
        %v3220 = vld [vmem:[%s1 + $0x20] sm:$0xf]
        %v3221 = vld [vmem:[%s1 + $0x24] sm:$0xf]
        %v3222 = vld [vmem:[%s1 + $0x28] sm:$0xf]
        %v3223 = vld [vmem:[%s1 + $0x2c] sm:$0xf]
        %v3224 = vld [vmem:[%s1 + $0x30] sm:$0xf]
        %v3225 = vld [vmem:[%s1 + $0x34] sm:$0xf]
        %v3226 = vld [vmem:[%s1 + $0x38] sm:$0xf]
        %v3227 = vld [vmem:[%s1 + $0x3c] sm:$0xf]
        %v3228 = vld [vmem:[#allocation2] sm:$0xf8]
        %v3229 = vld [vmem:[#allocation2 + $0x8] sm:$0xf]
        %v3230 = vld [vmem:[#allocation2 + $0x10] sm:$0xf8]
        %v3231 = vld [vmem:[#allocation2 + $0x18] sm:$0xf]
        %v3232 = vld [vmem:[#allocation2 + $0x20] sm:$0xf8]
        %v3233 = vld [vmem:[#allocation2 + $0x28] sm:$0xf]
        %v3234 = vld [vmem:[#allocation2 + $0x30] sm:$0xf8]
        %v3235 = vld [vmem:[#allocation2 + $0x38] sm:$0xf]
        %v3236 = vld [vmem:[#allocation2 + $0x40] sm:$0xf8]
        %v3237 = vld [vmem:[#allocation2 + $0x48] sm:$0xf]
        %v3238 = vld [vmem:[#allocation2 + $0x50] sm:$0xf8]
        %v3239 = vld [vmem:[#allocation2 + $0x58] sm:$0xf]
        %v3240 = vld [vmem:[#allocation2 + $0x60] sm:$0xf8]
        %v3241 = vld [vmem:[#allocation2 + $0x68] sm:$0xf]
        %v3242 = vld [vmem:[#allocation2 + $0x70] sm:$0xf8]
        %v3243 = vld [vmem:[#allocation2 + $0x78] sm:$0xf]
        %v3244 = vld [vmem:[#allocation2 + $0x80] sm:$0xf8]
        %v3245 = vld [vmem:[#allocation2 + $0x88] sm:$0xf]
        %v3246 = vld [vmem:[#allocation2 + $0x90] sm:$0xf8]
        %v3247 = vld [vmem:[#allocation2 + $0x98] sm:$0xf]
        %v3248 = vld [vmem:[#allocation2 + $0xa0] sm:$0xf8]
        %v3249 = vld [vmem:[#allocation2 + $0xa8] sm:$0xf]
        %v3250 = vld [vmem:[#allocation2 + $0xb0] sm:$0xf8]
        %v3251 = vld [vmem:[#allocation2 + $0xb8] sm:$0xf]
        %v3252 = vld [vmem:[#allocation2 + $0xc0] sm:$0xf8]
        %v3253 = vld [vmem:[#allocation2 + $0xc8] sm:$0xf]
        %v3254 = vld [vmem:[#allocation2 + $0xd0] sm:$0xf8]
        %v3255 = vld [vmem:[#allocation2 + $0xd8] sm:$0xf]
        %v3256 = vld [vmem:[#allocation2 + $0xe0] sm:$0xf8]
        %v3257 = vld [vmem:[#allocation2 + $0xe8] sm:$0xf]
        %v3258 = vld [vmem:[#allocation2 + $0xf0] sm:$0xf8]
        %v3259 = vld [vmem:[#allocation2 + $0xf8] sm:$0xf]
        %v3260 = vld [vmem:[#allocation2] sm:$0xf0]
        %v3261 = vld [vmem:[#allocation2 + $0x10] sm:$0xf0]
        %v3262 = vld [vmem:[#allocation2 + $0x20] sm:$0xf0]
        %v3263 = vld [vmem:[#allocation2 + $0x30] sm:$0xf0]
        %v3264 = vld [vmem:[#allocation2 + $0x40] sm:$0xf0]
        %v3265 = vld [vmem:[#allocation2 + $0x50] sm:$0xf0]
        %v3266 = vld [vmem:[#allocation2 + $0x60] sm:$0xf0]
        %v3267 = vld [vmem:[#allocation2 + $0x70] sm:$0xf0]
        %v3268 = vld [vmem:[#allocation2 + $0x80] sm:$0xf0]
        %v3269 = vld [vmem:[#allocation2 + $0x90] sm:$0xf0]
        %v3270 = vld [vmem:[#allocation2 + $0xa0] sm:$0xf0]
        %v3271 = vld [vmem:[#allocation2 + $0xb0] sm:$0xf0]
        %v3272 = vld [vmem:[#allocation2 + $0xc0] sm:$0xf0]
        %v3273 = vld [vmem:[#allocation2 + $0xd0] sm:$0xf0]
        %v3274 = vld [vmem:[#allocation2 + $0xe0] sm:$0xf0]
        %v3275 = vld [vmem:[#allocation2 + $0xf0] sm:$0xf0]
        %v3276 = vld [vmem:[#allocation2 + $0x8] sm:$0x1f]
        %v3277 = vld [vmem:[#allocation2 + $0x18] sm:$0x1f]
        %v3278 = vld [vmem:[#allocation2 + $0x28] sm:$0x1f]
        %v3279 = vld [vmem:[#allocation2 + $0x38] sm:$0x1f]
        %v3280 = vld [vmem:[#allocation2 + $0x48] sm:$0x1f]
        %v3281 = vld [vmem:[#allocation2 + $0x58] sm:$0x1f]
        %v3282 = vld [vmem:[#allocation2 + $0x68] sm:$0x1f]
        %v3283 = vld [vmem:[#allocation2 + $0x78] sm:$0x1f]
        %v3284 = vld [vmem:[#allocation2 + $0x88] sm:$0x1f]
        %v3285 = vld [vmem:[#allocation2 + $0x98] sm:$0x1f]
        %v3286 = vld [vmem:[#allocation2 + $0xa8] sm:$0x1f]
        %v3287 = vld [vmem:[#allocation2 + $0xb8] sm:$0x1f]
        %v3288 = vld [vmem:[#allocation2 + $0xc8] sm:$0x1f]
        %v3289 = vld [vmem:[#allocation2 + $0xd8] sm:$0x1f]
        %v3290 = vld [vmem:[#allocation2 + $0xe8] sm:$0x1f]
        %v3291 = vld [vmem:[#allocation2 + $0xf8] sm:$0x1f]
        %s3292 = scalar_lea.vmem [#allocation2], 16
        %v3293 = vld [vmem:[%s3292] sm:$0xf8]
        %v3294 = vld [vmem:[%s3292 + $0x8] sm:$0xf]
        %v3295 = vld [vmem:[%s3292 + $0x10] sm:$0xf8]
        %v3296 = vld [vmem:[%s3292 + $0x18] sm:$0xf]
        %v3297 = vld [vmem:[%s3292 + $0x20] sm:$0xf8]
        %v3298 = vld [vmem:[%s3292 + $0x28] sm:$0xf]
        %v3299 = vld [vmem:[%s3292 + $0x30] sm:$0xf8]
        %v3300 = vld [vmem:[%s3292 + $0x38] sm:$0xf]
        %v3301 = vld [vmem:[%s3292 + $0x40] sm:$0xf8]
        %v3302 = vld [vmem:[%s3292 + $0x48] sm:$0xf]
        %v3303 = vld [vmem:[%s3292 + $0x50] sm:$0xf8]
        %v3304 = vld [vmem:[%s3292 + $0x58] sm:$0xf]
        %v3305 = vld [vmem:[%s3292 + $0x60] sm:$0xf8]
        %v3306 = vld [vmem:[%s3292 + $0x68] sm:$0xf]
        %v3307 = vld [vmem:[%s3292 + $0x70] sm:$0xf8]
        %v3308 = vld [vmem:[%s3292 + $0x78] sm:$0xf]
        %v3309 = vld [vmem:[%s3292 + $0x80] sm:$0xf8]
        %v3310 = vld [vmem:[%s3292 + $0x88] sm:$0xf]
        %v3311 = vld [vmem:[%s3292 + $0x90] sm:$0xf8]
        %v3312 = vld [vmem:[%s3292 + $0x98] sm:$0xf]
        %v3313 = vld [vmem:[%s3292 + $0xa0] sm:$0xf8]
        %v3314 = vld [vmem:[%s3292 + $0xa8] sm:$0xf]
        %v3315 = vld [vmem:[%s3292 + $0xb0] sm:$0xf8]
        %v3316 = vld [vmem:[%s3292 + $0xb8] sm:$0xf]
        %v3317 = vld [vmem:[%s3292 + $0xc0] sm:$0xf8]
        %v3318 = vld [vmem:[%s3292 + $0xc8] sm:$0xf]
        %v3319 = vld [vmem:[%s3292 + $0xd0] sm:$0xf8]
        %v3320 = vld [vmem:[%s3292 + $0xd8] sm:$0xf]
        %v3321 = vld [vmem:[%s3292 + $0xe0] sm:$0xf8]
        %v3322 = vld [vmem:[%s3292 + $0xe8] sm:$0xf]
        %v3323 = vld [vmem:[%s3292 + $0xf0] sm:$0xf8]
        %v3324 = vld [vmem:[%s3292 + $0xf8] sm:$0xf]
        %v3325 = vld [vmem:[%s3292] sm:$0xf0]
        %v3326 = vld [vmem:[%s3292 + $0x10] sm:$0xf0]
        %v3327 = vld [vmem:[%s3292 + $0x20] sm:$0xf0]
        %v3328 = vld [vmem:[%s3292 + $0x30] sm:$0xf0]
        %v3329 = vld [vmem:[%s3292 + $0x40] sm:$0xf0]
        %v3330 = vld [vmem:[%s3292 + $0x50] sm:$0xf0]
        %v3331 = vld [vmem:[%s3292 + $0x60] sm:$0xf0]
        %v3332 = vld [vmem:[%s3292 + $0x70] sm:$0xf0]
        %v3333 = vld [vmem:[%s3292 + $0x80] sm:$0xf0]
        %v3334 = vld [vmem:[%s3292 + $0x90] sm:$0xf0]
        %v3335 = vld [vmem:[%s3292 + $0xa0] sm:$0xf0]
        %v3336 = vld [vmem:[%s3292 + $0xb0] sm:$0xf0]
        %v3337 = vld [vmem:[%s3292 + $0xc0] sm:$0xf0]
        %v3338 = vld [vmem:[%s3292 + $0xd0] sm:$0xf0]
        %v3339 = vld [vmem:[%s3292 + $0xe0] sm:$0xf0]
        %v3340 = vld [vmem:[%s3292 + $0xf0] sm:$0xf0]
        %v3341 = vld [vmem:[%s3292 + $0x8] sm:$0x1f]
        %v3342 = vld [vmem:[%s3292 + $0x18] sm:$0x1f]
        %v3343 = vld [vmem:[%s3292 + $0x28] sm:$0x1f]
        %v3344 = vld [vmem:[%s3292 + $0x38] sm:$0x1f]
        %v3345 = vld [vmem:[%s3292 + $0x48] sm:$0x1f]
        %v3346 = vld [vmem:[%s3292 + $0x58] sm:$0x1f]
        %v3347 = vld [vmem:[%s3292 + $0x68] sm:$0x1f]
        %v3348 = vld [vmem:[%s3292 + $0x78] sm:$0x1f]
        %v3349 = vld [vmem:[%s3292 + $0x88] sm:$0x1f]
        %v3350 = vld [vmem:[%s3292 + $0x98] sm:$0x1f]
        %v3351 = vld [vmem:[%s3292 + $0xa8] sm:$0x1f]
        %v3352 = vld [vmem:[%s3292 + $0xb8] sm:$0x1f]
        %v3353 = vld [vmem:[%s3292 + $0xc8] sm:$0x1f]
        %v3354 = vld [vmem:[%s3292 + $0xd8] sm:$0x1f]
        %v3355 = vld [vmem:[%s3292 + $0xe8] sm:$0x1f]
        %v3356 = vld [vmem:[%s3292 + $0xf8] sm:$0x1f]
        %s3357 = scalar_lea.vmem [#allocation2], 32
        %v3358 = vld [vmem:[%s3357] sm:$0xf8]
        %v3359 = vld [vmem:[%s3357 + $0x8] sm:$0xf]
        %v3360 = vld [vmem:[%s3357 + $0x10] sm:$0xf8]
        %v3361 = vld [vmem:[%s3357 + $0x18] sm:$0xf]
        %v3362 = vld [vmem:[%s3357 + $0x20] sm:$0xf8]
        %v3363 = vld [vmem:[%s3357 + $0x28] sm:$0xf]
        %v3364 = vld [vmem:[%s3357 + $0x30] sm:$0xf8]
        %v3365 = vld [vmem:[%s3357 + $0x38] sm:$0xf]
        %v3366 = vld [vmem:[%s3357 + $0x40] sm:$0xf8]
        %v3367 = vld [vmem:[%s3357 + $0x48] sm:$0xf]
        %v3368 = vld [vmem:[%s3357 + $0x50] sm:$0xf8]
        %v3369 = vld [vmem:[%s3357 + $0x58] sm:$0xf]
        %v3370 = vld [vmem:[%s3357 + $0x60] sm:$0xf8]
        %v3371 = vld [vmem:[%s3357 + $0x68] sm:$0xf]
        %v3372 = vld [vmem:[%s3357 + $0x70] sm:$0xf8]
        %v3373 = vld [vmem:[%s3357 + $0x78] sm:$0xf]
        %v3374 = vld [vmem:[%s3357 + $0x80] sm:$0xf8]
        %v3375 = vld [vmem:[%s3357 + $0x88] sm:$0xf]
        %v3376 = vld [vmem:[%s3357 + $0x90] sm:$0xf8]
        %v3377 = vld [vmem:[%s3357 + $0x98] sm:$0xf]
        %v3378 = vld [vmem:[%s3357 + $0xa0] sm:$0xf8]
        %v3379 = vld [vmem:[%s3357 + $0xa8] sm:$0xf]
        %v3380 = vld [vmem:[%s3357 + $0xb0] sm:$0xf8]
        %v3381 = vld [vmem:[%s3357 + $0xb8] sm:$0xf]
        %v3382 = vld [vmem:[%s3357 + $0xc0] sm:$0xf8]
        %v3383 = vld [vmem:[%s3357 + $0xc8] sm:$0xf]
        %v3384 = vld [vmem:[%s3357 + $0xd0] sm:$0xf8]
        %v3385 = vld [vmem:[%s3357 + $0xd8] sm:$0xf]
        %v3386 = vld [vmem:[%s3357 + $0xe0] sm:$0xf8]
        %v3387 = vld [vmem:[%s3357 + $0xe8] sm:$0xf]
        %v3388 = vld [vmem:[%s3357 + $0xf0] sm:$0xf8]
        %v3389 = vld [vmem:[%s3357 + $0xf8] sm:$0xf]
        %v3390 = vld [vmem:[%s3357] sm:$0xf0]
        %v3391 = vld [vmem:[%s3357 + $0x10] sm:$0xf0]
        %v3392 = vld [vmem:[%s3357 + $0x20] sm:$0xf0]
        %v3393 = vld [vmem:[%s3357 + $0x30] sm:$0xf0]
        %v3394 = vld [vmem:[%s3357 + $0x40] sm:$0xf0]
        %v3395 = vld [vmem:[%s3357 + $0x50] sm:$0xf0]
        %v3396 = vld [vmem:[%s3357 + $0x60] sm:$0xf0]
        %v3397 = vld [vmem:[%s3357 + $0x70] sm:$0xf0]
        %v3398 = vld [vmem:[%s3357 + $0x80] sm:$0xf0]
        %v3399 = vld [vmem:[%s3357 + $0x90] sm:$0xf0]
        %v3400 = vld [vmem:[%s3357 + $0xa0] sm:$0xf0]
        %v3401 = vld [vmem:[%s3357 + $0xb0] sm:$0xf0]
        %v3402 = vld [vmem:[%s3357 + $0xc0] sm:$0xf0]
        %v3403 = vld [vmem:[%s3357 + $0xd0] sm:$0xf0]
        %v3404 = vld [vmem:[%s3357 + $0xe0] sm:$0xf0]
        %v3405 = vld [vmem:[%s3357 + $0xf0] sm:$0xf0]
        %v3406 = vld [vmem:[%s3357 + $0x8] sm:$0x1f]
        %v3407 = vld [vmem:[%s3357 + $0x18] sm:$0x1f]
        %v3408 = vld [vmem:[%s3357 + $0x28] sm:$0x1f]
        %v3409 = vld [vmem:[%s3357 + $0x38] sm:$0x1f]
        %v3410 = vld [vmem:[%s3357 + $0x48] sm:$0x1f]
        %v3411 = vld [vmem:[%s3357 + $0x58] sm:$0x1f]
        %v3412 = vld [vmem:[%s3357 + $0x68] sm:$0x1f]
        %v3413 = vld [vmem:[%s3357 + $0x78] sm:$0x1f]
        %v3414 = vld [vmem:[%s3357 + $0x88] sm:$0x1f]
        %v3415 = vld [vmem:[%s3357 + $0x98] sm:$0x1f]
        %v3416 = vld [vmem:[%s3357 + $0xa8] sm:$0x1f]
        %v3417 = vld [vmem:[%s3357 + $0xb8] sm:$0x1f]
        %v3418 = vld [vmem:[%s3357 + $0xc8] sm:$0x1f]
        %v3419 = vld [vmem:[%s3357 + $0xd8] sm:$0x1f]
        %v3420 = vld [vmem:[%s3357 + $0xe8] sm:$0x1f]
        %v3421 = vld [vmem:[%s3357 + $0xf8] sm:$0x1f]
        %v3423 = vshrl.u32 %v3260, 16
        %v3425 = vshll.u32 %v3260, 16
        %v3427 = vrot.slane %v3425, 1
        %v3428 = vor.u32 %v3423, %v3427
        %v3430 = vshll.u32 %v3229, 16
        %v3432 = vrot.slane %v3430, 1
        %v3433 = vsel %vm517, %v3428, %v3432
        %v3434 = vshrl.u32 %v3229, 16
        %v3436 = vor.u32 %v3434, %v3432
        %v3438 = vshrl.u32 %v3261, 16
        %v3440 = vshll.u32 %v3261, 16
        %v3442 = vrot.slane %v3440, 1
        %v3443 = vor.u32 %v3438, %v3442
        %v3445 = vshll.u32 %v3231, 16
        %v3447 = vrot.slane %v3445, 1
        %v3448 = vsel %vm517, %v3443, %v3447
        %v3449 = vshrl.u32 %v3231, 16
        %v3451 = vor.u32 %v3449, %v3447
        %v3453 = vshrl.u32 %v3262, 16
        %v3455 = vshll.u32 %v3262, 16
        %v3457 = vrot.slane %v3455, 1
        %v3458 = vor.u32 %v3453, %v3457
        %v3460 = vshll.u32 %v3233, 16
        %v3462 = vrot.slane %v3460, 1
        %v3463 = vsel %vm517, %v3458, %v3462
        %v3464 = vshrl.u32 %v3233, 16
        %v3466 = vor.u32 %v3464, %v3462
        %v3468 = vshrl.u32 %v3263, 16
        %v3470 = vshll.u32 %v3263, 16
        %v3472 = vrot.slane %v3470, 1
        %v3473 = vor.u32 %v3468, %v3472
        %v3475 = vshll.u32 %v3235, 16
        %v3477 = vrot.slane %v3475, 1
        %v3478 = vsel %vm517, %v3473, %v3477
        %v3479 = vshrl.u32 %v3235, 16
        %v3481 = vor.u32 %v3479, %v3477
        %v3483 = vshrl.u32 %v3264, 16
        %v3485 = vshll.u32 %v3264, 16
        %v3487 = vrot.slane %v3485, 1
        %v3488 = vor.u32 %v3483, %v3487
        %v3490 = vshll.u32 %v3237, 16
        %v3492 = vrot.slane %v3490, 1
        %v3493 = vsel %vm517, %v3488, %v3492
        %v3494 = vshrl.u32 %v3237, 16
        %v3496 = vor.u32 %v3494, %v3492
        %v3498 = vshrl.u32 %v3265, 16
        %v3500 = vshll.u32 %v3265, 16
        %v3502 = vrot.slane %v3500, 1
        %v3503 = vor.u32 %v3498, %v3502
        %v3505 = vshll.u32 %v3239, 16
        %v3507 = vrot.slane %v3505, 1
        %v3508 = vsel %vm517, %v3503, %v3507
        %v3509 = vshrl.u32 %v3239, 16
        %v3511 = vor.u32 %v3509, %v3507
        %v3513 = vshrl.u32 %v3266, 16
        %v3515 = vshll.u32 %v3266, 16
        %v3517 = vrot.slane %v3515, 1
        %v3518 = vor.u32 %v3513, %v3517
        %v3520 = vshll.u32 %v3241, 16
        %v3522 = vrot.slane %v3520, 1
        %v3523 = vsel %vm517, %v3518, %v3522
        %v3524 = vshrl.u32 %v3241, 16
        %v3526 = vor.u32 %v3524, %v3522
        %v3528 = vshrl.u32 %v3267, 16
        %v3530 = vshll.u32 %v3267, 16
        %v3532 = vrot.slane %v3530, 1
        %v3533 = vor.u32 %v3528, %v3532
        %v3535 = vshll.u32 %v3243, 16
        %v3537 = vrot.slane %v3535, 1
        %v3538 = vsel %vm517, %v3533, %v3537
        %v3539 = vshrl.u32 %v3243, 16
        %v3541 = vor.u32 %v3539, %v3537
        %v3543 = vshrl.u32 %v3268, 16
        %v3545 = vshll.u32 %v3268, 16
        %v3547 = vrot.slane %v3545, 1
        %v3548 = vor.u32 %v3543, %v3547
        %v3550 = vshll.u32 %v3245, 16
        %v3552 = vrot.slane %v3550, 1
        %v3553 = vsel %vm517, %v3548, %v3552
        %v3554 = vshrl.u32 %v3245, 16
        %v3556 = vor.u32 %v3554, %v3552
        %v3558 = vshrl.u32 %v3269, 16
        %v3560 = vshll.u32 %v3269, 16
        %v3562 = vrot.slane %v3560, 1
        %v3563 = vor.u32 %v3558, %v3562
        %v3565 = vshll.u32 %v3247, 16
        %v3567 = vrot.slane %v3565, 1
        %v3568 = vsel %vm517, %v3563, %v3567
        %v3569 = vshrl.u32 %v3247, 16
        %v3571 = vor.u32 %v3569, %v3567
        %v3573 = vshrl.u32 %v3270, 16
        %v3575 = vshll.u32 %v3270, 16
        %v3577 = vrot.slane %v3575, 1
        %v3578 = vor.u32 %v3573, %v3577
        %v3580 = vshll.u32 %v3249, 16
        %v3582 = vrot.slane %v3580, 1
        %v3583 = vsel %vm517, %v3578, %v3582
        %v3584 = vshrl.u32 %v3249, 16
        %v3586 = vor.u32 %v3584, %v3582
        %v3588 = vshrl.u32 %v3271, 16
        %v3590 = vshll.u32 %v3271, 16
        %v3592 = vrot.slane %v3590, 1
        %v3593 = vor.u32 %v3588, %v3592
        %v3595 = vshll.u32 %v3251, 16
        %v3597 = vrot.slane %v3595, 1
        %v3598 = vsel %vm517, %v3593, %v3597
        %v3599 = vshrl.u32 %v3251, 16
        %v3601 = vor.u32 %v3599, %v3597
        %v3603 = vshrl.u32 %v3272, 16
        %v3605 = vshll.u32 %v3272, 16
        %v3607 = vrot.slane %v3605, 1
        %v3608 = vor.u32 %v3603, %v3607
        %v3610 = vshll.u32 %v3253, 16
        %v3612 = vrot.slane %v3610, 1
        %v3613 = vsel %vm517, %v3608, %v3612
        %v3614 = vshrl.u32 %v3253, 16
        %v3616 = vor.u32 %v3614, %v3612
        %v3618 = vshrl.u32 %v3273, 16
        %v3620 = vshll.u32 %v3273, 16
        %v3622 = vrot.slane %v3620, 1
        %v3623 = vor.u32 %v3618, %v3622
        %v3625 = vshll.u32 %v3255, 16
        %v3627 = vrot.slane %v3625, 1
        %v3628 = vsel %vm517, %v3623, %v3627
        %v3629 = vshrl.u32 %v3255, 16
        %v3631 = vor.u32 %v3629, %v3627
        %v3633 = vshrl.u32 %v3274, 16
        %v3635 = vshll.u32 %v3274, 16
        %v3637 = vrot.slane %v3635, 1
        %v3638 = vor.u32 %v3633, %v3637
        %v3640 = vshll.u32 %v3257, 16
        %v3642 = vrot.slane %v3640, 1
        %v3643 = vsel %vm517, %v3638, %v3642
        %v3644 = vshrl.u32 %v3257, 16
        %v3646 = vor.u32 %v3644, %v3642
        %v3648 = vshrl.u32 %v3275, 16
        %v3650 = vshll.u32 %v3275, 16
        %v3652 = vrot.slane %v3650, 1
        %v3653 = vor.u32 %v3648, %v3652
        %v3655 = vshll.u32 %v3259, 16
        %v3657 = vrot.slane %v3655, 1
        %v3658 = vsel %vm517, %v3653, %v3657
        %v3659 = vshrl.u32 %v3259, 16
        %v3661 = vor.u32 %v3659, %v3657
        %v3694 = vrot.slane %v3260, 1
        %v3695 = vrot.slane %v3276, 1
        %v3696 = vsel %vm752, %v3694, %v3695
        %v3697 = vrot.slane %v3261, 1
        %v3698 = vrot.slane %v3277, 1
        %v3699 = vsel %vm752, %v3697, %v3698
        %v3700 = vrot.slane %v3262, 1
        %v3701 = vrot.slane %v3278, 1
        %v3702 = vsel %vm752, %v3700, %v3701
        %v3703 = vrot.slane %v3263, 1
        %v3704 = vrot.slane %v3279, 1
        %v3705 = vsel %vm752, %v3703, %v3704
        %v3706 = vrot.slane %v3264, 1
        %v3707 = vrot.slane %v3280, 1
        %v3708 = vsel %vm752, %v3706, %v3707
        %v3709 = vrot.slane %v3265, 1
        %v3710 = vrot.slane %v3281, 1
        %v3711 = vsel %vm752, %v3709, %v3710
        %v3712 = vrot.slane %v3266, 1
        %v3713 = vrot.slane %v3282, 1
        %v3714 = vsel %vm752, %v3712, %v3713
        %v3715 = vrot.slane %v3267, 1
        %v3716 = vrot.slane %v3283, 1
        %v3717 = vsel %vm752, %v3715, %v3716
        %v3718 = vrot.slane %v3268, 1
        %v3719 = vrot.slane %v3284, 1
        %v3720 = vsel %vm752, %v3718, %v3719
        %v3721 = vrot.slane %v3269, 1
        %v3722 = vrot.slane %v3285, 1
        %v3723 = vsel %vm752, %v3721, %v3722
        %v3724 = vrot.slane %v3270, 1
        %v3725 = vrot.slane %v3286, 1
        %v3726 = vsel %vm752, %v3724, %v3725
        %v3727 = vrot.slane %v3271, 1
        %v3728 = vrot.slane %v3287, 1
        %v3729 = vsel %vm752, %v3727, %v3728
        %v3730 = vrot.slane %v3272, 1
        %v3731 = vrot.slane %v3288, 1
        %v3732 = vsel %vm752, %v3730, %v3731
        %v3733 = vrot.slane %v3273, 1
        %v3734 = vrot.slane %v3289, 1
        %v3735 = vsel %vm752, %v3733, %v3734
        %v3736 = vrot.slane %v3274, 1
        %v3737 = vrot.slane %v3290, 1
        %v3738 = vsel %vm752, %v3736, %v3737
        %v3739 = vrot.slane %v3275, 1
        %v3740 = vrot.slane %v3291, 1
        %v3741 = vsel %vm752, %v3739, %v3740
        %v3743 = vshrl.u32 %v3325, 16
        %v3745 = vshll.u32 %v3325, 16
        %v3747 = vrot.slane %v3745, 1
        %v3748 = vor.u32 %v3743, %v3747
        %v3750 = vshll.u32 %v3294, 16
        %v3752 = vrot.slane %v3750, 1
        %v3753 = vsel %vm517, %v3748, %v3752
        %v3754 = vshrl.u32 %v3294, 16
        %v3756 = vor.u32 %v3754, %v3752
        %v3758 = vshrl.u32 %v3326, 16
        %v3760 = vshll.u32 %v3326, 16
        %v3762 = vrot.slane %v3760, 1
        %v3763 = vor.u32 %v3758, %v3762
        %v3765 = vshll.u32 %v3296, 16
        %v3767 = vrot.slane %v3765, 1
        %v3768 = vsel %vm517, %v3763, %v3767
        %v3769 = vshrl.u32 %v3296, 16
        %v3771 = vor.u32 %v3769, %v3767
        %v3773 = vshrl.u32 %v3327, 16
        %v3775 = vshll.u32 %v3327, 16
        %v3777 = vrot.slane %v3775, 1
        %v3778 = vor.u32 %v3773, %v3777
        %v3780 = vshll.u32 %v3298, 16
        %v3782 = vrot.slane %v3780, 1
        %v3783 = vsel %vm517, %v3778, %v3782
        %v3784 = vshrl.u32 %v3298, 16
        %v3786 = vor.u32 %v3784, %v3782
        %v3788 = vshrl.u32 %v3328, 16
        %v3790 = vshll.u32 %v3328, 16
        %v3792 = vrot.slane %v3790, 1
        %v3793 = vor.u32 %v3788, %v3792
        %v3795 = vshll.u32 %v3300, 16
        %v3797 = vrot.slane %v3795, 1
        %v3798 = vsel %vm517, %v3793, %v3797
        %v3799 = vshrl.u32 %v3300, 16
        %v3801 = vor.u32 %v3799, %v3797
        %v3803 = vshrl.u32 %v3329, 16
        %v3805 = vshll.u32 %v3329, 16
        %v3807 = vrot.slane %v3805, 1
        %v3808 = vor.u32 %v3803, %v3807
        %v3810 = vshll.u32 %v3302, 16
        %v3812 = vrot.slane %v3810, 1
        %v3813 = vsel %vm517, %v3808, %v3812
        %v3814 = vshrl.u32 %v3302, 16
        %v3816 = vor.u32 %v3814, %v3812
        %v3818 = vshrl.u32 %v3330, 16
        %v3820 = vshll.u32 %v3330, 16
        %v3822 = vrot.slane %v3820, 1
        %v3823 = vor.u32 %v3818, %v3822
        %v3825 = vshll.u32 %v3304, 16
        %v3827 = vrot.slane %v3825, 1
        %v3828 = vsel %vm517, %v3823, %v3827
        %v3829 = vshrl.u32 %v3304, 16
        %v3831 = vor.u32 %v3829, %v3827
        %v3833 = vshrl.u32 %v3331, 16
        %v3835 = vshll.u32 %v3331, 16
        %v3837 = vrot.slane %v3835, 1
        %v3838 = vor.u32 %v3833, %v3837
        %v3840 = vshll.u32 %v3306, 16
        %v3842 = vrot.slane %v3840, 1
        %v3843 = vsel %vm517, %v3838, %v3842
        %v3844 = vshrl.u32 %v3306, 16
        %v3846 = vor.u32 %v3844, %v3842
        %v3848 = vshrl.u32 %v3332, 16
        %v3850 = vshll.u32 %v3332, 16
        %v3852 = vrot.slane %v3850, 1
        %v3853 = vor.u32 %v3848, %v3852
        %v3855 = vshll.u32 %v3308, 16
        %v3857 = vrot.slane %v3855, 1
        %v3858 = vsel %vm517, %v3853, %v3857
        %v3859 = vshrl.u32 %v3308, 16
        %v3861 = vor.u32 %v3859, %v3857
        %v3863 = vshrl.u32 %v3333, 16
        %v3865 = vshll.u32 %v3333, 16
        %v3867 = vrot.slane %v3865, 1
        %v3868 = vor.u32 %v3863, %v3867
        %v3870 = vshll.u32 %v3310, 16
        %v3872 = vrot.slane %v3870, 1
        %v3873 = vsel %vm517, %v3868, %v3872
        %v3874 = vshrl.u32 %v3310, 16
        %v3876 = vor.u32 %v3874, %v3872
        %v3878 = vshrl.u32 %v3334, 16
        %v3880 = vshll.u32 %v3334, 16
        %v3882 = vrot.slane %v3880, 1
        %v3883 = vor.u32 %v3878, %v3882
        %v3885 = vshll.u32 %v3312, 16
        %v3887 = vrot.slane %v3885, 1
        %v3888 = vsel %vm517, %v3883, %v3887
        %v3889 = vshrl.u32 %v3312, 16
        %v3891 = vor.u32 %v3889, %v3887
        %v3893 = vshrl.u32 %v3335, 16
        %v3895 = vshll.u32 %v3335, 16
        %v3897 = vrot.slane %v3895, 1
        %v3898 = vor.u32 %v3893, %v3897
        %v3900 = vshll.u32 %v3314, 16
        %v3902 = vrot.slane %v3900, 1
        %v3903 = vsel %vm517, %v3898, %v3902
        %v3904 = vshrl.u32 %v3314, 16
        %v3906 = vor.u32 %v3904, %v3902
        %v3908 = vshrl.u32 %v3336, 16
        %v3910 = vshll.u32 %v3336, 16
        %v3912 = vrot.slane %v3910, 1
        %v3913 = vor.u32 %v3908, %v3912
        %v3915 = vshll.u32 %v3316, 16
        %v3917 = vrot.slane %v3915, 1
        %v3918 = vsel %vm517, %v3913, %v3917
        %v3919 = vshrl.u32 %v3316, 16
        %v3921 = vor.u32 %v3919, %v3917
        %v3923 = vshrl.u32 %v3337, 16
        %v3925 = vshll.u32 %v3337, 16
        %v3927 = vrot.slane %v3925, 1
        %v3928 = vor.u32 %v3923, %v3927
        %v3930 = vshll.u32 %v3318, 16
        %v3932 = vrot.slane %v3930, 1
        %v3933 = vsel %vm517, %v3928, %v3932
        %v3934 = vshrl.u32 %v3318, 16
        %v3936 = vor.u32 %v3934, %v3932
        %v3938 = vshrl.u32 %v3338, 16
        %v3940 = vshll.u32 %v3338, 16
        %v3942 = vrot.slane %v3940, 1
        %v3943 = vor.u32 %v3938, %v3942
        %v3945 = vshll.u32 %v3320, 16
        %v3947 = vrot.slane %v3945, 1
        %v3948 = vsel %vm517, %v3943, %v3947
        %v3949 = vshrl.u32 %v3320, 16
        %v3951 = vor.u32 %v3949, %v3947
        %v3953 = vshrl.u32 %v3339, 16
        %v3955 = vshll.u32 %v3339, 16
        %v3957 = vrot.slane %v3955, 1
        %v3958 = vor.u32 %v3953, %v3957
        %v3960 = vshll.u32 %v3322, 16
        %v3962 = vrot.slane %v3960, 1
        %v3963 = vsel %vm517, %v3958, %v3962
        %v3964 = vshrl.u32 %v3322, 16
        %v3966 = vor.u32 %v3964, %v3962
        %v3968 = vshrl.u32 %v3340, 16
        %v3970 = vshll.u32 %v3340, 16
        %v3972 = vrot.slane %v3970, 1
        %v3973 = vor.u32 %v3968, %v3972
        %v3975 = vshll.u32 %v3324, 16
        %v3977 = vrot.slane %v3975, 1
        %v3978 = vsel %vm517, %v3973, %v3977
        %v3979 = vshrl.u32 %v3324, 16
        %v3981 = vor.u32 %v3979, %v3977
        %v4014 = vrot.slane %v3325, 1
        %v4015 = vrot.slane %v3341, 1
        %v4016 = vsel %vm752, %v4014, %v4015
        %v4017 = vrot.slane %v3326, 1
        %v4018 = vrot.slane %v3342, 1
        %v4019 = vsel %vm752, %v4017, %v4018
        %v4020 = vrot.slane %v3327, 1
        %v4021 = vrot.slane %v3343, 1
        %v4022 = vsel %vm752, %v4020, %v4021
        %v4023 = vrot.slane %v3328, 1
        %v4024 = vrot.slane %v3344, 1
        %v4025 = vsel %vm752, %v4023, %v4024
        %v4026 = vrot.slane %v3329, 1
        %v4027 = vrot.slane %v3345, 1
        %v4028 = vsel %vm752, %v4026, %v4027
        %v4029 = vrot.slane %v3330, 1
        %v4030 = vrot.slane %v3346, 1
        %v4031 = vsel %vm752, %v4029, %v4030
        %v4032 = vrot.slane %v3331, 1
        %v4033 = vrot.slane %v3347, 1
        %v4034 = vsel %vm752, %v4032, %v4033
        %v4035 = vrot.slane %v3332, 1
        %v4036 = vrot.slane %v3348, 1
        %v4037 = vsel %vm752, %v4035, %v4036
        %v4038 = vrot.slane %v3333, 1
        %v4039 = vrot.slane %v3349, 1
        %v4040 = vsel %vm752, %v4038, %v4039
        %v4041 = vrot.slane %v3334, 1
        %v4042 = vrot.slane %v3350, 1
        %v4043 = vsel %vm752, %v4041, %v4042
        %v4044 = vrot.slane %v3335, 1
        %v4045 = vrot.slane %v3351, 1
        %v4046 = vsel %vm752, %v4044, %v4045
        %v4047 = vrot.slane %v3336, 1
        %v4048 = vrot.slane %v3352, 1
        %v4049 = vsel %vm752, %v4047, %v4048
        %v4050 = vrot.slane %v3337, 1
        %v4051 = vrot.slane %v3353, 1
        %v4052 = vsel %vm752, %v4050, %v4051
        %v4053 = vrot.slane %v3338, 1
        %v4054 = vrot.slane %v3354, 1
        %v4055 = vsel %vm752, %v4053, %v4054
        %v4056 = vrot.slane %v3339, 1
        %v4057 = vrot.slane %v3355, 1
        %v4058 = vsel %vm752, %v4056, %v4057
        %v4059 = vrot.slane %v3340, 1
        %v4060 = vrot.slane %v3356, 1
        %v4061 = vsel %vm752, %v4059, %v4060
        %v4063 = vshrl.u32 %v3390, 16
        %v4065 = vshll.u32 %v3390, 16
        %v4067 = vrot.slane %v4065, 1
        %v4068 = vor.u32 %v4063, %v4067
        %v4070 = vshll.u32 %v3359, 16
        %v4072 = vrot.slane %v4070, 1
        %v4073 = vsel %vm517, %v4068, %v4072
        %v4074 = vshrl.u32 %v3359, 16
        %v4076 = vor.u32 %v4074, %v4072
        %v4078 = vshrl.u32 %v3391, 16
        %v4080 = vshll.u32 %v3391, 16
        %v4082 = vrot.slane %v4080, 1
        %v4083 = vor.u32 %v4078, %v4082
        %v4085 = vshll.u32 %v3361, 16
        %v4087 = vrot.slane %v4085, 1
        %v4088 = vsel %vm517, %v4083, %v4087
        %v4089 = vshrl.u32 %v3361, 16
        %v4091 = vor.u32 %v4089, %v4087
        %v4093 = vshrl.u32 %v3392, 16
        %v4095 = vshll.u32 %v3392, 16
        %v4097 = vrot.slane %v4095, 1
        %v4098 = vor.u32 %v4093, %v4097
        %v4100 = vshll.u32 %v3363, 16
        %v4102 = vrot.slane %v4100, 1
        %v4103 = vsel %vm517, %v4098, %v4102
        %v4104 = vshrl.u32 %v3363, 16
        %v4106 = vor.u32 %v4104, %v4102
        %v4108 = vshrl.u32 %v3393, 16
        %v4110 = vshll.u32 %v3393, 16
        %v4112 = vrot.slane %v4110, 1
        %v4113 = vor.u32 %v4108, %v4112
        %v4115 = vshll.u32 %v3365, 16
        %v4117 = vrot.slane %v4115, 1
        %v4118 = vsel %vm517, %v4113, %v4117
        %v4119 = vshrl.u32 %v3365, 16
        %v4121 = vor.u32 %v4119, %v4117
        %v4123 = vshrl.u32 %v3394, 16
        %v4125 = vshll.u32 %v3394, 16
        %v4127 = vrot.slane %v4125, 1
        %v4128 = vor.u32 %v4123, %v4127
        %v4130 = vshll.u32 %v3367, 16
        %v4132 = vrot.slane %v4130, 1
        %v4133 = vsel %vm517, %v4128, %v4132
        %v4134 = vshrl.u32 %v3367, 16
        %v4136 = vor.u32 %v4134, %v4132
        %v4138 = vshrl.u32 %v3395, 16
        %v4140 = vshll.u32 %v3395, 16
        %v4142 = vrot.slane %v4140, 1
        %v4143 = vor.u32 %v4138, %v4142
        %v4145 = vshll.u32 %v3369, 16
        %v4147 = vrot.slane %v4145, 1
        %v4148 = vsel %vm517, %v4143, %v4147
        %v4149 = vshrl.u32 %v3369, 16
        %v4151 = vor.u32 %v4149, %v4147
        %v4153 = vshrl.u32 %v3396, 16
        %v4155 = vshll.u32 %v3396, 16
        %v4157 = vrot.slane %v4155, 1
        %v4158 = vor.u32 %v4153, %v4157
        %v4160 = vshll.u32 %v3371, 16
        %v4162 = vrot.slane %v4160, 1
        %v4163 = vsel %vm517, %v4158, %v4162
        %v4164 = vshrl.u32 %v3371, 16
        %v4166 = vor.u32 %v4164, %v4162
        %v4168 = vshrl.u32 %v3397, 16
        %v4170 = vshll.u32 %v3397, 16
        %v4172 = vrot.slane %v4170, 1
        %v4173 = vor.u32 %v4168, %v4172
        %v4175 = vshll.u32 %v3373, 16
        %v4177 = vrot.slane %v4175, 1
        %v4178 = vsel %vm517, %v4173, %v4177
        %v4179 = vshrl.u32 %v3373, 16
        %v4181 = vor.u32 %v4179, %v4177
        %v4183 = vshrl.u32 %v3398, 16
        %v4185 = vshll.u32 %v3398, 16
        %v4187 = vrot.slane %v4185, 1
        %v4188 = vor.u32 %v4183, %v4187
        %v4190 = vshll.u32 %v3375, 16
        %v4192 = vrot.slane %v4190, 1
        %v4193 = vsel %vm517, %v4188, %v4192
        %v4194 = vshrl.u32 %v3375, 16
        %v4196 = vor.u32 %v4194, %v4192
        %v4198 = vshrl.u32 %v3399, 16
        %v4200 = vshll.u32 %v3399, 16
        %v4202 = vrot.slane %v4200, 1
        %v4203 = vor.u32 %v4198, %v4202
        %v4205 = vshll.u32 %v3377, 16
        %v4207 = vrot.slane %v4205, 1
        %v4208 = vsel %vm517, %v4203, %v4207
        %v4209 = vshrl.u32 %v3377, 16
        %v4211 = vor.u32 %v4209, %v4207
        %v4213 = vshrl.u32 %v3400, 16
        %v4215 = vshll.u32 %v3400, 16
        %v4217 = vrot.slane %v4215, 1
        %v4218 = vor.u32 %v4213, %v4217
        %v4220 = vshll.u32 %v3379, 16
        %v4222 = vrot.slane %v4220, 1
        %v4223 = vsel %vm517, %v4218, %v4222
        %v4224 = vshrl.u32 %v3379, 16
        %v4226 = vor.u32 %v4224, %v4222
        %v4228 = vshrl.u32 %v3401, 16
        %v4230 = vshll.u32 %v3401, 16
        %v4232 = vrot.slane %v4230, 1
        %v4233 = vor.u32 %v4228, %v4232
        %v4235 = vshll.u32 %v3381, 16
        %v4237 = vrot.slane %v4235, 1
        %v4238 = vsel %vm517, %v4233, %v4237
        %v4239 = vshrl.u32 %v3381, 16
        %v4241 = vor.u32 %v4239, %v4237
        %v4243 = vshrl.u32 %v3402, 16
        %v4245 = vshll.u32 %v3402, 16
        %v4247 = vrot.slane %v4245, 1
        %v4248 = vor.u32 %v4243, %v4247
        %v4250 = vshll.u32 %v3383, 16
        %v4252 = vrot.slane %v4250, 1
        %v4253 = vsel %vm517, %v4248, %v4252
        %v4254 = vshrl.u32 %v3383, 16
        %v4256 = vor.u32 %v4254, %v4252
        %v4258 = vshrl.u32 %v3403, 16
        %v4260 = vshll.u32 %v3403, 16
        %v4262 = vrot.slane %v4260, 1
        %v4263 = vor.u32 %v4258, %v4262
        %v4265 = vshll.u32 %v3385, 16
        %v4267 = vrot.slane %v4265, 1
        %v4268 = vsel %vm517, %v4263, %v4267
        %v4269 = vshrl.u32 %v3385, 16
        %v4271 = vor.u32 %v4269, %v4267
        %v4273 = vshrl.u32 %v3404, 16
        %v4275 = vshll.u32 %v3404, 16
        %v4277 = vrot.slane %v4275, 1
        %v4278 = vor.u32 %v4273, %v4277
        %v4280 = vshll.u32 %v3387, 16
        %v4282 = vrot.slane %v4280, 1
        %v4283 = vsel %vm517, %v4278, %v4282
        %v4284 = vshrl.u32 %v3387, 16
        %v4286 = vor.u32 %v4284, %v4282
        %v4288 = vshrl.u32 %v3405, 16
        %v4290 = vshll.u32 %v3405, 16
        %v4292 = vrot.slane %v4290, 1
        %v4293 = vor.u32 %v4288, %v4292
        %v4295 = vshll.u32 %v3389, 16
        %v4297 = vrot.slane %v4295, 1
        %v4298 = vsel %vm517, %v4293, %v4297
        %v4299 = vshrl.u32 %v3389, 16
        %v4301 = vor.u32 %v4299, %v4297
        %v4334 = vrot.slane %v3390, 1
        %v4335 = vrot.slane %v3406, 1
        %v4336 = vsel %vm752, %v4334, %v4335
        %v4337 = vrot.slane %v3391, 1
        %v4338 = vrot.slane %v3407, 1
        %v4339 = vsel %vm752, %v4337, %v4338
        %v4340 = vrot.slane %v3392, 1
        %v4341 = vrot.slane %v3408, 1
        %v4342 = vsel %vm752, %v4340, %v4341
        %v4343 = vrot.slane %v3393, 1
        %v4344 = vrot.slane %v3409, 1
        %v4345 = vsel %vm752, %v4343, %v4344
        %v4346 = vrot.slane %v3394, 1
        %v4347 = vrot.slane %v3410, 1
        %v4348 = vsel %vm752, %v4346, %v4347
        %v4349 = vrot.slane %v3395, 1
        %v4350 = vrot.slane %v3411, 1
        %v4351 = vsel %vm752, %v4349, %v4350
        %v4352 = vrot.slane %v3396, 1
        %v4353 = vrot.slane %v3412, 1
        %v4354 = vsel %vm752, %v4352, %v4353
        %v4355 = vrot.slane %v3397, 1
        %v4356 = vrot.slane %v3413, 1
        %v4357 = vsel %vm752, %v4355, %v4356
        %v4358 = vrot.slane %v3398, 1
        %v4359 = vrot.slane %v3414, 1
        %v4360 = vsel %vm752, %v4358, %v4359
        %v4361 = vrot.slane %v3399, 1
        %v4362 = vrot.slane %v3415, 1
        %v4363 = vsel %vm752, %v4361, %v4362
        %v4364 = vrot.slane %v3400, 1
        %v4365 = vrot.slane %v3416, 1
        %v4366 = vsel %vm752, %v4364, %v4365
        %v4367 = vrot.slane %v3401, 1
        %v4368 = vrot.slane %v3417, 1
        %v4369 = vsel %vm752, %v4367, %v4368
        %v4370 = vrot.slane %v3402, 1
        %v4371 = vrot.slane %v3418, 1
        %v4372 = vsel %vm752, %v4370, %v4371
        %v4373 = vrot.slane %v3403, 1
        %v4374 = vrot.slane %v3419, 1
        %v4375 = vsel %vm752, %v4373, %v4374
        %v4376 = vrot.slane %v3404, 1
        %v4377 = vrot.slane %v3420, 1
        %v4378 = vsel %vm752, %v4376, %v4377
        %v4379 = vrot.slane %v3405, 1
        %v4380 = vrot.slane %v3421, 1
        %v4381 = vsel %vm752, %v4379, %v4380
        %v4383 = vshrl.u32 %v3228, 16
        %v4385 = vrot.slane %v4383, 3
        %v4386 = vshll.u32 %v3228, 16
        %v4388 = vrot.slane %v4386, 4
        %v4389 = vor.u32 %v4385, %v4388
        %v4390 = vrot.slane %v3434, 3
        %v4391 = vrot.slane %v3430, 4
        %v4392 = vor.u32 %v4390, %v4391
        %v4393 = vsel %vm2547, %v4389, %v4392
        %v4395 = vshrl.u32 %v3433, 16
        %v4397 = vrot.slane %v4395, 3
        %v4398 = vshll.u32 %v3433, 16
        %v4400 = vrot.slane %v4398, 4
        %v4401 = vor.u32 %v4397, %v4400
        %v4403 = vshrl.u32 %v3436, 16
        %v4405 = vrot.slane %v4403, 3
        %v4406 = vshll.u32 %v3436, 16
        %v4408 = vrot.slane %v4406, 4
        %v4409 = vor.u32 %v4405, %v4408
        %v4410 = vsel %vm2547, %v4401, %v4409
        %v4412 = vshrl.u32 %v3696, 16
        %v4414 = vrot.slane %v4412, 3
        %v4415 = vshll.u32 %v3696, 16
        %v4417 = vrot.slane %v4415, 4
        %v4418 = vor.u32 %v4414, %v4417
        %v4420 = vshrl.u32 %v3695, 16
        %v4422 = vrot.slane %v4420, 3
        %v4423 = vshll.u32 %v3695, 16
        %v4425 = vrot.slane %v4423, 4
        %v4426 = vor.u32 %v4422, %v4425
        %v4427 = vsel %vm2547, %v4418, %v4426
        %v4429 = vshrl.u32 %v3293, 16
        %v4431 = vrot.slane %v4429, 3
        %v4432 = vshll.u32 %v3293, 16
        %v4434 = vrot.slane %v4432, 4
        %v4435 = vor.u32 %v4431, %v4434
        %v4436 = vrot.slane %v3754, 3
        %v4437 = vrot.slane %v3750, 4
        %v4438 = vor.u32 %v4436, %v4437
        %v4439 = vsel %vm2547, %v4435, %v4438
        %v4441 = vshrl.u32 %v3753, 16
        %v4443 = vrot.slane %v4441, 3
        %v4444 = vshll.u32 %v3753, 16
        %v4446 = vrot.slane %v4444, 4
        %v4447 = vor.u32 %v4443, %v4446
        %v4449 = vshrl.u32 %v3756, 16
        %v4451 = vrot.slane %v4449, 3
        %v4452 = vshll.u32 %v3756, 16
        %v4454 = vrot.slane %v4452, 4
        %v4455 = vor.u32 %v4451, %v4454
        %v4456 = vsel %vm2547, %v4447, %v4455
        %v4458 = vshrl.u32 %v4016, 16
        %v4460 = vrot.slane %v4458, 3
        %v4461 = vshll.u32 %v4016, 16
        %v4463 = vrot.slane %v4461, 4
        %v4464 = vor.u32 %v4460, %v4463
        %v4466 = vshrl.u32 %v4015, 16
        %v4468 = vrot.slane %v4466, 3
        %v4469 = vshll.u32 %v4015, 16
        %v4471 = vrot.slane %v4469, 4
        %v4472 = vor.u32 %v4468, %v4471
        %v4473 = vsel %vm2547, %v4464, %v4472
        %v4475 = vshrl.u32 %v3358, 16
        %v4477 = vrot.slane %v4475, 3
        %v4478 = vshll.u32 %v3358, 16
        %v4480 = vrot.slane %v4478, 4
        %v4481 = vor.u32 %v4477, %v4480
        %v4482 = vrot.slane %v4074, 3
        %v4483 = vrot.slane %v4070, 4
        %v4484 = vor.u32 %v4482, %v4483
        %v4485 = vsel %vm2547, %v4481, %v4484
        %v4487 = vshrl.u32 %v4073, 16
        %v4489 = vrot.slane %v4487, 3
        %v4490 = vshll.u32 %v4073, 16
        %v4492 = vrot.slane %v4490, 4
        %v4493 = vor.u32 %v4489, %v4492
        %v4495 = vshrl.u32 %v4076, 16
        %v4497 = vrot.slane %v4495, 3
        %v4498 = vshll.u32 %v4076, 16
        %v4500 = vrot.slane %v4498, 4
        %v4501 = vor.u32 %v4497, %v4500
        %v4502 = vsel %vm2547, %v4493, %v4501
        %v4504 = vshrl.u32 %v4336, 16
        %v4506 = vrot.slane %v4504, 3
        %v4507 = vshll.u32 %v4336, 16
        %v4509 = vrot.slane %v4507, 4
        %v4510 = vor.u32 %v4506, %v4509
        %v4512 = vshrl.u32 %v4335, 16
        %v4514 = vrot.slane %v4512, 3
        %v4515 = vshll.u32 %v4335, 16
        %v4517 = vrot.slane %v4515, 4
        %v4518 = vor.u32 %v4514, %v4517
        %v4519 = vsel %vm2547, %v4510, %v4518
        %v4521 = vshrl.u32 %v3230, 16
        %v4523 = vrot.slane %v4521, 3
        %v4524 = vshll.u32 %v3230, 16
        %v4526 = vrot.slane %v4524, 4
        %v4527 = vor.u32 %v4523, %v4526
        %v4528 = vrot.slane %v3449, 3
        %v4529 = vrot.slane %v3445, 4
        %v4530 = vor.u32 %v4528, %v4529
        %v4531 = vsel %vm2547, %v4527, %v4530
        %v4533 = vshrl.u32 %v3448, 16
        %v4535 = vrot.slane %v4533, 3
        %v4536 = vshll.u32 %v3448, 16
        %v4538 = vrot.slane %v4536, 4
        %v4539 = vor.u32 %v4535, %v4538
        %v4541 = vshrl.u32 %v3451, 16
        %v4543 = vrot.slane %v4541, 3
        %v4544 = vshll.u32 %v3451, 16
        %v4546 = vrot.slane %v4544, 4
        %v4547 = vor.u32 %v4543, %v4546
        %v4548 = vsel %vm2547, %v4539, %v4547
        %v4550 = vshrl.u32 %v3699, 16
        %v4552 = vrot.slane %v4550, 3
        %v4553 = vshll.u32 %v3699, 16
        %v4555 = vrot.slane %v4553, 4
        %v4556 = vor.u32 %v4552, %v4555
        %v4558 = vshrl.u32 %v3698, 16
        %v4560 = vrot.slane %v4558, 3
        %v4561 = vshll.u32 %v3698, 16
        %v4563 = vrot.slane %v4561, 4
        %v4564 = vor.u32 %v4560, %v4563
        %v4565 = vsel %vm2547, %v4556, %v4564
        %v4567 = vshrl.u32 %v3295, 16
        %v4569 = vrot.slane %v4567, 3
        %v4570 = vshll.u32 %v3295, 16
        %v4572 = vrot.slane %v4570, 4
        %v4573 = vor.u32 %v4569, %v4572
        %v4574 = vrot.slane %v3769, 3
        %v4575 = vrot.slane %v3765, 4
        %v4576 = vor.u32 %v4574, %v4575
        %v4577 = vsel %vm2547, %v4573, %v4576
        %v4579 = vshrl.u32 %v3768, 16
        %v4581 = vrot.slane %v4579, 3
        %v4582 = vshll.u32 %v3768, 16
        %v4584 = vrot.slane %v4582, 4
        %v4585 = vor.u32 %v4581, %v4584
        %v4587 = vshrl.u32 %v3771, 16
        %v4589 = vrot.slane %v4587, 3
        %v4590 = vshll.u32 %v3771, 16
        %v4592 = vrot.slane %v4590, 4
        %v4593 = vor.u32 %v4589, %v4592
        %v4594 = vsel %vm2547, %v4585, %v4593
        %v4596 = vshrl.u32 %v4019, 16
        %v4598 = vrot.slane %v4596, 3
        %v4599 = vshll.u32 %v4019, 16
        %v4601 = vrot.slane %v4599, 4
        %v4602 = vor.u32 %v4598, %v4601
        %v4604 = vshrl.u32 %v4018, 16
        %v4606 = vrot.slane %v4604, 3
        %v4607 = vshll.u32 %v4018, 16
        %v4609 = vrot.slane %v4607, 4
        %v4610 = vor.u32 %v4606, %v4609
        %v4611 = vsel %vm2547, %v4602, %v4610
        %v4613 = vshrl.u32 %v3360, 16
        %v4615 = vrot.slane %v4613, 3
        %v4616 = vshll.u32 %v3360, 16
        %v4618 = vrot.slane %v4616, 4
        %v4619 = vor.u32 %v4615, %v4618
        %v4620 = vrot.slane %v4089, 3
        %v4621 = vrot.slane %v4085, 4
        %v4622 = vor.u32 %v4620, %v4621
        %v4623 = vsel %vm2547, %v4619, %v4622
        %v4625 = vshrl.u32 %v4088, 16
        %v4627 = vrot.slane %v4625, 3
        %v4628 = vshll.u32 %v4088, 16
        %v4630 = vrot.slane %v4628, 4
        %v4631 = vor.u32 %v4627, %v4630
        %v4633 = vshrl.u32 %v4091, 16
        %v4635 = vrot.slane %v4633, 3
        %v4636 = vshll.u32 %v4091, 16
        %v4638 = vrot.slane %v4636, 4
        %v4639 = vor.u32 %v4635, %v4638
        %v4640 = vsel %vm2547, %v4631, %v4639
        %v4642 = vshrl.u32 %v4339, 16
        %v4644 = vrot.slane %v4642, 3
        %v4645 = vshll.u32 %v4339, 16
        %v4647 = vrot.slane %v4645, 4
        %v4648 = vor.u32 %v4644, %v4647
        %v4650 = vshrl.u32 %v4338, 16
        %v4652 = vrot.slane %v4650, 3
        %v4653 = vshll.u32 %v4338, 16
        %v4655 = vrot.slane %v4653, 4
        %v4656 = vor.u32 %v4652, %v4655
        %v4657 = vsel %vm2547, %v4648, %v4656
        %v4659 = vshrl.u32 %v3232, 16
        %v4661 = vrot.slane %v4659, 3
        %v4662 = vshll.u32 %v3232, 16
        %v4664 = vrot.slane %v4662, 4
        %v4665 = vor.u32 %v4661, %v4664
        %v4666 = vrot.slane %v3464, 3
        %v4667 = vrot.slane %v3460, 4
        %v4668 = vor.u32 %v4666, %v4667
        %v4669 = vsel %vm2547, %v4665, %v4668
        %v4671 = vshrl.u32 %v3463, 16
        %v4673 = vrot.slane %v4671, 3
        %v4674 = vshll.u32 %v3463, 16
        %v4676 = vrot.slane %v4674, 4
        %v4677 = vor.u32 %v4673, %v4676
        %v4679 = vshrl.u32 %v3466, 16
        %v4681 = vrot.slane %v4679, 3
        %v4682 = vshll.u32 %v3466, 16
        %v4684 = vrot.slane %v4682, 4
        %v4685 = vor.u32 %v4681, %v4684
        %v4686 = vsel %vm2547, %v4677, %v4685
        %v4688 = vshrl.u32 %v3702, 16
        %v4690 = vrot.slane %v4688, 3
        %v4691 = vshll.u32 %v3702, 16
        %v4693 = vrot.slane %v4691, 4
        %v4694 = vor.u32 %v4690, %v4693
        %v4696 = vshrl.u32 %v3701, 16
        %v4698 = vrot.slane %v4696, 3
        %v4699 = vshll.u32 %v3701, 16
        %v4701 = vrot.slane %v4699, 4
        %v4702 = vor.u32 %v4698, %v4701
        %v4703 = vsel %vm2547, %v4694, %v4702
        %v4705 = vshrl.u32 %v3297, 16
        %v4707 = vrot.slane %v4705, 3
        %v4708 = vshll.u32 %v3297, 16
        %v4710 = vrot.slane %v4708, 4
        %v4711 = vor.u32 %v4707, %v4710
        %v4712 = vrot.slane %v3784, 3
        %v4713 = vrot.slane %v3780, 4
        %v4714 = vor.u32 %v4712, %v4713
        %v4715 = vsel %vm2547, %v4711, %v4714
        %v4717 = vshrl.u32 %v3783, 16
        %v4719 = vrot.slane %v4717, 3
        %v4720 = vshll.u32 %v3783, 16
        %v4722 = vrot.slane %v4720, 4
        %v4723 = vor.u32 %v4719, %v4722
        %v4725 = vshrl.u32 %v3786, 16
        %v4727 = vrot.slane %v4725, 3
        %v4728 = vshll.u32 %v3786, 16
        %v4730 = vrot.slane %v4728, 4
        %v4731 = vor.u32 %v4727, %v4730
        %v4732 = vsel %vm2547, %v4723, %v4731
        %v4734 = vshrl.u32 %v4022, 16
        %v4736 = vrot.slane %v4734, 3
        %v4737 = vshll.u32 %v4022, 16
        %v4739 = vrot.slane %v4737, 4
        %v4740 = vor.u32 %v4736, %v4739
        %v4742 = vshrl.u32 %v4021, 16
        %v4744 = vrot.slane %v4742, 3
        %v4745 = vshll.u32 %v4021, 16
        %v4747 = vrot.slane %v4745, 4
        %v4748 = vor.u32 %v4744, %v4747
        %v4749 = vsel %vm2547, %v4740, %v4748
        %v4751 = vshrl.u32 %v3362, 16
        %v4753 = vrot.slane %v4751, 3
        %v4754 = vshll.u32 %v3362, 16
        %v4756 = vrot.slane %v4754, 4
        %v4757 = vor.u32 %v4753, %v4756
        %v4758 = vrot.slane %v4104, 3
        %v4759 = vrot.slane %v4100, 4
        %v4760 = vor.u32 %v4758, %v4759
        %v4761 = vsel %vm2547, %v4757, %v4760
        %v4763 = vshrl.u32 %v4103, 16
        %v4765 = vrot.slane %v4763, 3
        %v4766 = vshll.u32 %v4103, 16
        %v4768 = vrot.slane %v4766, 4
        %v4769 = vor.u32 %v4765, %v4768
        %v4771 = vshrl.u32 %v4106, 16
        %v4773 = vrot.slane %v4771, 3
        %v4774 = vshll.u32 %v4106, 16
        %v4776 = vrot.slane %v4774, 4
        %v4777 = vor.u32 %v4773, %v4776
        %v4778 = vsel %vm2547, %v4769, %v4777
        %v4780 = vshrl.u32 %v4342, 16
        %v4782 = vrot.slane %v4780, 3
        %v4783 = vshll.u32 %v4342, 16
        %v4785 = vrot.slane %v4783, 4
        %v4786 = vor.u32 %v4782, %v4785
        %v4788 = vshrl.u32 %v4341, 16
        %v4790 = vrot.slane %v4788, 3
        %v4791 = vshll.u32 %v4341, 16
        %v4793 = vrot.slane %v4791, 4
        %v4794 = vor.u32 %v4790, %v4793
        %v4795 = vsel %vm2547, %v4786, %v4794
        %v4797 = vshrl.u32 %v3234, 16
        %v4799 = vrot.slane %v4797, 3
        %v4800 = vshll.u32 %v3234, 16
        %v4802 = vrot.slane %v4800, 4
        %v4803 = vor.u32 %v4799, %v4802
        %v4804 = vrot.slane %v3479, 3
        %v4805 = vrot.slane %v3475, 4
        %v4806 = vor.u32 %v4804, %v4805
        %v4807 = vsel %vm2547, %v4803, %v4806
        %v4809 = vshrl.u32 %v3478, 16
        %v4811 = vrot.slane %v4809, 3
        %v4812 = vshll.u32 %v3478, 16
        %v4814 = vrot.slane %v4812, 4
        %v4815 = vor.u32 %v4811, %v4814
        %v4817 = vshrl.u32 %v3481, 16
        %v4819 = vrot.slane %v4817, 3
        %v4820 = vshll.u32 %v3481, 16
        %v4822 = vrot.slane %v4820, 4
        %v4823 = vor.u32 %v4819, %v4822
        %v4824 = vsel %vm2547, %v4815, %v4823
        %v4826 = vshrl.u32 %v3705, 16
        %v4828 = vrot.slane %v4826, 3
        %v4829 = vshll.u32 %v3705, 16
        %v4831 = vrot.slane %v4829, 4
        %v4832 = vor.u32 %v4828, %v4831
        %v4834 = vshrl.u32 %v3704, 16
        %v4836 = vrot.slane %v4834, 3
        %v4837 = vshll.u32 %v3704, 16
        %v4839 = vrot.slane %v4837, 4
        %v4840 = vor.u32 %v4836, %v4839
        %v4841 = vsel %vm2547, %v4832, %v4840
        %v4843 = vshrl.u32 %v3299, 16
        %v4845 = vrot.slane %v4843, 3
        %v4846 = vshll.u32 %v3299, 16
        %v4848 = vrot.slane %v4846, 4
        %v4849 = vor.u32 %v4845, %v4848
        %v4850 = vrot.slane %v3799, 3
        %v4851 = vrot.slane %v3795, 4
        %v4852 = vor.u32 %v4850, %v4851
        %v4853 = vsel %vm2547, %v4849, %v4852
        %v4855 = vshrl.u32 %v3798, 16
        %v4857 = vrot.slane %v4855, 3
        %v4858 = vshll.u32 %v3798, 16
        %v4860 = vrot.slane %v4858, 4
        %v4861 = vor.u32 %v4857, %v4860
        %v4863 = vshrl.u32 %v3801, 16
        %v4865 = vrot.slane %v4863, 3
        %v4866 = vshll.u32 %v3801, 16
        %v4868 = vrot.slane %v4866, 4
        %v4869 = vor.u32 %v4865, %v4868
        %v4870 = vsel %vm2547, %v4861, %v4869
        %v4872 = vshrl.u32 %v4025, 16
        %v4874 = vrot.slane %v4872, 3
        %v4875 = vshll.u32 %v4025, 16
        %v4877 = vrot.slane %v4875, 4
        %v4878 = vor.u32 %v4874, %v4877
        %v4880 = vshrl.u32 %v4024, 16
        %v4882 = vrot.slane %v4880, 3
        %v4883 = vshll.u32 %v4024, 16
        %v4885 = vrot.slane %v4883, 4
        %v4886 = vor.u32 %v4882, %v4885
        %v4887 = vsel %vm2547, %v4878, %v4886
        %v4889 = vshrl.u32 %v3364, 16
        %v4891 = vrot.slane %v4889, 3
        %v4892 = vshll.u32 %v3364, 16
        %v4894 = vrot.slane %v4892, 4
        %v4895 = vor.u32 %v4891, %v4894
        %v4896 = vrot.slane %v4119, 3
        %v4897 = vrot.slane %v4115, 4
        %v4898 = vor.u32 %v4896, %v4897
        %v4899 = vsel %vm2547, %v4895, %v4898
        %v4901 = vshrl.u32 %v4118, 16
        %v4903 = vrot.slane %v4901, 3
        %v4904 = vshll.u32 %v4118, 16
        %v4906 = vrot.slane %v4904, 4
        %v4907 = vor.u32 %v4903, %v4906
        %v4909 = vshrl.u32 %v4121, 16
        %v4911 = vrot.slane %v4909, 3
        %v4912 = vshll.u32 %v4121, 16
        %v4914 = vrot.slane %v4912, 4
        %v4915 = vor.u32 %v4911, %v4914
        %v4916 = vsel %vm2547, %v4907, %v4915
        %v4918 = vshrl.u32 %v4345, 16
        %v4920 = vrot.slane %v4918, 3
        %v4921 = vshll.u32 %v4345, 16
        %v4923 = vrot.slane %v4921, 4
        %v4924 = vor.u32 %v4920, %v4923
        %v4926 = vshrl.u32 %v4344, 16
        %v4928 = vrot.slane %v4926, 3
        %v4929 = vshll.u32 %v4344, 16
        %v4931 = vrot.slane %v4929, 4
        %v4932 = vor.u32 %v4928, %v4931
        %v4933 = vsel %vm2547, %v4924, %v4932
        %v4935 = vshrl.u32 %v3236, 16
        %v4937 = vrot.slane %v4935, 3
        %v4938 = vshll.u32 %v3236, 16
        %v4940 = vrot.slane %v4938, 4
        %v4941 = vor.u32 %v4937, %v4940
        %v4942 = vrot.slane %v3494, 3
        %v4943 = vrot.slane %v3490, 4
        %v4944 = vor.u32 %v4942, %v4943
        %v4945 = vsel %vm2547, %v4941, %v4944
        %v4947 = vshrl.u32 %v3493, 16
        %v4949 = vrot.slane %v4947, 3
        %v4950 = vshll.u32 %v3493, 16
        %v4952 = vrot.slane %v4950, 4
        %v4953 = vor.u32 %v4949, %v4952
        %v4955 = vshrl.u32 %v3496, 16
        %v4957 = vrot.slane %v4955, 3
        %v4958 = vshll.u32 %v3496, 16
        %v4960 = vrot.slane %v4958, 4
        %v4961 = vor.u32 %v4957, %v4960
        %v4962 = vsel %vm2547, %v4953, %v4961
        %v4964 = vshrl.u32 %v3708, 16
        %v4966 = vrot.slane %v4964, 3
        %v4967 = vshll.u32 %v3708, 16
        %v4969 = vrot.slane %v4967, 4
        %v4970 = vor.u32 %v4966, %v4969
        %v4972 = vshrl.u32 %v3707, 16
        %v4974 = vrot.slane %v4972, 3
        %v4975 = vshll.u32 %v3707, 16
        %v4977 = vrot.slane %v4975, 4
        %v4978 = vor.u32 %v4974, %v4977
        %v4979 = vsel %vm2547, %v4970, %v4978
        %v4981 = vshrl.u32 %v3301, 16
        %v4983 = vrot.slane %v4981, 3
        %v4984 = vshll.u32 %v3301, 16
        %v4986 = vrot.slane %v4984, 4
        %v4987 = vor.u32 %v4983, %v4986
        %v4988 = vrot.slane %v3814, 3
        %v4989 = vrot.slane %v3810, 4
        %v4990 = vor.u32 %v4988, %v4989
        %v4991 = vsel %vm2547, %v4987, %v4990
        %v4993 = vshrl.u32 %v3813, 16
        %v4995 = vrot.slane %v4993, 3
        %v4996 = vshll.u32 %v3813, 16
        %v4998 = vrot.slane %v4996, 4
        %v4999 = vor.u32 %v4995, %v4998
        %v5001 = vshrl.u32 %v3816, 16
        %v5003 = vrot.slane %v5001, 3
        %v5004 = vshll.u32 %v3816, 16
        %v5006 = vrot.slane %v5004, 4
        %v5007 = vor.u32 %v5003, %v5006
        %v5008 = vsel %vm2547, %v4999, %v5007
        %v5010 = vshrl.u32 %v4028, 16
        %v5012 = vrot.slane %v5010, 3
        %v5013 = vshll.u32 %v4028, 16
        %v5015 = vrot.slane %v5013, 4
        %v5016 = vor.u32 %v5012, %v5015
        %v5018 = vshrl.u32 %v4027, 16
        %v5020 = vrot.slane %v5018, 3
        %v5021 = vshll.u32 %v4027, 16
        %v5023 = vrot.slane %v5021, 4
        %v5024 = vor.u32 %v5020, %v5023
        %v5025 = vsel %vm2547, %v5016, %v5024
        %v5027 = vshrl.u32 %v3366, 16
        %v5029 = vrot.slane %v5027, 3
        %v5030 = vshll.u32 %v3366, 16
        %v5032 = vrot.slane %v5030, 4
        %v5033 = vor.u32 %v5029, %v5032
        %v5034 = vrot.slane %v4134, 3
        %v5035 = vrot.slane %v4130, 4
        %v5036 = vor.u32 %v5034, %v5035
        %v5037 = vsel %vm2547, %v5033, %v5036
        %v5039 = vshrl.u32 %v4133, 16
        %v5041 = vrot.slane %v5039, 3
        %v5042 = vshll.u32 %v4133, 16
        %v5044 = vrot.slane %v5042, 4
        %v5045 = vor.u32 %v5041, %v5044
        %v5047 = vshrl.u32 %v4136, 16
        %v5049 = vrot.slane %v5047, 3
        %v5050 = vshll.u32 %v4136, 16
        %v5052 = vrot.slane %v5050, 4
        %v5053 = vor.u32 %v5049, %v5052
        %v5054 = vsel %vm2547, %v5045, %v5053
        %v5056 = vshrl.u32 %v4348, 16
        %v5058 = vrot.slane %v5056, 3
        %v5059 = vshll.u32 %v4348, 16
        %v5061 = vrot.slane %v5059, 4
        %v5062 = vor.u32 %v5058, %v5061
        %v5064 = vshrl.u32 %v4347, 16
        %v5066 = vrot.slane %v5064, 3
        %v5067 = vshll.u32 %v4347, 16
        %v5069 = vrot.slane %v5067, 4
        %v5070 = vor.u32 %v5066, %v5069
        %v5071 = vsel %vm2547, %v5062, %v5070
        %v5073 = vshrl.u32 %v3238, 16
        %v5075 = vrot.slane %v5073, 3
        %v5076 = vshll.u32 %v3238, 16
        %v5078 = vrot.slane %v5076, 4
        %v5079 = vor.u32 %v5075, %v5078
        %v5080 = vrot.slane %v3509, 3
        %v5081 = vrot.slane %v3505, 4
        %v5082 = vor.u32 %v5080, %v5081
        %v5083 = vsel %vm2547, %v5079, %v5082
        %v5085 = vshrl.u32 %v3508, 16
        %v5087 = vrot.slane %v5085, 3
        %v5088 = vshll.u32 %v3508, 16
        %v5090 = vrot.slane %v5088, 4
        %v5091 = vor.u32 %v5087, %v5090
        %v5093 = vshrl.u32 %v3511, 16
        %v5095 = vrot.slane %v5093, 3
        %v5096 = vshll.u32 %v3511, 16
        %v5098 = vrot.slane %v5096, 4
        %v5099 = vor.u32 %v5095, %v5098
        %v5100 = vsel %vm2547, %v5091, %v5099
        %v5102 = vshrl.u32 %v3711, 16
        %v5104 = vrot.slane %v5102, 3
        %v5105 = vshll.u32 %v3711, 16
        %v5107 = vrot.slane %v5105, 4
        %v5108 = vor.u32 %v5104, %v5107
        %v5110 = vshrl.u32 %v3710, 16
        %v5112 = vrot.slane %v5110, 3
        %v5113 = vshll.u32 %v3710, 16
        %v5115 = vrot.slane %v5113, 4
        %v5116 = vor.u32 %v5112, %v5115
        %v5117 = vsel %vm2547, %v5108, %v5116
        %v5119 = vshrl.u32 %v3303, 16
        %v5121 = vrot.slane %v5119, 3
        %v5122 = vshll.u32 %v3303, 16
        %v5124 = vrot.slane %v5122, 4
        %v5125 = vor.u32 %v5121, %v5124
        %v5126 = vrot.slane %v3829, 3
        %v5127 = vrot.slane %v3825, 4
        %v5128 = vor.u32 %v5126, %v5127
        %v5129 = vsel %vm2547, %v5125, %v5128
        %v5131 = vshrl.u32 %v3828, 16
        %v5133 = vrot.slane %v5131, 3
        %v5134 = vshll.u32 %v3828, 16
        %v5136 = vrot.slane %v5134, 4
        %v5137 = vor.u32 %v5133, %v5136
        %v5139 = vshrl.u32 %v3831, 16
        %v5141 = vrot.slane %v5139, 3
        %v5142 = vshll.u32 %v3831, 16
        %v5144 = vrot.slane %v5142, 4
        %v5145 = vor.u32 %v5141, %v5144
        %v5146 = vsel %vm2547, %v5137, %v5145
        %v5148 = vshrl.u32 %v4031, 16
        %v5150 = vrot.slane %v5148, 3
        %v5151 = vshll.u32 %v4031, 16
        %v5153 = vrot.slane %v5151, 4
        %v5154 = vor.u32 %v5150, %v5153
        %v5156 = vshrl.u32 %v4030, 16
        %v5158 = vrot.slane %v5156, 3
        %v5159 = vshll.u32 %v4030, 16
        %v5161 = vrot.slane %v5159, 4
        %v5162 = vor.u32 %v5158, %v5161
        %v5163 = vsel %vm2547, %v5154, %v5162
        %v5165 = vshrl.u32 %v3368, 16
        %v5167 = vrot.slane %v5165, 3
        %v5168 = vshll.u32 %v3368, 16
        %v5170 = vrot.slane %v5168, 4
        %v5171 = vor.u32 %v5167, %v5170
        %v5172 = vrot.slane %v4149, 3
        %v5173 = vrot.slane %v4145, 4
        %v5174 = vor.u32 %v5172, %v5173
        %v5175 = vsel %vm2547, %v5171, %v5174
        %v5177 = vshrl.u32 %v4148, 16
        %v5179 = vrot.slane %v5177, 3
        %v5180 = vshll.u32 %v4148, 16
        %v5182 = vrot.slane %v5180, 4
        %v5183 = vor.u32 %v5179, %v5182
        %v5185 = vshrl.u32 %v4151, 16
        %v5187 = vrot.slane %v5185, 3
        %v5188 = vshll.u32 %v4151, 16
        %v5190 = vrot.slane %v5188, 4
        %v5191 = vor.u32 %v5187, %v5190
        %v5192 = vsel %vm2547, %v5183, %v5191
        %v5194 = vshrl.u32 %v4351, 16
        %v5196 = vrot.slane %v5194, 3
        %v5197 = vshll.u32 %v4351, 16
        %v5199 = vrot.slane %v5197, 4
        %v5200 = vor.u32 %v5196, %v5199
        %v5202 = vshrl.u32 %v4350, 16
        %v5204 = vrot.slane %v5202, 3
        %v5205 = vshll.u32 %v4350, 16
        %v5207 = vrot.slane %v5205, 4
        %v5208 = vor.u32 %v5204, %v5207
        %v5209 = vsel %vm2547, %v5200, %v5208
        %v5211 = vshrl.u32 %v3240, 16
        %v5213 = vrot.slane %v5211, 3
        %v5214 = vshll.u32 %v3240, 16
        %v5216 = vrot.slane %v5214, 4
        %v5217 = vor.u32 %v5213, %v5216
        %v5218 = vrot.slane %v3524, 3
        %v5219 = vrot.slane %v3520, 4
        %v5220 = vor.u32 %v5218, %v5219
        %v5221 = vsel %vm2547, %v5217, %v5220
        %v5223 = vshrl.u32 %v3523, 16
        %v5225 = vrot.slane %v5223, 3
        %v5226 = vshll.u32 %v3523, 16
        %v5228 = vrot.slane %v5226, 4
        %v5229 = vor.u32 %v5225, %v5228
        %v5231 = vshrl.u32 %v3526, 16
        %v5233 = vrot.slane %v5231, 3
        %v5234 = vshll.u32 %v3526, 16
        %v5236 = vrot.slane %v5234, 4
        %v5237 = vor.u32 %v5233, %v5236
        %v5238 = vsel %vm2547, %v5229, %v5237
        %v5240 = vshrl.u32 %v3714, 16
        %v5242 = vrot.slane %v5240, 3
        %v5243 = vshll.u32 %v3714, 16
        %v5245 = vrot.slane %v5243, 4
        %v5246 = vor.u32 %v5242, %v5245
        %v5248 = vshrl.u32 %v3713, 16
        %v5250 = vrot.slane %v5248, 3
        %v5251 = vshll.u32 %v3713, 16
        %v5253 = vrot.slane %v5251, 4
        %v5254 = vor.u32 %v5250, %v5253
        %v5255 = vsel %vm2547, %v5246, %v5254
        %v5257 = vshrl.u32 %v3305, 16
        %v5259 = vrot.slane %v5257, 3
        %v5260 = vshll.u32 %v3305, 16
        %v5262 = vrot.slane %v5260, 4
        %v5263 = vor.u32 %v5259, %v5262
        %v5264 = vrot.slane %v3844, 3
        %v5265 = vrot.slane %v3840, 4
        %v5266 = vor.u32 %v5264, %v5265
        %v5267 = vsel %vm2547, %v5263, %v5266
        %v5269 = vshrl.u32 %v3843, 16
        %v5271 = vrot.slane %v5269, 3
        %v5272 = vshll.u32 %v3843, 16
        %v5274 = vrot.slane %v5272, 4
        %v5275 = vor.u32 %v5271, %v5274
        %v5277 = vshrl.u32 %v3846, 16
        %v5279 = vrot.slane %v5277, 3
        %v5280 = vshll.u32 %v3846, 16
        %v5282 = vrot.slane %v5280, 4
        %v5283 = vor.u32 %v5279, %v5282
        %v5284 = vsel %vm2547, %v5275, %v5283
        %v5286 = vshrl.u32 %v4034, 16
        %v5288 = vrot.slane %v5286, 3
        %v5289 = vshll.u32 %v4034, 16
        %v5291 = vrot.slane %v5289, 4
        %v5292 = vor.u32 %v5288, %v5291
        %v5294 = vshrl.u32 %v4033, 16
        %v5296 = vrot.slane %v5294, 3
        %v5297 = vshll.u32 %v4033, 16
        %v5299 = vrot.slane %v5297, 4
        %v5300 = vor.u32 %v5296, %v5299
        %v5301 = vsel %vm2547, %v5292, %v5300
        %v5303 = vshrl.u32 %v3370, 16
        %v5305 = vrot.slane %v5303, 3
        %v5306 = vshll.u32 %v3370, 16
        %v5308 = vrot.slane %v5306, 4
        %v5309 = vor.u32 %v5305, %v5308
        %v5310 = vrot.slane %v4164, 3
        %v5311 = vrot.slane %v4160, 4
        %v5312 = vor.u32 %v5310, %v5311
        %v5313 = vsel %vm2547, %v5309, %v5312
        %v5315 = vshrl.u32 %v4163, 16
        %v5317 = vrot.slane %v5315, 3
        %v5318 = vshll.u32 %v4163, 16
        %v5320 = vrot.slane %v5318, 4
        %v5321 = vor.u32 %v5317, %v5320
        %v5323 = vshrl.u32 %v4166, 16
        %v5325 = vrot.slane %v5323, 3
        %v5326 = vshll.u32 %v4166, 16
        %v5328 = vrot.slane %v5326, 4
        %v5329 = vor.u32 %v5325, %v5328
        %v5330 = vsel %vm2547, %v5321, %v5329
        %v5332 = vshrl.u32 %v4354, 16
        %v5334 = vrot.slane %v5332, 3
        %v5335 = vshll.u32 %v4354, 16
        %v5337 = vrot.slane %v5335, 4
        %v5338 = vor.u32 %v5334, %v5337
        %v5340 = vshrl.u32 %v4353, 16
        %v5342 = vrot.slane %v5340, 3
        %v5343 = vshll.u32 %v4353, 16
        %v5345 = vrot.slane %v5343, 4
        %v5346 = vor.u32 %v5342, %v5345
        %v5347 = vsel %vm2547, %v5338, %v5346
        %v5349 = vshrl.u32 %v3242, 16
        %v5351 = vrot.slane %v5349, 3
        %v5352 = vshll.u32 %v3242, 16
        %v5354 = vrot.slane %v5352, 4
        %v5355 = vor.u32 %v5351, %v5354
        %v5356 = vrot.slane %v3539, 3
        %v5357 = vrot.slane %v3535, 4
        %v5358 = vor.u32 %v5356, %v5357
        %v5359 = vsel %vm2547, %v5355, %v5358
        %v5361 = vshrl.u32 %v3538, 16
        %v5363 = vrot.slane %v5361, 3
        %v5364 = vshll.u32 %v3538, 16
        %v5366 = vrot.slane %v5364, 4
        %v5367 = vor.u32 %v5363, %v5366
        %v5369 = vshrl.u32 %v3541, 16
        %v5371 = vrot.slane %v5369, 3
        %v5372 = vshll.u32 %v3541, 16
        %v5374 = vrot.slane %v5372, 4
        %v5375 = vor.u32 %v5371, %v5374
        %v5376 = vsel %vm2547, %v5367, %v5375
        %v5378 = vshrl.u32 %v3717, 16
        %v5380 = vrot.slane %v5378, 3
        %v5381 = vshll.u32 %v3717, 16
        %v5383 = vrot.slane %v5381, 4
        %v5384 = vor.u32 %v5380, %v5383
        %v5386 = vshrl.u32 %v3716, 16
        %v5388 = vrot.slane %v5386, 3
        %v5389 = vshll.u32 %v3716, 16
        %v5391 = vrot.slane %v5389, 4
        %v5392 = vor.u32 %v5388, %v5391
        %v5393 = vsel %vm2547, %v5384, %v5392
        %v5395 = vshrl.u32 %v3307, 16
        %v5397 = vrot.slane %v5395, 3
        %v5398 = vshll.u32 %v3307, 16
        %v5400 = vrot.slane %v5398, 4
        %v5401 = vor.u32 %v5397, %v5400
        %v5402 = vrot.slane %v3859, 3
        %v5403 = vrot.slane %v3855, 4
        %v5404 = vor.u32 %v5402, %v5403
        %v5405 = vsel %vm2547, %v5401, %v5404
        %v5407 = vshrl.u32 %v3858, 16
        %v5409 = vrot.slane %v5407, 3
        %v5410 = vshll.u32 %v3858, 16
        %v5412 = vrot.slane %v5410, 4
        %v5413 = vor.u32 %v5409, %v5412
        %v5415 = vshrl.u32 %v3861, 16
        %v5417 = vrot.slane %v5415, 3
        %v5418 = vshll.u32 %v3861, 16
        %v5420 = vrot.slane %v5418, 4
        %v5421 = vor.u32 %v5417, %v5420
        %v5422 = vsel %vm2547, %v5413, %v5421
        %v5424 = vshrl.u32 %v4037, 16
        %v5426 = vrot.slane %v5424, 3
        %v5427 = vshll.u32 %v4037, 16
        %v5429 = vrot.slane %v5427, 4
        %v5430 = vor.u32 %v5426, %v5429
        %v5432 = vshrl.u32 %v4036, 16
        %v5434 = vrot.slane %v5432, 3
        %v5435 = vshll.u32 %v4036, 16
        %v5437 = vrot.slane %v5435, 4
        %v5438 = vor.u32 %v5434, %v5437
        %v5439 = vsel %vm2547, %v5430, %v5438
        %v5441 = vshrl.u32 %v3372, 16
        %v5443 = vrot.slane %v5441, 3
        %v5444 = vshll.u32 %v3372, 16
        %v5446 = vrot.slane %v5444, 4
        %v5447 = vor.u32 %v5443, %v5446
        %v5448 = vrot.slane %v4179, 3
        %v5449 = vrot.slane %v4175, 4
        %v5450 = vor.u32 %v5448, %v5449
        %v5451 = vsel %vm2547, %v5447, %v5450
        %v5453 = vshrl.u32 %v4178, 16
        %v5455 = vrot.slane %v5453, 3
        %v5456 = vshll.u32 %v4178, 16
        %v5458 = vrot.slane %v5456, 4
        %v5459 = vor.u32 %v5455, %v5458
        %v5461 = vshrl.u32 %v4181, 16
        %v5463 = vrot.slane %v5461, 3
        %v5464 = vshll.u32 %v4181, 16
        %v5466 = vrot.slane %v5464, 4
        %v5467 = vor.u32 %v5463, %v5466
        %v5468 = vsel %vm2547, %v5459, %v5467
        %v5470 = vshrl.u32 %v4357, 16
        %v5472 = vrot.slane %v5470, 3
        %v5473 = vshll.u32 %v4357, 16
        %v5475 = vrot.slane %v5473, 4
        %v5476 = vor.u32 %v5472, %v5475
        %v5478 = vshrl.u32 %v4356, 16
        %v5480 = vrot.slane %v5478, 3
        %v5481 = vshll.u32 %v4356, 16
        %v5483 = vrot.slane %v5481, 4
        %v5484 = vor.u32 %v5480, %v5483
        %v5485 = vsel %vm2547, %v5476, %v5484
        %v5487 = vshrl.u32 %v3244, 16
        %v5489 = vrot.slane %v5487, 3
        %v5490 = vshll.u32 %v3244, 16
        %v5492 = vrot.slane %v5490, 4
        %v5493 = vor.u32 %v5489, %v5492
        %v5494 = vrot.slane %v3554, 3
        %v5495 = vrot.slane %v3550, 4
        %v5496 = vor.u32 %v5494, %v5495
        %v5497 = vsel %vm2547, %v5493, %v5496
        %v5499 = vshrl.u32 %v3553, 16
        %v5501 = vrot.slane %v5499, 3
        %v5502 = vshll.u32 %v3553, 16
        %v5504 = vrot.slane %v5502, 4
        %v5505 = vor.u32 %v5501, %v5504
        %v5507 = vshrl.u32 %v3556, 16
        %v5509 = vrot.slane %v5507, 3
        %v5510 = vshll.u32 %v3556, 16
        %v5512 = vrot.slane %v5510, 4
        %v5513 = vor.u32 %v5509, %v5512
        %v5514 = vsel %vm2547, %v5505, %v5513
        %v5516 = vshrl.u32 %v3720, 16
        %v5518 = vrot.slane %v5516, 3
        %v5519 = vshll.u32 %v3720, 16
        %v5521 = vrot.slane %v5519, 4
        %v5522 = vor.u32 %v5518, %v5521
        %v5524 = vshrl.u32 %v3719, 16
        %v5526 = vrot.slane %v5524, 3
        %v5527 = vshll.u32 %v3719, 16
        %v5529 = vrot.slane %v5527, 4
        %v5530 = vor.u32 %v5526, %v5529
        %v5531 = vsel %vm2547, %v5522, %v5530
        %v5533 = vshrl.u32 %v3309, 16
        %v5535 = vrot.slane %v5533, 3
        %v5536 = vshll.u32 %v3309, 16
        %v5538 = vrot.slane %v5536, 4
        %v5539 = vor.u32 %v5535, %v5538
        %v5540 = vrot.slane %v3874, 3
        %v5541 = vrot.slane %v3870, 4
        %v5542 = vor.u32 %v5540, %v5541
        %v5543 = vsel %vm2547, %v5539, %v5542
        %v5545 = vshrl.u32 %v3873, 16
        %v5547 = vrot.slane %v5545, 3
        %v5548 = vshll.u32 %v3873, 16
        %v5550 = vrot.slane %v5548, 4
        %v5551 = vor.u32 %v5547, %v5550
        %v5553 = vshrl.u32 %v3876, 16
        %v5555 = vrot.slane %v5553, 3
        %v5556 = vshll.u32 %v3876, 16
        %v5558 = vrot.slane %v5556, 4
        %v5559 = vor.u32 %v5555, %v5558
        %v5560 = vsel %vm2547, %v5551, %v5559
        %v5562 = vshrl.u32 %v4040, 16
        %v5564 = vrot.slane %v5562, 3
        %v5565 = vshll.u32 %v4040, 16
        %v5567 = vrot.slane %v5565, 4
        %v5568 = vor.u32 %v5564, %v5567
        %v5570 = vshrl.u32 %v4039, 16
        %v5572 = vrot.slane %v5570, 3
        %v5573 = vshll.u32 %v4039, 16
        %v5575 = vrot.slane %v5573, 4
        %v5576 = vor.u32 %v5572, %v5575
        %v5577 = vsel %vm2547, %v5568, %v5576
        %v5579 = vshrl.u32 %v3374, 16
        %v5581 = vrot.slane %v5579, 3
        %v5582 = vshll.u32 %v3374, 16
        %v5584 = vrot.slane %v5582, 4
        %v5585 = vor.u32 %v5581, %v5584
        %v5586 = vrot.slane %v4194, 3
        %v5587 = vrot.slane %v4190, 4
        %v5588 = vor.u32 %v5586, %v5587
        %v5589 = vsel %vm2547, %v5585, %v5588
        %v5591 = vshrl.u32 %v4193, 16
        %v5593 = vrot.slane %v5591, 3
        %v5594 = vshll.u32 %v4193, 16
        %v5596 = vrot.slane %v5594, 4
        %v5597 = vor.u32 %v5593, %v5596
        %v5599 = vshrl.u32 %v4196, 16
        %v5601 = vrot.slane %v5599, 3
        %v5602 = vshll.u32 %v4196, 16
        %v5604 = vrot.slane %v5602, 4
        %v5605 = vor.u32 %v5601, %v5604
        %v5606 = vsel %vm2547, %v5597, %v5605
        %v5608 = vshrl.u32 %v4360, 16
        %v5610 = vrot.slane %v5608, 3
        %v5611 = vshll.u32 %v4360, 16
        %v5613 = vrot.slane %v5611, 4
        %v5614 = vor.u32 %v5610, %v5613
        %v5616 = vshrl.u32 %v4359, 16
        %v5618 = vrot.slane %v5616, 3
        %v5619 = vshll.u32 %v4359, 16
        %v5621 = vrot.slane %v5619, 4
        %v5622 = vor.u32 %v5618, %v5621
        %v5623 = vsel %vm2547, %v5614, %v5622
        %v5625 = vshrl.u32 %v3246, 16
        %v5627 = vrot.slane %v5625, 3
        %v5628 = vshll.u32 %v3246, 16
        %v5630 = vrot.slane %v5628, 4
        %v5631 = vor.u32 %v5627, %v5630
        %v5632 = vrot.slane %v3569, 3
        %v5633 = vrot.slane %v3565, 4
        %v5634 = vor.u32 %v5632, %v5633
        %v5635 = vsel %vm2547, %v5631, %v5634
        %v5637 = vshrl.u32 %v3568, 16
        %v5639 = vrot.slane %v5637, 3
        %v5640 = vshll.u32 %v3568, 16
        %v5642 = vrot.slane %v5640, 4
        %v5643 = vor.u32 %v5639, %v5642
        %v5645 = vshrl.u32 %v3571, 16
        %v5647 = vrot.slane %v5645, 3
        %v5648 = vshll.u32 %v3571, 16
        %v5650 = vrot.slane %v5648, 4
        %v5651 = vor.u32 %v5647, %v5650
        %v5652 = vsel %vm2547, %v5643, %v5651
        %v5654 = vshrl.u32 %v3723, 16
        %v5656 = vrot.slane %v5654, 3
        %v5657 = vshll.u32 %v3723, 16
        %v5659 = vrot.slane %v5657, 4
        %v5660 = vor.u32 %v5656, %v5659
        %v5662 = vshrl.u32 %v3722, 16
        %v5664 = vrot.slane %v5662, 3
        %v5665 = vshll.u32 %v3722, 16
        %v5667 = vrot.slane %v5665, 4
        %v5668 = vor.u32 %v5664, %v5667
        %v5669 = vsel %vm2547, %v5660, %v5668
        %v5671 = vshrl.u32 %v3311, 16
        %v5673 = vrot.slane %v5671, 3
        %v5674 = vshll.u32 %v3311, 16
        %v5676 = vrot.slane %v5674, 4
        %v5677 = vor.u32 %v5673, %v5676
        %v5678 = vrot.slane %v3889, 3
        %v5679 = vrot.slane %v3885, 4
        %v5680 = vor.u32 %v5678, %v5679
        %v5681 = vsel %vm2547, %v5677, %v5680
        %v5683 = vshrl.u32 %v3888, 16
        %v5685 = vrot.slane %v5683, 3
        %v5686 = vshll.u32 %v3888, 16
        %v5688 = vrot.slane %v5686, 4
        %v5689 = vor.u32 %v5685, %v5688
        %v5691 = vshrl.u32 %v3891, 16
        %v5693 = vrot.slane %v5691, 3
        %v5694 = vshll.u32 %v3891, 16
        %v5696 = vrot.slane %v5694, 4
        %v5697 = vor.u32 %v5693, %v5696
        %v5698 = vsel %vm2547, %v5689, %v5697
        %v5700 = vshrl.u32 %v4043, 16
        %v5702 = vrot.slane %v5700, 3
        %v5703 = vshll.u32 %v4043, 16
        %v5705 = vrot.slane %v5703, 4
        %v5706 = vor.u32 %v5702, %v5705
        %v5708 = vshrl.u32 %v4042, 16
        %v5710 = vrot.slane %v5708, 3
        %v5711 = vshll.u32 %v4042, 16
        %v5713 = vrot.slane %v5711, 4
        %v5714 = vor.u32 %v5710, %v5713
        %v5715 = vsel %vm2547, %v5706, %v5714
        %v5717 = vshrl.u32 %v3376, 16
        %v5719 = vrot.slane %v5717, 3
        %v5720 = vshll.u32 %v3376, 16
        %v5722 = vrot.slane %v5720, 4
        %v5723 = vor.u32 %v5719, %v5722
        %v5724 = vrot.slane %v4209, 3
        %v5725 = vrot.slane %v4205, 4
        %v5726 = vor.u32 %v5724, %v5725
        %v5727 = vsel %vm2547, %v5723, %v5726
        %v5729 = vshrl.u32 %v4208, 16
        %v5731 = vrot.slane %v5729, 3
        %v5732 = vshll.u32 %v4208, 16
        %v5734 = vrot.slane %v5732, 4
        %v5735 = vor.u32 %v5731, %v5734
        %v5737 = vshrl.u32 %v4211, 16
        %v5739 = vrot.slane %v5737, 3
        %v5740 = vshll.u32 %v4211, 16
        %v5742 = vrot.slane %v5740, 4
        %v5743 = vor.u32 %v5739, %v5742
        %v5744 = vsel %vm2547, %v5735, %v5743
        %v5746 = vshrl.u32 %v4363, 16
        %v5748 = vrot.slane %v5746, 3
        %v5749 = vshll.u32 %v4363, 16
        %v5751 = vrot.slane %v5749, 4
        %v5752 = vor.u32 %v5748, %v5751
        %v5754 = vshrl.u32 %v4362, 16
        %v5756 = vrot.slane %v5754, 3
        %v5757 = vshll.u32 %v4362, 16
        %v5759 = vrot.slane %v5757, 4
        %v5760 = vor.u32 %v5756, %v5759
        %v5761 = vsel %vm2547, %v5752, %v5760
        %v5763 = vshrl.u32 %v3248, 16
        %v5765 = vrot.slane %v5763, 3
        %v5766 = vshll.u32 %v3248, 16
        %v5768 = vrot.slane %v5766, 4
        %v5769 = vor.u32 %v5765, %v5768
        %v5770 = vrot.slane %v3584, 3
        %v5771 = vrot.slane %v3580, 4
        %v5772 = vor.u32 %v5770, %v5771
        %v5773 = vsel %vm2547, %v5769, %v5772
        %v5775 = vshrl.u32 %v3583, 16
        %v5777 = vrot.slane %v5775, 3
        %v5778 = vshll.u32 %v3583, 16
        %v5780 = vrot.slane %v5778, 4
        %v5781 = vor.u32 %v5777, %v5780
        %v5783 = vshrl.u32 %v3586, 16
        %v5785 = vrot.slane %v5783, 3
        %v5786 = vshll.u32 %v3586, 16
        %v5788 = vrot.slane %v5786, 4
        %v5789 = vor.u32 %v5785, %v5788
        %v5790 = vsel %vm2547, %v5781, %v5789
        %v5792 = vshrl.u32 %v3726, 16
        %v5794 = vrot.slane %v5792, 3
        %v5795 = vshll.u32 %v3726, 16
        %v5797 = vrot.slane %v5795, 4
        %v5798 = vor.u32 %v5794, %v5797
        %v5800 = vshrl.u32 %v3725, 16
        %v5802 = vrot.slane %v5800, 3
        %v5803 = vshll.u32 %v3725, 16
        %v5805 = vrot.slane %v5803, 4
        %v5806 = vor.u32 %v5802, %v5805
        %v5807 = vsel %vm2547, %v5798, %v5806
        %v5809 = vshrl.u32 %v3313, 16
        %v5811 = vrot.slane %v5809, 3
        %v5812 = vshll.u32 %v3313, 16
        %v5814 = vrot.slane %v5812, 4
        %v5815 = vor.u32 %v5811, %v5814
        %v5816 = vrot.slane %v3904, 3
        %v5817 = vrot.slane %v3900, 4
        %v5818 = vor.u32 %v5816, %v5817
        %v5819 = vsel %vm2547, %v5815, %v5818
        %v5821 = vshrl.u32 %v3903, 16
        %v5823 = vrot.slane %v5821, 3
        %v5824 = vshll.u32 %v3903, 16
        %v5826 = vrot.slane %v5824, 4
        %v5827 = vor.u32 %v5823, %v5826
        %v5829 = vshrl.u32 %v3906, 16
        %v5831 = vrot.slane %v5829, 3
        %v5832 = vshll.u32 %v3906, 16
        %v5834 = vrot.slane %v5832, 4
        %v5835 = vor.u32 %v5831, %v5834
        %v5836 = vsel %vm2547, %v5827, %v5835
        %v5838 = vshrl.u32 %v4046, 16
        %v5840 = vrot.slane %v5838, 3
        %v5841 = vshll.u32 %v4046, 16
        %v5843 = vrot.slane %v5841, 4
        %v5844 = vor.u32 %v5840, %v5843
        %v5846 = vshrl.u32 %v4045, 16
        %v5848 = vrot.slane %v5846, 3
        %v5849 = vshll.u32 %v4045, 16
        %v5851 = vrot.slane %v5849, 4
        %v5852 = vor.u32 %v5848, %v5851
        %v5853 = vsel %vm2547, %v5844, %v5852
        %v5855 = vshrl.u32 %v3378, 16
        %v5857 = vrot.slane %v5855, 3
        %v5858 = vshll.u32 %v3378, 16
        %v5860 = vrot.slane %v5858, 4
        %v5861 = vor.u32 %v5857, %v5860
        %v5862 = vrot.slane %v4224, 3
        %v5863 = vrot.slane %v4220, 4
        %v5864 = vor.u32 %v5862, %v5863
        %v5865 = vsel %vm2547, %v5861, %v5864
        %v5867 = vshrl.u32 %v4223, 16
        %v5869 = vrot.slane %v5867, 3
        %v5870 = vshll.u32 %v4223, 16
        %v5872 = vrot.slane %v5870, 4
        %v5873 = vor.u32 %v5869, %v5872
        %v5875 = vshrl.u32 %v4226, 16
        %v5877 = vrot.slane %v5875, 3
        %v5878 = vshll.u32 %v4226, 16
        %v5880 = vrot.slane %v5878, 4
        %v5881 = vor.u32 %v5877, %v5880
        %v5882 = vsel %vm2547, %v5873, %v5881
        %v5884 = vshrl.u32 %v4366, 16
        %v5886 = vrot.slane %v5884, 3
        %v5887 = vshll.u32 %v4366, 16
        %v5889 = vrot.slane %v5887, 4
        %v5890 = vor.u32 %v5886, %v5889
        %v5892 = vshrl.u32 %v4365, 16
        %v5894 = vrot.slane %v5892, 3
        %v5895 = vshll.u32 %v4365, 16
        %v5897 = vrot.slane %v5895, 4
        %v5898 = vor.u32 %v5894, %v5897
        %v5899 = vsel %vm2547, %v5890, %v5898
        %v5901 = vshrl.u32 %v3250, 16
        %v5903 = vrot.slane %v5901, 3
        %v5904 = vshll.u32 %v3250, 16
        %v5906 = vrot.slane %v5904, 4
        %v5907 = vor.u32 %v5903, %v5906
        %v5908 = vrot.slane %v3599, 3
        %v5909 = vrot.slane %v3595, 4
        %v5910 = vor.u32 %v5908, %v5909
        %v5911 = vsel %vm2547, %v5907, %v5910
        %v5913 = vshrl.u32 %v3598, 16
        %v5915 = vrot.slane %v5913, 3
        %v5916 = vshll.u32 %v3598, 16
        %v5918 = vrot.slane %v5916, 4
        %v5919 = vor.u32 %v5915, %v5918
        %v5921 = vshrl.u32 %v3601, 16
        %v5923 = vrot.slane %v5921, 3
        %v5924 = vshll.u32 %v3601, 16
        %v5926 = vrot.slane %v5924, 4
        %v5927 = vor.u32 %v5923, %v5926
        %v5928 = vsel %vm2547, %v5919, %v5927
        %v5930 = vshrl.u32 %v3729, 16
        %v5932 = vrot.slane %v5930, 3
        %v5933 = vshll.u32 %v3729, 16
        %v5935 = vrot.slane %v5933, 4
        %v5936 = vor.u32 %v5932, %v5935
        %v5938 = vshrl.u32 %v3728, 16
        %v5940 = vrot.slane %v5938, 3
        %v5941 = vshll.u32 %v3728, 16
        %v5943 = vrot.slane %v5941, 4
        %v5944 = vor.u32 %v5940, %v5943
        %v5945 = vsel %vm2547, %v5936, %v5944
        %v5947 = vshrl.u32 %v3315, 16
        %v5949 = vrot.slane %v5947, 3
        %v5950 = vshll.u32 %v3315, 16
        %v5952 = vrot.slane %v5950, 4
        %v5953 = vor.u32 %v5949, %v5952
        %v5954 = vrot.slane %v3919, 3
        %v5955 = vrot.slane %v3915, 4
        %v5956 = vor.u32 %v5954, %v5955
        %v5957 = vsel %vm2547, %v5953, %v5956
        %v5959 = vshrl.u32 %v3918, 16
        %v5961 = vrot.slane %v5959, 3
        %v5962 = vshll.u32 %v3918, 16
        %v5964 = vrot.slane %v5962, 4
        %v5965 = vor.u32 %v5961, %v5964
        %v5967 = vshrl.u32 %v3921, 16
        %v5969 = vrot.slane %v5967, 3
        %v5970 = vshll.u32 %v3921, 16
        %v5972 = vrot.slane %v5970, 4
        %v5973 = vor.u32 %v5969, %v5972
        %v5974 = vsel %vm2547, %v5965, %v5973
        %v5976 = vshrl.u32 %v4049, 16
        %v5978 = vrot.slane %v5976, 3
        %v5979 = vshll.u32 %v4049, 16
        %v5981 = vrot.slane %v5979, 4
        %v5982 = vor.u32 %v5978, %v5981
        %v5984 = vshrl.u32 %v4048, 16
        %v5986 = vrot.slane %v5984, 3
        %v5987 = vshll.u32 %v4048, 16
        %v5989 = vrot.slane %v5987, 4
        %v5990 = vor.u32 %v5986, %v5989
        %v5991 = vsel %vm2547, %v5982, %v5990
        %v5993 = vshrl.u32 %v3380, 16
        %v5995 = vrot.slane %v5993, 3
        %v5996 = vshll.u32 %v3380, 16
        %v5998 = vrot.slane %v5996, 4
        %v5999 = vor.u32 %v5995, %v5998
        %v6000 = vrot.slane %v4239, 3
        %v6001 = vrot.slane %v4235, 4
        %v6002 = vor.u32 %v6000, %v6001
        %v6003 = vsel %vm2547, %v5999, %v6002
        %v6005 = vshrl.u32 %v4238, 16
        %v6007 = vrot.slane %v6005, 3
        %v6008 = vshll.u32 %v4238, 16
        %v6010 = vrot.slane %v6008, 4
        %v6011 = vor.u32 %v6007, %v6010
        %v6013 = vshrl.u32 %v4241, 16
        %v6015 = vrot.slane %v6013, 3
        %v6016 = vshll.u32 %v4241, 16
        %v6018 = vrot.slane %v6016, 4
        %v6019 = vor.u32 %v6015, %v6018
        %v6020 = vsel %vm2547, %v6011, %v6019
        %v6022 = vshrl.u32 %v4369, 16
        %v6024 = vrot.slane %v6022, 3
        %v6025 = vshll.u32 %v4369, 16
        %v6027 = vrot.slane %v6025, 4
        %v6028 = vor.u32 %v6024, %v6027
        %v6030 = vshrl.u32 %v4368, 16
        %v6032 = vrot.slane %v6030, 3
        %v6033 = vshll.u32 %v4368, 16
        %v6035 = vrot.slane %v6033, 4
        %v6036 = vor.u32 %v6032, %v6035
        %v6037 = vsel %vm2547, %v6028, %v6036
        %v6039 = vshrl.u32 %v3252, 16
        %v6041 = vrot.slane %v6039, 3
        %v6042 = vshll.u32 %v3252, 16
        %v6044 = vrot.slane %v6042, 4
        %v6045 = vor.u32 %v6041, %v6044
        %v6046 = vrot.slane %v3614, 3
        %v6047 = vrot.slane %v3610, 4
        %v6048 = vor.u32 %v6046, %v6047
        %v6049 = vsel %vm2547, %v6045, %v6048
        %v6051 = vshrl.u32 %v3613, 16
        %v6053 = vrot.slane %v6051, 3
        %v6054 = vshll.u32 %v3613, 16
        %v6056 = vrot.slane %v6054, 4
        %v6057 = vor.u32 %v6053, %v6056
        %v6059 = vshrl.u32 %v3616, 16
        %v6061 = vrot.slane %v6059, 3
        %v6062 = vshll.u32 %v3616, 16
        %v6064 = vrot.slane %v6062, 4
        %v6065 = vor.u32 %v6061, %v6064
        %v6066 = vsel %vm2547, %v6057, %v6065
        %v6068 = vshrl.u32 %v3732, 16
        %v6070 = vrot.slane %v6068, 3
        %v6071 = vshll.u32 %v3732, 16
        %v6073 = vrot.slane %v6071, 4
        %v6074 = vor.u32 %v6070, %v6073
        %v6076 = vshrl.u32 %v3731, 16
        %v6078 = vrot.slane %v6076, 3
        %v6079 = vshll.u32 %v3731, 16
        %v6081 = vrot.slane %v6079, 4
        %v6082 = vor.u32 %v6078, %v6081
        %v6083 = vsel %vm2547, %v6074, %v6082
        %v6085 = vshrl.u32 %v3317, 16
        %v6087 = vrot.slane %v6085, 3
        %v6088 = vshll.u32 %v3317, 16
        %v6090 = vrot.slane %v6088, 4
        %v6091 = vor.u32 %v6087, %v6090
        %v6092 = vrot.slane %v3934, 3
        %v6093 = vrot.slane %v3930, 4
        %v6094 = vor.u32 %v6092, %v6093
        %v6095 = vsel %vm2547, %v6091, %v6094
        %v6097 = vshrl.u32 %v3933, 16
        %v6099 = vrot.slane %v6097, 3
        %v6100 = vshll.u32 %v3933, 16
        %v6102 = vrot.slane %v6100, 4
        %v6103 = vor.u32 %v6099, %v6102
        %v6105 = vshrl.u32 %v3936, 16
        %v6107 = vrot.slane %v6105, 3
        %v6108 = vshll.u32 %v3936, 16
        %v6110 = vrot.slane %v6108, 4
        %v6111 = vor.u32 %v6107, %v6110
        %v6112 = vsel %vm2547, %v6103, %v6111
        %v6114 = vshrl.u32 %v4052, 16
        %v6116 = vrot.slane %v6114, 3
        %v6117 = vshll.u32 %v4052, 16
        %v6119 = vrot.slane %v6117, 4
        %v6120 = vor.u32 %v6116, %v6119
        %v6122 = vshrl.u32 %v4051, 16
        %v6124 = vrot.slane %v6122, 3
        %v6125 = vshll.u32 %v4051, 16
        %v6127 = vrot.slane %v6125, 4
        %v6128 = vor.u32 %v6124, %v6127
        %v6129 = vsel %vm2547, %v6120, %v6128
        %v6131 = vshrl.u32 %v3382, 16
        %v6133 = vrot.slane %v6131, 3
        %v6134 = vshll.u32 %v3382, 16
        %v6136 = vrot.slane %v6134, 4
        %v6137 = vor.u32 %v6133, %v6136
        %v6138 = vrot.slane %v4254, 3
        %v6139 = vrot.slane %v4250, 4
        %v6140 = vor.u32 %v6138, %v6139
        %v6141 = vsel %vm2547, %v6137, %v6140
        %v6143 = vshrl.u32 %v4253, 16
        %v6145 = vrot.slane %v6143, 3
        %v6146 = vshll.u32 %v4253, 16
        %v6148 = vrot.slane %v6146, 4
        %v6149 = vor.u32 %v6145, %v6148
        %v6151 = vshrl.u32 %v4256, 16
        %v6153 = vrot.slane %v6151, 3
        %v6154 = vshll.u32 %v4256, 16
        %v6156 = vrot.slane %v6154, 4
        %v6157 = vor.u32 %v6153, %v6156
        %v6158 = vsel %vm2547, %v6149, %v6157
        %v6160 = vshrl.u32 %v4372, 16
        %v6162 = vrot.slane %v6160, 3
        %v6163 = vshll.u32 %v4372, 16
        %v6165 = vrot.slane %v6163, 4
        %v6166 = vor.u32 %v6162, %v6165
        %v6168 = vshrl.u32 %v4371, 16
        %v6170 = vrot.slane %v6168, 3
        %v6171 = vshll.u32 %v4371, 16
        %v6173 = vrot.slane %v6171, 4
        %v6174 = vor.u32 %v6170, %v6173
        %v6175 = vsel %vm2547, %v6166, %v6174
        %v6177 = vshrl.u32 %v3254, 16
        %v6179 = vrot.slane %v6177, 3
        %v6180 = vshll.u32 %v3254, 16
        %v6182 = vrot.slane %v6180, 4
        %v6183 = vor.u32 %v6179, %v6182
        %v6184 = vrot.slane %v3629, 3
        %v6185 = vrot.slane %v3625, 4
        %v6186 = vor.u32 %v6184, %v6185
        %v6187 = vsel %vm2547, %v6183, %v6186
        %v6189 = vshrl.u32 %v3628, 16
        %v6191 = vrot.slane %v6189, 3
        %v6192 = vshll.u32 %v3628, 16
        %v6194 = vrot.slane %v6192, 4
        %v6195 = vor.u32 %v6191, %v6194
        %v6197 = vshrl.u32 %v3631, 16
        %v6199 = vrot.slane %v6197, 3
        %v6200 = vshll.u32 %v3631, 16
        %v6202 = vrot.slane %v6200, 4
        %v6203 = vor.u32 %v6199, %v6202
        %v6204 = vsel %vm2547, %v6195, %v6203
        %v6206 = vshrl.u32 %v3735, 16
        %v6208 = vrot.slane %v6206, 3
        %v6209 = vshll.u32 %v3735, 16
        %v6211 = vrot.slane %v6209, 4
        %v6212 = vor.u32 %v6208, %v6211
        %v6214 = vshrl.u32 %v3734, 16
        %v6216 = vrot.slane %v6214, 3
        %v6217 = vshll.u32 %v3734, 16
        %v6219 = vrot.slane %v6217, 4
        %v6220 = vor.u32 %v6216, %v6219
        %v6221 = vsel %vm2547, %v6212, %v6220
        %v6223 = vshrl.u32 %v3319, 16
        %v6225 = vrot.slane %v6223, 3
        %v6226 = vshll.u32 %v3319, 16
        %v6228 = vrot.slane %v6226, 4
        %v6229 = vor.u32 %v6225, %v6228
        %v6230 = vrot.slane %v3949, 3
        %v6231 = vrot.slane %v3945, 4
        %v6232 = vor.u32 %v6230, %v6231
        %v6233 = vsel %vm2547, %v6229, %v6232
        %v6235 = vshrl.u32 %v3948, 16
        %v6237 = vrot.slane %v6235, 3
        %v6238 = vshll.u32 %v3948, 16
        %v6240 = vrot.slane %v6238, 4
        %v6241 = vor.u32 %v6237, %v6240
        %v6243 = vshrl.u32 %v3951, 16
        %v6245 = vrot.slane %v6243, 3
        %v6246 = vshll.u32 %v3951, 16
        %v6248 = vrot.slane %v6246, 4
        %v6249 = vor.u32 %v6245, %v6248
        %v6250 = vsel %vm2547, %v6241, %v6249
        %v6252 = vshrl.u32 %v4055, 16
        %v6254 = vrot.slane %v6252, 3
        %v6255 = vshll.u32 %v4055, 16
        %v6257 = vrot.slane %v6255, 4
        %v6258 = vor.u32 %v6254, %v6257
        %v6260 = vshrl.u32 %v4054, 16
        %v6262 = vrot.slane %v6260, 3
        %v6263 = vshll.u32 %v4054, 16
        %v6265 = vrot.slane %v6263, 4
        %v6266 = vor.u32 %v6262, %v6265
        %v6267 = vsel %vm2547, %v6258, %v6266
        %v6269 = vshrl.u32 %v3384, 16
        %v6271 = vrot.slane %v6269, 3
        %v6272 = vshll.u32 %v3384, 16
        %v6274 = vrot.slane %v6272, 4
        %v6275 = vor.u32 %v6271, %v6274
        %v6276 = vrot.slane %v4269, 3
        %v6277 = vrot.slane %v4265, 4
        %v6278 = vor.u32 %v6276, %v6277
        %v6279 = vsel %vm2547, %v6275, %v6278
        %v6281 = vshrl.u32 %v4268, 16
        %v6283 = vrot.slane %v6281, 3
        %v6284 = vshll.u32 %v4268, 16
        %v6286 = vrot.slane %v6284, 4
        %v6287 = vor.u32 %v6283, %v6286
        %v6289 = vshrl.u32 %v4271, 16
        %v6291 = vrot.slane %v6289, 3
        %v6292 = vshll.u32 %v4271, 16
        %v6294 = vrot.slane %v6292, 4
        %v6295 = vor.u32 %v6291, %v6294
        %v6296 = vsel %vm2547, %v6287, %v6295
        %v6298 = vshrl.u32 %v4375, 16
        %v6300 = vrot.slane %v6298, 3
        %v6301 = vshll.u32 %v4375, 16
        %v6303 = vrot.slane %v6301, 4
        %v6304 = vor.u32 %v6300, %v6303
        %v6306 = vshrl.u32 %v4374, 16
        %v6308 = vrot.slane %v6306, 3
        %v6309 = vshll.u32 %v4374, 16
        %v6311 = vrot.slane %v6309, 4
        %v6312 = vor.u32 %v6308, %v6311
        %v6313 = vsel %vm2547, %v6304, %v6312
        %v6315 = vshrl.u32 %v3256, 16
        %v6317 = vrot.slane %v6315, 3
        %v6318 = vshll.u32 %v3256, 16
        %v6320 = vrot.slane %v6318, 4
        %v6321 = vor.u32 %v6317, %v6320
        %v6322 = vrot.slane %v3644, 3
        %v6323 = vrot.slane %v3640, 4
        %v6324 = vor.u32 %v6322, %v6323
        %v6325 = vsel %vm2547, %v6321, %v6324
        %v6327 = vshrl.u32 %v3643, 16
        %v6329 = vrot.slane %v6327, 3
        %v6330 = vshll.u32 %v3643, 16
        %v6332 = vrot.slane %v6330, 4
        %v6333 = vor.u32 %v6329, %v6332
        %v6335 = vshrl.u32 %v3646, 16
        %v6337 = vrot.slane %v6335, 3
        %v6338 = vshll.u32 %v3646, 16
        %v6340 = vrot.slane %v6338, 4
        %v6341 = vor.u32 %v6337, %v6340
        %v6342 = vsel %vm2547, %v6333, %v6341
        %v6344 = vshrl.u32 %v3738, 16
        %v6346 = vrot.slane %v6344, 3
        %v6347 = vshll.u32 %v3738, 16
        %v6349 = vrot.slane %v6347, 4
        %v6350 = vor.u32 %v6346, %v6349
        %v6352 = vshrl.u32 %v3737, 16
        %v6354 = vrot.slane %v6352, 3
        %v6355 = vshll.u32 %v3737, 16
        %v6357 = vrot.slane %v6355, 4
        %v6358 = vor.u32 %v6354, %v6357
        %v6359 = vsel %vm2547, %v6350, %v6358
        %v6361 = vshrl.u32 %v3321, 16
        %v6363 = vrot.slane %v6361, 3
        %v6364 = vshll.u32 %v3321, 16
        %v6366 = vrot.slane %v6364, 4
        %v6367 = vor.u32 %v6363, %v6366
        %v6368 = vrot.slane %v3964, 3
        %v6369 = vrot.slane %v3960, 4
        %v6370 = vor.u32 %v6368, %v6369
        %v6371 = vsel %vm2547, %v6367, %v6370
        %v6373 = vshrl.u32 %v3963, 16
        %v6375 = vrot.slane %v6373, 3
        %v6376 = vshll.u32 %v3963, 16
        %v6378 = vrot.slane %v6376, 4
        %v6379 = vor.u32 %v6375, %v6378
        %v6381 = vshrl.u32 %v3966, 16
        %v6383 = vrot.slane %v6381, 3
        %v6384 = vshll.u32 %v3966, 16
        %v6386 = vrot.slane %v6384, 4
        %v6387 = vor.u32 %v6383, %v6386
        %v6388 = vsel %vm2547, %v6379, %v6387
        %v6390 = vshrl.u32 %v4058, 16
        %v6392 = vrot.slane %v6390, 3
        %v6393 = vshll.u32 %v4058, 16
        %v6395 = vrot.slane %v6393, 4
        %v6396 = vor.u32 %v6392, %v6395
        %v6398 = vshrl.u32 %v4057, 16
        %v6400 = vrot.slane %v6398, 3
        %v6401 = vshll.u32 %v4057, 16
        %v6403 = vrot.slane %v6401, 4
        %v6404 = vor.u32 %v6400, %v6403
        %v6405 = vsel %vm2547, %v6396, %v6404
        %v6407 = vshrl.u32 %v3386, 16
        %v6409 = vrot.slane %v6407, 3
        %v6410 = vshll.u32 %v3386, 16
        %v6412 = vrot.slane %v6410, 4
        %v6413 = vor.u32 %v6409, %v6412
        %v6414 = vrot.slane %v4284, 3
        %v6415 = vrot.slane %v4280, 4
        %v6416 = vor.u32 %v6414, %v6415
        %v6417 = vsel %vm2547, %v6413, %v6416
        %v6419 = vshrl.u32 %v4283, 16
        %v6421 = vrot.slane %v6419, 3
        %v6422 = vshll.u32 %v4283, 16
        %v6424 = vrot.slane %v6422, 4
        %v6425 = vor.u32 %v6421, %v6424
        %v6427 = vshrl.u32 %v4286, 16
        %v6429 = vrot.slane %v6427, 3
        %v6430 = vshll.u32 %v4286, 16
        %v6432 = vrot.slane %v6430, 4
        %v6433 = vor.u32 %v6429, %v6432
        %v6434 = vsel %vm2547, %v6425, %v6433
        %v6436 = vshrl.u32 %v4378, 16
        %v6438 = vrot.slane %v6436, 3
        %v6439 = vshll.u32 %v4378, 16
        %v6441 = vrot.slane %v6439, 4
        %v6442 = vor.u32 %v6438, %v6441
        %v6444 = vshrl.u32 %v4377, 16
        %v6446 = vrot.slane %v6444, 3
        %v6447 = vshll.u32 %v4377, 16
        %v6449 = vrot.slane %v6447, 4
        %v6450 = vor.u32 %v6446, %v6449
        %v6451 = vsel %vm2547, %v6442, %v6450
        %v6453 = vshrl.u32 %v3258, 16
        %v6455 = vrot.slane %v6453, 3
        %v6456 = vshll.u32 %v3258, 16
        %v6458 = vrot.slane %v6456, 4
        %v6459 = vor.u32 %v6455, %v6458
        %v6460 = vrot.slane %v3659, 3
        %v6461 = vrot.slane %v3655, 4
        %v6462 = vor.u32 %v6460, %v6461
        %v6463 = vsel %vm2547, %v6459, %v6462
        %v6465 = vshrl.u32 %v3658, 16
        %v6467 = vrot.slane %v6465, 3
        %v6468 = vshll.u32 %v3658, 16
        %v6470 = vrot.slane %v6468, 4
        %v6471 = vor.u32 %v6467, %v6470
        %v6473 = vshrl.u32 %v3661, 16
        %v6475 = vrot.slane %v6473, 3
        %v6476 = vshll.u32 %v3661, 16
        %v6478 = vrot.slane %v6476, 4
        %v6479 = vor.u32 %v6475, %v6478
        %v6480 = vsel %vm2547, %v6471, %v6479
        %v6482 = vshrl.u32 %v3741, 16
        %v6484 = vrot.slane %v6482, 3
        %v6485 = vshll.u32 %v3741, 16
        %v6487 = vrot.slane %v6485, 4
        %v6488 = vor.u32 %v6484, %v6487
        %v6490 = vshrl.u32 %v3740, 16
        %v6492 = vrot.slane %v6490, 3
        %v6493 = vshll.u32 %v3740, 16
        %v6495 = vrot.slane %v6493, 4
        %v6496 = vor.u32 %v6492, %v6495
        %v6497 = vsel %vm2547, %v6488, %v6496
        %v6499 = vshrl.u32 %v3323, 16
        %v6501 = vrot.slane %v6499, 3
        %v6502 = vshll.u32 %v3323, 16
        %v6504 = vrot.slane %v6502, 4
        %v6505 = vor.u32 %v6501, %v6504
        %v6506 = vrot.slane %v3979, 3
        %v6507 = vrot.slane %v3975, 4
        %v6508 = vor.u32 %v6506, %v6507
        %v6509 = vsel %vm2547, %v6505, %v6508
        %v6511 = vshrl.u32 %v3978, 16
        %v6513 = vrot.slane %v6511, 3
        %v6514 = vshll.u32 %v3978, 16
        %v6516 = vrot.slane %v6514, 4
        %v6517 = vor.u32 %v6513, %v6516
        %v6519 = vshrl.u32 %v3981, 16
        %v6521 = vrot.slane %v6519, 3
        %v6522 = vshll.u32 %v3981, 16
        %v6524 = vrot.slane %v6522, 4
        %v6525 = vor.u32 %v6521, %v6524
        %v6526 = vsel %vm2547, %v6517, %v6525
        %v6528 = vshrl.u32 %v4061, 16
        %v6530 = vrot.slane %v6528, 3
        %v6531 = vshll.u32 %v4061, 16
        %v6533 = vrot.slane %v6531, 4
        %v6534 = vor.u32 %v6530, %v6533
        %v6536 = vshrl.u32 %v4060, 16
        %v6538 = vrot.slane %v6536, 3
        %v6539 = vshll.u32 %v4060, 16
        %v6541 = vrot.slane %v6539, 4
        %v6542 = vor.u32 %v6538, %v6541
        %v6543 = vsel %vm2547, %v6534, %v6542
        %v6545 = vshrl.u32 %v3388, 16
        %v6547 = vrot.slane %v6545, 3
        %v6548 = vshll.u32 %v3388, 16
        %v6550 = vrot.slane %v6548, 4
        %v6551 = vor.u32 %v6547, %v6550
        %v6552 = vrot.slane %v4299, 3
        %v6553 = vrot.slane %v4295, 4
        %v6554 = vor.u32 %v6552, %v6553
        %v6555 = vsel %vm2547, %v6551, %v6554
        %v6557 = vshrl.u32 %v4298, 16
        %v6559 = vrot.slane %v6557, 3
        %v6560 = vshll.u32 %v4298, 16
        %v6562 = vrot.slane %v6560, 4
        %v6563 = vor.u32 %v6559, %v6562
        %v6565 = vshrl.u32 %v4301, 16
        %v6567 = vrot.slane %v6565, 3
        %v6568 = vshll.u32 %v4301, 16
        %v6570 = vrot.slane %v6568, 4
        %v6571 = vor.u32 %v6567, %v6570
        %v6572 = vsel %vm2547, %v6563, %v6571
        %v6574 = vshrl.u32 %v4381, 16
        %v6576 = vrot.slane %v6574, 3
        %v6577 = vshll.u32 %v4381, 16
        %v6579 = vrot.slane %v6577, 4
        %v6580 = vor.u32 %v6576, %v6579
        %v6582 = vshrl.u32 %v4380, 16
        %v6584 = vrot.slane %v6582, 3
        %v6585 = vshll.u32 %v4380, 16
        %v6587 = vrot.slane %v6585, 4
        %v6588 = vor.u32 %v6584, %v6587
        %v6589 = vsel %vm2547, %v6580, %v6588
        %v6734 = vld [vmem:[#allocation3] sm:$0xf]
        %v6735 = vld [vmem:[#allocation3 + $0x4] sm:$0xf]
        %v6736 = vld [vmem:[#allocation3 + $0x8] sm:$0xf]
        %v6737 = vld [vmem:[#allocation3 + $0xc] sm:$0xf]
        %v6738 = vld [vmem:[#allocation3 + $0x10] sm:$0xf]
        %v6739 = vld [vmem:[#allocation3 + $0x14] sm:$0xf]
        %v6740 = vld [vmem:[#allocation3 + $0x18] sm:$0xf]
        %v6741 = vld [vmem:[#allocation3 + $0x1c] sm:$0xf]
        %v6742 = vld [vmem:[#allocation3 + $0x20] sm:$0xf]
        %v6743 = vld [vmem:[#allocation3 + $0x24] sm:$0xf]
        %v6744 = vld [vmem:[#allocation3 + $0x28] sm:$0xf]
        %v6745 = vld [vmem:[#allocation3 + $0x2c] sm:$0xf]
        %v6746 = vld [vmem:[#allocation3 + $0x30] sm:$0xf]
        %v6747 = vld [vmem:[#allocation3 + $0x34] sm:$0xf]
        %v6748 = vld [vmem:[#allocation3 + $0x38] sm:$0xf]
        %v6749 = vld [vmem:[#allocation3 + $0x3c] sm:$0xf]
        %v6750 = vld [vmem:[#allocation3 + $0x40] sm:$0xf]
        %v6751 = vld [vmem:[#allocation3 + $0x44] sm:$0xf]
        %v6752 = vld [vmem:[#allocation3 + $0x48] sm:$0xf]
        %v6753 = vld [vmem:[#allocation3 + $0x4c] sm:$0xf]
        %v6754 = vld [vmem:[#allocation3 + $0x50] sm:$0xf]
        %v6755 = vld [vmem:[#allocation3 + $0x54] sm:$0xf]
        %v6756 = vld [vmem:[#allocation3 + $0x58] sm:$0xf]
        %v6757 = vld [vmem:[#allocation3 + $0x5c] sm:$0xf]
        %v6758 = vld [vmem:[#allocation3 + $0x60] sm:$0xf]
        %v6759 = vld [vmem:[#allocation3 + $0x64] sm:$0xf]
        %v6760 = vld [vmem:[#allocation3 + $0x68] sm:$0xf]
        %v6761 = vld [vmem:[#allocation3 + $0x6c] sm:$0xf]
        %v6762 = vld [vmem:[#allocation3 + $0x70] sm:$0xf]
        %v6763 = vld [vmem:[#allocation3 + $0x74] sm:$0xf]
        %v6764 = vld [vmem:[#allocation3 + $0x78] sm:$0xf]
        %v6765 = vld [vmem:[#allocation3 + $0x7c] sm:$0xf]
        %v6766 = vld [vmem:[#allocation3 + $0x80] sm:$0xf]
        %v6767 = vld [vmem:[#allocation3 + $0x84] sm:$0xf]
        %v6768 = vld [vmem:[#allocation3 + $0x88] sm:$0xf]
        %v6769 = vld [vmem:[#allocation3 + $0x8c] sm:$0xf]
        %v6770 = vld [vmem:[#allocation3 + $0x90] sm:$0xf]
        %v6771 = vld [vmem:[#allocation3 + $0x94] sm:$0xf]
        %v6772 = vld [vmem:[#allocation3 + $0x98] sm:$0xf]
        %v6773 = vld [vmem:[#allocation3 + $0x9c] sm:$0xf]
        %v6774 = vld [vmem:[#allocation3 + $0xa0] sm:$0xf]
        %v6775 = vld [vmem:[#allocation3 + $0xa4] sm:$0xf]
        %v6776 = vld [vmem:[#allocation3 + $0xa8] sm:$0xf]
        %v6777 = vld [vmem:[#allocation3 + $0xac] sm:$0xf]
        %v6778 = vld [vmem:[#allocation3 + $0xb0] sm:$0xf]
        %v6779 = vld [vmem:[#allocation3 + $0xb4] sm:$0xf]
        %v6780 = vld [vmem:[#allocation3 + $0xb8] sm:$0xf]
        %v6781 = vld [vmem:[#allocation3 + $0xbc] sm:$0xf]
        %v6782 = vld [vmem:[#allocation3 + $0xc0] sm:$0xf]
        %v6783 = vld [vmem:[#allocation3 + $0xc4] sm:$0xf]
        %v6784 = vld [vmem:[#allocation3 + $0xc8] sm:$0xf]
        %v6785 = vld [vmem:[#allocation3 + $0xcc] sm:$0xf]
        %v6786 = vld [vmem:[#allocation3 + $0xd0] sm:$0xf]
        %v6787 = vld [vmem:[#allocation3 + $0xd4] sm:$0xf]
        %v6788 = vld [vmem:[#allocation3 + $0xd8] sm:$0xf]
        %v6789 = vld [vmem:[#allocation3 + $0xdc] sm:$0xf]
        %v6790 = vld [vmem:[#allocation3 + $0xe0] sm:$0xf]
        %v6791 = vld [vmem:[#allocation3 + $0xe4] sm:$0xf]
        %v6792 = vld [vmem:[#allocation3 + $0xe8] sm:$0xf]
        %v6793 = vld [vmem:[#allocation3 + $0xec] sm:$0xf]
        %v6794 = vld [vmem:[#allocation3 + $0xf0] sm:$0xf]
        %v6795 = vld [vmem:[#allocation3 + $0xf4] sm:$0xf]
        %v6796 = vld [vmem:[#allocation3 + $0xf8] sm:$0xf]
        %v6797 = vld [vmem:[#allocation3 + $0xfc] sm:$0xf]
        %v6798 = vld [vmem:[#allocation3 + $0x100] sm:$0xf]
        %v6799 = vld [vmem:[#allocation3 + $0x104] sm:$0xf]
        %v6800 = vld [vmem:[#allocation3 + $0x108] sm:$0xf]
        %v6801 = vld [vmem:[#allocation3 + $0x10c] sm:$0xf]
        %v6802 = vld [vmem:[#allocation3 + $0x110] sm:$0xf]
        %v6803 = vld [vmem:[#allocation3 + $0x114] sm:$0xf]
        %v6804 = vld [vmem:[#allocation3 + $0x118] sm:$0xf]
        %v6805 = vld [vmem:[#allocation3 + $0x11c] sm:$0xf]
        %v6806 = vld [vmem:[#allocation3 + $0x120] sm:$0xf]
        %v6807 = vld [vmem:[#allocation3 + $0x124] sm:$0xf]
        %v6808 = vld [vmem:[#allocation3 + $0x128] sm:$0xf]
        %v6809 = vld [vmem:[#allocation3 + $0x12c] sm:$0xf]
        %v6810 = vld [vmem:[#allocation3 + $0x130] sm:$0xf]
        %v6811 = vld [vmem:[#allocation3 + $0x134] sm:$0xf]
        %v6812 = vld [vmem:[#allocation3 + $0x138] sm:$0xf]
        %v6813 = vld [vmem:[#allocation3 + $0x13c] sm:$0xf]
        %v6814 = vld [vmem:[#allocation3 + $0x140] sm:$0xf]
        %v6815 = vld [vmem:[#allocation3 + $0x144] sm:$0xf]
        %v6816 = vld [vmem:[#allocation3 + $0x148] sm:$0xf]
        %v6817 = vld [vmem:[#allocation3 + $0x14c] sm:$0xf]
        %v6818 = vld [vmem:[#allocation3 + $0x150] sm:$0xf]
        %v6819 = vld [vmem:[#allocation3 + $0x154] sm:$0xf]
        %v6820 = vld [vmem:[#allocation3 + $0x158] sm:$0xf]
        %v6821 = vld [vmem:[#allocation3 + $0x15c] sm:$0xf]
        %v6822 = vld [vmem:[#allocation3 + $0x160] sm:$0xf]
        %v6823 = vld [vmem:[#allocation3 + $0x164] sm:$0xf]
        %v6824 = vld [vmem:[#allocation3 + $0x168] sm:$0xf]
        %v6825 = vld [vmem:[#allocation3 + $0x16c] sm:$0xf]
        %v6826 = vld [vmem:[#allocation3 + $0x170] sm:$0xf]
        %v6827 = vld [vmem:[#allocation3 + $0x174] sm:$0xf]
        %v6828 = vld [vmem:[#allocation3 + $0x178] sm:$0xf]
        %v6829 = vld [vmem:[#allocation3 + $0x17c] sm:$0xf]
        %v6830 = vld [vmem:[#allocation3 + $0x180] sm:$0xf]
        %v6831 = vld [vmem:[#allocation3 + $0x184] sm:$0xf]
        %v6832 = vld [vmem:[#allocation3 + $0x188] sm:$0xf]
        %v6833 = vld [vmem:[#allocation3 + $0x18c] sm:$0xf]
        %v6834 = vld [vmem:[#allocation3 + $0x190] sm:$0xf]
        %v6835 = vld [vmem:[#allocation3 + $0x194] sm:$0xf]
        %v6836 = vld [vmem:[#allocation3 + $0x198] sm:$0xf]
        %v6837 = vld [vmem:[#allocation3 + $0x19c] sm:$0xf]
        %v6838 = vld [vmem:[#allocation3 + $0x1a0] sm:$0xf]
        %v6839 = vld [vmem:[#allocation3 + $0x1a4] sm:$0xf]
        %v6840 = vld [vmem:[#allocation3 + $0x1a8] sm:$0xf]
        %v6841 = vld [vmem:[#allocation3 + $0x1ac] sm:$0xf]
        %v6842 = vld [vmem:[#allocation3 + $0x1b0] sm:$0xf]
        %v6843 = vld [vmem:[#allocation3 + $0x1b4] sm:$0xf]
        %v6844 = vld [vmem:[#allocation3 + $0x1b8] sm:$0xf]
        %v6845 = vld [vmem:[#allocation3 + $0x1bc] sm:$0xf]
        %v6846 = vld [vmem:[#allocation3 + $0x1c0] sm:$0xf]
        %v6847 = vld [vmem:[#allocation3 + $0x1c4] sm:$0xf]
        %v6848 = vld [vmem:[#allocation3 + $0x1c8] sm:$0xf]
        %v6849 = vld [vmem:[#allocation3 + $0x1cc] sm:$0xf]
        %v6850 = vld [vmem:[#allocation3 + $0x1d0] sm:$0xf]
        %v6851 = vld [vmem:[#allocation3 + $0x1d4] sm:$0xf]
        %v6852 = vld [vmem:[#allocation3 + $0x1d8] sm:$0xf]
        %v6853 = vld [vmem:[#allocation3 + $0x1dc] sm:$0xf]
        %v6854 = vld [vmem:[#allocation3 + $0x1e0] sm:$0xf]
        %v6855 = vld [vmem:[#allocation3 + $0x1e4] sm:$0xf]
        %v6856 = vld [vmem:[#allocation3 + $0x1e8] sm:$0xf]
        %v6857 = vld [vmem:[#allocation3 + $0x1ec] sm:$0xf]
        %v6858 = vld [vmem:[#allocation3 + $0x1f0] sm:$0xf]
        %v6859 = vld [vmem:[#allocation3 + $0x1f4] sm:$0xf]
        %v6860 = vld [vmem:[#allocation3 + $0x1f8] sm:$0xf]
        %v6861 = vld [vmem:[#allocation3 + $0x1fc] sm:$0xf]
        %v6862 = vld [vmem:[#allocation3 + $0x200] sm:$0xf]
        %v6863 = vld [vmem:[#allocation3 + $0x204] sm:$0xf]
        %v6864 = vld [vmem:[#allocation3 + $0x208] sm:$0xf]
        %v6865 = vld [vmem:[#allocation3 + $0x20c] sm:$0xf]
        %v6866 = vld [vmem:[#allocation3 + $0x210] sm:$0xf]
        %v6867 = vld [vmem:[#allocation3 + $0x214] sm:$0xf]
        %v6868 = vld [vmem:[#allocation3 + $0x218] sm:$0xf]
        %v6869 = vld [vmem:[#allocation3 + $0x21c] sm:$0xf]
        %v6870 = vld [vmem:[#allocation3 + $0x220] sm:$0xf]
        %v6871 = vld [vmem:[#allocation3 + $0x224] sm:$0xf]
        %v6872 = vld [vmem:[#allocation3 + $0x228] sm:$0xf]
        %v6873 = vld [vmem:[#allocation3 + $0x22c] sm:$0xf]
        %v6874 = vld [vmem:[#allocation3 + $0x230] sm:$0xf]
        %v6875 = vld [vmem:[#allocation3 + $0x234] sm:$0xf]
        %v6876 = vld [vmem:[#allocation3 + $0x238] sm:$0xf]
        %v6877 = vld [vmem:[#allocation3 + $0x23c] sm:$0xf]
        %v7022 = vunpack.c.l.b16 %v6734
        %v7023 = vunpack.c.l.b16 %v6735
        %v7024 = vunpack.c.l.b16 %v6736
        %v7025 = vunpack.c.l.b16 %v6737
        %v7026 = vunpack.c.l.b16 %v6738
        %v7027 = vunpack.c.l.b16 %v6739
        %v7028 = vunpack.c.l.b16 %v6740
        %v7029 = vunpack.c.l.b16 %v6741
        %v7030 = vunpack.c.l.b16 %v6742
        %v7031 = vunpack.c.l.b16 %v6743
        %v7032 = vunpack.c.l.b16 %v6744
        %v7033 = vunpack.c.l.b16 %v6745
        %v7034 = vunpack.c.l.b16 %v6746
        %v7035 = vunpack.c.l.b16 %v6747
        %v7036 = vunpack.c.l.b16 %v6748
        %v7037 = vunpack.c.l.b16 %v6749
        %v7038 = vunpack.c.l.b16 %v6750
        %v7039 = vunpack.c.l.b16 %v6751
        %v7040 = vunpack.c.l.b16 %v6752
        %v7041 = vunpack.c.l.b16 %v6753
        %v7042 = vunpack.c.l.b16 %v6754
        %v7043 = vunpack.c.l.b16 %v6755
        %v7044 = vunpack.c.l.b16 %v6756
        %v7045 = vunpack.c.l.b16 %v6757
        %v7046 = vunpack.c.l.b16 %v6758
        %v7047 = vunpack.c.l.b16 %v6759
        %v7048 = vunpack.c.l.b16 %v6760
        %v7049 = vunpack.c.l.b16 %v6761
        %v7050 = vunpack.c.l.b16 %v6762
        %v7051 = vunpack.c.l.b16 %v6763
        %v7052 = vunpack.c.l.b16 %v6764
        %v7053 = vunpack.c.l.b16 %v6765
        %v7054 = vunpack.c.l.b16 %v6766
        %v7055 = vunpack.c.l.b16 %v6767
        %v7056 = vunpack.c.l.b16 %v6768
        %v7057 = vunpack.c.l.b16 %v6769
        %v7058 = vunpack.c.l.b16 %v6770
        %v7059 = vunpack.c.l.b16 %v6771
        %v7060 = vunpack.c.l.b16 %v6772
        %v7061 = vunpack.c.l.b16 %v6773
        %v7062 = vunpack.c.l.b16 %v6774
        %v7063 = vunpack.c.l.b16 %v6775
        %v7064 = vunpack.c.l.b16 %v6776
        %v7065 = vunpack.c.l.b16 %v6777
        %v7066 = vunpack.c.l.b16 %v6778
        %v7067 = vunpack.c.l.b16 %v6779
        %v7068 = vunpack.c.l.b16 %v6780
        %v7069 = vunpack.c.l.b16 %v6781
        %v7070 = vunpack.c.l.b16 %v6782
        %v7071 = vunpack.c.l.b16 %v6783
        %v7072 = vunpack.c.l.b16 %v6784
        %v7073 = vunpack.c.l.b16 %v6785
        %v7074 = vunpack.c.l.b16 %v6786
        %v7075 = vunpack.c.l.b16 %v6787
        %v7076 = vunpack.c.l.b16 %v6788
        %v7077 = vunpack.c.l.b16 %v6789
        %v7078 = vunpack.c.l.b16 %v6790
        %v7079 = vunpack.c.l.b16 %v6791
        %v7080 = vunpack.c.l.b16 %v6792
        %v7081 = vunpack.c.l.b16 %v6793
        %v7082 = vunpack.c.l.b16 %v6794
        %v7083 = vunpack.c.l.b16 %v6795
        %v7084 = vunpack.c.l.b16 %v6796
        %v7085 = vunpack.c.l.b16 %v6797
        %v7086 = vunpack.c.l.b16 %v6798
        %v7087 = vunpack.c.l.b16 %v6799
        %v7088 = vunpack.c.l.b16 %v6800
        %v7089 = vunpack.c.l.b16 %v6801
        %v7090 = vunpack.c.l.b16 %v6802
        %v7091 = vunpack.c.l.b16 %v6803
        %v7092 = vunpack.c.l.b16 %v6804
        %v7093 = vunpack.c.l.b16 %v6805
        %v7094 = vunpack.c.l.b16 %v6806
        %v7095 = vunpack.c.l.b16 %v6807
        %v7096 = vunpack.c.l.b16 %v6808
        %v7097 = vunpack.c.l.b16 %v6809
        %v7098 = vunpack.c.l.b16 %v6810
        %v7099 = vunpack.c.l.b16 %v6811
        %v7100 = vunpack.c.l.b16 %v6812
        %v7101 = vunpack.c.l.b16 %v6813
        %v7102 = vunpack.c.l.b16 %v6814
        %v7103 = vunpack.c.l.b16 %v6815
        %v7104 = vunpack.c.l.b16 %v6816
        %v7105 = vunpack.c.l.b16 %v6817
        %v7106 = vunpack.c.l.b16 %v6818
        %v7107 = vunpack.c.l.b16 %v6819
        %v7108 = vunpack.c.l.b16 %v6820
        %v7109 = vunpack.c.l.b16 %v6821
        %v7110 = vunpack.c.l.b16 %v6822
        %v7111 = vunpack.c.l.b16 %v6823
        %v7112 = vunpack.c.l.b16 %v6824
        %v7113 = vunpack.c.l.b16 %v6825
        %v7114 = vunpack.c.l.b16 %v6826
        %v7115 = vunpack.c.l.b16 %v6827
        %v7116 = vunpack.c.l.b16 %v6828
        %v7117 = vunpack.c.l.b16 %v6829
        %v7118 = vunpack.c.l.b16 %v6830
        %v7119 = vunpack.c.l.b16 %v6831
        %v7120 = vunpack.c.l.b16 %v6832
        %v7121 = vunpack.c.l.b16 %v6833
        %v7122 = vunpack.c.l.b16 %v6834
        %v7123 = vunpack.c.l.b16 %v6835
        %v7124 = vunpack.c.l.b16 %v6836
        %v7125 = vunpack.c.l.b16 %v6837
        %v7126 = vunpack.c.l.b16 %v6838
        %v7127 = vunpack.c.l.b16 %v6839
        %v7128 = vunpack.c.l.b16 %v6840
        %v7129 = vunpack.c.l.b16 %v6841
        %v7130 = vunpack.c.l.b16 %v6842
        %v7131 = vunpack.c.l.b16 %v6843
        %v7132 = vunpack.c.l.b16 %v6844
        %v7133 = vunpack.c.l.b16 %v6845
        %v7134 = vunpack.c.l.b16 %v6846
        %v7135 = vunpack.c.l.b16 %v6847
        %v7136 = vunpack.c.l.b16 %v6848
        %v7137 = vunpack.c.l.b16 %v6849
        %v7138 = vunpack.c.l.b16 %v6850
        %v7139 = vunpack.c.l.b16 %v6851
        %v7140 = vunpack.c.l.b16 %v6852
        %v7141 = vunpack.c.l.b16 %v6853
        %v7142 = vunpack.c.l.b16 %v6854
        %v7143 = vunpack.c.l.b16 %v6855
        %v7144 = vunpack.c.l.b16 %v6856
        %v7145 = vunpack.c.l.b16 %v6857
        %v7146 = vunpack.c.l.b16 %v6858
        %v7147 = vunpack.c.l.b16 %v6859
        %v7148 = vunpack.c.l.b16 %v6860
        %v7149 = vunpack.c.l.b16 %v6861
        %v7150 = vunpack.c.l.b16 %v6862
        %v7151 = vunpack.c.l.b16 %v6863
        %v7152 = vunpack.c.l.b16 %v6864
        %v7153 = vunpack.c.l.b16 %v6865
        %v7154 = vunpack.c.l.b16 %v6866
        %v7155 = vunpack.c.l.b16 %v6867
        %v7156 = vunpack.c.l.b16 %v6868
        %v7157 = vunpack.c.l.b16 %v6869
        %v7158 = vunpack.c.l.b16 %v6870
        %v7159 = vunpack.c.l.b16 %v6871
        %v7160 = vunpack.c.l.b16 %v6872
        %v7161 = vunpack.c.l.b16 %v6873
        %v7162 = vunpack.c.l.b16 %v6874
        %v7163 = vunpack.c.l.b16 %v6875
        %v7164 = vunpack.c.l.b16 %v6876
        %v7165 = vunpack.c.l.b16 %v6877
        %v7166 = vpack.c.b16 %v7023, %v7022
        %v7167 = vpack.c.b16 %v7025, %v7024
        %v7168 = vpack.c.b16 %v7027, %v7026
        %v7169 = vpack.c.b16 %v7029, %v7028
        %v7170 = vpack.c.b16 %v7031, %v7030
        %v7171 = vpack.c.b16 %v7033, %v7032
        %v7172 = vpack.c.b16 %v7035, %v7034
        %v7173 = vpack.c.b16 %v7037, %v7036
        %v7174 = vpack.c.b16 %v7039, %v7038
        %v7175 = vpack.c.b16 %v7041, %v7040
        %v7176 = vpack.c.b16 %v7043, %v7042
        %v7177 = vpack.c.b16 %v7045, %v7044
        %v7178 = vpack.c.b16 %v7047, %v7046
        %v7179 = vpack.c.b16 %v7049, %v7048
        %v7180 = vpack.c.b16 %v7051, %v7050
        %v7181 = vpack.c.b16 %v7053, %v7052
        %v7182 = vpack.c.b16 %v7055, %v7054
        %v7183 = vpack.c.b16 %v7057, %v7056
        %v7184 = vpack.c.b16 %v7059, %v7058
        %v7185 = vpack.c.b16 %v7061, %v7060
        %v7186 = vpack.c.b16 %v7063, %v7062
        %v7187 = vpack.c.b16 %v7065, %v7064
        %v7188 = vpack.c.b16 %v7067, %v7066
        %v7189 = vpack.c.b16 %v7069, %v7068
        %v7190 = vpack.c.b16 %v7071, %v7070
        %v7191 = vpack.c.b16 %v7073, %v7072
        %v7192 = vpack.c.b16 %v7075, %v7074
        %v7193 = vpack.c.b16 %v7077, %v7076
        %v7194 = vpack.c.b16 %v7079, %v7078
        %v7195 = vpack.c.b16 %v7081, %v7080
        %v7196 = vpack.c.b16 %v7083, %v7082
        %v7197 = vpack.c.b16 %v7085, %v7084
        %v7198 = vpack.c.b16 %v7087, %v7086
        %v7199 = vpack.c.b16 %v7089, %v7088
        %v7200 = vpack.c.b16 %v7091, %v7090
        %v7201 = vpack.c.b16 %v7093, %v7092
        %v7202 = vpack.c.b16 %v7095, %v7094
        %v7203 = vpack.c.b16 %v7097, %v7096
        %v7204 = vpack.c.b16 %v7099, %v7098
        %v7205 = vpack.c.b16 %v7101, %v7100
        %v7206 = vpack.c.b16 %v7103, %v7102
        %v7207 = vpack.c.b16 %v7105, %v7104
        %v7208 = vpack.c.b16 %v7107, %v7106
        %v7209 = vpack.c.b16 %v7109, %v7108
        %v7210 = vpack.c.b16 %v7111, %v7110
        %v7211 = vpack.c.b16 %v7113, %v7112
        %v7212 = vpack.c.b16 %v7115, %v7114
        %v7213 = vpack.c.b16 %v7117, %v7116
        %v7214 = vpack.c.b16 %v7119, %v7118
        %v7215 = vpack.c.b16 %v7121, %v7120
        %v7216 = vpack.c.b16 %v7123, %v7122
        %v7217 = vpack.c.b16 %v7125, %v7124
        %v7218 = vpack.c.b16 %v7127, %v7126
        %v7219 = vpack.c.b16 %v7129, %v7128
        %v7220 = vpack.c.b16 %v7131, %v7130
        %v7221 = vpack.c.b16 %v7133, %v7132
        %v7222 = vpack.c.b16 %v7135, %v7134
        %v7223 = vpack.c.b16 %v7137, %v7136
        %v7224 = vpack.c.b16 %v7139, %v7138
        %v7225 = vpack.c.b16 %v7141, %v7140
        %v7226 = vpack.c.b16 %v7143, %v7142
        %v7227 = vpack.c.b16 %v7145, %v7144
        %v7228 = vpack.c.b16 %v7147, %v7146
        %v7229 = vpack.c.b16 %v7149, %v7148
        %v7230 = vpack.c.b16 %v7151, %v7150
        %v7231 = vpack.c.b16 %v7153, %v7152
        %v7232 = vpack.c.b16 %v7155, %v7154
        %v7233 = vpack.c.b16 %v7157, %v7156
        %v7234 = vpack.c.b16 %v7159, %v7158
        %v7235 = vpack.c.b16 %v7161, %v7160
        %v7236 = vpack.c.b16 %v7163, %v7162
        %v7237 = vpack.c.b16 %v7165, %v7164
        %7310 = vmatprep.subr.bf16.mxu0 0
        %7311 = vmatpush1.bf16.msra.mxu0 %v7166
        %7312 = vmatprep.subr.bf16.mxu0 0
        %7313 = vmatpush1.bf16.msra.mxu0 %v7167
        %7314 = vmatprep.subr.bf16.mxu0 0
        %7315 = vmatpush1.bf16.msra.mxu0 %v7168
        %7316 = vmatprep.subr.bf16.mxu0 0
        %7317 = vmatpush1.bf16.msra.mxu0 %v7169
        %7318 = vmatprep.subr.bf16.mxu0 0
        %7319 = vmatpush1.bf16.msra.mxu0 %v7170
        %7320 = vmatprep.subr.bf16.mxu0 0
        %7321 = vmatpush1.bf16.msra.mxu0 %v7171
        %7322 = vmatprep.subr.bf16.mxu0 0
        %7323 = vmatpush1.bf16.msra.mxu0 %v7172
        %7324 = vmatprep.subr.bf16.mxu0 0
        %7325 = vmatpush1.bf16.msra.mxu0 %v7173
        %7326 = vmatprep.subr.bf16.mxu0 0
        %7327 = vmatpush1.bf16.msra.mxu0 %v7174
        %7328 = vmatprep.subr.bf16.mxu0 0
        %7329 = vmatpush1.bf16.msra.mxu0 %v7175
        %7330 = vmatprep.subr.bf16.mxu0 0
        %7331 = vmatpush1.bf16.msra.mxu0 %v7176
        %7332 = vmatprep.subr.bf16.mxu0 0
        %7333 = vmatpush1.bf16.msra.mxu0 %v7177
        %7334 = vmatprep.subr.bf16.mxu0 0
        %7335 = vmatpush1.bf16.msra.mxu0 %v7178
        %7336 = vmatprep.subr.bf16.mxu0 0
        %7337 = vmatpush1.bf16.msra.mxu0 %v7179
        %7338 = vmatprep.subr.bf16.mxu0 0
        %7339 = vmatpush1.bf16.msra.mxu0 %v7180
        %7340 = vmatprep.subr.bf16.mxu0 0
        %7341 = vmatpush1.bf16.msra.mxu0 %v7181
        %7342 = vmatprep.mubr.bf16.mxu0 %v4410
        %7343 = vmatmul.mubr.bf16.gmra.mrb[0].mxu0 %v4393
        %v7344 = vpop.f32.mrb[0].mxu0
        %v7345 = vadd.f32 0.0, %v7344
        %v7346 = vpop.f32.mrb[0].mxu0
        %v7347 = vpop.f32.mrb[0].mxu0
        %v7348 = vadd.f32 0.0, %v7347
        %v7349 = vpop.f32.mrb[0].mxu0
        %7350 = vmatprep.mubr.bf16.mxu0 %v4548
        %7351 = vmatmul.mubr.bf16.gmra.mrb[0].mxu0 %v4531
        %v7352 = vpop.f32.mrb[0].mxu0
        %v7353 = vadd.f32 0.0, %v7352
        %v7354 = vpop.f32.mrb[0].mxu0
        %v7355 = vpop.f32.mrb[0].mxu0
        %v7356 = vadd.f32 0.0, %v7355
        %v7357 = vpop.f32.mrb[0].mxu0
        %7358 = vmatprep.mubr.bf16.mxu0 %v4686
        %7359 = vmatmul.mubr.bf16.gmra.mrb[0].mxu0 %v4669
        %v7360 = vpop.f32.mrb[0].mxu0
        %v7361 = vadd.f32 0.0, %v7360
        %v7362 = vpop.f32.mrb[0].mxu0
        %v7363 = vpop.f32.mrb[0].mxu0
        %v7364 = vadd.f32 0.0, %v7363
        %v7365 = vpop.f32.mrb[0].mxu0
        %7366 = vmatprep.mubr.bf16.mxu0 %v4824
        %7367 = vmatmul.mubr.bf16.gmra.mrb[0].mxu0 %v4807
        %v7368 = vpop.f32.mrb[0].mxu0
        %v7369 = vadd.f32 0.0, %v7368
        %v7370 = vpop.f32.mrb[0].mxu0
        %v7371 = vpop.f32.mrb[0].mxu0
        %v7372 = vadd.f32 0.0, %v7371
        %v7373 = vpop.f32.mrb[0].mxu0
        %7374 = vmatprep.mubr.bf16.mxu0 %v4962
        %7375 = vmatmul.mubr.bf16.gmra.mrb[0].mxu0 %v4945
        %v7376 = vpop.f32.mrb[0].mxu0
        %v7377 = vadd.f32 0.0, %v7376
        %v7378 = vpop.f32.mrb[0].mxu0
        %v7379 = vpop.f32.mrb[0].mxu0
        %v7380 = vadd.f32 0.0, %v7379
        %v7381 = vpop.f32.mrb[0].mxu0
        %7382 = vmatprep.mubr.bf16.mxu0 %v5100
        %7383 = vmatmul.mubr.bf16.gmra.mrb[0].mxu0 %v5083
        %v7384 = vpop.f32.mrb[0].mxu0
        %v7385 = vadd.f32 0.0, %v7384
        %v7386 = vpop.f32.mrb[0].mxu0
        %v7387 = vpop.f32.mrb[0].mxu0
        %v7388 = vadd.f32 0.0, %v7387
        %v7389 = vpop.f32.mrb[0].mxu0
        %7390 = vmatprep.mubr.bf16.mxu0 %v5238
        %7391 = vmatmul.mubr.bf16.gmra.mrb[0].mxu0 %v5221
        %v7392 = vpop.f32.mrb[0].mxu0
        %v7393 = vadd.f32 0.0, %v7392
        %v7394 = vpop.f32.mrb[0].mxu0
        %v7395 = vpop.f32.mrb[0].mxu0
        %v7396 = vadd.f32 0.0, %v7395
        %v7397 = vpop.f32.mrb[0].mxu0
        %7398 = vmatprep.mubr.bf16.mxu0 %v5376
        %7399 = vmatmul.mubr.bf16.gmra.mrb[0].mxu0 %v5359
        %v7400 = vpop.f32.mrb[0].mxu0
        %v7401 = vadd.f32 0.0, %v7400
        %v7402 = vpop.f32.mrb[0].mxu0
        %v7403 = vpop.f32.mrb[0].mxu0
        %v7404 = vadd.f32 0.0, %v7403
        %v7405 = vpop.f32.mrb[0].mxu0
        %7406 = vmatprep.mubr.bf16.mxu0 %v5514
        %7407 = vmatmul.mubr.bf16.gmra.mrb[0].mxu0 %v5497
        %v7408 = vpop.f32.mrb[0].mxu0
        %v7409 = vadd.f32 0.0, %v7408
        %v7410 = vpop.f32.mrb[0].mxu0
        %v7411 = vpop.f32.mrb[0].mxu0
        %v7412 = vadd.f32 0.0, %v7411
        %v7413 = vpop.f32.mrb[0].mxu0
        %7414 = vmatprep.mubr.bf16.mxu0 %v5652
        %7415 = vmatmul.mubr.bf16.gmra.mrb[0].mxu0 %v5635
        %v7416 = vpop.f32.mrb[0].mxu0
        %v7417 = vadd.f32 0.0, %v7416
        %v7418 = vpop.f32.mrb[0].mxu0
        %v7419 = vpop.f32.mrb[0].mxu0
        %v7420 = vadd.f32 0.0, %v7419
        %v7421 = vpop.f32.mrb[0].mxu0
        %7422 = vmatprep.mubr.bf16.mxu0 %v5790
        %7423 = vmatmul.mubr.bf16.gmra.mrb[0].mxu0 %v5773
        %v7424 = vpop.f32.mrb[0].mxu0
        %v7425 = vadd.f32 0.0, %v7424
        %v7426 = vpop.f32.mrb[0].mxu0
        %v7427 = vpop.f32.mrb[0].mxu0
        %v7428 = vadd.f32 0.0, %v7427
        %v7429 = vpop.f32.mrb[0].mxu0
        %7430 = vmatprep.mubr.bf16.mxu0 %v5928
        %7431 = vmatmul.mubr.bf16.gmra.mrb[0].mxu0 %v5911
        %v7432 = vpop.f32.mrb[0].mxu0
        %v7433 = vadd.f32 0.0, %v7432
        %v7434 = vpop.f32.mrb[0].mxu0
        %v7435 = vpop.f32.mrb[0].mxu0
        %v7436 = vadd.f32 0.0, %v7435
        %v7437 = vpop.f32.mrb[0].mxu0
        %7438 = vmatprep.mubr.bf16.mxu0 %v6066
        %7439 = vmatmul.mubr.bf16.gmra.mrb[0].mxu0 %v6049
        %v7440 = vpop.f32.mrb[0].mxu0
        %v7441 = vadd.f32 0.0, %v7440
        %v7442 = vpop.f32.mrb[0].mxu0
        %v7443 = vpop.f32.mrb[0].mxu0
        %v7444 = vadd.f32 0.0, %v7443
        %v7445 = vpop.f32.mrb[0].mxu0
        %7446 = vmatprep.mubr.bf16.mxu0 %v6204
        %7447 = vmatmul.mubr.bf16.gmra.mrb[0].mxu0 %v6187
        %v7448 = vpop.f32.mrb[0].mxu0
        %v7449 = vadd.f32 0.0, %v7448
        %v7450 = vpop.f32.mrb[0].mxu0
        %v7451 = vpop.f32.mrb[0].mxu0
        %v7452 = vadd.f32 0.0, %v7451
        %v7453 = vpop.f32.mrb[0].mxu0
        %7454 = vmatprep.mubr.bf16.mxu0 %v6342
        %7455 = vmatmul.mubr.bf16.gmra.mrb[0].mxu0 %v6325
        %v7456 = vpop.f32.mrb[0].mxu0
        %v7457 = vadd.f32 0.0, %v7456
        %v7458 = vpop.f32.mrb[0].mxu0
        %v7459 = vpop.f32.mrb[0].mxu0
        %v7460 = vadd.f32 0.0, %v7459
        %v7461 = vpop.f32.mrb[0].mxu0
        %7462 = vmatprep.mubr.bf16.mxu0 %v6480
        %7463 = vmatmul.mubr.bf16.gmra.mrb[0].mxu0 %v6463
        %v7464 = vpop.f32.mrb[0].mxu0
        %v7465 = vadd.f32 0.0, %v7464
        %v7466 = vpop.f32.mrb[0].mxu0
        %v7467 = vpop.f32.mrb[0].mxu0
        %v7468 = vadd.f32 0.0, %v7467
        %v7469 = vpop.f32.mrb[0].mxu0
        %7470 = vdwg.mxu0
        %7471 = vmatprep.subr.bf16.mxu0 0
        %7472 = vmatpush1.bf16.msra.mxu0 %v7182
        %7473 = vmatprep.subr.bf16.mxu0 0
        %7474 = vmatpush1.bf16.msra.mxu0 %v7183
        %7475 = vmatprep.subr.bf16.mxu0 0
        %7476 = vmatpush1.bf16.msra.mxu0 %v7184
        %7477 = vmatprep.subr.bf16.mxu0 0
        %7478 = vmatpush1.bf16.msra.mxu0 %v7185
        %7479 = vmatprep.subr.bf16.mxu0 0
        %7480 = vmatpush1.bf16.msra.mxu0 %v7186
        %7481 = vmatprep.subr.bf16.mxu0 0
        %7482 = vmatpush1.bf16.msra.mxu0 %v7187
        %7483 = vmatprep.subr.bf16.mxu0 0
        %7484 = vmatpush1.bf16.msra.mxu0 %v7188
        %7485 = vmatprep.subr.bf16.mxu0 0
        %7486 = vmatpush1.bf16.msra.mxu0 %v7189
        %7487 = vmatprep.subr.bf16.mxu0 0
        %7488 = vmatpush1.bf16.msra.mxu0 %v7190
        %7489 = vmatprep.subr.bf16.mxu0 0
        %7490 = vmatpush1.bf16.msra.mxu0 %v7191
        %7491 = vmatprep.subr.bf16.mxu0 0
        %7492 = vmatpush1.bf16.msra.mxu0 %v7192
        %7493 = vmatprep.subr.bf16.mxu0 0
        %7494 = vmatpush1.bf16.msra.mxu0 %v7193
        %7495 = vmatprep.subr.bf16.mxu0 0
        %7496 = vmatpush1.bf16.msra.mxu0 %v7194
        %7497 = vmatprep.subr.bf16.mxu0 0
        %7498 = vmatpush1.bf16.msra.mxu0 %v7195
        %7499 = vmatprep.subr.bf16.mxu0 0
        %7500 = vmatpush1.bf16.msra.mxu0 %v7196
        %7501 = vmatprep.subr.bf16.mxu0 0
        %7502 = vmatpush1.bf16.msra.mxu0 %v7197
        %7503 = vmatprep.mubr.bf16.mxu0 %v4439
        %7504 = vmatmul.mubr.bf16.gmra.mrb[0].mxu0 %v4427
        %v7505 = vpop.f32.mrb[0].mxu0
        %v7506 = vadd.f32 %v7345, %v7505
        %v7507 = vpop.f32.mrb[0].mxu0
        %v7508 = vpop.f32.mrb[0].mxu0
        %v7509 = vadd.f32 %v7348, %v7508
        %v7510 = vpop.f32.mrb[0].mxu0
        %7511 = vmatprep.mubr.bf16.mxu0 %v4577
        %7512 = vmatmul.mubr.bf16.gmra.mrb[0].mxu0 %v4565
        %v7513 = vpop.f32.mrb[0].mxu0
        %v7514 = vadd.f32 %v7353, %v7513
        %v7515 = vpop.f32.mrb[0].mxu0
        %v7516 = vpop.f32.mrb[0].mxu0
        %v7517 = vadd.f32 %v7356, %v7516
        %v7518 = vpop.f32.mrb[0].mxu0
        %7519 = vmatprep.mubr.bf16.mxu0 %v4715
        %7520 = vmatmul.mubr.bf16.gmra.mrb[0].mxu0 %v4703
        %v7521 = vpop.f32.mrb[0].mxu0
        %v7522 = vadd.f32 %v7361, %v7521
        %v7523 = vpop.f32.mrb[0].mxu0
        %v7524 = vpop.f32.mrb[0].mxu0
        %v7525 = vadd.f32 %v7364, %v7524
        %v7526 = vpop.f32.mrb[0].mxu0
        %7527 = vmatprep.mubr.bf16.mxu0 %v4853
        %7528 = vmatmul.mubr.bf16.gmra.mrb[0].mxu0 %v4841
        %v7529 = vpop.f32.mrb[0].mxu0
        %v7530 = vadd.f32 %v7369, %v7529
        %v7531 = vpop.f32.mrb[0].mxu0
        %v7532 = vpop.f32.mrb[0].mxu0
        %v7533 = vadd.f32 %v7372, %v7532
        %v7534 = vpop.f32.mrb[0].mxu0
        %7535 = vmatprep.mubr.bf16.mxu0 %v4991
        %7536 = vmatmul.mubr.bf16.gmra.mrb[0].mxu0 %v4979
        %v7537 = vpop.f32.mrb[0].mxu0
        %v7538 = vadd.f32 %v7377, %v7537
        %v7539 = vpop.f32.mrb[0].mxu0
        %v7540 = vpop.f32.mrb[0].mxu0
        %v7541 = vadd.f32 %v7380, %v7540
        %v7542 = vpop.f32.mrb[0].mxu0
        %7543 = vmatprep.mubr.bf16.mxu0 %v5129
        %7544 = vmatmul.mubr.bf16.gmra.mrb[0].mxu0 %v5117
        %v7545 = vpop.f32.mrb[0].mxu0
        %v7546 = vadd.f32 %v7385, %v7545
        %v7547 = vpop.f32.mrb[0].mxu0
        %v7548 = vpop.f32.mrb[0].mxu0
        %v7549 = vadd.f32 %v7388, %v7548
        %v7550 = vpop.f32.mrb[0].mxu0
        %7551 = vmatprep.mubr.bf16.mxu0 %v5267
        %7552 = vmatmul.mubr.bf16.gmra.mrb[0].mxu0 %v5255
        %v7553 = vpop.f32.mrb[0].mxu0
        %v7554 = vadd.f32 %v7393, %v7553
        %v7555 = vpop.f32.mrb[0].mxu0
        %v7556 = vpop.f32.mrb[0].mxu0
        %v7557 = vadd.f32 %v7396, %v7556
        %v7558 = vpop.f32.mrb[0].mxu0
        %7559 = vmatprep.mubr.bf16.mxu0 %v5405
        %7560 = vmatmul.mubr.bf16.gmra.mrb[0].mxu0 %v5393
        %v7561 = vpop.f32.mrb[0].mxu0
        %v7562 = vadd.f32 %v7401, %v7561
        %v7563 = vpop.f32.mrb[0].mxu0
        %v7564 = vpop.f32.mrb[0].mxu0
        %v7565 = vadd.f32 %v7404, %v7564
        %v7566 = vpop.f32.mrb[0].mxu0
        %7567 = vmatprep.mubr.bf16.mxu0 %v5543
        %7568 = vmatmul.mubr.bf16.gmra.mrb[0].mxu0 %v5531
        %v7569 = vpop.f32.mrb[0].mxu0
        %v7570 = vadd.f32 %v7409, %v7569
        %v7571 = vpop.f32.mrb[0].mxu0
        %v7572 = vpop.f32.mrb[0].mxu0
        %v7573 = vadd.f32 %v7412, %v7572
        %v7574 = vpop.f32.mrb[0].mxu0
        %7575 = vmatprep.mubr.bf16.mxu0 %v5681
        %7576 = vmatmul.mubr.bf16.gmra.mrb[0].mxu0 %v5669
        %v7577 = vpop.f32.mrb[0].mxu0
        %v7578 = vadd.f32 %v7417, %v7577
        %v7579 = vpop.f32.mrb[0].mxu0
        %v7580 = vpop.f32.mrb[0].mxu0
        %v7581 = vadd.f32 %v7420, %v7580
        %v7582 = vpop.f32.mrb[0].mxu0
        %7583 = vmatprep.mubr.bf16.mxu0 %v5819
        %7584 = vmatmul.mubr.bf16.gmra.mrb[0].mxu0 %v5807
        %v7585 = vpop.f32.mrb[0].mxu0
        %v7586 = vadd.f32 %v7425, %v7585
        %v7587 = vpop.f32.mrb[0].mxu0
        %v7588 = vpop.f32.mrb[0].mxu0
        %v7589 = vadd.f32 %v7428, %v7588
        %v7590 = vpop.f32.mrb[0].mxu0
        %7591 = vmatprep.mubr.bf16.mxu0 %v5957
        %7592 = vmatmul.mubr.bf16.gmra.mrb[0].mxu0 %v5945
        %v7593 = vpop.f32.mrb[0].mxu0
        %v7594 = vadd.f32 %v7433, %v7593
        %v7595 = vpop.f32.mrb[0].mxu0
        %v7596 = vpop.f32.mrb[0].mxu0
        %v7597 = vadd.f32 %v7436, %v7596
        %v7598 = vpop.f32.mrb[0].mxu0
        %7599 = vmatprep.mubr.bf16.mxu0 %v6095
        %7600 = vmatmul.mubr.bf16.gmra.mrb[0].mxu0 %v6083
        %v7601 = vpop.f32.mrb[0].mxu0
        %v7602 = vadd.f32 %v7441, %v7601
        %v7603 = vpop.f32.mrb[0].mxu0
        %v7604 = vpop.f32.mrb[0].mxu0
        %v7605 = vadd.f32 %v7444, %v7604
        %v7606 = vpop.f32.mrb[0].mxu0
        %7607 = vmatprep.mubr.bf16.mxu0 %v6233
        %7608 = vmatmul.mubr.bf16.gmra.mrb[0].mxu0 %v6221
        %v7609 = vpop.f32.mrb[0].mxu0
        %v7610 = vadd.f32 %v7449, %v7609
        %v7611 = vpop.f32.mrb[0].mxu0
        %v7612 = vpop.f32.mrb[0].mxu0
        %v7613 = vadd.f32 %v7452, %v7612
        %v7614 = vpop.f32.mrb[0].mxu0
        %7615 = vmatprep.mubr.bf16.mxu0 %v6371
        %7616 = vmatmul.mubr.bf16.gmra.mrb[0].mxu0 %v6359
        %v7617 = vpop.f32.mrb[0].mxu0
        %v7618 = vadd.f32 %v7457, %v7617
        %v7619 = vpop.f32.mrb[0].mxu0
        %v7620 = vpop.f32.mrb[0].mxu0
        %v7621 = vadd.f32 %v7460, %v7620
        %v7622 = vpop.f32.mrb[0].mxu0
        %7623 = vmatprep.mubr.bf16.mxu0 %v6509
        %7624 = vmatmul.mubr.bf16.gmra.mrb[0].mxu0 %v6497
        %v7625 = vpop.f32.mrb[0].mxu0
        %v7626 = vadd.f32 %v7465, %v7625
        %v7627 = vpop.f32.mrb[0].mxu0
        %v7628 = vpop.f32.mrb[0].mxu0
        %v7629 = vadd.f32 %v7468, %v7628
        %v7630 = vpop.f32.mrb[0].mxu0
        %7631 = vdwg.mxu0
        %7632 = vmatprep.subr.bf16.mxu0 0
        %7633 = vmatpush1.bf16.msra.mxu0 %v7198
        %7634 = vmatprep.subr.bf16.mxu0 0
        %7635 = vmatpush1.bf16.msra.mxu0 %v7199
        %7636 = vmatprep.subr.bf16.mxu0 0
        %7637 = vmatpush1.bf16.msra.mxu0 %v7200
        %7638 = vmatprep.subr.bf16.mxu0 0
        %7639 = vmatpush1.bf16.msra.mxu0 %v7201
        %7640 = vmatprep.subr.bf16.mxu0 0
        %7641 = vmatpush1.bf16.msra.mxu0 %v7202
        %7642 = vmatprep.subr.bf16.mxu0 0
        %7643 = vmatpush1.bf16.msra.mxu0 %v7203
        %7644 = vmatprep.subr.bf16.mxu0 0
        %7645 = vmatpush1.bf16.msra.mxu0 %v7204
        %7646 = vmatprep.subr.bf16.mxu0 0
        %7647 = vmatpush1.bf16.msra.mxu0 %v7205
        %7648 = vmatprep.subr.bf16.mxu0 0
        %7649 = vmatpush1.bf16.msra.mxu0 %v7206
        %7650 = vmatprep.subr.bf16.mxu0 0
        %7651 = vmatpush1.bf16.msra.mxu0 %v7207
        %7652 = vmatprep.subr.bf16.mxu0 0
        %7653 = vmatpush1.bf16.msra.mxu0 %v7208
        %7654 = vmatprep.subr.bf16.mxu0 0
        %7655 = vmatpush1.bf16.msra.mxu0 %v7209
        %7656 = vmatprep.subr.bf16.mxu0 0
        %7657 = vmatpush1.bf16.msra.mxu0 %v7210
        %7658 = vmatprep.subr.bf16.mxu0 0
        %7659 = vmatpush1.bf16.msra.mxu0 %v7211
        %7660 = vmatprep.subr.bf16.mxu0 0
        %7661 = vmatpush1.bf16.msra.mxu0 %v7212
        %7662 = vmatprep.subr.bf16.mxu0 0
        %7663 = vmatpush1.bf16.msra.mxu0 %v7213
        %7664 = vmatprep.mubr.bf16.mxu0 %v4473
        %7665 = vmatmul.mubr.bf16.gmra.mrb[0].mxu0 %v4456
        %v7666 = vpop.f32.mrb[0].mxu0
        %v7667 = vadd.f32 %v7506, %v7666
        %v7668 = vpop.f32.mrb[0].mxu0
        %v7669 = vpop.f32.mrb[0].mxu0
        %v7670 = vadd.f32 %v7509, %v7669
        %v7671 = vpop.f32.mrb[0].mxu0
        %7672 = vmatprep.mubr.bf16.mxu0 %v4611
        %7673 = vmatmul.mubr.bf16.gmra.mrb[0].mxu0 %v4594
        %v7674 = vpop.f32.mrb[0].mxu0
        %v7675 = vadd.f32 %v7514, %v7674
        %v7676 = vpop.f32.mrb[0].mxu0
        %v7677 = vpop.f32.mrb[0].mxu0
        %v7678 = vadd.f32 %v7517, %v7677
        %v7679 = vpop.f32.mrb[0].mxu0
        %7680 = vmatprep.mubr.bf16.mxu0 %v4749
        %7681 = vmatmul.mubr.bf16.gmra.mrb[0].mxu0 %v4732
        %v7682 = vpop.f32.mrb[0].mxu0
        %v7683 = vadd.f32 %v7522, %v7682
        %v7684 = vpop.f32.mrb[0].mxu0
        %v7685 = vpop.f32.mrb[0].mxu0
        %v7686 = vadd.f32 %v7525, %v7685
        %v7687 = vpop.f32.mrb[0].mxu0
        %7688 = vmatprep.mubr.bf16.mxu0 %v4887
        %7689 = vmatmul.mubr.bf16.gmra.mrb[0].mxu0 %v4870
        %v7690 = vpop.f32.mrb[0].mxu0
        %v7691 = vadd.f32 %v7530, %v7690
        %v7692 = vpop.f32.mrb[0].mxu0
        %v7693 = vpop.f32.mrb[0].mxu0
        %v7694 = vadd.f32 %v7533, %v7693
        %v7695 = vpop.f32.mrb[0].mxu0
        %7696 = vmatprep.mubr.bf16.mxu0 %v5025
        %7697 = vmatmul.mubr.bf16.gmra.mrb[0].mxu0 %v5008
        %v7698 = vpop.f32.mrb[0].mxu0
        %v7699 = vadd.f32 %v7538, %v7698
        %v7700 = vpop.f32.mrb[0].mxu0
        %v7701 = vpop.f32.mrb[0].mxu0
        %v7702 = vadd.f32 %v7541, %v7701
        %v7703 = vpop.f32.mrb[0].mxu0
        %7704 = vmatprep.mubr.bf16.mxu0 %v5163
        %7705 = vmatmul.mubr.bf16.gmra.mrb[0].mxu0 %v5146
        %v7706 = vpop.f32.mrb[0].mxu0
        %v7707 = vadd.f32 %v7546, %v7706
        %v7708 = vpop.f32.mrb[0].mxu0
        %v7709 = vpop.f32.mrb[0].mxu0
        %v7710 = vadd.f32 %v7549, %v7709
        %v7711 = vpop.f32.mrb[0].mxu0
        %7712 = vmatprep.mubr.bf16.mxu0 %v5301
        %7713 = vmatmul.mubr.bf16.gmra.mrb[0].mxu0 %v5284
        %v7714 = vpop.f32.mrb[0].mxu0
        %v7715 = vadd.f32 %v7554, %v7714
        %v7716 = vpop.f32.mrb[0].mxu0
        %v7717 = vpop.f32.mrb[0].mxu0
        %v7718 = vadd.f32 %v7557, %v7717
        %v7719 = vpop.f32.mrb[0].mxu0
        %7720 = vmatprep.mubr.bf16.mxu0 %v5439
        %7721 = vmatmul.mubr.bf16.gmra.mrb[0].mxu0 %v5422
        %v7722 = vpop.f32.mrb[0].mxu0
        %v7723 = vadd.f32 %v7562, %v7722
        %v7724 = vpop.f32.mrb[0].mxu0
        %v7725 = vpop.f32.mrb[0].mxu0
        %v7726 = vadd.f32 %v7565, %v7725
        %v7727 = vpop.f32.mrb[0].mxu0
        %7728 = vmatprep.mubr.bf16.mxu0 %v5577
        %7729 = vmatmul.mubr.bf16.gmra.mrb[0].mxu0 %v5560
        %v7730 = vpop.f32.mrb[0].mxu0
        %v7731 = vadd.f32 %v7570, %v7730
        %v7732 = vpop.f32.mrb[0].mxu0
        %v7733 = vpop.f32.mrb[0].mxu0
        %v7734 = vadd.f32 %v7573, %v7733
        %v7735 = vpop.f32.mrb[0].mxu0
        %7736 = vmatprep.mubr.bf16.mxu0 %v5715
        %7737 = vmatmul.mubr.bf16.gmra.mrb[0].mxu0 %v5698
        %v7738 = vpop.f32.mrb[0].mxu0
        %v7739 = vadd.f32 %v7578, %v7738
        %v7740 = vpop.f32.mrb[0].mxu0
        %v7741 = vpop.f32.mrb[0].mxu0
        %v7742 = vadd.f32 %v7581, %v7741
        %v7743 = vpop.f32.mrb[0].mxu0
        %7744 = vmatprep.mubr.bf16.mxu0 %v5853
        %7745 = vmatmul.mubr.bf16.gmra.mrb[0].mxu0 %v5836
        %v7746 = vpop.f32.mrb[0].mxu0
        %v7747 = vadd.f32 %v7586, %v7746
        %v7748 = vpop.f32.mrb[0].mxu0
        %v7749 = vpop.f32.mrb[0].mxu0
        %v7750 = vadd.f32 %v7589, %v7749
        %v7751 = vpop.f32.mrb[0].mxu0
        %7752 = vmatprep.mubr.bf16.mxu0 %v5991
        %7753 = vmatmul.mubr.bf16.gmra.mrb[0].mxu0 %v5974
        %v7754 = vpop.f32.mrb[0].mxu0
        %v7755 = vadd.f32 %v7594, %v7754
        %v7756 = vpop.f32.mrb[0].mxu0
        %v7757 = vpop.f32.mrb[0].mxu0
        %v7758 = vadd.f32 %v7597, %v7757
        %v7759 = vpop.f32.mrb[0].mxu0
        %7760 = vmatprep.mubr.bf16.mxu0 %v6129
        %7761 = vmatmul.mubr.bf16.gmra.mrb[0].mxu0 %v6112
        %v7762 = vpop.f32.mrb[0].mxu0
        %v7763 = vadd.f32 %v7602, %v7762
        %v7764 = vpop.f32.mrb[0].mxu0
        %v7765 = vpop.f32.mrb[0].mxu0
        %v7766 = vadd.f32 %v7605, %v7765
        %v7767 = vpop.f32.mrb[0].mxu0
        %7768 = vmatprep.mubr.bf16.mxu0 %v6267
        %7769 = vmatmul.mubr.bf16.gmra.mrb[0].mxu0 %v6250
        %v7770 = vpop.f32.mrb[0].mxu0
        %v7771 = vadd.f32 %v7610, %v7770
        %v7772 = vpop.f32.mrb[0].mxu0
        %v7773 = vpop.f32.mrb[0].mxu0
        %v7774 = vadd.f32 %v7613, %v7773
        %v7775 = vpop.f32.mrb[0].mxu0
        %7776 = vmatprep.mubr.bf16.mxu0 %v6405
        %7777 = vmatmul.mubr.bf16.gmra.mrb[0].mxu0 %v6388
        %v7778 = vpop.f32.mrb[0].mxu0
        %v7779 = vadd.f32 %v7618, %v7778
        %v7780 = vpop.f32.mrb[0].mxu0
        %v7781 = vpop.f32.mrb[0].mxu0
        %v7782 = vadd.f32 %v7621, %v7781
        %v7783 = vpop.f32.mrb[0].mxu0
        %7784 = vmatprep.mubr.bf16.mxu0 %v6543
        %7785 = vmatmul.mubr.bf16.gmra.mrb[0].mxu0 %v6526
        %v7786 = vpop.f32.mrb[0].mxu0
        %v7787 = vadd.f32 %v7626, %v7786
        %v7788 = vpop.f32.mrb[0].mxu0
        %v7789 = vpop.f32.mrb[0].mxu0
        %v7790 = vadd.f32 %v7629, %v7789
        %v7791 = vpop.f32.mrb[0].mxu0
        %7792 = vdwg.mxu0
        %7793 = vmatprep.subr.bf16.mxu0 0
        %7794 = vmatpush1.bf16.msra.mxu0 %v7214
        %7795 = vmatprep.subr.bf16.mxu0 0
        %7796 = vmatpush1.bf16.msra.mxu0 %v7215
        %7797 = vmatprep.subr.bf16.mxu0 0
        %7798 = vmatpush1.bf16.msra.mxu0 %v7216
        %7799 = vmatprep.subr.bf16.mxu0 0
        %7800 = vmatpush1.bf16.msra.mxu0 %v7217
        %7801 = vmatprep.subr.bf16.mxu0 0
        %7802 = vmatpush1.bf16.msra.mxu0 %v7218
        %7803 = vmatprep.subr.bf16.mxu0 0
        %7804 = vmatpush1.bf16.msra.mxu0 %v7219
        %7805 = vmatprep.subr.bf16.mxu0 0
        %7806 = vmatpush1.bf16.msra.mxu0 %v7220
        %7807 = vmatprep.subr.bf16.mxu0 0
        %7808 = vmatpush1.bf16.msra.mxu0 %v7221
        %7809 = vmatprep.subr.bf16.mxu0 0
        %7810 = vmatpush1.bf16.msra.mxu0 %v7222
        %7811 = vmatprep.subr.bf16.mxu0 0
        %7812 = vmatpush1.bf16.msra.mxu0 %v7223
        %7813 = vmatprep.subr.bf16.mxu0 0
        %7814 = vmatpush1.bf16.msra.mxu0 %v7224
        %7815 = vmatprep.subr.bf16.mxu0 0
        %7816 = vmatpush1.bf16.msra.mxu0 %v7225
        %7817 = vmatprep.subr.bf16.mxu0 0
        %7818 = vmatpush1.bf16.msra.mxu0 %v7226
        %7819 = vmatprep.subr.bf16.mxu0 0
        %7820 = vmatpush1.bf16.msra.mxu0 %v7227
        %7821 = vmatprep.subr.bf16.mxu0 0
        %7822 = vmatpush1.bf16.msra.mxu0 %v7228
        %7823 = vmatprep.subr.bf16.mxu0 0
        %7824 = vmatpush1.bf16.msra.mxu0 %v7229
        %7825 = vmatprep.mubr.bf16.mxu0 %v4502
        %7826 = vmatmul.mubr.bf16.gmra.mrb[0].mxu0 %v4485
        %v7827 = vpop.f32.mrb[0].mxu0
        %v7828 = vadd.f32 %v7667, %v7827
        %v7829 = vpop.f32.mrb[0].mxu0
        %v7830 = vpop.f32.mrb[0].mxu0
        %v7831 = vadd.f32 %v7670, %v7830
        %v7832 = vpop.f32.mrb[0].mxu0
        %7833 = vmatprep.mubr.bf16.mxu0 %v4640
        %7834 = vmatmul.mubr.bf16.gmra.mrb[0].mxu0 %v4623
        %v7835 = vpop.f32.mrb[0].mxu0
        %v7836 = vadd.f32 %v7675, %v7835
        %v7837 = vpop.f32.mrb[0].mxu0
        %v7838 = vpop.f32.mrb[0].mxu0
        %v7839 = vadd.f32 %v7678, %v7838
        %v7840 = vpop.f32.mrb[0].mxu0
        %7841 = vmatprep.mubr.bf16.mxu0 %v4778
        %7842 = vmatmul.mubr.bf16.gmra.mrb[0].mxu0 %v4761
        %v7843 = vpop.f32.mrb[0].mxu0
        %v7844 = vadd.f32 %v7683, %v7843
        %v7845 = vpop.f32.mrb[0].mxu0
        %v7846 = vpop.f32.mrb[0].mxu0
        %v7847 = vadd.f32 %v7686, %v7846
        %v7848 = vpop.f32.mrb[0].mxu0
        %7849 = vmatprep.mubr.bf16.mxu0 %v4916
        %7850 = vmatmul.mubr.bf16.gmra.mrb[0].mxu0 %v4899
        %v7851 = vpop.f32.mrb[0].mxu0
        %v7852 = vadd.f32 %v7691, %v7851
        %v7853 = vpop.f32.mrb[0].mxu0
        %v7854 = vpop.f32.mrb[0].mxu0
        %v7855 = vadd.f32 %v7694, %v7854
        %v7856 = vpop.f32.mrb[0].mxu0
        %7857 = vmatprep.mubr.bf16.mxu0 %v5054
        %7858 = vmatmul.mubr.bf16.gmra.mrb[0].mxu0 %v5037
        %v7859 = vpop.f32.mrb[0].mxu0
        %v7860 = vadd.f32 %v7699, %v7859
        %v7861 = vpop.f32.mrb[0].mxu0
        %v7862 = vpop.f32.mrb[0].mxu0
        %v7863 = vadd.f32 %v7702, %v7862
        %v7864 = vpop.f32.mrb[0].mxu0
        %7865 = vmatprep.mubr.bf16.mxu0 %v5192
        %7866 = vmatmul.mubr.bf16.gmra.mrb[0].mxu0 %v5175
        %v7867 = vpop.f32.mrb[0].mxu0
        %v7868 = vadd.f32 %v7707, %v7867
        %v7869 = vpop.f32.mrb[0].mxu0
        %v7870 = vpop.f32.mrb[0].mxu0
        %v7871 = vadd.f32 %v7710, %v7870
        %v7872 = vpop.f32.mrb[0].mxu0
        %7873 = vmatprep.mubr.bf16.mxu0 %v5330
        %7874 = vmatmul.mubr.bf16.gmra.mrb[0].mxu0 %v5313
        %v7875 = vpop.f32.mrb[0].mxu0
        %v7876 = vadd.f32 %v7715, %v7875
        %v7877 = vpop.f32.mrb[0].mxu0
        %v7878 = vpop.f32.mrb[0].mxu0
        %v7879 = vadd.f32 %v7718, %v7878
        %v7880 = vpop.f32.mrb[0].mxu0
        %7881 = vmatprep.mubr.bf16.mxu0 %v5468
        %7882 = vmatmul.mubr.bf16.gmra.mrb[0].mxu0 %v5451
        %v7883 = vpop.f32.mrb[0].mxu0
        %v7884 = vadd.f32 %v7723, %v7883
        %v7885 = vpop.f32.mrb[0].mxu0
        %v7886 = vpop.f32.mrb[0].mxu0
        %v7887 = vadd.f32 %v7726, %v7886
        %v7888 = vpop.f32.mrb[0].mxu0
        %7889 = vmatprep.mubr.bf16.mxu0 %v5606
        %7890 = vmatmul.mubr.bf16.gmra.mrb[0].mxu0 %v5589
        %v7891 = vpop.f32.mrb[0].mxu0
        %v7892 = vadd.f32 %v7731, %v7891
        %v7893 = vpop.f32.mrb[0].mxu0
        %v7894 = vpop.f32.mrb[0].mxu0
        %v7895 = vadd.f32 %v7734, %v7894
        %v7896 = vpop.f32.mrb[0].mxu0
        %7897 = vmatprep.mubr.bf16.mxu0 %v5744
        %7898 = vmatmul.mubr.bf16.gmra.mrb[0].mxu0 %v5727
        %v7899 = vpop.f32.mrb[0].mxu0
        %v7900 = vadd.f32 %v7739, %v7899
        %v7901 = vpop.f32.mrb[0].mxu0
        %v7902 = vpop.f32.mrb[0].mxu0
        %v7903 = vadd.f32 %v7742, %v7902
        %v7904 = vpop.f32.mrb[0].mxu0
        %7905 = vmatprep.mubr.bf16.mxu0 %v5882
        %7906 = vmatmul.mubr.bf16.gmra.mrb[0].mxu0 %v5865
        %v7907 = vpop.f32.mrb[0].mxu0
        %v7908 = vadd.f32 %v7747, %v7907
        %v7909 = vpop.f32.mrb[0].mxu0
        %v7910 = vpop.f32.mrb[0].mxu0
        %v7911 = vadd.f32 %v7750, %v7910
        %v7912 = vpop.f32.mrb[0].mxu0
        %7913 = vmatprep.mubr.bf16.mxu0 %v6020
        %7914 = vmatmul.mubr.bf16.gmra.mrb[0].mxu0 %v6003
        %v7915 = vpop.f32.mrb[0].mxu0
        %v7916 = vadd.f32 %v7755, %v7915
        %v7917 = vpop.f32.mrb[0].mxu0
        %v7918 = vpop.f32.mrb[0].mxu0
        %v7919 = vadd.f32 %v7758, %v7918
        %v7920 = vpop.f32.mrb[0].mxu0
        %7921 = vmatprep.mubr.bf16.mxu0 %v6158
        %7922 = vmatmul.mubr.bf16.gmra.mrb[0].mxu0 %v6141
        %v7923 = vpop.f32.mrb[0].mxu0
        %v7924 = vadd.f32 %v7763, %v7923
        %v7925 = vpop.f32.mrb[0].mxu0
        %v7926 = vpop.f32.mrb[0].mxu0
        %v7927 = vadd.f32 %v7766, %v7926
        %v7928 = vpop.f32.mrb[0].mxu0
        %7929 = vmatprep.mubr.bf16.mxu0 %v6296
        %7930 = vmatmul.mubr.bf16.gmra.mrb[0].mxu0 %v6279
        %v7931 = vpop.f32.mrb[0].mxu0
        %v7932 = vadd.f32 %v7771, %v7931
        %v7933 = vpop.f32.mrb[0].mxu0
        %v7934 = vpop.f32.mrb[0].mxu0
        %v7935 = vadd.f32 %v7774, %v7934
        %v7936 = vpop.f32.mrb[0].mxu0
        %7937 = vmatprep.mubr.bf16.mxu0 %v6434
        %7938 = vmatmul.mubr.bf16.gmra.mrb[0].mxu0 %v6417
        %v7939 = vpop.f32.mrb[0].mxu0
        %v7940 = vadd.f32 %v7779, %v7939
        %v7941 = vpop.f32.mrb[0].mxu0
        %v7942 = vpop.f32.mrb[0].mxu0
        %v7943 = vadd.f32 %v7782, %v7942
        %v7944 = vpop.f32.mrb[0].mxu0
        %7945 = vmatprep.mubr.bf16.mxu0 %v6572
        %7946 = vmatmul.mubr.bf16.gmra.mrb[0].mxu0 %v6555
        %v7947 = vpop.f32.mrb[0].mxu0
        %v7948 = vadd.f32 %v7787, %v7947
        %v7949 = vpop.f32.mrb[0].mxu0
        %v7950 = vpop.f32.mrb[0].mxu0
        %v7951 = vadd.f32 %v7790, %v7950
        %v7952 = vpop.f32.mrb[0].mxu0
        %7953 = vdwg.mxu0
        %7954 = vmatprep.subr.bf16.mxu0 0
        %7955 = vmatpush1.bf16.msra.mxu0 %v7230
        %7956 = vmatprep.subr.bf16.mxu0 0
        %7957 = vmatpush1.bf16.msra.mxu0 %v7231
        %7958 = vmatprep.subr.bf16.mxu0 0
        %7959 = vmatpush1.bf16.msra.mxu0 %v7232
        %7960 = vmatprep.subr.bf16.mxu0 0
        %7961 = vmatpush1.bf16.msra.mxu0 %v7233
        %7962 = vmatprep.subr.bf16.mxu0 0
        %7963 = vmatpush1.bf16.msra.mxu0 %v7234
        %7964 = vmatprep.subr.bf16.mxu0 0
        %7965 = vmatpush1.bf16.msra.mxu0 %v7235
        %7966 = vmatprep.subr.bf16.mxu0 0
        %7967 = vmatpush1.bf16.msra.mxu0 %v7236
        %7968 = vmatprep.subr.bf16.mxu0 0
        %7969 = vmatpush1.bf16.msra.mxu0 %v7237
        %7970 = vmatprep.subr.bf16.mxu0 0
        %7971 = vmatpush1.bf16.msra.mxu0 0
        %7972 = vmatprep.subr.bf16.mxu0 0
        %7973 = vmatpush1.bf16.msra.mxu0 0
        %7974 = vmatprep.subr.bf16.mxu0 0
        %7975 = vmatpush1.bf16.msra.mxu0 0
        %7976 = vmatprep.subr.bf16.mxu0 0
        %7977 = vmatpush1.bf16.msra.mxu0 0
        %7978 = vmatprep.subr.bf16.mxu0 0
        %7979 = vmatpush1.bf16.msra.mxu0 0
        %7980 = vmatprep.subr.bf16.mxu0 0
        %7981 = vmatpush1.bf16.msra.mxu0 0
        %7982 = vmatprep.subr.bf16.mxu0 0
        %7983 = vmatpush1.bf16.msra.mxu0 0
        %7984 = vmatprep.subr.bf16.mxu0 0
        %7985 = vmatpush1.bf16.msra.mxu0 0
        %7986 = vmatprep.mubr.bf16.mxu0 0
        %7987 = vmatmul.mubr.bf16.gmra.mrb[0].mxu0 %v4519
        %v7988 = vpop.f32.mrb[0].mxu0
        %v7989 = vadd.f32 %v7828, %v7988
        %v7990 = vpop.f32.mrb[0].mxu0
        %v7991 = vpop.f32.mrb[0].mxu0
        %v7992 = vadd.f32 %v7831, %v7991
        %v7993 = vpop.f32.mrb[0].mxu0
        %7994 = vmatprep.mubr.bf16.mxu0 0
        %7995 = vmatmul.mubr.bf16.gmra.mrb[0].mxu0 %v4657
        %v7996 = vpop.f32.mrb[0].mxu0
        %v7997 = vadd.f32 %v7836, %v7996
        %v7998 = vpop.f32.mrb[0].mxu0
        %v7999 = vpop.f32.mrb[0].mxu0
        %v8000 = vadd.f32 %v7839, %v7999
        %v8001 = vpop.f32.mrb[0].mxu0
        %8002 = vmatprep.mubr.bf16.mxu0 0
        %8003 = vmatmul.mubr.bf16.gmra.mrb[0].mxu0 %v4795
        %v8004 = vpop.f32.mrb[0].mxu0
        %v8005 = vadd.f32 %v7844, %v8004
        %v8006 = vpop.f32.mrb[0].mxu0
        %v8007 = vpop.f32.mrb[0].mxu0
        %v8008 = vadd.f32 %v7847, %v8007
        %v8009 = vpop.f32.mrb[0].mxu0
        %8010 = vmatprep.mubr.bf16.mxu0 0
        %8011 = vmatmul.mubr.bf16.gmra.mrb[0].mxu0 %v4933
        %v8012 = vpop.f32.mrb[0].mxu0
        %v8013 = vadd.f32 %v7852, %v8012
        %v8014 = vpop.f32.mrb[0].mxu0
        %v8015 = vpop.f32.mrb[0].mxu0
        %v8016 = vadd.f32 %v7855, %v8015
        %v8017 = vpop.f32.mrb[0].mxu0
        %8018 = vmatprep.mubr.bf16.mxu0 0
        %8019 = vmatmul.mubr.bf16.gmra.mrb[0].mxu0 %v5071
        %v8020 = vpop.f32.mrb[0].mxu0
        %v8021 = vadd.f32 %v7860, %v8020
        %v8022 = vpop.f32.mrb[0].mxu0
        %v8023 = vpop.f32.mrb[0].mxu0
        %v8024 = vadd.f32 %v7863, %v8023
        %v8025 = vpop.f32.mrb[0].mxu0
        %8026 = vmatprep.mubr.bf16.mxu0 0
        %8027 = vmatmul.mubr.bf16.gmra.mrb[0].mxu0 %v5209
        %v8028 = vpop.f32.mrb[0].mxu0
        %v8029 = vadd.f32 %v7868, %v8028
        %v8030 = vpop.f32.mrb[0].mxu0
        %v8031 = vpop.f32.mrb[0].mxu0
        %v8032 = vadd.f32 %v7871, %v8031
        %v8033 = vpop.f32.mrb[0].mxu0
        %8034 = vmatprep.mubr.bf16.mxu0 0
        %8035 = vmatmul.mubr.bf16.gmra.mrb[0].mxu0 %v5347
        %v8036 = vpop.f32.mrb[0].mxu0
        %v8037 = vadd.f32 %v7876, %v8036
        %v8038 = vpop.f32.mrb[0].mxu0
        %v8039 = vpop.f32.mrb[0].mxu0
        %v8040 = vadd.f32 %v7879, %v8039
        %v8041 = vpop.f32.mrb[0].mxu0
        %8042 = vmatprep.mubr.bf16.mxu0 0
        %8043 = vmatmul.mubr.bf16.gmra.mrb[0].mxu0 %v5485
        %v8044 = vpop.f32.mrb[0].mxu0
        %v8045 = vadd.f32 %v7884, %v8044
        %v8046 = vpop.f32.mrb[0].mxu0
        %v8047 = vpop.f32.mrb[0].mxu0
        %v8048 = vadd.f32 %v7887, %v8047
        %v8049 = vpop.f32.mrb[0].mxu0
        %8050 = vmatprep.mubr.bf16.mxu0 0
        %8051 = vmatmul.mubr.bf16.gmra.mrb[0].mxu0 %v5623
        %v8052 = vpop.f32.mrb[0].mxu0
        %v8053 = vadd.f32 %v7892, %v8052
        %v8054 = vpop.f32.mrb[0].mxu0
        %v8055 = vpop.f32.mrb[0].mxu0
        %v8056 = vadd.f32 %v7895, %v8055
        %v8057 = vpop.f32.mrb[0].mxu0
        %8058 = vmatprep.mubr.bf16.mxu0 0
        %8059 = vmatmul.mubr.bf16.gmra.mrb[0].mxu0 %v5761
        %v8060 = vpop.f32.mrb[0].mxu0
        %v8061 = vadd.f32 %v7900, %v8060
        %v8062 = vpop.f32.mrb[0].mxu0
        %v8063 = vpop.f32.mrb[0].mxu0
        %v8064 = vadd.f32 %v7903, %v8063
        %v8065 = vpop.f32.mrb[0].mxu0
        %8066 = vmatprep.mubr.bf16.mxu0 0
        %8067 = vmatmul.mubr.bf16.gmra.mrb[0].mxu0 %v5899
        %v8068 = vpop.f32.mrb[0].mxu0
        %v8069 = vadd.f32 %v7908, %v8068
        %v8070 = vpop.f32.mrb[0].mxu0
        %v8071 = vpop.f32.mrb[0].mxu0
        %v8072 = vadd.f32 %v7911, %v8071
        %v8073 = vpop.f32.mrb[0].mxu0
        %8074 = vmatprep.mubr.bf16.mxu0 0
        %8075 = vmatmul.mubr.bf16.gmra.mrb[0].mxu0 %v6037
        %v8076 = vpop.f32.mrb[0].mxu0
        %v8077 = vadd.f32 %v7916, %v8076
        %v8078 = vpop.f32.mrb[0].mxu0
        %v8079 = vpop.f32.mrb[0].mxu0
        %v8080 = vadd.f32 %v7919, %v8079
        %v8081 = vpop.f32.mrb[0].mxu0
        %8082 = vmatprep.mubr.bf16.mxu0 0
        %8083 = vmatmul.mubr.bf16.gmra.mrb[0].mxu0 %v6175
        %v8084 = vpop.f32.mrb[0].mxu0
        %v8085 = vadd.f32 %v7924, %v8084
        %v8086 = vpop.f32.mrb[0].mxu0
        %v8087 = vpop.f32.mrb[0].mxu0
        %v8088 = vadd.f32 %v7927, %v8087
        %v8089 = vpop.f32.mrb[0].mxu0
        %8090 = vmatprep.mubr.bf16.mxu0 0
        %8091 = vmatmul.mubr.bf16.gmra.mrb[0].mxu0 %v6313
        %v8092 = vpop.f32.mrb[0].mxu0
        %v8093 = vadd.f32 %v7932, %v8092
        %v8094 = vpop.f32.mrb[0].mxu0
        %v8095 = vpop.f32.mrb[0].mxu0
        %v8096 = vadd.f32 %v7935, %v8095
        %v8097 = vpop.f32.mrb[0].mxu0
        %8098 = vmatprep.mubr.bf16.mxu0 0
        %8099 = vmatmul.mubr.bf16.gmra.mrb[0].mxu0 %v6451
        %v8100 = vpop.f32.mrb[0].mxu0
        %v8101 = vadd.f32 %v7940, %v8100
        %v8102 = vpop.f32.mrb[0].mxu0
        %v8103 = vpop.f32.mrb[0].mxu0
        %v8104 = vadd.f32 %v7943, %v8103
        %v8105 = vpop.f32.mrb[0].mxu0
        %8106 = vmatprep.mubr.bf16.mxu0 0
        %8107 = vmatmul.mubr.bf16.gmra.mrb[0].mxu0 %v6589
        %v8108 = vpop.f32.mrb[0].mxu0
        %v8109 = vadd.f32 %v7948, %v8108
        %v8110 = vpop.f32.mrb[0].mxu0
        %v8111 = vpop.f32.mrb[0].mxu0
        %v8112 = vadd.f32 %v7951, %v8111
        %v8113 = vpop.f32.mrb[0].mxu0
        %8114 = vdwg.mxu0
        %v8115 = vunpack.c.l.b16 %v2841
        %v8116 = vunpack.c.l.b16 %v2851
        %v8117 = vunpack.c.l.b16 %v2865
        %v8118 = vunpack.c.l.b16 %v2875
        %v8119 = vunpack.c.l.b16 %v2889
        %v8120 = vunpack.c.l.b16 %v2899
        %v8121 = vunpack.c.l.b16 %v2913
        %v8122 = vunpack.c.l.b16 %v2923
        %v8123 = vunpack.c.l.b16 %v2937
        %v8124 = vunpack.c.l.b16 %v2947
        %v8125 = vunpack.c.l.b16 %v2961
        %v8126 = vunpack.c.l.b16 %v2971
        %v8127 = vunpack.c.l.b16 %v2985
        %v8128 = vunpack.c.l.b16 %v2995
        %v8129 = vunpack.c.l.b16 %v3009
        %v8130 = vunpack.c.l.b16 %v3019
        %v8131 = vunpack.c.l.b16 %v3033
        %v8132 = vunpack.c.l.b16 %v3043
        %v8133 = vunpack.c.l.b16 %v3057
        %v8134 = vunpack.c.l.b16 %v3067
        %v8135 = vunpack.c.l.b16 %v3081
        %v8136 = vunpack.c.l.b16 %v3091
        %v8137 = vunpack.c.l.b16 %v3105
        %v8138 = vunpack.c.l.b16 %v3115
        %v8139 = vunpack.c.l.b16 %v3129
        %v8140 = vunpack.c.l.b16 %v3139
        %v8141 = vunpack.c.l.b16 %v3153
        %v8142 = vunpack.c.l.b16 %v3163
        %v8143 = vunpack.c.l.b16 %v3177
        %v8144 = vunpack.c.l.b16 %v3187
        %v8145 = vunpack.c.l.b16 %v3201
        %v8146 = vunpack.c.l.b16 %v3211
        %v8147 = vpack.c.b16 %v8116, %v8115
        %v8148 = vpack.c.b16 %v8118, %v8117
        %v8149 = vpack.c.b16 %v8120, %v8119
        %v8150 = vpack.c.b16 %v8122, %v8121
        %v8151 = vpack.c.b16 %v8124, %v8123
        %v8152 = vpack.c.b16 %v8126, %v8125
        %v8153 = vpack.c.b16 %v8128, %v8127
        %v8154 = vpack.c.b16 %v8130, %v8129
        %v8155 = vpack.c.b16 %v8132, %v8131
        %v8156 = vpack.c.b16 %v8134, %v8133
        %v8157 = vpack.c.b16 %v8136, %v8135
        %v8158 = vpack.c.b16 %v8138, %v8137
        %v8159 = vpack.c.b16 %v8140, %v8139
        %v8160 = vpack.c.b16 %v8142, %v8141
        %v8161 = vpack.c.b16 %v8144, %v8143
        %v8162 = vpack.c.b16 %v8146, %v8145
        %v8195 = vunpack.c.l.b16 %v3212
        %v8196 = vunpack.c.l.b16 %v3213
        %v8197 = vunpack.c.l.b16 %v3214
        %v8198 = vunpack.c.l.b16 %v3215
        %v8199 = vunpack.c.l.b16 %v3216
        %v8200 = vunpack.c.l.b16 %v3217
        %v8201 = vunpack.c.l.b16 %v3218
        %v8202 = vunpack.c.l.b16 %v3219
        %v8203 = vunpack.c.l.b16 %v3220
        %v8204 = vunpack.c.l.b16 %v3221
        %v8205 = vunpack.c.l.b16 %v3222
        %v8206 = vunpack.c.l.b16 %v3223
        %v8207 = vunpack.c.l.b16 %v3224
        %v8208 = vunpack.c.l.b16 %v3225
        %v8209 = vunpack.c.l.b16 %v3226
        %v8210 = vunpack.c.l.b16 %v3227
        %v8211 = vpack.c.b16 %v8196, %v8195
        %v8212 = vpack.c.b16 %v8198, %v8197
        %v8213 = vpack.c.b16 %v8200, %v8199
        %v8214 = vpack.c.b16 %v8202, %v8201
        %v8215 = vpack.c.b16 %v8204, %v8203
        %v8216 = vpack.c.b16 %v8206, %v8205
        %v8217 = vpack.c.b16 %v8208, %v8207
        %v8218 = vpack.c.b16 %v8210, %v8209
        %8227 = vmatprep.subr.bf16.mxu0 0
        %8228 = vmatpush1.bf16.msra.mxu0 %v8211
        %8229 = vmatprep.subr.bf16.mxu0 0
        %8230 = vmatpush1.bf16.msra.mxu0 %v8212
        %8231 = vmatprep.subr.bf16.mxu0 0
        %8232 = vmatpush1.bf16.msra.mxu0 %v8213
        %8233 = vmatprep.subr.bf16.mxu0 0
        %8234 = vmatpush1.bf16.msra.mxu0 %v8214
        %8235 = vmatprep.subr.bf16.mxu0 0
        %8236 = vmatpush1.bf16.msra.mxu0 %v8215
        %8237 = vmatprep.subr.bf16.mxu0 0
        %8238 = vmatpush1.bf16.msra.mxu0 %v8216
        %8239 = vmatprep.subr.bf16.mxu0 0
        %8240 = vmatpush1.bf16.msra.mxu0 %v8217
        %8241 = vmatprep.subr.bf16.mxu0 0
        %8242 = vmatpush1.bf16.msra.mxu0 %v8218
        %8243 = vmatprep.subr.bf16.mxu0 0
        %8244 = vmatpush1.bf16.msra.mxu0 0
        %8245 = vmatprep.subr.bf16.mxu0 0
        %8246 = vmatpush1.bf16.msra.mxu0 0
        %8247 = vmatprep.subr.bf16.mxu0 0
        %8248 = vmatpush1.bf16.msra.mxu0 0
        %8249 = vmatprep.subr.bf16.mxu0 0
        %8250 = vmatpush1.bf16.msra.mxu0 0
        %8251 = vmatprep.subr.bf16.mxu0 0
        %8252 = vmatpush1.bf16.msra.mxu0 0
        %8253 = vmatprep.subr.bf16.mxu0 0
        %8254 = vmatpush1.bf16.msra.mxu0 0
        %8255 = vmatprep.subr.bf16.mxu0 0
        %8256 = vmatpush1.bf16.msra.mxu0 0
        %8257 = vmatprep.subr.bf16.mxu0 0
        %8258 = vmatpush1.bf16.msra.mxu0 0
        %8259 = vmatprep.mubr.bf16.mxu0 0
        %8260 = vmatmul.mubr.bf16.gmra.mrb[0].mxu0 %v8147
        %v8261 = vpop.f32.mrb[0].mxu0
        %v8262 = vadd.f32 %v7989, %v8261
        %v8263 = vpop.f32.mrb[0].mxu0
        %v8264 = vpop.f32.mrb[0].mxu0
        %v8265 = vadd.f32 %v7992, %v8264
        %v8266 = vpop.f32.mrb[0].mxu0
        %8267 = vmatprep.mubr.bf16.mxu0 0
        %8268 = vmatmul.mubr.bf16.gmra.mrb[0].mxu0 %v8148
        %v8269 = vpop.f32.mrb[0].mxu0
        %v8270 = vadd.f32 %v7997, %v8269
        %v8271 = vpop.f32.mrb[0].mxu0
        %v8272 = vpop.f32.mrb[0].mxu0
        %v8273 = vadd.f32 %v8000, %v8272
        %v8274 = vpop.f32.mrb[0].mxu0
        %8275 = vmatprep.mubr.bf16.mxu0 0
        %8276 = vmatmul.mubr.bf16.gmra.mrb[0].mxu0 %v8149
        %v8277 = vpop.f32.mrb[0].mxu0
        %v8278 = vadd.f32 %v8005, %v8277
        %v8279 = vpop.f32.mrb[0].mxu0
        %v8280 = vpop.f32.mrb[0].mxu0
        %v8281 = vadd.f32 %v8008, %v8280
        %v8282 = vpop.f32.mrb[0].mxu0
        %8283 = vmatprep.mubr.bf16.mxu0 0
        %8284 = vmatmul.mubr.bf16.gmra.mrb[0].mxu0 %v8150
        %v8285 = vpop.f32.mrb[0].mxu0
        %v8286 = vadd.f32 %v8013, %v8285
        %v8287 = vpop.f32.mrb[0].mxu0
        %v8288 = vpop.f32.mrb[0].mxu0
        %v8289 = vadd.f32 %v8016, %v8288
        %v8290 = vpop.f32.mrb[0].mxu0
        %8291 = vmatprep.mubr.bf16.mxu0 0
        %8292 = vmatmul.mubr.bf16.gmra.mrb[0].mxu0 %v8151
        %v8293 = vpop.f32.mrb[0].mxu0
        %v8294 = vadd.f32 %v8021, %v8293
        %v8295 = vpop.f32.mrb[0].mxu0
        %v8296 = vpop.f32.mrb[0].mxu0
        %v8297 = vadd.f32 %v8024, %v8296
        %v8298 = vpop.f32.mrb[0].mxu0
        %8299 = vmatprep.mubr.bf16.mxu0 0
        %8300 = vmatmul.mubr.bf16.gmra.mrb[0].mxu0 %v8152
        %v8301 = vpop.f32.mrb[0].mxu0
        %v8302 = vadd.f32 %v8029, %v8301
        %v8303 = vpop.f32.mrb[0].mxu0
        %v8304 = vpop.f32.mrb[0].mxu0
        %v8305 = vadd.f32 %v8032, %v8304
        %v8306 = vpop.f32.mrb[0].mxu0
        %8307 = vmatprep.mubr.bf16.mxu0 0
        %8308 = vmatmul.mubr.bf16.gmra.mrb[0].mxu0 %v8153
        %v8309 = vpop.f32.mrb[0].mxu0
        %v8310 = vadd.f32 %v8037, %v8309
        %v8311 = vpop.f32.mrb[0].mxu0
        %v8312 = vpop.f32.mrb[0].mxu0
        %v8313 = vadd.f32 %v8040, %v8312
        %v8314 = vpop.f32.mrb[0].mxu0
        %8315 = vmatprep.mubr.bf16.mxu0 0
        %8316 = vmatmul.mubr.bf16.gmra.mrb[0].mxu0 %v8154
        %v8317 = vpop.f32.mrb[0].mxu0
        %v8318 = vadd.f32 %v8045, %v8317
        %v8319 = vpop.f32.mrb[0].mxu0
        %v8320 = vpop.f32.mrb[0].mxu0
        %v8321 = vadd.f32 %v8048, %v8320
        %v8322 = vpop.f32.mrb[0].mxu0
        %8323 = vmatprep.mubr.bf16.mxu0 0
        %8324 = vmatmul.mubr.bf16.gmra.mrb[0].mxu0 %v8155
        %v8325 = vpop.f32.mrb[0].mxu0
        %v8326 = vadd.f32 %v8053, %v8325
        %v8327 = vpop.f32.mrb[0].mxu0
        %v8328 = vpop.f32.mrb[0].mxu0
        %v8329 = vadd.f32 %v8056, %v8328
        %v8330 = vpop.f32.mrb[0].mxu0
        %8331 = vmatprep.mubr.bf16.mxu0 0
        %8332 = vmatmul.mubr.bf16.gmra.mrb[0].mxu0 %v8156
        %v8333 = vpop.f32.mrb[0].mxu0
        %v8334 = vadd.f32 %v8061, %v8333
        %v8335 = vpop.f32.mrb[0].mxu0
        %v8336 = vpop.f32.mrb[0].mxu0
        %v8337 = vadd.f32 %v8064, %v8336
        %v8338 = vpop.f32.mrb[0].mxu0
        %8339 = vmatprep.mubr.bf16.mxu0 0
        %8340 = vmatmul.mubr.bf16.gmra.mrb[0].mxu0 %v8157
        %v8341 = vpop.f32.mrb[0].mxu0
        %v8342 = vadd.f32 %v8069, %v8341
        %v8343 = vpop.f32.mrb[0].mxu0
        %v8344 = vpop.f32.mrb[0].mxu0
        %v8345 = vadd.f32 %v8072, %v8344
        %v8346 = vpop.f32.mrb[0].mxu0
        %8347 = vmatprep.mubr.bf16.mxu0 0
        %8348 = vmatmul.mubr.bf16.gmra.mrb[0].mxu0 %v8158
        %v8349 = vpop.f32.mrb[0].mxu0
        %v8350 = vadd.f32 %v8077, %v8349
        %v8351 = vpop.f32.mrb[0].mxu0
        %v8352 = vpop.f32.mrb[0].mxu0
        %v8353 = vadd.f32 %v8080, %v8352
        %v8354 = vpop.f32.mrb[0].mxu0
        %8355 = vmatprep.mubr.bf16.mxu0 0
        %8356 = vmatmul.mubr.bf16.gmra.mrb[0].mxu0 %v8159
        %v8357 = vpop.f32.mrb[0].mxu0
        %v8358 = vadd.f32 %v8085, %v8357
        %v8359 = vpop.f32.mrb[0].mxu0
        %v8360 = vpop.f32.mrb[0].mxu0
        %v8361 = vadd.f32 %v8088, %v8360
        %v8362 = vpop.f32.mrb[0].mxu0
        %8363 = vmatprep.mubr.bf16.mxu0 0
        %8364 = vmatmul.mubr.bf16.gmra.mrb[0].mxu0 %v8160
        %v8365 = vpop.f32.mrb[0].mxu0
        %v8366 = vadd.f32 %v8093, %v8365
        %v8367 = vpop.f32.mrb[0].mxu0
        %v8368 = vpop.f32.mrb[0].mxu0
        %v8369 = vadd.f32 %v8096, %v8368
        %v8370 = vpop.f32.mrb[0].mxu0
        %8371 = vmatprep.mubr.bf16.mxu0 0
        %8372 = vmatmul.mubr.bf16.gmra.mrb[0].mxu0 %v8161
        %v8373 = vpop.f32.mrb[0].mxu0
        %v8374 = vadd.f32 %v8101, %v8373
        %v8375 = vpop.f32.mrb[0].mxu0
        %v8376 = vpop.f32.mrb[0].mxu0
        %v8377 = vadd.f32 %v8104, %v8376
        %v8378 = vpop.f32.mrb[0].mxu0
        %8379 = vmatprep.mubr.bf16.mxu0 0
        %8380 = vmatmul.mubr.bf16.gmra.mrb[0].mxu0 %v8162
        %v8381 = vpop.f32.mrb[0].mxu0
        %v8382 = vadd.f32 %v8109, %v8381
        %v8383 = vpop.f32.mrb[0].mxu0
        %v8384 = vpop.f32.mrb[0].mxu0
        %v8385 = vadd.f32 %v8112, %v8384
        %v8386 = vpop.f32.mrb[0].mxu0
        %8387 = vdwg.mxu0
        %v8388 = vld [vmem:[%s5] sm:$0x1]
        %v8390 = vlaneseq
        %v8391 = vshrl.u32 %v8390, 7
        %v8392 = vsub.s32 0, %v8391
        %v8393 = vrot.slane %v8388, %v8392
        %v8395 = vadd.f32 %v8262, %v8393
        %v8396 = vadd.f32 %v8265, %v8393
        %v8397 = vadd.f32 %v8270, %v8393
        %v8398 = vadd.f32 %v8273, %v8393
        %v8399 = vadd.f32 %v8278, %v8393
        %v8400 = vadd.f32 %v8281, %v8393
        %v8401 = vadd.f32 %v8286, %v8393
        %v8402 = vadd.f32 %v8289, %v8393
        %v8403 = vadd.f32 %v8294, %v8393
        %v8404 = vadd.f32 %v8297, %v8393
        %v8405 = vadd.f32 %v8302, %v8393
        %v8406 = vadd.f32 %v8305, %v8393
        %v8407 = vadd.f32 %v8310, %v8393
        %v8408 = vadd.f32 %v8313, %v8393
        %v8409 = vadd.f32 %v8318, %v8393
        %v8410 = vadd.f32 %v8321, %v8393
        %v8411 = vadd.f32 %v8326, %v8393
        %v8412 = vadd.f32 %v8329, %v8393
        %v8413 = vadd.f32 %v8334, %v8393
        %v8414 = vadd.f32 %v8337, %v8393
        %v8415 = vadd.f32 %v8342, %v8393
        %v8416 = vadd.f32 %v8345, %v8393
        %v8417 = vadd.f32 %v8350, %v8393
        %v8418 = vadd.f32 %v8353, %v8393
        %v8419 = vadd.f32 %v8358, %v8393
        %v8420 = vadd.f32 %v8361, %v8393
        %v8421 = vadd.f32 %v8366, %v8393
        %v8422 = vadd.f32 %v8369, %v8393
        %v8423 = vadd.f32 %v8374, %v8393
        %v8424 = vadd.f32 %v8377, %v8393
        %v8425 = vadd.f32 %v8382, %v8393
        %v8426 = vadd.f32 %v8385, %v8393
        %v8427 = vmax.f32 %v8395, 0.0
        %v8428 = vmax.f32 %v8396, 0.0
        %v8429 = vmax.f32 %v8397, 0.0
        %v8430 = vmax.f32 %v8398, 0.0
        %v8431 = vmax.f32 %v8399, 0.0
        %v8432 = vmax.f32 %v8400, 0.0
        %v8433 = vmax.f32 %v8401, 0.0
        %v8434 = vmax.f32 %v8402, 0.0
        %v8435 = vmax.f32 %v8403, 0.0
        %v8436 = vmax.f32 %v8404, 0.0
        %v8437 = vmax.f32 %v8405, 0.0
        %v8438 = vmax.f32 %v8406, 0.0
        %v8439 = vmax.f32 %v8407, 0.0
        %v8440 = vmax.f32 %v8408, 0.0
        %v8441 = vmax.f32 %v8409, 0.0
        %v8442 = vmax.f32 %v8410, 0.0
        %v8443 = vmax.f32 %v8411, 0.0
        %v8444 = vmax.f32 %v8412, 0.0
        %v8445 = vmax.f32 %v8413, 0.0
        %v8446 = vmax.f32 %v8414, 0.0
        %v8447 = vmax.f32 %v8415, 0.0
        %v8448 = vmax.f32 %v8416, 0.0
        %v8449 = vmax.f32 %v8417, 0.0
        %v8450 = vmax.f32 %v8418, 0.0
        %v8451 = vmax.f32 %v8419, 0.0
        %v8452 = vmax.f32 %v8420, 0.0
        %v8453 = vmax.f32 %v8421, 0.0
        %v8454 = vmax.f32 %v8422, 0.0
        %v8455 = vmax.f32 %v8423, 0.0
        %v8456 = vmax.f32 %v8424, 0.0
        %v8457 = vmax.f32 %v8425, 0.0
        %v8458 = vmax.f32 %v8426, 0.0
        %8459 = vst [vmem:[%s283] sm:$0xff] %v8427
        %8460 = vst [vmem:[%s283 + $0x8] sm:$0xff] %v8428
        %8461 = vst [vmem:[%s283 + $0x10] sm:$0xff] %v8429
        %8462 = vst [vmem:[%s283 + $0x18] sm:$0xff] %v8430
        %8463 = vst [vmem:[%s283 + $0x20] sm:$0xff] %v8431
        %8464 = vst [vmem:[%s283 + $0x28] sm:$0xff] %v8432
        %8465 = vst [vmem:[%s283 + $0x30] sm:$0xff] %v8433
        %8466 = vst [vmem:[%s283 + $0x38] sm:$0xff] %v8434
        %8467 = vst [vmem:[%s283 + $0x40] sm:$0xff] %v8435
        %8468 = vst [vmem:[%s283 + $0x48] sm:$0xff] %v8436
        %8469 = vst [vmem:[%s283 + $0x50] sm:$0xff] %v8437
        %8470 = vst [vmem:[%s283 + $0x58] sm:$0xff] %v8438
        %8471 = vst [vmem:[%s283 + $0x60] sm:$0xff] %v8439
        %8472 = vst [vmem:[%s283 + $0x68] sm:$0xff] %v8440
        %8473 = vst [vmem:[%s283 + $0x70] sm:$0xff] %v8441
        %8474 = vst [vmem:[%s283 + $0x78] sm:$0xff] %v8442
        %8475 = vst [vmem:[%s283 + $0x80] sm:$0xff] %v8443
        %8476 = vst [vmem:[%s283 + $0x88] sm:$0xff] %v8444
        %8477 = vst [vmem:[%s283 + $0x90] sm:$0xff] %v8445
        %8478 = vst [vmem:[%s283 + $0x98] sm:$0xff] %v8446
        %8479 = vst [vmem:[%s283 + $0xa0] sm:$0xff] %v8447
        %8480 = vst [vmem:[%s283 + $0xa8] sm:$0xff] %v8448
        %8481 = vst [vmem:[%s283 + $0xb0] sm:$0xff] %v8449
        %8482 = vst [vmem:[%s283 + $0xb8] sm:$0xff] %v8450
        %8483 = vst [vmem:[%s283 + $0xc0] sm:$0xff] %v8451
        %8484 = vst [vmem:[%s283 + $0xc8] sm:$0xff] %v8452
        %8485 = vst [vmem:[%s283 + $0xd0] sm:$0xff] %v8453
        %8486 = vst [vmem:[%s283 + $0xd8] sm:$0xff] %v8454
        %8487 = vst [vmem:[%s283 + $0xe0] sm:$0xff] %v8455
        %8488 = vst [vmem:[%s283 + $0xe8] sm:$0xff] %v8456
        %8489 = vst [vmem:[%s283 + $0xf0] sm:$0xff] %v8457
        %8490 = vst [vmem:[%s283 + $0xf8] sm:$0xff] %v8458
        %s8491 = sand.u32 %s176, 1
        %s8492 = scalar_lea.sflag [#allocation5], %s8491
        %s8493 = sand.u32 %s176, 1
        %s8494 = smul.addr %s8493, 256
        %s8495 = scalar_lea.vmem [#allocation6], %s8494
        // Predicated region
        $region53: #{tpu_custom_call.1} parent=43 // pred_check
          %p8496 = pneg %p186
        $region54: #{tpu_custom_call.1} parent=43 // pred_check_branch
          %8498 = sbr.rel (%p8496) target = $region56
        $region55: #{tpu_custom_call.1} parent=43 // pred_region
          %s8499 = smul.u32 16, %s26
          %s8501 = ssub.s32 4096, 4096
          %8502 = vsyncadd %s8492, %s8501
          %s8503 = smul.addr %s8499, 2
          %s8504 = smul.addr %s25, 32
          %s8505 = sadd.s32 %s8503, %s8504
          %s8506 = smul.addr %s8505, 128
          %s8507 = scalar_lea.hbm %s6, %s8506
          %s8508 = sshll.u32 %s8495, 4
          %s8509 = int_to_ptr.vmem [resolvable:$true] %s8508
          %8514 = dma.vmem_to_hbm [thread:$0]  %s8509, 4096, %s8507, %s8492, 128, 128, 8
        $region56: #{tpu_custom_call.1} parent=43 // pred_fallthru
          _
      $region44: #{tpu_custom_call.1} parent=5 // pred_fallthru
        _
      %p8515 = scmp.le.s32.totalorder 2, %s16
      // Predicated region
      $region57: #{tpu_custom_call.1} parent=5 // pred_check
        %p8516 = pneg %p8515
      $region58: #{tpu_custom_call.1} parent=5 // pred_check_branch
        %8518 = sbr.rel (%p8516) target = $region60
      $region59: #{tpu_custom_call.1} parent=5 // pred_region
        %s8519 = ssub.s32 %s16, 2
        // Predicated region
        $region61: #{tpu_custom_call.1} parent=59 // pred_check
          %p8520 = pneg %p192
        $region62: #{tpu_custom_call.1} parent=59 // pred_check_branch
          %8522 = sbr.rel (%p8520) target = $region64
        $region63: #{tpu_custom_call.1} parent=59 // pred_region
          %s8523 = sand.u32 %s177, 1
          %s8524 = scalar_lea.sflag [#allocation5], %s8523
          %s8525 = sand.u32 %s177, 1
          %s8526 = smul.addr %s8525, 256
          %s8527 = scalar_lea.vmem [#allocation6], %s8526
          %8528 = dma.done %s8524, 4096
        $region64: #{tpu_custom_call.1} parent=59 // pred_fallthru
          _
      $region60: #{tpu_custom_call.1} parent=5 // pred_fallthru
        _
    $region6: #{tpu_custom_call.1} parent=1 // loop_footer
      %s20 = sadd.s32 1, %s16
    $region7: #{tpu_custom_call.1} parent=1 // loop_footer_branch
      %15 = sbr.rel target = $region3
    $region8: #{tpu_custom_call.1} parent=1 // loop_exit
      _
    %8529 = vsyncpa [#allocation4], 1
    %s8530 = scalar_lea.sflag [#allocation4], 1
    %8531 = vsyncpa %s8530, 1
    %8532 = vsyncpa [#allocation5], 1
    %s8533 = scalar_lea.sflag [#allocation5], 1
    %8534 = vsyncpa %s8533, 1

</llo_original>
